<compile_context>
chip_gen: v5e
topology: v5e:2x2
jax: 0.10.0
libtpu: 0.0.40
codegen_flags: <defaults>
</compile_context>

<pallas_src>
import functools

import jax
import jax.numpy as jnp
from jax import lax
from jax.experimental import pallas as pl
from jax.experimental.pallas import tpu as pltpu


def _round_up(x, m):
    return ((x + m - 1) // m) * m


# ----------------------------------------------------------------------------
# Fused Pallas kernel: full ConvLSTM recurrence for one batch element.
# ----------------------------------------------------------------------------
def _convlstm_fused_kernel(*refs, layer_dims, K, Hh, Ww, ph, pw, step, num_eff):
    # refs (in order):
    #   eff_slot_ref : SMEM (step,) int32, eff_slot[s] = output slot or -1
    #   xp_ref       : (1, Hp, Wp, Cin0) f32   zero-padded input (padded once)
    #   per layer l  : w_ref (K, Kc_pad, 4*Hc) bf16 fused [Wh|Wx], dx-major
    #                  b_ref (1, 4*Hc) f32
    #   outputs      : [out_eff (E, M, Hc_last) f32]  (only if num_eff > 0)
    #                  h_last (1, M, Hc_last) f32,  c_last (1, M, Hc_last) f32
    #   scratch/layer: comb (Hp, Wp, Cl) bf16, stk (Hp*Ww, Kc_pad) bf16,
    #                  c (M, Hc) f32
    L = len(layer_dims)
    E = num_eff
    M = Hh * Ww
    Hp = Hh + 2 * ph
    Wp = Ww + 2 * pw

    it = iter(refs)
    eff_slot_ref = next(it)
    xp_ref = next(it)
    w_refs, b_refs = [], []
    for _ in range(L):
        w_refs.append(next(it))
        b_refs.append(next(it))
    out_eff_ref = next(it) if E > 0 else None
    h_last_ref = next(it)
    c_last_ref = next(it)
    comb_refs, stk_refs, c_refs = [], [], []
    for _ in range(L):
        comb_refs.append(next(it))
        stk_refs.append(next(it))
        c_refs.append(next(it))

    Cin0, Hc0 = layer_dims[0]

    # ---- once per batch element: zero h/c (and padded tails), write the
    # (constant over steps) padded input into layer 0's x channels ------------
    for l in range(L):
        comb_refs[l][...] = jnp.zeros_like(comb_refs[l])
        stk_refs[l][...] = jnp.zeros_like(stk_refs[l])
        c_refs[l][...] = jnp.zeros_like(c_refs[l])
    comb_refs[0][:, :, Hc0:Hc0 + Cin0] = xp_ref[0].astype(jnp.bfloat16)

    # H-row chunks sized so each chunk's (rows, 4*Hc) f32 gate block stays in
    # vector registers across the K tap matmuls (no VMEM accumulator RMW).
    hb = max(1, min(Hh, 128 // max(1, Ww)))
    chunks = [(y0, min(hb, Hh - y0)) for y0 in range(0, Hh, hb)]

    def step_body(s, carry):
        slot = eff_slot_ref[s] if E > 0 else None
        for l in range(L):
            Cin_l, Hc_l = layer_dims[l]
            Cl = Cin_l + Hc_l

            # Layer l > 0 consumes layer l-1's hidden state of THIS step,
            # which already sits in comb_{l-1}'s h channels.  Interior copy
            # only; the halo stays zero from the one-time init.
            if l > 0:
                comb_refs[l][ph:ph + Hh, pw:pw + Ww, Hc_l:Hc_l + Cin_l] = (
                    comb_refs[l - 1][ph:ph + Hh, pw:pw + Ww, 0:Cin_l])

            # Build the dx-stacked LHS once per (layer, step): channel-stack
            # the K W-shifted views.  Each dy tap then reads a sublane-aligned
            # row range of this flat buffer (no misaligned per-tap W slices).
            for dx in range(K):
                shifted = comb_refs[l][:, pw - ph + dx:pw - ph + dx + Ww, :]
                stk_refs[l][:, dx * Cl:(dx + 1) * Cl] = shifted.reshape(
                    Hp * Ww, Cl)

            bias = b_refs[l][...]                           # (1, 4*Hc) f32

            for (y0, nrow) in chunks:
                rows = nrow * Ww
                r0 = y0 * Ww

                # K chained matmuls (depth = padded K*Cl) accumulated in
                # registers / the MXU result buffer (MRB on v7x) -- the gate
                # sum never touches VMEM until the nonlinearities.
                g = None
                for dy in range(K):
                    lhs = stk_refs[l][(y0 + dy) * Ww:(y0 + dy) * Ww + rows, :]
                    d = jnp.dot(lhs, w_refs[l][dy],
                                preferred_element_type=jnp.float32)
                    g = d if g is None else g + d
                g = g + bias                                # bias in registers

                # Gate math in f32; one full-width sigmoid covers i, f, o.
                # TODO(synk): for production configs pick 4*Hc a multiple of
                # 128 so the per-gate lane slices are tile aligned.
                sg = jax.nn.sigmoid(g)
                ci = sg[:, 0 * Hc_l:1 * Hc_l]
                cf = sg[:, 1 * Hc_l:2 * Hc_l]
                co = sg[:, 3 * Hc_l:4 * Hc_l]
                cg = jnp.tanh(g[:, 2 * Hc_l:3 * Hc_l])

                c_new = cf * c_refs[l][r0:r0 + rows, :] + ci * cg
                h_new = co * jnp.tanh(c_new)
                c_refs[l][r0:r0 + rows, :] = c_new

                # New hidden state -> comb (next step's h / next layer's x).
                comb_refs[l][ph + y0:ph + y0 + nrow, pw:pw + Ww, 0:Hc_l] = (
                    h_new.astype(jnp.bfloat16).reshape(nrow, Ww, Hc_l))

                if l == L - 1:
                    if E > 0:
                        @pl.when(slot >= 0)
                        def _(h_new=h_new, r0=r0, rows=rows, Hc_l=Hc_l):
                            out_eff_ref[pl.ds(slot, 1), r0:r0 + rows, :] = (
                                h_new.reshape(1, rows, Hc_l))

                    @pl.when(s == step - 1)
                    def _(h_new=h_new, c_new=c_new, r0=r0, rows=rows):
                        h_last_ref[0, r0:r0 + rows, :] = h_new
                        c_last_ref[0, r0:r0 + rows, :] = c_new
        return carry

    lax.fori_loop(0, step, step_body, jnp.int32(0))


# ----------------------------------------------------------------------------
# Wrapper: one pallas_call for the whole ConvLSTM forward.
# ----------------------------------------------------------------------------
def conv_lstm_forward(x_nchw, params, step, effective_step):
    """Mirrors ConvLSTM.forward. Returns (outputs_nchw_list, (h_last, c_last))."""
    assert step >= 1 and len(params) >= 1, "need step >= 1 and >= 1 layer"

    x = jnp.transpose(x_nchw, (0, 2, 3, 1)).astype(jnp.float32)   # NCHW -> NHWC
    B, Hh, Ww, Cin0 = x.shape
    K = params[0][0].shape[0]
    ph = (K - 1) // 2                       # conv "same" halo (H)
    pw = _round_up(max(ph, 1), 8)           # sublane-aligned W halo
    Hp, Wp = Hh + 2 * ph, Ww + 2 * pw
    M = Hh * Ww

    # Pad the input ONCE (it is re-fed unchanged every time step).
    xp = jnp.pad(x, ((0, 0), (ph, ph), (pw, pw), (0, 0)))

    layer_dims, w_fused, b_list = [], [], []
    for (wx, wh, b) in params:
        Cin = wx.shape[2]
        Hc = wh.shape[2]
        Cl = Cin + Hc
        Kc = K * Cl
        Kc_pad = _round_up(Kc, 128)         # full MXU contraction depth (v5e)
        layer_dims.append((Cin, Hc))
        # [Wh | Wx] channel order (matches comb's [h | x]); fuse dx (dx-major).
        w_cat = jnp.concatenate([wh, wx], axis=2)            # (K, K, Cl, 4Hc)
        w_r = w_cat.reshape(K, Kc, 4 * Hc)
        if Kc_pad > Kc:
            w_r = jnp.pad(w_r, ((0, 0), (0, Kc_pad - Kc), (0, 0)))
        w_fused.append(w_r.astype(jnp.bfloat16))
        b_list.append(b.astype(jnp.float32).reshape(1, 4 * Hc))
    L = len(params)
    Hc_last = layer_dims[-1][1]

    # effective_step entries >= step never execute (same as the PyTorch loop).
    eff_steps = tuple(s for s in range(step) if s in effective_step)
    E = len(eff_steps)
    eff_slot_list = [-1] * step
    for slot, s in enumerate(eff_steps):
        eff_slot_list[s] = slot
    eff_slot = jnp.asarray(eff_slot_list, dtype=jnp.int32)

    kernel = functools.partial(
        _convlstm_fused_kernel, layer_dims=tuple(layer_dims), K=K, Hh=Hh,
        Ww=Ww, ph=ph, pw=pw, step=step, num_eff=E)

    in_specs = [pl.BlockSpec((1, Hp, Wp, Cin0), lambda b, eff: (b, 0, 0, 0))]
    inputs = [xp]
    for l in range(L):
        Cin, Hc = layer_dims[l]
        Kc_pad = w_fused[l].shape[1]
        in_specs.append(pl.BlockSpec((K, Kc_pad, 4 * Hc),
                                     lambda b, eff: (0, 0, 0)))
        in_specs.append(pl.BlockSpec((1, 4 * Hc), lambda b, eff: (0, 0)))
        inputs.append(w_fused[l])
        inputs.append(b_list[l])

    out_shapes, out_specs = [], []
    if E > 0:
        out_shapes.append(jax.ShapeDtypeStruct((B * E, M, Hc_last), jnp.float32))
        out_specs.append(pl.BlockSpec((E, M, Hc_last), lambda b, eff: (b, 0, 0)))
    out_shapes.append(jax.ShapeDtypeStruct((B, M, Hc_last), jnp.float32))
    out_specs.append(pl.BlockSpec((1, M, Hc_last), lambda b, eff: (b, 0, 0)))
    out_shapes.append(jax.ShapeDtypeStruct((B, M, Hc_last), jnp.float32))
    out_specs.append(pl.BlockSpec((1, M, Hc_last), lambda b, eff: (b, 0, 0)))

    scratch = []
    for l in range(L):
        Cin, Hc = layer_dims[l]
        Cl = Cin + Hc
        Kc_pad = w_fused[l].shape[1]
        scratch.append(pltpu.VMEM((Hp, Wp, Cl), jnp.bfloat16))       # comb
        scratch.append(pltpu.VMEM((Hp * Ww, Kc_pad), jnp.bfloat16))  # stacked LHS
        scratch.append(pltpu.VMEM((M, Hc), jnp.float32))             # cell state

    grid_spec = pltpu.PrefetchScalarGridSpec(
        num_scalar_prefetch=1,
        grid=(B,),
        in_specs=in_specs,
        out_specs=out_specs,
        scratch_shapes=scratch,
    )

    flops = 2 * B * step * sum(M * K * K * (c + h) * 4 * h
                               for (c, h) in layer_dims)
    transcendentals = B * step * sum(6 * M * h for (_, h) in layer_dims)
    bytes_accessed = int(xp.size * 4
                         + sum(w.size * 2 for w in w_fused)
                         + sum(b.size * 4 for b in b_list)
                         + (E + 2) * B * M * Hc_last * 4)
    cost = pl.CostEstimate(flops=flops, transcendentals=transcendentals,
                           bytes_accessed=bytes_accessed)

    # TODO(synk): when B == 1 on v7x, add a second parallel split (e.g. halves
    # of the H rows with a halo exchange) so both TensorCores get work.
    results = pl.pallas_call(
        kernel,
        out_shape=tuple(out_shapes),
        grid_spec=grid_spec,
        compiler_params=pltpu.CompilerParams(
            dimension_semantics=("parallel",),
            vmem_limit_bytes=32 * 1024 * 1024),   # ~3 MiB used; ample headroom
        cost_estimate=cost,
    )(eff_slot, *inputs)

    if E > 0:
        out_eff, h_last, c_last = results
        out_eff = out_eff.reshape(B, E, Hh, Ww, Hc_last)
        outputs = [jnp.transpose(out_eff[:, e], (0, 3, 1, 2)) for e in range(E)]
    else:
        h_last, c_last = results
        outputs = []
    h_last = jnp.transpose(h_last.reshape(B, Hh, Ww, Hc_last), (0, 3, 1, 2))
    c_last = jnp.transpose(c_last.reshape(B, Hh, Ww, Hc_last), (0, 3, 1, 2))
    # TODO(synk): PyTorch forward prints outputs[0][0].sum() at effective steps;
    # the print side-effect is omitted so the script's only output is KERNEL_OK.
    return outputs, (h_last, c_last)


# ----------------------------------------------------------------------------
# Parameter construction (deterministic, synthetic).
# ----------------------------------------------------------------------------
def make_params(key, input_channels, hidden_channels, kernel_size):
    """Per layer: (Wx[K,K,Cin,4*Hc], Wh[K,K,Hc,4*Hc], b[1,4*Hc]); gate order i,f,c,o."""
    in_chs = [input_channels] + list(hidden_channels)
    params = []
    for i, Hc in enumerate(hidden_channels):
        assert Hc % 2 == 0
        Cin = in_chs[i]
        key, k1, k2, k3 = jax.random.split(key, 4)
        wx = 0.1 * jax.random.normal(
            k1, (kernel_size, kernel_size, Cin, 4 * Hc), jnp.float32)
        wh = 0.1 * jax.random.normal(
            k2, (kernel_size, kernel_size, Hc, 4 * Hc), jnp.float32)
        b = 0.1 * jax.random.normal(k3, (1, 4 * Hc), jnp.float32)
        params.append((wx, wh, b))
    return params


# ----------------------------------------------------------------------------
# Pure-JAX reference (lax.conv) for correctness checking.
# ----------------------------------------------------------------------------
def _ref_cell(x, h, c, wx, wh, b, mm_dtype):
    K = wx.shape[0]
    p = (K - 1) // 2
    dn = ('NHWC', 'HWIO', 'NHWC')

    def conv(a, w):
        return lax.conv_general_dilated(
            a.astype(mm_dtype), w.astype(mm_dtype), (1, 1),
            [(p, p), (p, p)], dimension_numbers=dn,
            preferred_element_type=jnp.float32)

    g = conv(x, wx) + conv(h, wh) + b.reshape(1, 1, 1, -1)
    Hc = h.shape[-1]
    ci = jax.nn.sigmoid(g[..., 0 * Hc:1 * Hc])
    cf = jax.nn.sigmoid(g[..., 1 * Hc:2 * Hc])
    cg = jnp.tanh(g[..., 2 * Hc:3 * Hc])
    co = jax.nn.sigmoid(g[..., 3 * Hc:4 * Hc])
    cc = cf * c + ci * cg
    ch = co * jnp.tanh(cc)
    return ch, cc


def _ref_forward(x_nchw, params, step, effective_step, mm_dtype=jnp.float32):
    x_in = jnp.transpose(x_nchw, (0, 2, 3, 1)).astype(jnp.float32)
    state = []
    outs = []
    x = x_in
    new_c = None
    for s in range(step):
        x = x_in
        for i, (wx, wh, b) in enumerate(params):
            if s == 0:
                B, Hh, Ww, _ = x.shape
                Hc = wx.shape[-1] // 4
                state.append((jnp.zeros((B, Hh, Ww, Hc), jnp.float32),
                              jnp.zeros((B, Hh, Ww, Hc), jnp.float32)))
            h, c = state[i]
            x, new_c = _ref_cell(x, h, c, wx, wh, b, mm_dtype)
            state[i] = (x, new_c)
        if s in effective_step:
            outs.append(jnp.transpose(x, (0, 3, 1, 2)))
    return outs, (jnp.transpose(x, (0, 3, 1, 2)),
                  jnp.transpose(new_c, (0, 3, 1, 2)))


if __name__ == "__main__":
    # Small deterministic config consistent with the module.
    input_channels = 4
    hidden_channels = [32, 32]   # each must be even
    kernel_size = 3
    step = 2
    effective_step = [1]

    key = jax.random.PRNGKey(0)
    key, kx, kp = jax.random.split(key, 3)
    x = jax.random.normal(kx, (2, input_channels, 16, 16), jnp.float32)  # NCHW

    params = make_params(kp, input_channels, hidden_channels, kernel_size)

    outputs, (h_last, c_last) = conv_lstm_forward(x, params, step,
                                                  effective_step)
    jax.block_until_ready(h_last)
    jax.block_until_ready(c_last)
    for o in outputs:
        jax.block_until_ready(o)

    # (1) reference mirroring the kernel's bf16 matmul operands (tight check),
    # (2) pure-f32 (PyTorch-semantics) reference (coarser check).
    ref_bf_out, (ref_bf_h, ref_bf_c) = _ref_forward(
        x, params, step, effective_step, mm_dtype=jnp.bfloat16)
    ref_f32_out, (ref_f32_h, ref_f32_c) = _ref_forward(
        x, params, step, effective_step, mm_dtype=jnp.float32)

    ok = bool(jnp.allclose(h_last, ref_bf_h, atol=1e-2, rtol=1e-2))
    ok &= bool(jnp.allclose(c_last, ref_bf_c, atol=1e-2, rtol=1e-2))
    for o, ro in zip(outputs, ref_bf_out):
        ok &= bool(jnp.allclose(o, ro, atol=1e-2, rtol=1e-2))
    ok &= bool(jnp.allclose(h_last, ref_f32_h, atol=5e-2, rtol=5e-2))
    ok &= bool(jnp.allclose(c_last, ref_f32_c, atol=5e-2, rtol=5e-2))
    for o, ro in zip(outputs, ref_f32_out):
        ok &= bool(jnp.allclose(o, ro, atol=5e-2, rtol=5e-2))
    assert ok, "Pallas ConvLSTM output mismatch vs reference"

    print("KERNEL_OK")
</pallas_src>

<mosaic_0001>
module attributes {stable_mosaic.version = 11 : i64} {
  func.func @_convlstm_fused_kernel(%arg0: i32, %arg1: memref<2xi32, #tpu.memory_space<smem>>, %arg2: memref<1x18x32x4xf32, #tpu.memory_space<vmem>>, %arg3: memref<3x128x128xbf16, #tpu.memory_space<vmem>>, %arg4: memref<1x128xf32, #tpu.memory_space<vmem>>, %arg5: memref<3x256x128xbf16, #tpu.memory_space<vmem>>, %arg6: memref<1x128xf32, #tpu.memory_space<vmem>>, %arg7: memref<1x256x32xf32, #tpu.memory_space<vmem>>, %arg8: memref<1x256x32xf32, #tpu.memory_space<vmem>>, %arg9: memref<1x256x32xf32, #tpu.memory_space<vmem>>, %arg10: memref<18x32x36xbf16, #tpu.memory_space<vmem>>, %arg11: memref<288x128xbf16, #tpu.memory_space<vmem>>, %arg12: memref<256x32xf32, #tpu.memory_space<vmem>>, %arg13: memref<18x32x64xbf16, #tpu.memory_space<vmem>>, %arg14: memref<288x256xbf16, #tpu.memory_space<vmem>>, %arg15: memref<256x32xf32, #tpu.memory_space<vmem>>) attributes {dimension_semantics = [#tpu.dimension_semantics<parallel>], iteration_bounds = array<i64: 2>, scalar_prefetch = 1 : i64, scratch_operands = 6 : i64, tpu.core_type = #tpu.core_type<tc>, window_params = [{transform_indices = @transform_0, window_bounds = array<i64: 1, 18, 32, 4>}, {pipeline_mode = #tpu.pipeline_mode<synchronous>, transform_indices = @transform_1, window_bounds = array<i64: 3, 128, 128>}, {pipeline_mode = #tpu.pipeline_mode<synchronous>, transform_indices = @transform_2, window_bounds = array<i64: 1, 128>}, {pipeline_mode = #tpu.pipeline_mode<synchronous>, transform_indices = @transform_3, window_bounds = array<i64: 3, 256, 128>}, {pipeline_mode = #tpu.pipeline_mode<synchronous>, transform_indices = @transform_4, window_bounds = array<i64: 1, 128>}, {transform_indices = @transform_5, window_bounds = array<i64: 1, 256, 32>}, {transform_indices = @transform_6, window_bounds = array<i64: 1, 256, 32>}, {transform_indices = @transform_7, window_bounds = array<i64: 1, 256, 32>}]} {
    %cst = arith.constant 0.000000e+00 : bf16
    %0 = vector.broadcast %cst : bf16 to vector<18x32x36xbf16>
    %c0 = arith.constant 0 : index
    %c0_0 = arith.constant 0 : index
    %c0_1 = arith.constant 0 : index
    %1 = vector.load %arg10[%c0, %c0_0, %c0_1] : memref<18x32x36xbf16, #tpu.memory_space<vmem>>, vector<18x32x36xbf16>
    tpu.vector_store %arg10[%c0, %c0_0, %c0_1], %0 {strides = array<i32>} : memref<18x32x36xbf16, #tpu.memory_space<vmem>>, vector<18x32x36xbf16>,
    %cst_2 = arith.constant 0.000000e+00 : bf16
    %2 = vector.broadcast %cst_2 : bf16 to vector<288x128xbf16>
    %c0_3 = arith.constant 0 : index
    %c0_4 = arith.constant 0 : index
    %3 = vector.load %arg11[%c0_3, %c0_4] : memref<288x128xbf16, #tpu.memory_space<vmem>>, vector<288x128xbf16>
    tpu.vector_store %arg11[%c0_3, %c0_4], %2 {strides = array<i32>} : memref<288x128xbf16, #tpu.memory_space<vmem>>, vector<288x128xbf16>,
    %cst_5 = arith.constant 0.000000e+00 : f32
    %4 = vector.broadcast %cst_5 : f32 to vector<256x32xf32>
    %c0_6 = arith.constant 0 : index
    %c0_7 = arith.constant 0 : index
    %5 = vector.load %arg12[%c0_6, %c0_7] : memref<256x32xf32, #tpu.memory_space<vmem>>, vector<256x32xf32>
    tpu.vector_store %arg12[%c0_6, %c0_7], %4 {strides = array<i32>} : memref<256x32xf32, #tpu.memory_space<vmem>>, vector<256x32xf32>,
    %cst_8 = arith.constant 0.000000e+00 : bf16
    %6 = vector.broadcast %cst_8 : bf16 to vector<18x32x64xbf16>
    %c0_9 = arith.constant 0 : index
    %c0_10 = arith.constant 0 : index
    %c0_11 = arith.constant 0 : index
    %7 = vector.load %arg13[%c0_9, %c0_10, %c0_11] : memref<18x32x64xbf16, #tpu.memory_space<vmem>>, vector<18x32x64xbf16>
    tpu.vector_store %arg13[%c0_9, %c0_10, %c0_11], %6 {strides = array<i32>} : memref<18x32x64xbf16, #tpu.memory_space<vmem>>, vector<18x32x64xbf16>,
    %cst_12 = arith.constant 0.000000e+00 : bf16
    %8 = vector.broadcast %cst_12 : bf16 to vector<288x256xbf16>
    %c0_13 = arith.constant 0 : index
    %c0_14 = arith.constant 0 : index
    %9 = vector.load %arg14[%c0_13, %c0_14] : memref<288x256xbf16, #tpu.memory_space<vmem>>, vector<288x256xbf16>
    tpu.vector_store %arg14[%c0_13, %c0_14], %8 {strides = array<i32>} : memref<288x256xbf16, #tpu.memory_space<vmem>>, vector<288x256xbf16>,
    %cst_15 = arith.constant 0.000000e+00 : f32
    %10 = vector.broadcast %cst_15 : f32 to vector<256x32xf32>
    %c0_16 = arith.constant 0 : index
    %c0_17 = arith.constant 0 : index
    %11 = vector.load %arg15[%c0_16, %c0_17] : memref<256x32xf32, #tpu.memory_space<vmem>>, vector<256x32xf32>
    tpu.vector_store %arg15[%c0_16, %c0_17], %10 {strides = array<i32>} : memref<256x32xf32, #tpu.memory_space<vmem>>, vector<256x32xf32>,
    %c0_18 = arith.constant 0 : index
    %c0_19 = arith.constant 0 : index
    %c0_20 = arith.constant 0 : index
    %c0_21 = arith.constant 0 : index
    %12 = vector.load %arg2[%c0_18, %c0_19, %c0_20, %c0_21] : memref<1x18x32x4xf32, #tpu.memory_space<vmem>>, vector<1x18x32x4xf32>
    %13 = vector.shape_cast %12 : vector<1x18x32x4xf32> to vector<18x32x4xf32>
    %14 = arith.truncf %13 : vector<18x32x4xf32> to vector<18x32x4xbf16>
    %c0_22 = arith.constant 0 : index
    %c0_23 = arith.constant 0 : index
    %c32 = arith.constant 32 : index
    %15 = vector.load %arg10[%c0_22, %c0_23, %c32] : memref<18x32x36xbf16, #tpu.memory_space<vmem>>, vector<18x32x4xbf16>
    tpu.vector_store %arg10[%c0_22, %c0_23, %c32], %14 {strides = array<i32>} : memref<18x32x36xbf16, #tpu.memory_space<vmem>>, vector<18x32x4xbf16>,
    %c0_i32 = arith.constant 0 : i32
    %c2_i32 = arith.constant 2 : i32
    %16 = arith.addi %c0_i32, %c2_i32 : i32
    %c1_i32 = arith.constant 1 : i32
    scf.for %arg16 = %c0_i32 to %16 step %c1_i32  : i32 {
      %17 = arith.index_cast %arg16 : i32 to index
      %18 = memref.load %arg1[%17] : memref<2xi32, #tpu.memory_space<smem>>
      %c0_25 = arith.constant 0 : index
      %c7 = arith.constant 7 : index
      %c0_26 = arith.constant 0 : index
      %19 = vector.load %arg10[%c0_25, %c7, %c0_26] : memref<18x32x36xbf16, #tpu.memory_space<vmem>>, vector<18x16x36xbf16>
      %20 = vector.shape_cast %19 : vector<18x16x36xbf16> to vector<288x36xbf16>
      %c0_27 = arith.constant 0 : index
      %c0_28 = arith.constant 0 : index
      %21 = vector.load %arg11[%c0_27, %c0_28] : memref<288x128xbf16, #tpu.memory_space<vmem>>, vector<288x36xbf16>
      tpu.vector_store %arg11[%c0_27, %c0_28], %20 {strides = array<i32>} : memref<288x128xbf16, #tpu.memory_space<vmem>>, vector<288x36xbf16>,
      %c0_29 = arith.constant 0 : index
      %c8 = arith.constant 8 : index
      %c0_30 = arith.constant 0 : index
      %22 = vector.load %arg10[%c0_29, %c8, %c0_30] : memref<18x32x36xbf16, #tpu.memory_space<vmem>>, vector<18x16x36xbf16>
      %23 = vector.shape_cast %22 : vector<18x16x36xbf16> to vector<288x36xbf16>
      %c0_31 = arith.constant 0 : index
      %c36 = arith.constant 36 : index
      %24 = vector.load %arg11[%c0_31, %c36] : memref<288x128xbf16, #tpu.memory_space<vmem>>, vector<288x36xbf16>
      tpu.vector_store %arg11[%c0_31, %c36], %23 {strides = array<i32>} : memref<288x128xbf16, #tpu.memory_space<vmem>>, vector<288x36xbf16>,
      %c0_32 = arith.constant 0 : index
      %c9 = arith.constant 9 : index
      %c0_33 = arith.constant 0 : index
      %25 = vector.load %arg10[%c0_32, %c9, %c0_33] : memref<18x32x36xbf16, #tpu.memory_space<vmem>>, vector<18x16x36xbf16>
      %26 = vector.shape_cast %25 : vector<18x16x36xbf16> to vector<288x36xbf16>
      %c0_34 = arith.constant 0 : index
      %c72 = arith.constant 72 : index
      %27 = vector.load %arg11[%c0_34, %c72] : memref<288x128xbf16, #tpu.memory_space<vmem>>, vector<288x36xbf16>
      tpu.vector_store %arg11[%c0_34, %c72], %26 {strides = array<i32>} : memref<288x128xbf16, #tpu.memory_space<vmem>>, vector<288x36xbf16>,
      %c0_35 = arith.constant 0 : index
      %c0_36 = arith.constant 0 : index
      %28 = vector.load %arg4[%c0_35, %c0_36] : memref<1x128xf32, #tpu.memory_space<vmem>>, vector<1x128xf32>
      %c0_37 = arith.constant 0 : index
      %c0_38 = arith.constant 0 : index
      %29 = vector.load %arg11[%c0_37, %c0_38] : memref<288x128xbf16, #tpu.memory_space<vmem>>, vector<128x128xbf16>
      %c0_39 = arith.constant 0 : index
      %c0_40 = arith.constant 0 : index
      %c0_41 = arith.constant 0 : index
      %30 = vector.load %arg3[%c0_39, %c0_40, %c0_41] : memref<3x128x128xbf16, #tpu.memory_space<vmem>>, vector<1x128x128xbf16>
      %31 = vector.shape_cast %30 : vector<1x128x128xbf16> to vector<128x128xbf16>
      %cst_42 = arith.constant dense<0.000000e+00> : vector<128x128xf32>
      %32 = tpu.matmul %29, %31, %cst_42 {dimension_numbers = #tpu.dot_dimension_numbers<[1], [0], [0], [1], [0, 0, 1, 1], [], []>} : vector<128x128xbf16>, vector<128x128xbf16>, vector<128x128xf32> -> vector<128x128xf32>
      %c16 = arith.constant 16 : index
      %c0_43 = arith.constant 0 : index
      %33 = vector.load %arg11[%c16, %c0_43] : memref<288x128xbf16, #tpu.memory_space<vmem>>, vector<128x128xbf16>
      %c1 = arith.constant 1 : index
      %c0_44 = arith.constant 0 : index
      %c0_45 = arith.constant 0 : index
      %34 = vector.load %arg3[%c1, %c0_44, %c0_45] : memref<3x128x128xbf16, #tpu.memory_space<vmem>>, vector<1x128x128xbf16>
      %35 = vector.shape_cast %34 : vector<1x128x128xbf16> to vector<128x128xbf16>
      %cst_46 = arith.constant dense<0.000000e+00> : vector<128x128xf32>
      %36 = tpu.matmul %33, %35, %cst_46 {dimension_numbers = #tpu.dot_dimension_numbers<[1], [0], [0], [1], [0, 0, 1, 1], [], []>} : vector<128x128xbf16>, vector<128x128xbf16>, vector<128x128xf32> -> vector<128x128xf32>
      %37 = arith.addf %32, %36 : vector<128x128xf32>
      %c32_47 = arith.constant 32 : index
      %c0_48 = arith.constant 0 : index
      %38 = vector.load %arg11[%c32_47, %c0_48] : memref<288x128xbf16, #tpu.memory_space<vmem>>, vector<128x128xbf16>
      %c2 = arith.constant 2 : index
      %c0_49 = arith.constant 0 : index
      %c0_50 = arith.constant 0 : index
      %39 = vector.load %arg3[%c2, %c0_49, %c0_50] : memref<3x128x128xbf16, #tpu.memory_space<vmem>>, vector<1x128x128xbf16>
      %40 = vector.shape_cast %39 : vector<1x128x128xbf16> to vector<128x128xbf16>
      %cst_51 = arith.constant dense<0.000000e+00> : vector<128x128xf32>
      %41 = tpu.matmul %38, %40, %cst_51 {dimension_numbers = #tpu.dot_dimension_numbers<[1], [0], [0], [1], [0, 0, 1, 1], [], []>} : vector<128x128xbf16>, vector<128x128xbf16>, vector<128x128xf32> -> vector<128x128xf32>
      %42 = arith.addf %37, %41 : vector<128x128xf32>
      %43 = vector.broadcast %28 : vector<1x128xf32> to vector<128x128xf32>
      %44 = arith.addf %42, %43 : vector<128x128xf32>
      %45 = arith.negf %44 : vector<128x128xf32>
      %46 = math.exp %45 : vector<128x128xf32>
      %cst_52 = arith.constant 1.000000e+00 : f32
      %47 = vector.broadcast %cst_52 : f32 to vector<128x128xf32>
      %48 = arith.addf %47, %46 : vector<128x128xf32>
      %49 = arith.divf %47, %48 : vector<128x128xf32>
      %50 = vector.extract_strided_slice %49 {offsets = [0, 0], sizes = [128, 32], strides = [1, 1]} : vector<128x128xf32> to vector<128x32xf32>
      %51 = vector.extract_strided_slice %49 {offsets = [0, 32], sizes = [128, 32], strides = [1, 1]} : vector<128x128xf32> to vector<128x32xf32>
      %52 = vector.extract_strided_slice %49 {offsets = [0, 96], sizes = [128, 32], strides = [1, 1]} : vector<128x128xf32> to vector<128x32xf32>
      %53 = vector.extract_strided_slice %44 {offsets = [0, 64], sizes = [128, 32], strides = [1, 1]} : vector<128x128xf32> to vector<128x32xf32>
      %54 = math.tanh %53 : vector<128x32xf32>
      %c0_53 = arith.constant 0 : index
      %c0_54 = arith.constant 0 : index
      %55 = vector.load %arg12[%c0_53, %c0_54] : memref<256x32xf32, #tpu.memory_space<vmem>>, vector<128x32xf32>
      %56 = arith.mulf %51, %55 : vector<128x32xf32>
      %57 = arith.mulf %50, %54 : vector<128x32xf32>
      %58 = arith.addf %56, %57 : vector<128x32xf32>
      %59 = math.tanh %58 : vector<128x32xf32>
      %60 = arith.mulf %52, %59 : vector<128x32xf32>
      %c0_55 = arith.constant 0 : index
      %c0_56 = arith.constant 0 : index
      %61 = vector.load %arg12[%c0_55, %c0_56] : memref<256x32xf32, #tpu.memory_space<vmem>>, vector<128x32xf32>
      tpu.vector_store %arg12[%c0_55, %c0_56], %58 {strides = array<i32>} : memref<256x32xf32, #tpu.memory_space<vmem>>, vector<128x32xf32>,
      %62 = arith.truncf %60 : vector<128x32xf32> to vector<128x32xbf16>
      %63 = vector.shape_cast %62 : vector<128x32xbf16> to vector<8x16x32xbf16>
      %c1_57 = arith.constant 1 : index
      %c8_58 = arith.constant 8 : index
      %c0_59 = arith.constant 0 : index
      %64 = vector.load %arg10[%c1_57, %c8_58, %c0_59] : memref<18x32x36xbf16, #tpu.memory_space<vmem>>, vector<8x16x32xbf16>
      tpu.vector_store %arg10[%c1_57, %c8_58, %c0_59], %63 {strides = array<i32>} : memref<18x32x36xbf16, #tpu.memory_space<vmem>>, vector<8x16x32xbf16>,
      %c128 = arith.constant 128 : index
      %c0_60 = arith.constant 0 : index
      %65 = vector.load %arg11[%c128, %c0_60] : memref<288x128xbf16, #tpu.memory_space<vmem>>, vector<128x128xbf16>
      %c0_61 = arith.constant 0 : index
      %c0_62 = arith.constant 0 : index
      %c0_63 = arith.constant 0 : index
      %66 = vector.load %arg3[%c0_61, %c0_62, %c0_63] : memref<3x128x128xbf16, #tpu.memory_space<vmem>>, vector<1x128x128xbf16>
      %67 = vector.shape_cast %66 : vector<1x128x128xbf16> to vector<128x128xbf16>
      %cst_64 = arith.constant dense<0.000000e+00> : vector<128x128xf32>
      %68 = tpu.matmul %65, %67, %cst_64 {dimension_numbers = #tpu.dot_dimension_numbers<[1], [0], [0], [1], [0, 0, 1, 1], [], []>} : vector<128x128xbf16>, vector<128x128xbf16>, vector<128x128xf32> -> vector<128x128xf32>
      %c144 = arith.constant 144 : index
      %c0_65 = arith.constant 0 : index
      %69 = vector.load %arg11[%c144, %c0_65] : memref<288x128xbf16, #tpu.memory_space<vmem>>, vector<128x128xbf16>
      %c1_66 = arith.constant 1 : index
      %c0_67 = arith.constant 0 : index
      %c0_68 = arith.constant 0 : index
      %70 = vector.load %arg3[%c1_66, %c0_67, %c0_68] : memref<3x128x128xbf16, #tpu.memory_space<vmem>>, vector<1x128x128xbf16>
      %71 = vector.shape_cast %70 : vector<1x128x128xbf16> to vector<128x128xbf16>
      %cst_69 = arith.constant dense<0.000000e+00> : vector<128x128xf32>
      %72 = tpu.matmul %69, %71, %cst_69 {dimension_numbers = #tpu.dot_dimension_numbers<[1], [0], [0], [1], [0, 0, 1, 1], [], []>} : vector<128x128xbf16>, vector<128x128xbf16>, vector<128x128xf32> -> vector<128x128xf32>
      %73 = arith.addf %68, %72 : vector<128x128xf32>
      %c160 = arith.constant 160 : index
      %c0_70 = arith.constant 0 : index
      %74 = vector.load %arg11[%c160, %c0_70] : memref<288x128xbf16, #tpu.memory_space<vmem>>, vector<128x128xbf16>
      %c2_71 = arith.constant 2 : index
      %c0_72 = arith.constant 0 : index
      %c0_73 = arith.constant 0 : index
      %75 = vector.load %arg3[%c2_71, %c0_72, %c0_73] : memref<3x128x128xbf16, #tpu.memory_space<vmem>>, vector<1x128x128xbf16>
      %76 = vector.shape_cast %75 : vector<1x128x128xbf16> to vector<128x128xbf16>
      %cst_74 = arith.constant dense<0.000000e+00> : vector<128x128xf32>
      %77 = tpu.matmul %74, %76, %cst_74 {dimension_numbers = #tpu.dot_dimension_numbers<[1], [0], [0], [1], [0, 0, 1, 1], [], []>} : vector<128x128xbf16>, vector<128x128xbf16>, vector<128x128xf32> -> vector<128x128xf32>
      %78 = arith.addf %73, %77 : vector<128x128xf32>
      %79 = vector.broadcast %28 : vector<1x128xf32> to vector<128x128xf32>
      %80 = arith.addf %78, %79 : vector<128x128xf32>
      %81 = arith.negf %80 : vector<128x128xf32>
      %82 = math.exp %81 : vector<128x128xf32>
      %cst_75 = arith.constant 1.000000e+00 : f32
      %83 = vector.broadcast %cst_75 : f32 to vector<128x128xf32>
      %84 = arith.addf %83, %82 : vector<128x128xf32>
      %85 = arith.divf %83, %84 : vector<128x128xf32>
      %86 = vector.extract_strided_slice %85 {offsets = [0, 0], sizes = [128, 32], strides = [1, 1]} : vector<128x128xf32> to vector<128x32xf32>
      %87 = vector.extract_strided_slice %85 {offsets = [0, 32], sizes = [128, 32], strides = [1, 1]} : vector<128x128xf32> to vector<128x32xf32>
      %88 = vector.extract_strided_slice %85 {offsets = [0, 96], sizes = [128, 32], strides = [1, 1]} : vector<128x128xf32> to vector<128x32xf32>
      %89 = vector.extract_strided_slice %80 {offsets = [0, 64], sizes = [128, 32], strides = [1, 1]} : vector<128x128xf32> to vector<128x32xf32>
      %90 = math.tanh %89 : vector<128x32xf32>
      %c128_76 = arith.constant 128 : index
      %c0_77 = arith.constant 0 : index
      %91 = vector.load %arg12[%c128_76, %c0_77] : memref<256x32xf32, #tpu.memory_space<vmem>>, vector<128x32xf32>
      %92 = arith.mulf %87, %91 : vector<128x32xf32>
      %93 = arith.mulf %86, %90 : vector<128x32xf32>
      %94 = arith.addf %92, %93 : vector<128x32xf32>
      %95 = math.tanh %94 : vector<128x32xf32>
      %96 = arith.mulf %88, %95 : vector<128x32xf32>
      %c128_78 = arith.constant 128 : index
      %c0_79 = arith.constant 0 : index
      %97 = vector.load %arg12[%c128_78, %c0_79] : memref<256x32xf32, #tpu.memory_space<vmem>>, vector<128x32xf32>
      tpu.vector_store %arg12[%c128_78, %c0_79], %94 {strides = array<i32>} : memref<256x32xf32, #tpu.memory_space<vmem>>, vector<128x32xf32>,
      %98 = arith.truncf %96 : vector<128x32xf32> to vector<128x32xbf16>
      %99 = vector.shape_cast %98 : vector<128x32xbf16> to vector<8x16x32xbf16>
      %c9_80 = arith.constant 9 : index
      %c8_81 = arith.constant 8 : index
      %c0_82 = arith.constant 0 : index
      %100 = vector.load %arg10[%c9_80, %c8_81, %c0_82] : memref<18x32x36xbf16, #tpu.memory_space<vmem>>, vector<8x16x32xbf16>
      tpu.vector_store %arg10[%c9_80, %c8_81, %c0_82], %99 {strides = array<i32>} : memref<18x32x36xbf16, #tpu.memory_space<vmem>>, vector<8x16x32xbf16>,
      %c1_83 = arith.constant 1 : index
      %c8_84 = arith.constant 8 : index
      %c0_85 = arith.constant 0 : index
      %101 = vector.load %arg10[%c1_83, %c8_84, %c0_85] : memref<18x32x36xbf16, #tpu.memory_space<vmem>>, vector<16x16x32xbf16>
      %c1_86 = arith.constant 1 : index
      %c8_87 = arith.constant 8 : index
      %c32_88 = arith.constant 32 : index
      %102 = vector.load %arg13[%c1_86, %c8_87, %c32_88] : memref<18x32x64xbf16, #tpu.memory_space<vmem>>, vector<16x16x32xbf16>
      tpu.vector_store %arg13[%c1_86, %c8_87, %c32_88], %101 {strides = array<i32>} : memref<18x32x64xbf16, #tpu.memory_space<vmem>>, vector<16x16x32xbf16>,
      %c0_89 = arith.constant 0 : index
      %c7_90 = arith.constant 7 : index
      %c0_91 = arith.constant 0 : index
      %103 = vector.load %arg13[%c0_89, %c7_90, %c0_91] : memref<18x32x64xbf16, #tpu.memory_space<vmem>>, vector<18x16x64xbf16>
      %104 = vector.shape_cast %103 : vector<18x16x64xbf16> to vector<288x64xbf16>
      %c0_92 = arith.constant 0 : index
      %c0_93 = arith.constant 0 : index
      %105 = vector.load %arg14[%c0_92, %c0_93] : memref<288x256xbf16, #tpu.memory_space<vmem>>, vector<288x64xbf16>
      tpu.vector_store %arg14[%c0_92, %c0_93], %104 {strides = array<i32>} : memref<288x256xbf16, #tpu.memory_space<vmem>>, vector<288x64xbf16>,
      %c0_94 = arith.constant 0 : index
      %c8_95 = arith.constant 8 : index
      %c0_96 = arith.constant 0 : index
      %106 = vector.load %arg13[%c0_94, %c8_95, %c0_96] : memref<18x32x64xbf16, #tpu.memory_space<vmem>>, vector<18x16x64xbf16>
      %107 = vector.shape_cast %106 : vector<18x16x64xbf16> to vector<288x64xbf16>
      %c0_97 = arith.constant 0 : index
      %c64 = arith.constant 64 : index
      %108 = vector.load %arg14[%c0_97, %c64] : memref<288x256xbf16, #tpu.memory_space<vmem>>, vector<288x64xbf16>
      tpu.vector_store %arg14[%c0_97, %c64], %107 {strides = array<i32>} : memref<288x256xbf16, #tpu.memory_space<vmem>>, vector<288x64xbf16>,
      %c0_98 = arith.constant 0 : index
      %c9_99 = arith.constant 9 : index
      %c0_100 = arith.constant 0 : index
      %109 = vector.load %arg13[%c0_98, %c9_99, %c0_100] : memref<18x32x64xbf16, #tpu.memory_space<vmem>>, vector<18x16x64xbf16>
      %110 = vector.shape_cast %109 : vector<18x16x64xbf16> to vector<288x64xbf16>
      %c0_101 = arith.constant 0 : index
      %c128_102 = arith.constant 128 : index
      %111 = vector.load %arg14[%c0_101, %c128_102] : memref<288x256xbf16, #tpu.memory_space<vmem>>, vector<288x64xbf16>
      tpu.vector_store %arg14[%c0_101, %c128_102], %110 {strides = array<i32>} : memref<288x256xbf16, #tpu.memory_space<vmem>>, vector<288x64xbf16>,
      %c0_103 = arith.constant 0 : index
      %c0_104 = arith.constant 0 : index
      %112 = vector.load %arg6[%c0_103, %c0_104] : memref<1x128xf32, #tpu.memory_space<vmem>>, vector<1x128xf32>
      %c0_105 = arith.constant 0 : index
      %c0_106 = arith.constant 0 : index
      %113 = vector.load %arg14[%c0_105, %c0_106] : memref<288x256xbf16, #tpu.memory_space<vmem>>, vector<128x256xbf16>
      %c0_107 = arith.constant 0 : index
      %c0_108 = arith.constant 0 : index
      %c0_109 = arith.constant 0 : index
      %114 = vector.load %arg5[%c0_107, %c0_108, %c0_109] : memref<3x256x128xbf16, #tpu.memory_space<vmem>>, vector<1x256x128xbf16>
      %115 = vector.shape_cast %114 : vector<1x256x128xbf16> to vector<256x128xbf16>
      %cst_110 = arith.constant dense<0.000000e+00> : vector<128x128xf32>
      %116 = tpu.matmul %113, %115, %cst_110 {dimension_numbers = #tpu.dot_dimension_numbers<[1], [0], [0], [1], [0, 0, 1, 1], [], []>} : vector<128x256xbf16>, vector<256x128xbf16>, vector<128x128xf32> -> vector<128x128xf32>
      %c16_111 = arith.constant 16 : index
      %c0_112 = arith.constant 0 : index
      %117 = vector.load %arg14[%c16_111, %c0_112] : memref<288x256xbf16, #tpu.memory_space<vmem>>, vector<128x256xbf16>
      %c1_113 = arith.constant 1 : index
      %c0_114 = arith.constant 0 : index
      %c0_115 = arith.constant 0 : index
      %118 = vector.load %arg5[%c1_113, %c0_114, %c0_115] : memref<3x256x128xbf16, #tpu.memory_space<vmem>>, vector<1x256x128xbf16>
      %119 = vector.shape_cast %118 : vector<1x256x128xbf16> to vector<256x128xbf16>
      %cst_116 = arith.constant dense<0.000000e+00> : vector<128x128xf32>
      %120 = tpu.matmul %117, %119, %cst_116 {dimension_numbers = #tpu.dot_dimension_numbers<[1], [0], [0], [1], [0, 0, 1, 1], [], []>} : vector<128x256xbf16>, vector<256x128xbf16>, vector<128x128xf32> -> vector<128x128xf32>
      %121 = arith.addf %116, %120 : vector<128x128xf32>
      %c32_117 = arith.constant 32 : index
      %c0_118 = arith.constant 0 : index
      %122 = vector.load %arg14[%c32_117, %c0_118] : memref<288x256xbf16, #tpu.memory_space<vmem>>, vector<128x256xbf16>
      %c2_119 = arith.constant 2 : index
      %c0_120 = arith.constant 0 : index
      %c0_121 = arith.constant 0 : index
      %123 = vector.load %arg5[%c2_119, %c0_120, %c0_121] : memref<3x256x128xbf16, #tpu.memory_space<vmem>>, vector<1x256x128xbf16>
      %124 = vector.shape_cast %123 : vector<1x256x128xbf16> to vector<256x128xbf16>
      %cst_122 = arith.constant dense<0.000000e+00> : vector<128x128xf32>
      %125 = tpu.matmul %122, %124, %cst_122 {dimension_numbers = #tpu.dot_dimension_numbers<[1], [0], [0], [1], [0, 0, 1, 1], [], []>} : vector<128x256xbf16>, vector<256x128xbf16>, vector<128x128xf32> -> vector<128x128xf32>
      %126 = arith.addf %121, %125 : vector<128x128xf32>
      %127 = vector.broadcast %112 : vector<1x128xf32> to vector<128x128xf32>
      %128 = arith.addf %126, %127 : vector<128x128xf32>
      %129 = arith.negf %128 : vector<128x128xf32>
      %130 = math.exp %129 : vector<128x128xf32>
      %cst_123 = arith.constant 1.000000e+00 : f32
      %131 = vector.broadcast %cst_123 : f32 to vector<128x128xf32>
      %132 = arith.addf %131, %130 : vector<128x128xf32>
      %133 = arith.divf %131, %132 : vector<128x128xf32>
      %134 = vector.extract_strided_slice %133 {offsets = [0, 0], sizes = [128, 32], strides = [1, 1]} : vector<128x128xf32> to vector<128x32xf32>
      %135 = vector.extract_strided_slice %133 {offsets = [0, 32], sizes = [128, 32], strides = [1, 1]} : vector<128x128xf32> to vector<128x32xf32>
      %136 = vector.extract_strided_slice %133 {offsets = [0, 96], sizes = [128, 32], strides = [1, 1]} : vector<128x128xf32> to vector<128x32xf32>
      %137 = vector.extract_strided_slice %128 {offsets = [0, 64], sizes = [128, 32], strides = [1, 1]} : vector<128x128xf32> to vector<128x32xf32>
      %138 = math.tanh %137 : vector<128x32xf32>
      %c0_124 = arith.constant 0 : index
      %c0_125 = arith.constant 0 : index
      %139 = vector.load %arg15[%c0_124, %c0_125] : memref<256x32xf32, #tpu.memory_space<vmem>>, vector<128x32xf32>
      %140 = arith.mulf %135, %139 : vector<128x32xf32>
      %141 = arith.mulf %134, %138 : vector<128x32xf32>
      %142 = arith.addf %140, %141 : vector<128x32xf32>
      %143 = math.tanh %142 : vector<128x32xf32>
      %144 = arith.mulf %136, %143 : vector<128x32xf32>
      %c0_126 = arith.constant 0 : index
      %c0_127 = arith.constant 0 : index
      %145 = vector.load %arg15[%c0_126, %c0_127] : memref<256x32xf32, #tpu.memory_space<vmem>>, vector<128x32xf32>
      tpu.vector_store %arg15[%c0_126, %c0_127], %142 {strides = array<i32>} : memref<256x32xf32, #tpu.memory_space<vmem>>, vector<128x32xf32>,
      %146 = arith.truncf %144 : vector<128x32xf32> to vector<128x32xbf16>
      %147 = vector.shape_cast %146 : vector<128x32xbf16> to vector<8x16x32xbf16>
      %c1_128 = arith.constant 1 : index
      %c8_129 = arith.constant 8 : index
      %c0_130 = arith.constant 0 : index
      %148 = vector.load %arg13[%c1_128, %c8_129, %c0_130] : memref<18x32x64xbf16, #tpu.memory_space<vmem>>, vector<8x16x32xbf16>
      tpu.vector_store %arg13[%c1_128, %c8_129, %c0_130], %147 {strides = array<i32>} : memref<18x32x64xbf16, #tpu.memory_space<vmem>>, vector<8x16x32xbf16>,
      %c0_i32_131 = arith.constant 0 : i32
      %149 = arith.cmpi sge, %18, %c0_i32_131 : i32
      %150 = arith.extui %149 : i1 to i32
      %c0_i32_132 = arith.constant 0 : i32
      %151 = arith.cmpi ne, %150, %c0_i32_132 : i32
      scf.if %151 {
        %197 = vector.shape_cast %144 : vector<128x32xf32> to vector<1x128x32xf32>
        %198 = arith.index_cast %18 : i32 to index
        %c0_165 = arith.constant 0 : index
        %c0_166 = arith.constant 0 : index
        %199 = vector.load %arg7[%198, %c0_165, %c0_166] : memref<1x256x32xf32, #tpu.memory_space<vmem>>, vector<1x128x32xf32>
        tpu.vector_store %arg7[%198, %c0_165, %c0_166], %197 {strides = array<i32>} : memref<1x256x32xf32, #tpu.memory_space<vmem>>, vector<1x128x32xf32>,
      } else {
      }
      %c1_i32_133 = arith.constant 1 : i32
      %152 = arith.cmpi eq, %arg16, %c1_i32_133 : i32
      %153 = arith.extui %152 : i1 to i32
      %c0_i32_134 = arith.constant 0 : i32
      %154 = arith.cmpi ne, %153, %c0_i32_134 : i32
      scf.if %154 {
        %c0_165 = arith.constant 0 : index
        %c0_166 = arith.constant 0 : index
        %c0_167 = arith.constant 0 : index
        %197 = vector.load %arg8[%c0_165, %c0_166, %c0_167] : memref<1x256x32xf32, #tpu.memory_space<vmem>>, vector<1x128x32xf32>
        %198 = vector.shape_cast %197 : vector<1x128x32xf32> to vector<128x32xf32>
        %199 = vector.shape_cast %144 : vector<128x32xf32> to vector<1x128x32xf32>
        tpu.vector_store %arg8[%c0_165, %c0_166, %c0_167], %199 {strides = array<i32>} : memref<1x256x32xf32, #tpu.memory_space<vmem>>, vector<1x128x32xf32>,
        %c0_168 = arith.constant 0 : index
        %c0_169 = arith.constant 0 : index
        %c0_170 = arith.constant 0 : index
        %200 = vector.load %arg9[%c0_168, %c0_169, %c0_170] : memref<1x256x32xf32, #tpu.memory_space<vmem>>, vector<1x128x32xf32>
        %201 = vector.shape_cast %200 : vector<1x128x32xf32> to vector<128x32xf32>
        %202 = vector.shape_cast %142 : vector<128x32xf32> to vector<1x128x32xf32>
        tpu.vector_store %arg9[%c0_168, %c0_169, %c0_170], %202 {strides = array<i32>} : memref<1x256x32xf32, #tpu.memory_space<vmem>>, vector<1x128x32xf32>,
      } else {
      }
      %c128_135 = arith.constant 128 : index
      %c0_136 = arith.constant 0 : index
      %155 = vector.load %arg14[%c128_135, %c0_136] : memref<288x256xbf16, #tpu.memory_space<vmem>>, vector<128x256xbf16>
      %c0_137 = arith.constant 0 : index
      %c0_138 = arith.constant 0 : index
      %c0_139 = arith.constant 0 : index
      %156 = vector.load %arg5[%c0_137, %c0_138, %c0_139] : memref<3x256x128xbf16, #tpu.memory_space<vmem>>, vector<1x256x128xbf16>
      %157 = vector.shape_cast %156 : vector<1x256x128xbf16> to vector<256x128xbf16>
      %cst_140 = arith.constant dense<0.000000e+00> : vector<128x128xf32>
      %158 = tpu.matmul %155, %157, %cst_140 {dimension_numbers = #tpu.dot_dimension_numbers<[1], [0], [0], [1], [0, 0, 1, 1], [], []>} : vector<128x256xbf16>, vector<256x128xbf16>, vector<128x128xf32> -> vector<128x128xf32>
      %c144_141 = arith.constant 144 : index
      %c0_142 = arith.constant 0 : index
      %159 = vector.load %arg14[%c144_141, %c0_142] : memref<288x256xbf16, #tpu.memory_space<vmem>>, vector<128x256xbf16>
      %c1_143 = arith.constant 1 : index
      %c0_144 = arith.constant 0 : index
      %c0_145 = arith.constant 0 : index
      %160 = vector.load %arg5[%c1_143, %c0_144, %c0_145] : memref<3x256x128xbf16, #tpu.memory_space<vmem>>, vector<1x256x128xbf16>
      %161 = vector.shape_cast %160 : vector<1x256x128xbf16> to vector<256x128xbf16>
      %cst_146 = arith.constant dense<0.000000e+00> : vector<128x128xf32>
      %162 = tpu.matmul %159, %161, %cst_146 {dimension_numbers = #tpu.dot_dimension_numbers<[1], [0], [0], [1], [0, 0, 1, 1], [], []>} : vector<128x256xbf16>, vector<256x128xbf16>, vector<128x128xf32> -> vector<128x128xf32>
      %163 = arith.addf %158, %162 : vector<128x128xf32>
      %c160_147 = arith.constant 160 : index
      %c0_148 = arith.constant 0 : index
      %164 = vector.load %arg14[%c160_147, %c0_148] : memref<288x256xbf16, #tpu.memory_space<vmem>>, vector<128x256xbf16>
      %c2_149 = arith.constant 2 : index
      %c0_150 = arith.constant 0 : index
      %c0_151 = arith.constant 0 : index
      %165 = vector.load %arg5[%c2_149, %c0_150, %c0_151] : memref<3x256x128xbf16, #tpu.memory_space<vmem>>, vector<1x256x128xbf16>
      %166 = vector.shape_cast %165 : vector<1x256x128xbf16> to vector<256x128xbf16>
      %cst_152 = arith.constant dense<0.000000e+00> : vector<128x128xf32>
      %167 = tpu.matmul %164, %166, %cst_152 {dimension_numbers = #tpu.dot_dimension_numbers<[1], [0], [0], [1], [0, 0, 1, 1], [], []>} : vector<128x256xbf16>, vector<256x128xbf16>, vector<128x128xf32> -> vector<128x128xf32>
      %168 = arith.addf %163, %167 : vector<128x128xf32>
      %169 = vector.broadcast %112 : vector<1x128xf32> to vector<128x128xf32>
      %170 = arith.addf %168, %169 : vector<128x128xf32>
      %171 = arith.negf %170 : vector<128x128xf32>
      %172 = math.exp %171 : vector<128x128xf32>
      %cst_153 = arith.constant 1.000000e+00 : f32
      %173 = vector.broadcast %cst_153 : f32 to vector<128x128xf32>
      %174 = arith.addf %173, %172 : vector<128x128xf32>
      %175 = arith.divf %173, %174 : vector<128x128xf32>
      %176 = vector.extract_strided_slice %175 {offsets = [0, 0], sizes = [128, 32], strides = [1, 1]} : vector<128x128xf32> to vector<128x32xf32>
      %177 = vector.extract_strided_slice %175 {offsets = [0, 32], sizes = [128, 32], strides = [1, 1]} : vector<128x128xf32> to vector<128x32xf32>
      %178 = vector.extract_strided_slice %175 {offsets = [0, 96], sizes = [128, 32], strides = [1, 1]} : vector<128x128xf32> to vector<128x32xf32>
      %179 = vector.extract_strided_slice %170 {offsets = [0, 64], sizes = [128, 32], strides = [1, 1]} : vector<128x128xf32> to vector<128x32xf32>
      %180 = math.tanh %179 : vector<128x32xf32>
      %c128_154 = arith.constant 128 : index
      %c0_155 = arith.constant 0 : index
      %181 = vector.load %arg15[%c128_154, %c0_155] : memref<256x32xf32, #tpu.memory_space<vmem>>, vector<128x32xf32>
      %182 = arith.mulf %177, %181 : vector<128x32xf32>
      %183 = arith.mulf %176, %180 : vector<128x32xf32>
      %184 = arith.addf %182, %183 : vector<128x32xf32>
      %185 = math.tanh %184 : vector<128x32xf32>
      %186 = arith.mulf %178, %185 : vector<128x32xf32>
      %c128_156 = arith.constant 128 : index
      %c0_157 = arith.constant 0 : index
      %187 = vector.load %arg15[%c128_156, %c0_157] : memref<256x32xf32, #tpu.memory_space<vmem>>, vector<128x32xf32>
      tpu.vector_store %arg15[%c128_156, %c0_157], %184 {strides = array<i32>} : memref<256x32xf32, #tpu.memory_space<vmem>>, vector<128x32xf32>,
      %188 = arith.truncf %186 : vector<128x32xf32> to vector<128x32xbf16>
      %189 = vector.shape_cast %188 : vector<128x32xbf16> to vector<8x16x32xbf16>
      %c9_158 = arith.constant 9 : index
      %c8_159 = arith.constant 8 : index
      %c0_160 = arith.constant 0 : index
      %190 = vector.load %arg13[%c9_158, %c8_159, %c0_160] : memref<18x32x64xbf16, #tpu.memory_space<vmem>>, vector<8x16x32xbf16>
      tpu.vector_store %arg13[%c9_158, %c8_159, %c0_160], %189 {strides = array<i32>} : memref<18x32x64xbf16, #tpu.memory_space<vmem>>, vector<8x16x32xbf16>,
      %c0_i32_161 = arith.constant 0 : i32
      %191 = arith.cmpi sge, %18, %c0_i32_161 : i32
      %192 = arith.extui %191 : i1 to i32
      %c0_i32_162 = arith.constant 0 : i32
      %193 = arith.cmpi ne, %192, %c0_i32_162 : i32
      scf.if %193 {
        %197 = vector.shape_cast %186 : vector<128x32xf32> to vector<1x128x32xf32>
        %198 = arith.index_cast %18 : i32 to index
        %c128_165 = arith.constant 128 : index
        %c0_166 = arith.constant 0 : index
        %199 = vector.load %arg7[%198, %c128_165, %c0_166] : memref<1x256x32xf32, #tpu.memory_space<vmem>>, vector<1x128x32xf32>
        tpu.vector_store %arg7[%198, %c128_165, %c0_166], %197 {strides = array<i32>} : memref<1x256x32xf32, #tpu.memory_space<vmem>>, vector<1x128x32xf32>,
      } else {
      }
      %c1_i32_163 = arith.constant 1 : i32
      %194 = arith.cmpi eq, %arg16, %c1_i32_163 : i32
      %195 = arith.extui %194 : i1 to i32
      %c0_i32_164 = arith.constant 0 : i32
      %196 = arith.cmpi ne, %195, %c0_i32_164 : i32
      scf.if %196 {
        %c0_165 = arith.constant 0 : index
        %c128_166 = arith.constant 128 : index
        %c0_167 = arith.constant 0 : index
        %197 = vector.load %arg8[%c0_165, %c128_166, %c0_167] : memref<1x256x32xf32, #tpu.memory_space<vmem>>, vector<1x128x32xf32>
        %198 = vector.shape_cast %197 : vector<1x128x32xf32> to vector<128x32xf32>
        %199 = vector.shape_cast %186 : vector<128x32xf32> to vector<1x128x32xf32>
        tpu.vector_store %arg8[%c0_165, %c128_166, %c0_167], %199 {strides = array<i32>} : memref<1x256x32xf32, #tpu.memory_space<vmem>>, vector<1x128x32xf32>,
        %c0_168 = arith.constant 0 : index
        %c128_169 = arith.constant 128 : index
        %c0_170 = arith.constant 0 : index
        %200 = vector.load %arg9[%c0_168, %c128_169, %c0_170] : memref<1x256x32xf32, #tpu.memory_space<vmem>>, vector<1x128x32xf32>
        %201 = vector.shape_cast %200 : vector<1x128x32xf32> to vector<128x32xf32>
        %202 = vector.shape_cast %184 : vector<128x32xf32> to vector<1x128x32xf32>
        tpu.vector_store %arg9[%c0_168, %c128_169, %c0_170], %202 {strides = array<i32>} : memref<1x256x32xf32, #tpu.memory_space<vmem>>, vector<1x128x32xf32>,
      } else {
      }
    }
    %c2_i32_24 = arith.constant 2 : i32
    return
  }
  func.func @transform_0(%arg0: i32, %arg1: memref<2xi32, #tpu.memory_space<smem>>) -> (i32, i32, i32, i32) {
    %c0_i32 = arith.constant 0 : i32
    %c0_i32_0 = arith.constant 0 : i32
    %c0_i32_1 = arith.constant 0 : i32
    %c0_i32_2 = arith.constant 0 : i32
    return %arg0, %c0_i32, %c0_i32_0, %c0_i32_1 : i32, i32, i32, i32
  }
  func.func @transform_1(%arg0: i32, %arg1: memref<2xi32, #tpu.memory_space<smem>>) -> (i32, i32, i32) {
    %c0_i32 = arith.constant 0 : i32
    %c0_i32_0 = arith.constant 0 : i32
    %c0_i32_1 = arith.constant 0 : i32
    %c0_i32_2 = arith.constant 0 : i32
    return %c0_i32, %c0_i32_0, %c0_i32_1 : i32, i32, i32
  }
  func.func @transform_2(%arg0: i32, %arg1: memref<2xi32, #tpu.memory_space<smem>>) -> (i32, i32) {
    %c0_i32 = arith.constant 0 : i32
    %c0_i32_0 = arith.constant 0 : i32
    %c0_i32_1 = arith.constant 0 : i32
    return %c0_i32, %c0_i32_0 : i32, i32
  }
  func.func @transform_3(%arg0: i32, %arg1: memref<2xi32, #tpu.memory_space<smem>>) -> (i32, i32, i32) {
    %c0_i32 = arith.constant 0 : i32
    %c0_i32_0 = arith.constant 0 : i32
    %c0_i32_1 = arith.constant 0 : i32
    %c0_i32_2 = arith.constant 0 : i32
    return %c0_i32, %c0_i32_0, %c0_i32_1 : i32, i32, i32
  }
  func.func @transform_4(%arg0: i32, %arg1: memref<2xi32, #tpu.memory_space<smem>>) -> (i32, i32) {
    %c0_i32 = arith.constant 0 : i32
    %c0_i32_0 = arith.constant 0 : i32
    %c0_i32_1 = arith.constant 0 : i32
    return %c0_i32, %c0_i32_0 : i32, i32
  }
  func.func @transform_5(%arg0: i32, %arg1: memref<2xi32, #tpu.memory_space<smem>>) -> (i32, i32, i32) {
    %c0_i32 = arith.constant 0 : i32
    %c0_i32_0 = arith.constant 0 : i32
    %c0_i32_1 = arith.constant 0 : i32
    return %arg0, %c0_i32, %c0_i32_0 : i32, i32, i32
  }
  func.func @transform_6(%arg0: i32, %arg1: memref<2xi32, #tpu.memory_space<smem>>) -> (i32, i32, i32) {
    %c0_i32 = arith.constant 0 : i32
    %c0_i32_0 = arith.constant 0 : i32
    %c0_i32_1 = arith.constant 0 : i32
    return %arg0, %c0_i32, %c0_i32_0 : i32, i32, i32
  }
  func.func @transform_7(%arg0: i32, %arg1: memref<2xi32, #tpu.memory_space<smem>>) -> (i32, i32, i32) {
    %c0_i32 = arith.constant 0 : i32
    %c0_i32_0 = arith.constant 0 : i32
    %c0_i32_1 = arith.constant 0 : i32
    return %arg0, %c0_i32, %c0_i32_0 : i32, i32, i32
  }
}

</mosaic_0001>

<llo_original>
// kernel: tpu_custom_call.1
$region0: #{tpu_custom_call.1}
  #allocation0 [shape = 'u32[]', space=smem, size = 0x4, offset = 0x4, fixed_abs, tag = 'smem constant byte address 0x4 - core index']
  #allocation1 [shape = 'u32[72,128]{1,0:T(1,128)}', space=vmem, size = 0x9000, scoped, tag = 'internal scratch']
  #allocation2 [shape = 'bf16[18,32,36]{2,1,0:T(8,128)(2,1)}', space=vmem, size = 0x24000, scoped, tag = 'scratch operand']
  #allocation3 [shape = 'bf16[288,128]{1,0:T(8,128)(2,1)}', space=vmem, size = 0x12000, scoped, tag = 'scratch operand']
  #allocation4 [shape = 'f32[256,32]{1,0:T(8,128)}', space=vmem, size = 0x20000, scoped, tag = 'scratch operand']
  #allocation5 [shape = 'bf16[18,32,64]{2,1,0:T(8,128)(2,1)}', space=vmem, size = 0x24000, scoped, tag = 'scratch operand']
  #allocation6 [shape = 'bf16[288,256]{1,0:T(8,128)(2,1)}', space=vmem, size = 0x24000, scoped, tag = 'scratch operand']
  #allocation7 [shape = 'f32[256,32]{1,0:T(8,128)}', space=vmem, size = 0x20000, scoped, tag = 'scratch operand']
  #allocation8 [shape = 's32[1]{0}', space=sflag, size = 0x4, scoped, tag = 'scoped memory for tpu_custom_call.1']
  #allocation9 [shape = 'u8[512]{0}', space=smem, size = 0x200, scoped, tag = 'prefetched SMEM operand 0']
  %s0 = inlined_call_operand.vmem [shape: s32[2], index: 0, kind: input, shape index: {}]
  %s1 = inlined_call_operand.vmem [shape: f32[2,18,32,4], index: 1, kind: input, shape index: {}]
  %s2 = inlined_call_operand.vmem [shape: bf16[3,128,128], index: 2, kind: input, shape index: {}]
  %s3 = inlined_call_operand.vmem [shape: f32[1,128], index: 3, kind: input, shape index: {}]
  %s4 = inlined_call_operand.vmem [shape: bf16[3,256,128], index: 4, kind: input, shape index: {}]
  %s5 = inlined_call_operand.vmem [shape: f32[1,128], index: 5, kind: input, shape index: {}]
  %s6 = inlined_call_operand.vmem [shape: f32[2,256,32], index: 6, kind: output, shape index: {0}]
  %s7 = inlined_call_operand.vmem [shape: f32[2,256,32], index: 7, kind: output, shape index: {1}]
  %s8 = inlined_call_operand.vmem [shape: f32[2,256,32], index: 8, kind: output, shape index: {2}]
  %9 = xla_tuple %s6, %s7, %s8
  %s10 = sld [smem:[#allocation0]]
  $region92: #{tpu_custom_call.1} parent=0
    _
  %s12 = ssub.s32 1, %s10
  %s13 = scalar_select 0, %s12, %s10
  %s15 = sshll.u32 %s0, 4
  %s16 = int_to_ptr.vmem [resolvable:$true] %s15
  %18 = dma.vmem_to_smem %s16, 16, [#allocation9], [#allocation8]
  %20 = dma.done [#allocation8], 16
  %21 = sfence
  loop: start=0, step=1, limit=4
  $region2: #{tpu_custom_call.1} parent=0 // loop_pre_header
    _
  $region3: #{tpu_custom_call.1} parent=0 // loop_header
    %s23 = sphi 0, %s27
    %p24 = scmp.ge.s32.totalorder %s23, 4
    %s33 = sphi 0, %s35
    %s36 = sphi 0, %s33
    %s37 = sphi 0, %s36
    %s53 = sphi 0, %s37
    %s57 = sphi 0, %s57
    %s59 = sphi 0, %s57
    %s60 = sphi 0, %s59
    %s74 = sphi 0, %s60
    %s78 = sphi 0, %s78
    %s80 = sphi 0, %s78
    %s81 = sphi 0, %s80
    %s95 = sphi 0, %s81
    %s99 = sphi 0, %s99
    %s101 = sphi 0, %s99
    %s102 = sphi 0, %s101
    %s116 = sphi 0, %s102
    %s120 = sphi 0, %s120
    %s122 = sphi 0, %s120
    %s123 = sphi 0, %s122
    %s137 = sphi 0, %s123
    %s143 = sphi 0, %s145
    %s146 = sphi 0, %s143
    %s147 = sphi 0, %s146
    %s163 = sphi 0, %s147
    %s169 = sphi 0, %s171
    %s172 = sphi 0, %s169
    %s173 = sphi 0, %s172
    %s189 = sphi 0, %s173
    %s195 = sphi 0, %s197
    %s198 = sphi 0, %s195
    %s199 = sphi 0, %s198
    %s215 = sphi 0, %s199
  $region4: #{tpu_custom_call.1} parent=0 // loop_header_branch
    %26 = sbr.rel (%p24) target = $region8
  $region5: #{tpu_custom_call.1} parent=0 // loop_body
    %s28 = ssub.s32 %s23, 1
    %s29 = ssub.s32 %s23, 2
    %s30 = sadd.s32 %s23, 1
    %s31 = ssub.s32 %s23, %s30
    %p32 = scmp.eq.s32.totalorder %s31, 0
    %s34 = sadd.s32 %s33, 1
    %s35 = scalar_select %p32, %s33, %s34
    %p38 = pneg %p32
    %p39 = scmp.eq.s32.totalorder %s23, 1
    %p40 = por %p38, %p39
    %p41 = scmp.ne.s32.totalorder %s33, %s36
    %p42 = scmp.eq.s32.totalorder %s23, 0
    %p43 = por %p41, %p42
    %p44 = scmp.ne.s32.totalorder %s33, %s36
    %p45 = scmp.eq.s32.totalorder %s28, 1
    %p46 = por %p44, %p45
    %p47 = scmp.ne.s32.totalorder %s36, %s37
    %p48 = scmp.eq.s32.totalorder %s28, 0
    %p49 = por %p47, %p48
    %p50 = scmp.ne.s32.totalorder %s36, %s37
    %p51 = scmp.eq.s32.totalorder %s29, 1
    %p52 = por %p50, %p51
    %p54 = scmp.ne.s32.totalorder %s37, %s53
    %p55 = scmp.eq.s32.totalorder %s29, 0
    %p56 = por %p54, %p55
    %s58 = sadd.s32 %s57, 1
    %p61 = scmp.eq.s32.totalorder %s23, 1
    %p62 = scmp.ne.s32.totalorder %s57, %s59
    %p63 = scmp.eq.s32.totalorder %s23, 0
    %p64 = por %p62, %p63
    %p65 = scmp.ne.s32.totalorder %s57, %s59
    %p66 = scmp.eq.s32.totalorder %s28, 1
    %p67 = por %p65, %p66
    %p68 = scmp.ne.s32.totalorder %s59, %s60
    %p69 = scmp.eq.s32.totalorder %s28, 0
    %p70 = por %p68, %p69
    %p71 = scmp.ne.s32.totalorder %s59, %s60
    %p72 = scmp.eq.s32.totalorder %s29, 1
    %p73 = por %p71, %p72
    %p75 = scmp.ne.s32.totalorder %s60, %s74
    %p76 = scmp.eq.s32.totalorder %s29, 0
    %p77 = por %p75, %p76
    %s79 = sadd.s32 %s78, 1
    %p82 = scmp.eq.s32.totalorder %s23, 1
    %p83 = scmp.ne.s32.totalorder %s78, %s80
    %p84 = scmp.eq.s32.totalorder %s23, 0
    %p85 = por %p83, %p84
    %p86 = scmp.ne.s32.totalorder %s78, %s80
    %p87 = scmp.eq.s32.totalorder %s28, 1
    %p88 = por %p86, %p87
    %p89 = scmp.ne.s32.totalorder %s80, %s81
    %p90 = scmp.eq.s32.totalorder %s28, 0
    %p91 = por %p89, %p90
    %p92 = scmp.ne.s32.totalorder %s80, %s81
    %p93 = scmp.eq.s32.totalorder %s29, 1
    %p94 = por %p92, %p93
    %p96 = scmp.ne.s32.totalorder %s81, %s95
    %p97 = scmp.eq.s32.totalorder %s29, 0
    %p98 = por %p96, %p97
    %s100 = sadd.s32 %s99, 1
    %p103 = scmp.eq.s32.totalorder %s23, 1
    %p104 = scmp.ne.s32.totalorder %s99, %s101
    %p105 = scmp.eq.s32.totalorder %s23, 0
    %p106 = por %p104, %p105
    %p107 = scmp.ne.s32.totalorder %s99, %s101
    %p108 = scmp.eq.s32.totalorder %s28, 1
    %p109 = por %p107, %p108
    %p110 = scmp.ne.s32.totalorder %s101, %s102
    %p111 = scmp.eq.s32.totalorder %s28, 0
    %p112 = por %p110, %p111
    %p113 = scmp.ne.s32.totalorder %s101, %s102
    %p114 = scmp.eq.s32.totalorder %s29, 1
    %p115 = por %p113, %p114
    %p117 = scmp.ne.s32.totalorder %s102, %s116
    %p118 = scmp.eq.s32.totalorder %s29, 0
    %p119 = por %p117, %p118
    %s121 = sadd.s32 %s120, 1
    %p124 = scmp.eq.s32.totalorder %s23, 1
    %p125 = scmp.ne.s32.totalorder %s120, %s122
    %p126 = scmp.eq.s32.totalorder %s23, 0
    %p127 = por %p125, %p126
    %p128 = scmp.ne.s32.totalorder %s120, %s122
    %p129 = scmp.eq.s32.totalorder %s28, 1
    %p130 = por %p128, %p129
    %p131 = scmp.ne.s32.totalorder %s122, %s123
    %p132 = scmp.eq.s32.totalorder %s28, 0
    %p133 = por %p131, %p132
    %p134 = scmp.ne.s32.totalorder %s122, %s123
    %p135 = scmp.eq.s32.totalorder %s29, 1
    %p136 = por %p134, %p135
    %p138 = scmp.ne.s32.totalorder %s123, %s137
    %p139 = scmp.eq.s32.totalorder %s29, 0
    %p140 = por %p138, %p139
    %s141 = ssub.s32 %s23, %s30
    %p142 = scmp.eq.s32.totalorder %s141, 0
    %s144 = sadd.s32 %s143, 1
    %s145 = scalar_select %p142, %s143, %s144
    %p148 = pneg %p142
    %p149 = scmp.eq.s32.totalorder %s23, 1
    %p150 = por %p148, %p149
    %p151 = scmp.ne.s32.totalorder %s143, %s146
    %p152 = scmp.eq.s32.totalorder %s23, 0
    %p153 = por %p151, %p152
    %p154 = scmp.ne.s32.totalorder %s143, %s146
    %p155 = scmp.eq.s32.totalorder %s28, 1
    %p156 = por %p154, %p155
    %p157 = scmp.ne.s32.totalorder %s146, %s147
    %p158 = scmp.eq.s32.totalorder %s28, 0
    %p159 = por %p157, %p158
    %p160 = scmp.ne.s32.totalorder %s146, %s147
    %p161 = scmp.eq.s32.totalorder %s29, 1
    %p162 = por %p160, %p161
    %p164 = scmp.ne.s32.totalorder %s147, %s163
    %p165 = scmp.eq.s32.totalorder %s29, 0
    %p166 = por %p164, %p165
    %s167 = ssub.s32 %s23, %s30
    %p168 = scmp.eq.s32.totalorder %s167, 0
    %s170 = sadd.s32 %s169, 1
    %s171 = scalar_select %p168, %s169, %s170
    %p174 = pneg %p168
    %p175 = scmp.eq.s32.totalorder %s23, 1
    %p176 = por %p174, %p175
    %p177 = scmp.ne.s32.totalorder %s169, %s172
    %p178 = scmp.eq.s32.totalorder %s23, 0
    %p179 = por %p177, %p178
    %p180 = scmp.ne.s32.totalorder %s169, %s172
    %p181 = scmp.eq.s32.totalorder %s28, 1
    %p182 = por %p180, %p181
    %p183 = scmp.ne.s32.totalorder %s172, %s173
    %p184 = scmp.eq.s32.totalorder %s28, 0
    %p185 = por %p183, %p184
    %p186 = scmp.ne.s32.totalorder %s172, %s173
    %p187 = scmp.eq.s32.totalorder %s29, 1
    %p188 = por %p186, %p187
    %p190 = scmp.ne.s32.totalorder %s173, %s189
    %p191 = scmp.eq.s32.totalorder %s29, 0
    %p192 = por %p190, %p191
    %s193 = ssub.s32 %s23, %s30
    %p194 = scmp.eq.s32.totalorder %s193, 0
    %s196 = sadd.s32 %s195, 1
    %s197 = scalar_select %p194, %s195, %s196
    %p200 = pneg %p194
    %p201 = scmp.eq.s32.totalorder %s23, 1
    %p202 = por %p200, %p201
    %p203 = scmp.ne.s32.totalorder %s195, %s198
    %p204 = scmp.eq.s32.totalorder %s23, 0
    %p205 = por %p203, %p204
    %p206 = scmp.ne.s32.totalorder %s195, %s198
    %p207 = scmp.eq.s32.totalorder %s28, 1
    %p208 = por %p206, %p207
    %p209 = scmp.ne.s32.totalorder %s198, %s199
    %p210 = scmp.eq.s32.totalorder %s28, 0
    %p211 = por %p209, %p210
    %p212 = scmp.ne.s32.totalorder %s198, %s199
    %p213 = scmp.eq.s32.totalorder %s29, 1
    %p214 = por %p212, %p213
    %p216 = scmp.ne.s32.totalorder %s199, %s215
    %p217 = scmp.eq.s32.totalorder %s29, 0
    %p218 = por %p216, %p217
    %p219 = scmp.le.s32.totalorder 1, %s23
    %p220 = scmp.lt.s32.totalorder %s23, 3
    %p221 = pnand %p219, %p220
    %p222 = pneg %p221
    // Predicated region
    $region9: #{tpu_custom_call.1} parent=5 // pred_check
      _
    $region10: #{tpu_custom_call.1} parent=5 // pred_check_branch
      %224 = sbr.rel (%p221) target = $region12
    $region11: #{tpu_custom_call.1} parent=5 // pred_region
      %s225 = ssub.s32 %s23, 1
      // Predicated region
      $region13: #{tpu_custom_call.1} parent=11 // pred_check
        %p226 = pneg %p70
      $region14: #{tpu_custom_call.1} parent=11 // pred_check_branch
        %228 = sbr.rel (%p226) target = $region16
      $region15: #{tpu_custom_call.1} parent=11 // pred_region
        _
      $region16: #{tpu_custom_call.1} parent=11 // pred_fallthru
        _
      // Predicated region
      $region17: #{tpu_custom_call.1} parent=11 // pred_check
        %p229 = pneg %p91
      $region18: #{tpu_custom_call.1} parent=11 // pred_check_branch
        %231 = sbr.rel (%p229) target = $region20
      $region19: #{tpu_custom_call.1} parent=11 // pred_region
        _
      $region20: #{tpu_custom_call.1} parent=11 // pred_fallthru
        _
      // Predicated region
      $region21: #{tpu_custom_call.1} parent=11 // pred_check
        %p232 = pneg %p112
      $region22: #{tpu_custom_call.1} parent=11 // pred_check_branch
        %234 = sbr.rel (%p232) target = $region24
      $region23: #{tpu_custom_call.1} parent=11 // pred_region
        _
      $region24: #{tpu_custom_call.1} parent=11 // pred_fallthru
        _
      // Predicated region
      $region25: #{tpu_custom_call.1} parent=11 // pred_check
        %p235 = pneg %p133
      $region26: #{tpu_custom_call.1} parent=11 // pred_check_branch
        %237 = sbr.rel (%p235) target = $region28
      $region27: #{tpu_custom_call.1} parent=11 // pred_region
        _
      $region28: #{tpu_custom_call.1} parent=11 // pred_fallthru
        _
    $region12: #{tpu_custom_call.1} parent=5 // pred_fallthru
      _
    %p238 = scmp.lt.s32.totalorder %s23, 2
    // Predicated region
    $region29: #{tpu_custom_call.1} parent=5 // pred_check
      %p239 = pneg %p238
    $region30: #{tpu_custom_call.1} parent=5 // pred_check_branch
      %241 = sbr.rel (%p239) target = $region32
    $region31: #{tpu_custom_call.1} parent=5 // pred_region
      // Predicated region
      $region33: #{tpu_custom_call.1} parent=31 // pred_check
        %p242 = pneg %p43
      $region34: #{tpu_custom_call.1} parent=31 // pred_check_branch
        %244 = sbr.rel (%p242) target = $region36
      $region35: #{tpu_custom_call.1} parent=31 // pred_region
        %p245 = scmp.lt.s32.totalorder %s23, 1
        %s246 = scalar_select %p245, %s23, 1
        %s247 = smul.addr %s246, 72
        %s248 = smul.addr %s247, 8
        %s249 = scalar_lea.vmem %s1, %s248
      $region36: #{tpu_custom_call.1} parent=31 // pred_fallthru
        _
    $region32: #{tpu_custom_call.1} parent=5 // pred_fallthru
      _
    %p250 = scmp.le.s32.totalorder 1, %s23
    %p251 = scmp.lt.s32.totalorder %s23, 3
    %p252 = pnand %p250, %p251
    %p253 = pneg %p252
    // Predicated region
    $region37: #{tpu_custom_call.1} parent=5 // pred_check
      _
    $region38: #{tpu_custom_call.1} parent=5 // pred_check_branch
      %255 = sbr.rel (%p252) target = $region40
    $region39: #{tpu_custom_call.1} parent=5 // pred_region
      %s256 = ssub.s32 %s23, 1
      %p257 = scmp.lt.s32.totalorder %s28, 1
      %s258 = scalar_select %p257, %s28, 1
      %s259 = smul.addr %s258, 72
      %s260 = smul.addr %s259, 8
      %s261 = scalar_lea.vmem %s1, %s260
      %p262 = pneg %p49
      %p263 = pneg %p46
      %p264 = pneg %p70
      %p265 = pneg %p67
      %p266 = pneg %p91
      %p267 = pneg %p88
      %p268 = pneg %p112
      %p269 = pneg %p109
      %p270 = pneg %p133
      %p271 = pneg %p130
      %p272 = pneg %p159
      %p273 = pneg %p156
      %p274 = scmp.lt.s32.totalorder %s28, 1
      %s275 = scalar_select %p274, %s28, 1
      %s276 = smul.addr %s275, 32
      %s277 = smul.addr %s276, 8
      %s278 = scalar_lea.vmem %s6, %s277
      %p279 = pneg %p185
      %p280 = pneg %p182
      %p281 = scmp.lt.s32.totalorder %s28, 1
      %s282 = scalar_select %p281, %s28, 1
      %s283 = smul.addr %s282, 32
      %s284 = smul.addr %s283, 8
      %s285 = scalar_lea.vmem %s7, %s284
      %p286 = pneg %p211
      %p287 = pneg %p208
      %p288 = scmp.lt.s32.totalorder %s28, 1
      %s289 = scalar_select %p288, %s28, 1
      %s290 = smul.addr %s289, 32
      %s291 = smul.addr %s290, 8
      %s292 = scalar_lea.vmem %s8, %s291
      %p293 = scmp.lt.s32.totalorder %s28, 1
      %s294 = scalar_select %p293, %s28, 1
      %s295 = smul.addr %s294, 72
      %s296 = smul.addr %s295, 8
      %s297 = scalar_lea.vmem %s1, %s296
      %p298 = scmp.lt.s32.totalorder %s28, 1
      %s299 = scalar_select %p298, %s28, 1
      %s300 = smul.addr %s299, 32
      %s301 = smul.addr %s300, 8
      %s302 = scalar_lea.vmem %s6, %s301
      %p303 = scmp.lt.s32.totalorder %s28, 1
      %s304 = scalar_select %p303, %s28, 1
      %s305 = smul.addr %s304, 32
      %s306 = smul.addr %s305, 8
      %s307 = scalar_lea.vmem %s7, %s306
      %p308 = scmp.lt.s32.totalorder %s28, 1
      %s309 = scalar_select %p308, %s28, 1
      %s310 = smul.addr %s309, 32
      %s311 = smul.addr %s310, 8
      %s312 = scalar_lea.vmem %s8, %s311
      %vm314 = vcmask 289792
      %315 = vst.msk [vmem:[#allocation2] sm:$0xf] %vm314, 0
      %316 = vst.msk [vmem:[#allocation2 + $0x4] sm:$0xf] %vm314, 0
      %317 = vst.msk [vmem:[#allocation2 + $0x8] sm:$0xf] %vm314, 0
      %318 = vst.msk [vmem:[#allocation2 + $0xc] sm:$0xf] %vm314, 0
      %319 = vst.msk [vmem:[#allocation2 + $0x10] sm:$0xf] %vm314, 0
      %320 = vst.msk [vmem:[#allocation2 + $0x14] sm:$0xf] %vm314, 0
      %321 = vst.msk [vmem:[#allocation2 + $0x18] sm:$0xf] %vm314, 0
      %322 = vst.msk [vmem:[#allocation2 + $0x1c] sm:$0xf] %vm314, 0
      %323 = vst.msk [vmem:[#allocation2 + $0x20] sm:$0xf] %vm314, 0
      %324 = vst.msk [vmem:[#allocation2 + $0x24] sm:$0xf] %vm314, 0
      %325 = vst.msk [vmem:[#allocation2 + $0x28] sm:$0xf] %vm314, 0
      %326 = vst.msk [vmem:[#allocation2 + $0x2c] sm:$0xf] %vm314, 0
      %327 = vst.msk [vmem:[#allocation2 + $0x30] sm:$0xf] %vm314, 0
      %328 = vst.msk [vmem:[#allocation2 + $0x34] sm:$0xf] %vm314, 0
      %329 = vst.msk [vmem:[#allocation2 + $0x38] sm:$0xf] %vm314, 0
      %330 = vst.msk [vmem:[#allocation2 + $0x3c] sm:$0xf] %vm314, 0
      %331 = vst.msk [vmem:[#allocation2 + $0x40] sm:$0xf] %vm314, 0
      %332 = vst.msk [vmem:[#allocation2 + $0x44] sm:$0xf] %vm314, 0
      %333 = vst.msk [vmem:[#allocation2 + $0x48] sm:$0xf] %vm314, 0
      %334 = vst.msk [vmem:[#allocation2 + $0x4c] sm:$0xf] %vm314, 0
      %335 = vst.msk [vmem:[#allocation2 + $0x50] sm:$0xf] %vm314, 0
      %336 = vst.msk [vmem:[#allocation2 + $0x54] sm:$0xf] %vm314, 0
      %337 = vst.msk [vmem:[#allocation2 + $0x58] sm:$0xf] %vm314, 0
      %338 = vst.msk [vmem:[#allocation2 + $0x5c] sm:$0xf] %vm314, 0
      %339 = vst.msk [vmem:[#allocation2 + $0x60] sm:$0xf] %vm314, 0
      %340 = vst.msk [vmem:[#allocation2 + $0x64] sm:$0xf] %vm314, 0
      %341 = vst.msk [vmem:[#allocation2 + $0x68] sm:$0xf] %vm314, 0
      %342 = vst.msk [vmem:[#allocation2 + $0x6c] sm:$0xf] %vm314, 0
      %343 = vst.msk [vmem:[#allocation2 + $0x70] sm:$0xf] %vm314, 0
      %344 = vst.msk [vmem:[#allocation2 + $0x74] sm:$0xf] %vm314, 0
      %345 = vst.msk [vmem:[#allocation2 + $0x78] sm:$0xf] %vm314, 0
      %346 = vst.msk [vmem:[#allocation2 + $0x7c] sm:$0xf] %vm314, 0
      %347 = vst.msk [vmem:[#allocation2 + $0x80] sm:$0xf] %vm314, 0
      %348 = vst.msk [vmem:[#allocation2 + $0x84] sm:$0xf] %vm314, 0
      %349 = vst.msk [vmem:[#allocation2 + $0x88] sm:$0xf] %vm314, 0
      %350 = vst.msk [vmem:[#allocation2 + $0x8c] sm:$0xf] %vm314, 0
      %351 = vst.msk [vmem:[#allocation2 + $0x90] sm:$0xf] %vm314, 0
      %352 = vst.msk [vmem:[#allocation2 + $0x94] sm:$0xf] %vm314, 0
      %353 = vst.msk [vmem:[#allocation2 + $0x98] sm:$0xf] %vm314, 0
      %354 = vst.msk [vmem:[#allocation2 + $0x9c] sm:$0xf] %vm314, 0
      %355 = vst.msk [vmem:[#allocation2 + $0xa0] sm:$0xf] %vm314, 0
      %356 = vst.msk [vmem:[#allocation2 + $0xa4] sm:$0xf] %vm314, 0
      %357 = vst.msk [vmem:[#allocation2 + $0xa8] sm:$0xf] %vm314, 0
      %358 = vst.msk [vmem:[#allocation2 + $0xac] sm:$0xf] %vm314, 0
      %359 = vst.msk [vmem:[#allocation2 + $0xb0] sm:$0xf] %vm314, 0
      %360 = vst.msk [vmem:[#allocation2 + $0xb4] sm:$0xf] %vm314, 0
      %361 = vst.msk [vmem:[#allocation2 + $0xb8] sm:$0xf] %vm314, 0
      %362 = vst.msk [vmem:[#allocation2 + $0xbc] sm:$0xf] %vm314, 0
      %363 = vst.msk [vmem:[#allocation2 + $0xc0] sm:$0xf] %vm314, 0
      %364 = vst.msk [vmem:[#allocation2 + $0xc4] sm:$0xf] %vm314, 0
      %365 = vst.msk [vmem:[#allocation2 + $0xc8] sm:$0xf] %vm314, 0
      %366 = vst.msk [vmem:[#allocation2 + $0xcc] sm:$0xf] %vm314, 0
      %367 = vst.msk [vmem:[#allocation2 + $0xd0] sm:$0xf] %vm314, 0
      %368 = vst.msk [vmem:[#allocation2 + $0xd4] sm:$0xf] %vm314, 0
      %369 = vst.msk [vmem:[#allocation2 + $0xd8] sm:$0xf] %vm314, 0
      %370 = vst.msk [vmem:[#allocation2 + $0xdc] sm:$0xf] %vm314, 0
      %371 = vst.msk [vmem:[#allocation2 + $0xe0] sm:$0xf] %vm314, 0
      %372 = vst.msk [vmem:[#allocation2 + $0xe4] sm:$0xf] %vm314, 0
      %373 = vst.msk [vmem:[#allocation2 + $0xe8] sm:$0xf] %vm314, 0
      %374 = vst.msk [vmem:[#allocation2 + $0xec] sm:$0xf] %vm314, 0
      %375 = vst.msk [vmem:[#allocation2 + $0xf0] sm:$0xf] %vm314, 0
      %376 = vst.msk [vmem:[#allocation2 + $0xf4] sm:$0xf] %vm314, 0
      %377 = vst.msk [vmem:[#allocation2 + $0xf8] sm:$0xf] %vm314, 0
      %378 = vst.msk [vmem:[#allocation2 + $0xfc] sm:$0xf] %vm314, 0
      %379 = vst.msk [vmem:[#allocation2 + $0x100] sm:$0xf] %vm314, 0
      %380 = vst.msk [vmem:[#allocation2 + $0x104] sm:$0xf] %vm314, 0
      %381 = vst.msk [vmem:[#allocation2 + $0x108] sm:$0xf] %vm314, 0
      %382 = vst.msk [vmem:[#allocation2 + $0x10c] sm:$0xf] %vm314, 0
      %383 = vst.msk [vmem:[#allocation2 + $0x110] sm:$0xf] %vm314, 0
      %384 = vst.msk [vmem:[#allocation2 + $0x114] sm:$0xf] %vm314, 0
      %385 = vst.msk [vmem:[#allocation2 + $0x118] sm:$0xf] %vm314, 0
      %386 = vst.msk [vmem:[#allocation2 + $0x11c] sm:$0xf] %vm314, 0
      %387 = vst [vmem:[#allocation3] sm:$0xf] 0
      %388 = vst [vmem:[#allocation3 + $0x4] sm:$0xf] 0
      %389 = vst [vmem:[#allocation3 + $0x8] sm:$0xf] 0
      %390 = vst [vmem:[#allocation3 + $0xc] sm:$0xf] 0
      %391 = vst [vmem:[#allocation3 + $0x10] sm:$0xf] 0
      %392 = vst [vmem:[#allocation3 + $0x14] sm:$0xf] 0
      %393 = vst [vmem:[#allocation3 + $0x18] sm:$0xf] 0
      %394 = vst [vmem:[#allocation3 + $0x1c] sm:$0xf] 0
      %395 = vst [vmem:[#allocation3 + $0x20] sm:$0xf] 0
      %396 = vst [vmem:[#allocation3 + $0x24] sm:$0xf] 0
      %397 = vst [vmem:[#allocation3 + $0x28] sm:$0xf] 0
      %398 = vst [vmem:[#allocation3 + $0x2c] sm:$0xf] 0
      %399 = vst [vmem:[#allocation3 + $0x30] sm:$0xf] 0
      %400 = vst [vmem:[#allocation3 + $0x34] sm:$0xf] 0
      %401 = vst [vmem:[#allocation3 + $0x38] sm:$0xf] 0
      %402 = vst [vmem:[#allocation3 + $0x3c] sm:$0xf] 0
      %403 = vst [vmem:[#allocation3 + $0x40] sm:$0xf] 0
      %404 = vst [vmem:[#allocation3 + $0x44] sm:$0xf] 0
      %405 = vst [vmem:[#allocation3 + $0x48] sm:$0xf] 0
      %406 = vst [vmem:[#allocation3 + $0x4c] sm:$0xf] 0
      %407 = vst [vmem:[#allocation3 + $0x50] sm:$0xf] 0
      %408 = vst [vmem:[#allocation3 + $0x54] sm:$0xf] 0
      %409 = vst [vmem:[#allocation3 + $0x58] sm:$0xf] 0
      %410 = vst [vmem:[#allocation3 + $0x5c] sm:$0xf] 0
      %411 = vst [vmem:[#allocation3 + $0x60] sm:$0xf] 0
      %412 = vst [vmem:[#allocation3 + $0x64] sm:$0xf] 0
      %413 = vst [vmem:[#allocation3 + $0x68] sm:$0xf] 0
      %414 = vst [vmem:[#allocation3 + $0x6c] sm:$0xf] 0
      %415 = vst [vmem:[#allocation3 + $0x70] sm:$0xf] 0
      %416 = vst [vmem:[#allocation3 + $0x74] sm:$0xf] 0
      %417 = vst [vmem:[#allocation3 + $0x78] sm:$0xf] 0
      %418 = vst [vmem:[#allocation3 + $0x7c] sm:$0xf] 0
      %419 = vst [vmem:[#allocation3 + $0x80] sm:$0xf] 0
      %420 = vst [vmem:[#allocation3 + $0x84] sm:$0xf] 0
      %421 = vst [vmem:[#allocation3 + $0x88] sm:$0xf] 0
      %422 = vst [vmem:[#allocation3 + $0x8c] sm:$0xf] 0
      %vm423 = vcmask 261120
      %424 = vst.msk [vmem:[#allocation4] sm:$0xff] %vm423, 0.0
      %425 = vst.msk [vmem:[#allocation4 + $0x8] sm:$0xff] %vm423, 0.0
      %426 = vst.msk [vmem:[#allocation4 + $0x10] sm:$0xff] %vm423, 0.0
      %427 = vst.msk [vmem:[#allocation4 + $0x18] sm:$0xff] %vm423, 0.0
      %428 = vst.msk [vmem:[#allocation4 + $0x20] sm:$0xff] %vm423, 0.0
      %429 = vst.msk [vmem:[#allocation4 + $0x28] sm:$0xff] %vm423, 0.0
      %430 = vst.msk [vmem:[#allocation4 + $0x30] sm:$0xff] %vm423, 0.0
      %431 = vst.msk [vmem:[#allocation4 + $0x38] sm:$0xff] %vm423, 0.0
      %432 = vst.msk [vmem:[#allocation4 + $0x40] sm:$0xff] %vm423, 0.0
      %433 = vst.msk [vmem:[#allocation4 + $0x48] sm:$0xff] %vm423, 0.0
      %434 = vst.msk [vmem:[#allocation4 + $0x50] sm:$0xff] %vm423, 0.0
      %435 = vst.msk [vmem:[#allocation4 + $0x58] sm:$0xff] %vm423, 0.0
      %436 = vst.msk [vmem:[#allocation4 + $0x60] sm:$0xff] %vm423, 0.0
      %437 = vst.msk [vmem:[#allocation4 + $0x68] sm:$0xff] %vm423, 0.0
      %438 = vst.msk [vmem:[#allocation4 + $0x70] sm:$0xff] %vm423, 0.0
      %439 = vst.msk [vmem:[#allocation4 + $0x78] sm:$0xff] %vm423, 0.0
      %440 = vst.msk [vmem:[#allocation4 + $0x80] sm:$0xff] %vm423, 0.0
      %441 = vst.msk [vmem:[#allocation4 + $0x88] sm:$0xff] %vm423, 0.0
      %442 = vst.msk [vmem:[#allocation4 + $0x90] sm:$0xff] %vm423, 0.0
      %443 = vst.msk [vmem:[#allocation4 + $0x98] sm:$0xff] %vm423, 0.0
      %444 = vst.msk [vmem:[#allocation4 + $0xa0] sm:$0xff] %vm423, 0.0
      %445 = vst.msk [vmem:[#allocation4 + $0xa8] sm:$0xff] %vm423, 0.0
      %446 = vst.msk [vmem:[#allocation4 + $0xb0] sm:$0xff] %vm423, 0.0
      %447 = vst.msk [vmem:[#allocation4 + $0xb8] sm:$0xff] %vm423, 0.0
      %448 = vst.msk [vmem:[#allocation4 + $0xc0] sm:$0xff] %vm423, 0.0
      %449 = vst.msk [vmem:[#allocation4 + $0xc8] sm:$0xff] %vm423, 0.0
      %450 = vst.msk [vmem:[#allocation4 + $0xd0] sm:$0xff] %vm423, 0.0
      %451 = vst.msk [vmem:[#allocation4 + $0xd8] sm:$0xff] %vm423, 0.0
      %452 = vst.msk [vmem:[#allocation4 + $0xe0] sm:$0xff] %vm423, 0.0
      %453 = vst.msk [vmem:[#allocation4 + $0xe8] sm:$0xff] %vm423, 0.0
      %454 = vst.msk [vmem:[#allocation4 + $0xf0] sm:$0xff] %vm423, 0.0
      %455 = vst.msk [vmem:[#allocation4 + $0xf8] sm:$0xff] %vm423, 0.0
      %vm456 = vcmask 519168
      %457 = vst.msk [vmem:[#allocation5] sm:$0xf] %vm456, 0
      %458 = vst.msk [vmem:[#allocation5 + $0x4] sm:$0xf] %vm456, 0
      %459 = vst.msk [vmem:[#allocation5 + $0x8] sm:$0xf] %vm456, 0
      %460 = vst.msk [vmem:[#allocation5 + $0xc] sm:$0xf] %vm456, 0
      %461 = vst.msk [vmem:[#allocation5 + $0x10] sm:$0xf] %vm456, 0
      %462 = vst.msk [vmem:[#allocation5 + $0x14] sm:$0xf] %vm456, 0
      %463 = vst.msk [vmem:[#allocation5 + $0x18] sm:$0xf] %vm456, 0
      %464 = vst.msk [vmem:[#allocation5 + $0x1c] sm:$0xf] %vm456, 0
      %465 = vst.msk [vmem:[#allocation5 + $0x20] sm:$0xf] %vm456, 0
      %466 = vst.msk [vmem:[#allocation5 + $0x24] sm:$0xf] %vm456, 0
      %467 = vst.msk [vmem:[#allocation5 + $0x28] sm:$0xf] %vm456, 0
      %468 = vst.msk [vmem:[#allocation5 + $0x2c] sm:$0xf] %vm456, 0
      %469 = vst.msk [vmem:[#allocation5 + $0x30] sm:$0xf] %vm456, 0
      %470 = vst.msk [vmem:[#allocation5 + $0x34] sm:$0xf] %vm456, 0
      %471 = vst.msk [vmem:[#allocation5 + $0x38] sm:$0xf] %vm456, 0
      %472 = vst.msk [vmem:[#allocation5 + $0x3c] sm:$0xf] %vm456, 0
      %473 = vst.msk [vmem:[#allocation5 + $0x40] sm:$0xf] %vm456, 0
      %474 = vst.msk [vmem:[#allocation5 + $0x44] sm:$0xf] %vm456, 0
      %475 = vst.msk [vmem:[#allocation5 + $0x48] sm:$0xf] %vm456, 0
      %476 = vst.msk [vmem:[#allocation5 + $0x4c] sm:$0xf] %vm456, 0
      %477 = vst.msk [vmem:[#allocation5 + $0x50] sm:$0xf] %vm456, 0
      %478 = vst.msk [vmem:[#allocation5 + $0x54] sm:$0xf] %vm456, 0
      %479 = vst.msk [vmem:[#allocation5 + $0x58] sm:$0xf] %vm456, 0
      %480 = vst.msk [vmem:[#allocation5 + $0x5c] sm:$0xf] %vm456, 0
      %481 = vst.msk [vmem:[#allocation5 + $0x60] sm:$0xf] %vm456, 0
      %482 = vst.msk [vmem:[#allocation5 + $0x64] sm:$0xf] %vm456, 0
      %483 = vst.msk [vmem:[#allocation5 + $0x68] sm:$0xf] %vm456, 0
      %484 = vst.msk [vmem:[#allocation5 + $0x6c] sm:$0xf] %vm456, 0
      %485 = vst.msk [vmem:[#allocation5 + $0x70] sm:$0xf] %vm456, 0
      %486 = vst.msk [vmem:[#allocation5 + $0x74] sm:$0xf] %vm456, 0
      %487 = vst.msk [vmem:[#allocation5 + $0x78] sm:$0xf] %vm456, 0
      %488 = vst.msk [vmem:[#allocation5 + $0x7c] sm:$0xf] %vm456, 0
      %489 = vst.msk [vmem:[#allocation5 + $0x80] sm:$0xf] %vm456, 0
      %490 = vst.msk [vmem:[#allocation5 + $0x84] sm:$0xf] %vm456, 0
      %491 = vst.msk [vmem:[#allocation5 + $0x88] sm:$0xf] %vm456, 0
      %492 = vst.msk [vmem:[#allocation5 + $0x8c] sm:$0xf] %vm456, 0
      %493 = vst.msk [vmem:[#allocation5 + $0x90] sm:$0xf] %vm456, 0
      %494 = vst.msk [vmem:[#allocation5 + $0x94] sm:$0xf] %vm456, 0
      %495 = vst.msk [vmem:[#allocation5 + $0x98] sm:$0xf] %vm456, 0
      %496 = vst.msk [vmem:[#allocation5 + $0x9c] sm:$0xf] %vm456, 0
      %497 = vst.msk [vmem:[#allocation5 + $0xa0] sm:$0xf] %vm456, 0
      %498 = vst.msk [vmem:[#allocation5 + $0xa4] sm:$0xf] %vm456, 0
      %499 = vst.msk [vmem:[#allocation5 + $0xa8] sm:$0xf] %vm456, 0
      %500 = vst.msk [vmem:[#allocation5 + $0xac] sm:$0xf] %vm456, 0
      %501 = vst.msk [vmem:[#allocation5 + $0xb0] sm:$0xf] %vm456, 0
      %502 = vst.msk [vmem:[#allocation5 + $0xb4] sm:$0xf] %vm456, 0
      %503 = vst.msk [vmem:[#allocation5 + $0xb8] sm:$0xf] %vm456, 0
      %504 = vst.msk [vmem:[#allocation5 + $0xbc] sm:$0xf] %vm456, 0
      %505 = vst.msk [vmem:[#allocation5 + $0xc0] sm:$0xf] %vm456, 0
      %506 = vst.msk [vmem:[#allocation5 + $0xc4] sm:$0xf] %vm456, 0
      %507 = vst.msk [vmem:[#allocation5 + $0xc8] sm:$0xf] %vm456, 0
      %508 = vst.msk [vmem:[#allocation5 + $0xcc] sm:$0xf] %vm456, 0
      %509 = vst.msk [vmem:[#allocation5 + $0xd0] sm:$0xf] %vm456, 0
      %510 = vst.msk [vmem:[#allocation5 + $0xd4] sm:$0xf] %vm456, 0
      %511 = vst.msk [vmem:[#allocation5 + $0xd8] sm:$0xf] %vm456, 0
      %512 = vst.msk [vmem:[#allocation5 + $0xdc] sm:$0xf] %vm456, 0
      %513 = vst.msk [vmem:[#allocation5 + $0xe0] sm:$0xf] %vm456, 0
      %514 = vst.msk [vmem:[#allocation5 + $0xe4] sm:$0xf] %vm456, 0
      %515 = vst.msk [vmem:[#allocation5 + $0xe8] sm:$0xf] %vm456, 0
      %516 = vst.msk [vmem:[#allocation5 + $0xec] sm:$0xf] %vm456, 0
      %517 = vst.msk [vmem:[#allocation5 + $0xf0] sm:$0xf] %vm456, 0
      %518 = vst.msk [vmem:[#allocation5 + $0xf4] sm:$0xf] %vm456, 0
      %519 = vst.msk [vmem:[#allocation5 + $0xf8] sm:$0xf] %vm456, 0
      %520 = vst.msk [vmem:[#allocation5 + $0xfc] sm:$0xf] %vm456, 0
      %521 = vst.msk [vmem:[#allocation5 + $0x100] sm:$0xf] %vm456, 0
      %522 = vst.msk [vmem:[#allocation5 + $0x104] sm:$0xf] %vm456, 0
      %523 = vst.msk [vmem:[#allocation5 + $0x108] sm:$0xf] %vm456, 0
      %524 = vst.msk [vmem:[#allocation5 + $0x10c] sm:$0xf] %vm456, 0
      %525 = vst.msk [vmem:[#allocation5 + $0x110] sm:$0xf] %vm456, 0
      %526 = vst.msk [vmem:[#allocation5 + $0x114] sm:$0xf] %vm456, 0
      %527 = vst.msk [vmem:[#allocation5 + $0x118] sm:$0xf] %vm456, 0
      %528 = vst.msk [vmem:[#allocation5 + $0x11c] sm:$0xf] %vm456, 0
      %529 = vst [vmem:[#allocation6] sm:$0xff] 0
      %530 = vst [vmem:[#allocation6 + $0x8] sm:$0xff] 0
      %531 = vst [vmem:[#allocation6 + $0x10] sm:$0xff] 0
      %532 = vst [vmem:[#allocation6 + $0x18] sm:$0xff] 0
      %533 = vst [vmem:[#allocation6 + $0x20] sm:$0xff] 0
      %534 = vst [vmem:[#allocation6 + $0x28] sm:$0xff] 0
      %535 = vst [vmem:[#allocation6 + $0x30] sm:$0xff] 0
      %536 = vst [vmem:[#allocation6 + $0x38] sm:$0xff] 0
      %537 = vst [vmem:[#allocation6 + $0x40] sm:$0xff] 0
      %538 = vst [vmem:[#allocation6 + $0x48] sm:$0xff] 0
      %539 = vst [vmem:[#allocation6 + $0x50] sm:$0xff] 0
      %540 = vst [vmem:[#allocation6 + $0x58] sm:$0xff] 0
      %541 = vst [vmem:[#allocation6 + $0x60] sm:$0xff] 0
      %542 = vst [vmem:[#allocation6 + $0x68] sm:$0xff] 0
      %543 = vst [vmem:[#allocation6 + $0x70] sm:$0xff] 0
      %544 = vst [vmem:[#allocation6 + $0x78] sm:$0xff] 0
      %545 = vst [vmem:[#allocation6 + $0x80] sm:$0xff] 0
      %546 = vst [vmem:[#allocation6 + $0x88] sm:$0xff] 0
      %547 = vst [vmem:[#allocation6 + $0x90] sm:$0xff] 0
      %548 = vst [vmem:[#allocation6 + $0x98] sm:$0xff] 0
      %549 = vst [vmem:[#allocation6 + $0xa0] sm:$0xff] 0
      %550 = vst [vmem:[#allocation6 + $0xa8] sm:$0xff] 0
      %551 = vst [vmem:[#allocation6 + $0xb0] sm:$0xff] 0
      %552 = vst [vmem:[#allocation6 + $0xb8] sm:$0xff] 0
      %553 = vst [vmem:[#allocation6 + $0xc0] sm:$0xff] 0
      %554 = vst [vmem:[#allocation6 + $0xc8] sm:$0xff] 0
      %555 = vst [vmem:[#allocation6 + $0xd0] sm:$0xff] 0
      %556 = vst [vmem:[#allocation6 + $0xd8] sm:$0xff] 0
      %557 = vst [vmem:[#allocation6 + $0xe0] sm:$0xff] 0
      %558 = vst [vmem:[#allocation6 + $0xe8] sm:$0xff] 0
      %559 = vst [vmem:[#allocation6 + $0xf0] sm:$0xff] 0
      %560 = vst [vmem:[#allocation6 + $0xf8] sm:$0xff] 0
      %561 = vst [vmem:[#allocation6 + $0x100] sm:$0xff] 0
      %562 = vst [vmem:[#allocation6 + $0x108] sm:$0xff] 0
      %563 = vst [vmem:[#allocation6 + $0x110] sm:$0xff] 0
      %564 = vst [vmem:[#allocation6 + $0x118] sm:$0xff] 0
      %565 = vst.msk [vmem:[#allocation7] sm:$0xff] %vm423, 0.0
      %566 = vst.msk [vmem:[#allocation7 + $0x8] sm:$0xff] %vm423, 0.0
      %567 = vst.msk [vmem:[#allocation7 + $0x10] sm:$0xff] %vm423, 0.0
      %568 = vst.msk [vmem:[#allocation7 + $0x18] sm:$0xff] %vm423, 0.0
      %569 = vst.msk [vmem:[#allocation7 + $0x20] sm:$0xff] %vm423, 0.0
      %570 = vst.msk [vmem:[#allocation7 + $0x28] sm:$0xff] %vm423, 0.0
      %571 = vst.msk [vmem:[#allocation7 + $0x30] sm:$0xff] %vm423, 0.0
      %572 = vst.msk [vmem:[#allocation7 + $0x38] sm:$0xff] %vm423, 0.0
      %573 = vst.msk [vmem:[#allocation7 + $0x40] sm:$0xff] %vm423, 0.0
      %574 = vst.msk [vmem:[#allocation7 + $0x48] sm:$0xff] %vm423, 0.0
      %575 = vst.msk [vmem:[#allocation7 + $0x50] sm:$0xff] %vm423, 0.0
      %576 = vst.msk [vmem:[#allocation7 + $0x58] sm:$0xff] %vm423, 0.0
      %577 = vst.msk [vmem:[#allocation7 + $0x60] sm:$0xff] %vm423, 0.0
      %578 = vst.msk [vmem:[#allocation7 + $0x68] sm:$0xff] %vm423, 0.0
      %579 = vst.msk [vmem:[#allocation7 + $0x70] sm:$0xff] %vm423, 0.0
      %580 = vst.msk [vmem:[#allocation7 + $0x78] sm:$0xff] %vm423, 0.0
      %581 = vst.msk [vmem:[#allocation7 + $0x80] sm:$0xff] %vm423, 0.0
      %582 = vst.msk [vmem:[#allocation7 + $0x88] sm:$0xff] %vm423, 0.0
      %583 = vst.msk [vmem:[#allocation7 + $0x90] sm:$0xff] %vm423, 0.0
      %584 = vst.msk [vmem:[#allocation7 + $0x98] sm:$0xff] %vm423, 0.0
      %585 = vst.msk [vmem:[#allocation7 + $0xa0] sm:$0xff] %vm423, 0.0
      %586 = vst.msk [vmem:[#allocation7 + $0xa8] sm:$0xff] %vm423, 0.0
      %587 = vst.msk [vmem:[#allocation7 + $0xb0] sm:$0xff] %vm423, 0.0
      %588 = vst.msk [vmem:[#allocation7 + $0xb8] sm:$0xff] %vm423, 0.0
      %589 = vst.msk [vmem:[#allocation7 + $0xc0] sm:$0xff] %vm423, 0.0
      %590 = vst.msk [vmem:[#allocation7 + $0xc8] sm:$0xff] %vm423, 0.0
      %591 = vst.msk [vmem:[#allocation7 + $0xd0] sm:$0xff] %vm423, 0.0
      %592 = vst.msk [vmem:[#allocation7 + $0xd8] sm:$0xff] %vm423, 0.0
      %593 = vst.msk [vmem:[#allocation7 + $0xe0] sm:$0xff] %vm423, 0.0
      %594 = vst.msk [vmem:[#allocation7 + $0xe8] sm:$0xff] %vm423, 0.0
      %595 = vst.msk [vmem:[#allocation7 + $0xf0] sm:$0xff] %vm423, 0.0
      %596 = vst.msk [vmem:[#allocation7 + $0xf8] sm:$0xff] %vm423, 0.0
      %v597 = vld [vmem:[%s297] sm:$0xff]
      %v598 = vld [vmem:[%s297 + $0x8] sm:$0xff]
      %v599 = vld [vmem:[%s297 + $0x10] sm:$0xff]
      %v600 = vld [vmem:[%s297 + $0x18] sm:$0xff]
      %v601 = vld [vmem:[%s297 + $0x20] sm:$0xff]
      %v602 = vld [vmem:[%s297 + $0x28] sm:$0xff]
      %v603 = vld [vmem:[%s297 + $0x30] sm:$0xff]
      %v604 = vld [vmem:[%s297 + $0x38] sm:$0xff]
      %v605 = vld [vmem:[%s297 + $0x40] sm:$0xff]
      %v606 = vld [vmem:[%s297 + $0x48] sm:$0xff]
      %v607 = vld [vmem:[%s297 + $0x50] sm:$0xff]
      %v608 = vld [vmem:[%s297 + $0x58] sm:$0xff]
      %v609 = vld [vmem:[%s297 + $0x60] sm:$0xff]
      %v610 = vld [vmem:[%s297 + $0x68] sm:$0xff]
      %v611 = vld [vmem:[%s297 + $0x70] sm:$0xff]
      %v612 = vld [vmem:[%s297 + $0x78] sm:$0xff]
      %v613 = vld [vmem:[%s297 + $0x80] sm:$0xff]
      %v614 = vld [vmem:[%s297 + $0x88] sm:$0xff]
      %v615 = vld [vmem:[%s297 + $0x90] sm:$0xff]
      %v616 = vld [vmem:[%s297 + $0x98] sm:$0xff]
      %v617 = vld [vmem:[%s297 + $0xa0] sm:$0xff]
      %v618 = vld [vmem:[%s297 + $0xa8] sm:$0xff]
      %v619 = vld [vmem:[%s297 + $0xb0] sm:$0xff]
      %v620 = vld [vmem:[%s297 + $0xb8] sm:$0xff]
      %v621 = vld [vmem:[%s297 + $0xc0] sm:$0xff]
      %v622 = vld [vmem:[%s297 + $0xc8] sm:$0xff]
      %v623 = vld [vmem:[%s297 + $0xd0] sm:$0xff]
      %v624 = vld [vmem:[%s297 + $0xd8] sm:$0xff]
      %v625 = vld [vmem:[%s297 + $0xe0] sm:$0xff]
      %v626 = vld [vmem:[%s297 + $0xe8] sm:$0xff]
      %v627 = vld [vmem:[%s297 + $0xf0] sm:$0xff]
      %v628 = vld [vmem:[%s297 + $0xf8] sm:$0xff]
      %v629 = vld [vmem:[%s297 + $0x100] sm:$0xff]
      %v630 = vld [vmem:[%s297 + $0x108] sm:$0xff]
      %v631 = vld [vmem:[%s297 + $0x110] sm:$0xff]
      %v632 = vld [vmem:[%s297 + $0x118] sm:$0xff]
      %v633 = vld [vmem:[%s297 + $0x120] sm:$0xff]
      %v634 = vld [vmem:[%s297 + $0x128] sm:$0xff]
      %v635 = vld [vmem:[%s297 + $0x130] sm:$0xff]
      %v636 = vld [vmem:[%s297 + $0x138] sm:$0xff]
      %v637 = vld [vmem:[%s297 + $0x140] sm:$0xff]
      %v638 = vld [vmem:[%s297 + $0x148] sm:$0xff]
      %v639 = vld [vmem:[%s297 + $0x150] sm:$0xff]
      %v640 = vld [vmem:[%s297 + $0x158] sm:$0xff]
      %v641 = vld [vmem:[%s297 + $0x160] sm:$0xff]
      %v642 = vld [vmem:[%s297 + $0x168] sm:$0xff]
      %v643 = vld [vmem:[%s297 + $0x170] sm:$0xff]
      %v644 = vld [vmem:[%s297 + $0x178] sm:$0xff]
      %v645 = vld [vmem:[%s297 + $0x180] sm:$0xff]
      %v646 = vld [vmem:[%s297 + $0x188] sm:$0xff]
      %v647 = vld [vmem:[%s297 + $0x190] sm:$0xff]
      %v648 = vld [vmem:[%s297 + $0x198] sm:$0xff]
      %v649 = vld [vmem:[%s297 + $0x1a0] sm:$0xff]
      %v650 = vld [vmem:[%s297 + $0x1a8] sm:$0xff]
      %v651 = vld [vmem:[%s297 + $0x1b0] sm:$0xff]
      %v652 = vld [vmem:[%s297 + $0x1b8] sm:$0xff]
      %v653 = vld [vmem:[%s297 + $0x1c0] sm:$0xff]
      %v654 = vld [vmem:[%s297 + $0x1c8] sm:$0xff]
      %v655 = vld [vmem:[%s297 + $0x1d0] sm:$0xff]
      %v656 = vld [vmem:[%s297 + $0x1d8] sm:$0xff]
      %v657 = vld [vmem:[%s297 + $0x1e0] sm:$0xff]
      %v658 = vld [vmem:[%s297 + $0x1e8] sm:$0xff]
      %v659 = vld [vmem:[%s297 + $0x1f0] sm:$0xff]
      %v660 = vld [vmem:[%s297 + $0x1f8] sm:$0xff]
      %v661 = vld [vmem:[%s297 + $0x200] sm:$0xff]
      %v662 = vld [vmem:[%s297 + $0x208] sm:$0xff]
      %v663 = vld [vmem:[%s297 + $0x210] sm:$0xff]
      %v664 = vld [vmem:[%s297 + $0x218] sm:$0xff]
      %v665 = vld [vmem:[%s297 + $0x220] sm:$0xff]
      %v666 = vld [vmem:[%s297 + $0x228] sm:$0xff]
      %v667 = vld [vmem:[%s297 + $0x230] sm:$0xff]
      %v668 = vld [vmem:[%s297 + $0x238] sm:$0xff]
      %v669 = vpack.c.bf16 %v597, %v597
      %v670 = vpack.c.bf16 %v598, %v598
      %v671 = vpack.c.bf16 %v599, %v599
      %v672 = vpack.c.bf16 %v600, %v600
      %v673 = vpack.c.bf16 %v601, %v601
      %v674 = vpack.c.bf16 %v602, %v602
      %v675 = vpack.c.bf16 %v603, %v603
      %v676 = vpack.c.bf16 %v604, %v604
      %v677 = vpack.c.bf16 %v605, %v605
      %v678 = vpack.c.bf16 %v606, %v606
      %v679 = vpack.c.bf16 %v607, %v607
      %v680 = vpack.c.bf16 %v608, %v608
      %v681 = vpack.c.bf16 %v609, %v609
      %v682 = vpack.c.bf16 %v610, %v610
      %v683 = vpack.c.bf16 %v611, %v611
      %v684 = vpack.c.bf16 %v612, %v612
      %v685 = vpack.c.bf16 %v613, %v613
      %v686 = vpack.c.bf16 %v614, %v614
      %v687 = vpack.c.bf16 %v615, %v615
      %v688 = vpack.c.bf16 %v616, %v616
      %v689 = vpack.c.bf16 %v617, %v617
      %v690 = vpack.c.bf16 %v618, %v618
      %v691 = vpack.c.bf16 %v619, %v619
      %v692 = vpack.c.bf16 %v620, %v620
      %v693 = vpack.c.bf16 %v621, %v621
      %v694 = vpack.c.bf16 %v622, %v622
      %v695 = vpack.c.bf16 %v623, %v623
      %v696 = vpack.c.bf16 %v624, %v624
      %v697 = vpack.c.bf16 %v625, %v625
      %v698 = vpack.c.bf16 %v626, %v626
      %v699 = vpack.c.bf16 %v627, %v627
      %v700 = vpack.c.bf16 %v628, %v628
      %v701 = vpack.c.bf16 %v629, %v629
      %v702 = vpack.c.bf16 %v630, %v630
      %v703 = vpack.c.bf16 %v631, %v631
      %v704 = vpack.c.bf16 %v632, %v632
      %v705 = vpack.c.bf16 %v633, %v633
      %v706 = vpack.c.bf16 %v634, %v634
      %v707 = vpack.c.bf16 %v635, %v635
      %v708 = vpack.c.bf16 %v636, %v636
      %v709 = vpack.c.bf16 %v637, %v637
      %v710 = vpack.c.bf16 %v638, %v638
      %v711 = vpack.c.bf16 %v639, %v639
      %v712 = vpack.c.bf16 %v640, %v640
      %v713 = vpack.c.bf16 %v641, %v641
      %v714 = vpack.c.bf16 %v642, %v642
      %v715 = vpack.c.bf16 %v643, %v643
      %v716 = vpack.c.bf16 %v644, %v644
      %v717 = vpack.c.bf16 %v645, %v645
      %v718 = vpack.c.bf16 %v646, %v646
      %v719 = vpack.c.bf16 %v647, %v647
      %v720 = vpack.c.bf16 %v648, %v648
      %v721 = vpack.c.bf16 %v649, %v649
      %v722 = vpack.c.bf16 %v650, %v650
      %v723 = vpack.c.bf16 %v651, %v651
      %v724 = vpack.c.bf16 %v652, %v652
      %v725 = vpack.c.bf16 %v653, %v653
      %v726 = vpack.c.bf16 %v654, %v654
      %v727 = vpack.c.bf16 %v655, %v655
      %v728 = vpack.c.bf16 %v656, %v656
      %v729 = vpack.c.bf16 %v657, %v657
      %v730 = vpack.c.bf16 %v658, %v658
      %v731 = vpack.c.bf16 %v659, %v659
      %v732 = vpack.c.bf16 %v660, %v660
      %v733 = vpack.c.bf16 %v661, %v661
      %v734 = vpack.c.bf16 %v662, %v662
      %v735 = vpack.c.bf16 %v663, %v663
      %v736 = vpack.c.bf16 %v664, %v664
      %v737 = vpack.c.bf16 %v665, %v665
      %v738 = vpack.c.bf16 %v666, %v666
      %v739 = vpack.c.bf16 %v667, %v667
      %v740 = vpack.c.bf16 %v668, %v668
      %813 = vrot.lane.b32.xlu0 %v669, 32
      %v814 = vpop.permute.xlu0 %813
      %815 = vrot.lane.b32.xlu0 %v670, 32
      %v816 = vpop.permute.xlu0 %815
      %817 = vrot.lane.b32.xlu0 %v671, 32
      %v818 = vpop.permute.xlu0 %817
      %819 = vrot.lane.b32.xlu0 %v672, 32
      %v820 = vpop.permute.xlu0 %819
      %821 = vrot.lane.b32.xlu0 %v673, 32
      %v822 = vpop.permute.xlu0 %821
      %823 = vrot.lane.b32.xlu0 %v674, 32
      %v824 = vpop.permute.xlu0 %823
      %825 = vrot.lane.b32.xlu0 %v675, 32
      %v826 = vpop.permute.xlu0 %825
      %827 = vrot.lane.b32.xlu0 %v676, 32
      %v828 = vpop.permute.xlu0 %827
      %829 = vrot.lane.b32.xlu0 %v677, 32
      %v830 = vpop.permute.xlu0 %829
      %831 = vrot.lane.b32.xlu0 %v678, 32
      %v832 = vpop.permute.xlu0 %831
      %833 = vrot.lane.b32.xlu0 %v679, 32
      %v834 = vpop.permute.xlu0 %833
      %835 = vrot.lane.b32.xlu0 %v680, 32
      %v836 = vpop.permute.xlu0 %835
      %837 = vrot.lane.b32.xlu0 %v681, 32
      %v838 = vpop.permute.xlu0 %837
      %839 = vrot.lane.b32.xlu0 %v682, 32
      %v840 = vpop.permute.xlu0 %839
      %841 = vrot.lane.b32.xlu0 %v683, 32
      %v842 = vpop.permute.xlu0 %841
      %843 = vrot.lane.b32.xlu0 %v684, 32
      %v844 = vpop.permute.xlu0 %843
      %845 = vrot.lane.b32.xlu0 %v685, 32
      %v846 = vpop.permute.xlu0 %845
      %847 = vrot.lane.b32.xlu0 %v686, 32
      %v848 = vpop.permute.xlu0 %847
      %849 = vrot.lane.b32.xlu0 %v687, 32
      %v850 = vpop.permute.xlu0 %849
      %851 = vrot.lane.b32.xlu0 %v688, 32
      %v852 = vpop.permute.xlu0 %851
      %853 = vrot.lane.b32.xlu0 %v689, 32
      %v854 = vpop.permute.xlu0 %853
      %855 = vrot.lane.b32.xlu0 %v690, 32
      %v856 = vpop.permute.xlu0 %855
      %857 = vrot.lane.b32.xlu0 %v691, 32
      %v858 = vpop.permute.xlu0 %857
      %859 = vrot.lane.b32.xlu0 %v692, 32
      %v860 = vpop.permute.xlu0 %859
      %861 = vrot.lane.b32.xlu0 %v693, 32
      %v862 = vpop.permute.xlu0 %861
      %863 = vrot.lane.b32.xlu0 %v694, 32
      %v864 = vpop.permute.xlu0 %863
      %865 = vrot.lane.b32.xlu0 %v695, 32
      %v866 = vpop.permute.xlu0 %865
      %867 = vrot.lane.b32.xlu0 %v696, 32
      %v868 = vpop.permute.xlu0 %867
      %869 = vrot.lane.b32.xlu0 %v697, 32
      %v870 = vpop.permute.xlu0 %869
      %871 = vrot.lane.b32.xlu0 %v698, 32
      %v872 = vpop.permute.xlu0 %871
      %873 = vrot.lane.b32.xlu0 %v699, 32
      %v874 = vpop.permute.xlu0 %873
      %875 = vrot.lane.b32.xlu0 %v700, 32
      %v876 = vpop.permute.xlu0 %875
      %877 = vrot.lane.b32.xlu0 %v701, 32
      %v878 = vpop.permute.xlu0 %877
      %879 = vrot.lane.b32.xlu0 %v702, 32
      %v880 = vpop.permute.xlu0 %879
      %881 = vrot.lane.b32.xlu0 %v703, 32
      %v882 = vpop.permute.xlu0 %881
      %883 = vrot.lane.b32.xlu0 %v704, 32
      %v884 = vpop.permute.xlu0 %883
      %885 = vrot.lane.b32.xlu0 %v705, 32
      %v886 = vpop.permute.xlu0 %885
      %887 = vrot.lane.b32.xlu0 %v706, 32
      %v888 = vpop.permute.xlu0 %887
      %889 = vrot.lane.b32.xlu0 %v707, 32
      %v890 = vpop.permute.xlu0 %889
      %891 = vrot.lane.b32.xlu0 %v708, 32
      %v892 = vpop.permute.xlu0 %891
      %893 = vrot.lane.b32.xlu0 %v709, 32
      %v894 = vpop.permute.xlu0 %893
      %895 = vrot.lane.b32.xlu0 %v710, 32
      %v896 = vpop.permute.xlu0 %895
      %897 = vrot.lane.b32.xlu0 %v711, 32
      %v898 = vpop.permute.xlu0 %897
      %899 = vrot.lane.b32.xlu0 %v712, 32
      %v900 = vpop.permute.xlu0 %899
      %901 = vrot.lane.b32.xlu0 %v713, 32
      %v902 = vpop.permute.xlu0 %901
      %903 = vrot.lane.b32.xlu0 %v714, 32
      %v904 = vpop.permute.xlu0 %903
      %905 = vrot.lane.b32.xlu0 %v715, 32
      %v906 = vpop.permute.xlu0 %905
      %907 = vrot.lane.b32.xlu0 %v716, 32
      %v908 = vpop.permute.xlu0 %907
      %909 = vrot.lane.b32.xlu0 %v717, 32
      %v910 = vpop.permute.xlu0 %909
      %911 = vrot.lane.b32.xlu0 %v718, 32
      %v912 = vpop.permute.xlu0 %911
      %913 = vrot.lane.b32.xlu0 %v719, 32
      %v914 = vpop.permute.xlu0 %913
      %915 = vrot.lane.b32.xlu0 %v720, 32
      %v916 = vpop.permute.xlu0 %915
      %917 = vrot.lane.b32.xlu0 %v721, 32
      %v918 = vpop.permute.xlu0 %917
      %919 = vrot.lane.b32.xlu0 %v722, 32
      %v920 = vpop.permute.xlu0 %919
      %921 = vrot.lane.b32.xlu0 %v723, 32
      %v922 = vpop.permute.xlu0 %921
      %923 = vrot.lane.b32.xlu0 %v724, 32
      %v924 = vpop.permute.xlu0 %923
      %925 = vrot.lane.b32.xlu0 %v725, 32
      %v926 = vpop.permute.xlu0 %925
      %927 = vrot.lane.b32.xlu0 %v726, 32
      %v928 = vpop.permute.xlu0 %927
      %929 = vrot.lane.b32.xlu0 %v727, 32
      %v930 = vpop.permute.xlu0 %929
      %931 = vrot.lane.b32.xlu0 %v728, 32
      %v932 = vpop.permute.xlu0 %931
      %933 = vrot.lane.b32.xlu0 %v729, 32
      %v934 = vpop.permute.xlu0 %933
      %935 = vrot.lane.b32.xlu0 %v730, 32
      %v936 = vpop.permute.xlu0 %935
      %937 = vrot.lane.b32.xlu0 %v731, 32
      %v938 = vpop.permute.xlu0 %937
      %939 = vrot.lane.b32.xlu0 %v732, 32
      %v940 = vpop.permute.xlu0 %939
      %941 = vrot.lane.b32.xlu0 %v733, 32
      %v942 = vpop.permute.xlu0 %941
      %943 = vrot.lane.b32.xlu0 %v734, 32
      %v944 = vpop.permute.xlu0 %943
      %945 = vrot.lane.b32.xlu0 %v735, 32
      %v946 = vpop.permute.xlu0 %945
      %947 = vrot.lane.b32.xlu0 %v736, 32
      %v948 = vpop.permute.xlu0 %947
      %949 = vrot.lane.b32.xlu0 %v737, 32
      %v950 = vpop.permute.xlu0 %949
      %951 = vrot.lane.b32.xlu0 %v738, 32
      %v952 = vpop.permute.xlu0 %951
      %953 = vrot.lane.b32.xlu0 %v739, 32
      %v954 = vpop.permute.xlu0 %953
      %955 = vrot.lane.b32.xlu0 %v740, 32
      %v956 = vpop.permute.xlu0 %955
      %vm1029 = vcmask 290048
      %1030 = vst.msk [vmem:[#allocation2] sm:$0xf] %vm1029, %v814
      %1031 = vst.msk [vmem:[#allocation2 + $0x4] sm:$0xf] %vm1029, %v816
      %1032 = vst.msk [vmem:[#allocation2 + $0x8] sm:$0xf] %vm1029, %v818
      %1033 = vst.msk [vmem:[#allocation2 + $0xc] sm:$0xf] %vm1029, %v820
      %1034 = vst.msk [vmem:[#allocation2 + $0x10] sm:$0xf] %vm1029, %v822
      %1035 = vst.msk [vmem:[#allocation2 + $0x14] sm:$0xf] %vm1029, %v824
      %1036 = vst.msk [vmem:[#allocation2 + $0x18] sm:$0xf] %vm1029, %v826
      %1037 = vst.msk [vmem:[#allocation2 + $0x1c] sm:$0xf] %vm1029, %v828
      %1038 = vst.msk [vmem:[#allocation2 + $0x20] sm:$0xf] %vm1029, %v830
      %1039 = vst.msk [vmem:[#allocation2 + $0x24] sm:$0xf] %vm1029, %v832
      %1040 = vst.msk [vmem:[#allocation2 + $0x28] sm:$0xf] %vm1029, %v834
      %1041 = vst.msk [vmem:[#allocation2 + $0x2c] sm:$0xf] %vm1029, %v836
      %1042 = vst.msk [vmem:[#allocation2 + $0x30] sm:$0xf] %vm1029, %v838
      %1043 = vst.msk [vmem:[#allocation2 + $0x34] sm:$0xf] %vm1029, %v840
      %1044 = vst.msk [vmem:[#allocation2 + $0x38] sm:$0xf] %vm1029, %v842
      %1045 = vst.msk [vmem:[#allocation2 + $0x3c] sm:$0xf] %vm1029, %v844
      %1046 = vst.msk [vmem:[#allocation2 + $0x40] sm:$0xf] %vm1029, %v846
      %1047 = vst.msk [vmem:[#allocation2 + $0x44] sm:$0xf] %vm1029, %v848
      %1048 = vst.msk [vmem:[#allocation2 + $0x48] sm:$0xf] %vm1029, %v850
      %1049 = vst.msk [vmem:[#allocation2 + $0x4c] sm:$0xf] %vm1029, %v852
      %1050 = vst.msk [vmem:[#allocation2 + $0x50] sm:$0xf] %vm1029, %v854
      %1051 = vst.msk [vmem:[#allocation2 + $0x54] sm:$0xf] %vm1029, %v856
      %1052 = vst.msk [vmem:[#allocation2 + $0x58] sm:$0xf] %vm1029, %v858
      %1053 = vst.msk [vmem:[#allocation2 + $0x5c] sm:$0xf] %vm1029, %v860
      %1054 = vst.msk [vmem:[#allocation2 + $0x60] sm:$0xf] %vm1029, %v862
      %1055 = vst.msk [vmem:[#allocation2 + $0x64] sm:$0xf] %vm1029, %v864
      %1056 = vst.msk [vmem:[#allocation2 + $0x68] sm:$0xf] %vm1029, %v866
      %1057 = vst.msk [vmem:[#allocation2 + $0x6c] sm:$0xf] %vm1029, %v868
      %1058 = vst.msk [vmem:[#allocation2 + $0x70] sm:$0xf] %vm1029, %v870
      %1059 = vst.msk [vmem:[#allocation2 + $0x74] sm:$0xf] %vm1029, %v872
      %1060 = vst.msk [vmem:[#allocation2 + $0x78] sm:$0xf] %vm1029, %v874
      %1061 = vst.msk [vmem:[#allocation2 + $0x7c] sm:$0xf] %vm1029, %v876
      %1062 = vst.msk [vmem:[#allocation2 + $0x80] sm:$0xf] %vm1029, %v878
      %1063 = vst.msk [vmem:[#allocation2 + $0x84] sm:$0xf] %vm1029, %v880
      %1064 = vst.msk [vmem:[#allocation2 + $0x88] sm:$0xf] %vm1029, %v882
      %1065 = vst.msk [vmem:[#allocation2 + $0x8c] sm:$0xf] %vm1029, %v884
      %1066 = vst.msk [vmem:[#allocation2 + $0x90] sm:$0xf] %vm1029, %v886
      %1067 = vst.msk [vmem:[#allocation2 + $0x94] sm:$0xf] %vm1029, %v888
      %1068 = vst.msk [vmem:[#allocation2 + $0x98] sm:$0xf] %vm1029, %v890
      %1069 = vst.msk [vmem:[#allocation2 + $0x9c] sm:$0xf] %vm1029, %v892
      %1070 = vst.msk [vmem:[#allocation2 + $0xa0] sm:$0xf] %vm1029, %v894
      %1071 = vst.msk [vmem:[#allocation2 + $0xa4] sm:$0xf] %vm1029, %v896
      %1072 = vst.msk [vmem:[#allocation2 + $0xa8] sm:$0xf] %vm1029, %v898
      %1073 = vst.msk [vmem:[#allocation2 + $0xac] sm:$0xf] %vm1029, %v900
      %1074 = vst.msk [vmem:[#allocation2 + $0xb0] sm:$0xf] %vm1029, %v902
      %1075 = vst.msk [vmem:[#allocation2 + $0xb4] sm:$0xf] %vm1029, %v904
      %1076 = vst.msk [vmem:[#allocation2 + $0xb8] sm:$0xf] %vm1029, %v906
      %1077 = vst.msk [vmem:[#allocation2 + $0xbc] sm:$0xf] %vm1029, %v908
      %1078 = vst.msk [vmem:[#allocation2 + $0xc0] sm:$0xf] %vm1029, %v910
      %1079 = vst.msk [vmem:[#allocation2 + $0xc4] sm:$0xf] %vm1029, %v912
      %1080 = vst.msk [vmem:[#allocation2 + $0xc8] sm:$0xf] %vm1029, %v914
      %1081 = vst.msk [vmem:[#allocation2 + $0xcc] sm:$0xf] %vm1029, %v916
      %1082 = vst.msk [vmem:[#allocation2 + $0xd0] sm:$0xf] %vm1029, %v918
      %1083 = vst.msk [vmem:[#allocation2 + $0xd4] sm:$0xf] %vm1029, %v920
      %1084 = vst.msk [vmem:[#allocation2 + $0xd8] sm:$0xf] %vm1029, %v922
      %1085 = vst.msk [vmem:[#allocation2 + $0xdc] sm:$0xf] %vm1029, %v924
      %1086 = vst.msk [vmem:[#allocation2 + $0xe0] sm:$0xf] %vm1029, %v926
      %1087 = vst.msk [vmem:[#allocation2 + $0xe4] sm:$0xf] %vm1029, %v928
      %1088 = vst.msk [vmem:[#allocation2 + $0xe8] sm:$0xf] %vm1029, %v930
      %1089 = vst.msk [vmem:[#allocation2 + $0xec] sm:$0xf] %vm1029, %v932
      %1090 = vst.msk [vmem:[#allocation2 + $0xf0] sm:$0xf] %vm1029, %v934
      %1091 = vst.msk [vmem:[#allocation2 + $0xf4] sm:$0xf] %vm1029, %v936
      %1092 = vst.msk [vmem:[#allocation2 + $0xf8] sm:$0xf] %vm1029, %v938
      %1093 = vst.msk [vmem:[#allocation2 + $0xfc] sm:$0xf] %vm1029, %v940
      %1094 = vst.msk [vmem:[#allocation2 + $0x100] sm:$0xf] %vm1029, %v942
      %1095 = vst.msk [vmem:[#allocation2 + $0x104] sm:$0xf] %vm1029, %v944
      %1096 = vst.msk [vmem:[#allocation2 + $0x108] sm:$0xf] %vm1029, %v946
      %1097 = vst.msk [vmem:[#allocation2 + $0x10c] sm:$0xf] %vm1029, %v948
      %1098 = vst.msk [vmem:[#allocation2 + $0x110] sm:$0xf] %vm1029, %v950
      %1099 = vst.msk [vmem:[#allocation2 + $0x114] sm:$0xf] %vm1029, %v952
      %1100 = vst.msk [vmem:[#allocation2 + $0x118] sm:$0xf] %vm1029, %v954
      %1101 = vst.msk [vmem:[#allocation2 + $0x11c] sm:$0xf] %vm1029, %v956
      loop: start=0, step=1, limit=2
      $region41: #{tpu_custom_call.1} parent=39 // loop_pre_header
        _
      $region42: #{tpu_custom_call.1} parent=39 // loop_header
        %s1103 = sphi 0, %s1107
        %p1104 = scmp.ge.s32.totalorder %s1103, 2
      $region43: #{tpu_custom_call.1} parent=39 // loop_header_branch
        %1106 = sbr.rel (%p1104) target = $region47
      $region44: #{tpu_custom_call.1} parent=39 // loop_body
        %s1108 = sld [smem:[#allocation9 + %s1103]]
        %v1109 = vld [vmem:[#allocation2] sm:$0x8]
        %v1110 = vld [vmem:[#allocation2 + $0x4] sm:$0xf]
        %v1111 = vld [vmem:[#allocation2 + $0x8] sm:$0xf]
        %v1112 = vld [vmem:[#allocation2 + $0x10] sm:$0x8]
        %v1113 = vld [vmem:[#allocation2 + $0x14] sm:$0xf]
        %v1114 = vld [vmem:[#allocation2 + $0x18] sm:$0xf]
        %v1115 = vld [vmem:[#allocation2 + $0x20] sm:$0x8]
        %v1116 = vld [vmem:[#allocation2 + $0x24] sm:$0xf]
        %v1117 = vld [vmem:[#allocation2 + $0x28] sm:$0xf]
        %v1118 = vld [vmem:[#allocation2 + $0x30] sm:$0x8]
        %v1119 = vld [vmem:[#allocation2 + $0x34] sm:$0xf]
        %v1120 = vld [vmem:[#allocation2 + $0x38] sm:$0xf]
        %v1121 = vld [vmem:[#allocation2 + $0x40] sm:$0x8]
        %v1122 = vld [vmem:[#allocation2 + $0x44] sm:$0xf]
        %v1123 = vld [vmem:[#allocation2 + $0x48] sm:$0xf]
        %v1124 = vld [vmem:[#allocation2 + $0x50] sm:$0x8]
        %v1125 = vld [vmem:[#allocation2 + $0x54] sm:$0xf]
        %v1126 = vld [vmem:[#allocation2 + $0x58] sm:$0xf]
        %v1127 = vld [vmem:[#allocation2 + $0x60] sm:$0x8]
        %v1128 = vld [vmem:[#allocation2 + $0x64] sm:$0xf]
        %v1129 = vld [vmem:[#allocation2 + $0x68] sm:$0xf]
        %v1130 = vld [vmem:[#allocation2 + $0x70] sm:$0x8]
        %v1131 = vld [vmem:[#allocation2 + $0x74] sm:$0xf]
        %v1132 = vld [vmem:[#allocation2 + $0x78] sm:$0xf]
        %v1133 = vld [vmem:[#allocation2 + $0x80] sm:$0x8]
        %v1134 = vld [vmem:[#allocation2 + $0x84] sm:$0xf]
        %v1135 = vld [vmem:[#allocation2 + $0x88] sm:$0xf]
        %v1136 = vld [vmem:[#allocation2 + $0x90] sm:$0x8]
        %v1137 = vld [vmem:[#allocation2 + $0x94] sm:$0xf]
        %v1138 = vld [vmem:[#allocation2 + $0x98] sm:$0xf]
        %v1139 = vld [vmem:[#allocation2 + $0xa0] sm:$0x8]
        %v1140 = vld [vmem:[#allocation2 + $0xa4] sm:$0xf]
        %v1141 = vld [vmem:[#allocation2 + $0xa8] sm:$0xf]
        %v1142 = vld [vmem:[#allocation2 + $0xb0] sm:$0x8]
        %v1143 = vld [vmem:[#allocation2 + $0xb4] sm:$0xf]
        %v1144 = vld [vmem:[#allocation2 + $0xb8] sm:$0xf]
        %v1145 = vld [vmem:[#allocation2 + $0xc0] sm:$0x8]
        %v1146 = vld [vmem:[#allocation2 + $0xc4] sm:$0xf]
        %v1147 = vld [vmem:[#allocation2 + $0xc8] sm:$0xf]
        %v1148 = vld [vmem:[#allocation2 + $0xd0] sm:$0x8]
        %v1149 = vld [vmem:[#allocation2 + $0xd4] sm:$0xf]
        %v1150 = vld [vmem:[#allocation2 + $0xd8] sm:$0xf]
        %v1151 = vld [vmem:[#allocation2 + $0xe0] sm:$0x8]
        %v1152 = vld [vmem:[#allocation2 + $0xe4] sm:$0xf]
        %v1153 = vld [vmem:[#allocation2 + $0xe8] sm:$0xf]
        %v1154 = vld [vmem:[#allocation2 + $0xf0] sm:$0x8]
        %v1155 = vld [vmem:[#allocation2 + $0xf4] sm:$0xf]
        %v1156 = vld [vmem:[#allocation2 + $0xf8] sm:$0xf]
        %v1157 = vld [vmem:[#allocation2 + $0x100] sm:$0x8]
        %v1158 = vld [vmem:[#allocation2 + $0x104] sm:$0xf]
        %v1159 = vld [vmem:[#allocation2 + $0x108] sm:$0xf]
        %v1160 = vld [vmem:[#allocation2 + $0x110] sm:$0x8]
        %v1161 = vld [vmem:[#allocation2 + $0x114] sm:$0xf]
        %v1162 = vld [vmem:[#allocation2 + $0x118] sm:$0xf]
        %vm1163 = vsmask.f32 256
        %vm1164 = vsmask.f32 4368
        %vm1165 = vmor %vm1163, %vm1164
        %v1167 = vshrl.u32 %v1109, 16
        %v1169 = vrot.slane %v1167, 7
        %v1170 = vrot.slane %v1169, 4
        %v1172 = vshrl.u32 %v1110, 16
        %v1174 = vrot.slane %v1172, 7
        %v1175 = vshll.u32 %v1110, 16
        %v1177 = vor.u32 %v1174, %v1175
        %v1178 = vsel %vm1165, %v1170, %v1177
        %v1179 = vrot.slane %v1174, 4
        %v1181 = vshrl.u32 %v1111, 16
        %v1183 = vrot.slane %v1181, 7
        %v1184 = vshll.u32 %v1111, 16
        %v1186 = vor.u32 %v1183, %v1184
        %v1187 = vsel %vm1165, %v1179, %v1186
        %v1189 = vshrl.u32 %v1112, 16
        %v1191 = vrot.slane %v1189, 7
        %v1192 = vrot.slane %v1191, 4
        %v1194 = vshrl.u32 %v1113, 16
        %v1196 = vrot.slane %v1194, 7
        %v1197 = vshll.u32 %v1113, 16
        %v1199 = vor.u32 %v1196, %v1197
        %v1200 = vsel %vm1165, %v1192, %v1199
        %v1201 = vrot.slane %v1196, 4
        %v1203 = vshrl.u32 %v1114, 16
        %v1205 = vrot.slane %v1203, 7
        %v1206 = vshll.u32 %v1114, 16
        %v1208 = vor.u32 %v1205, %v1206
        %v1209 = vsel %vm1165, %v1201, %v1208
        %v1211 = vshrl.u32 %v1115, 16
        %v1213 = vrot.slane %v1211, 7
        %v1214 = vrot.slane %v1213, 4
        %v1216 = vshrl.u32 %v1116, 16
        %v1218 = vrot.slane %v1216, 7
        %v1219 = vshll.u32 %v1116, 16
        %v1221 = vor.u32 %v1218, %v1219
        %v1222 = vsel %vm1165, %v1214, %v1221
        %v1223 = vrot.slane %v1218, 4
        %v1225 = vshrl.u32 %v1117, 16
        %v1227 = vrot.slane %v1225, 7
        %v1228 = vshll.u32 %v1117, 16
        %v1230 = vor.u32 %v1227, %v1228
        %v1231 = vsel %vm1165, %v1223, %v1230
        %v1233 = vshrl.u32 %v1118, 16
        %v1235 = vrot.slane %v1233, 7
        %v1236 = vrot.slane %v1235, 4
        %v1238 = vshrl.u32 %v1119, 16
        %v1240 = vrot.slane %v1238, 7
        %v1241 = vshll.u32 %v1119, 16
        %v1243 = vor.u32 %v1240, %v1241
        %v1244 = vsel %vm1165, %v1236, %v1243
        %v1245 = vrot.slane %v1240, 4
        %v1247 = vshrl.u32 %v1120, 16
        %v1249 = vrot.slane %v1247, 7
        %v1250 = vshll.u32 %v1120, 16
        %v1252 = vor.u32 %v1249, %v1250
        %v1253 = vsel %vm1165, %v1245, %v1252
        %v1255 = vshrl.u32 %v1121, 16
        %v1257 = vrot.slane %v1255, 7
        %v1258 = vrot.slane %v1257, 4
        %v1260 = vshrl.u32 %v1122, 16
        %v1262 = vrot.slane %v1260, 7
        %v1263 = vshll.u32 %v1122, 16
        %v1265 = vor.u32 %v1262, %v1263
        %v1266 = vsel %vm1165, %v1258, %v1265
        %v1267 = vrot.slane %v1262, 4
        %v1269 = vshrl.u32 %v1123, 16
        %v1271 = vrot.slane %v1269, 7
        %v1272 = vshll.u32 %v1123, 16
        %v1274 = vor.u32 %v1271, %v1272
        %v1275 = vsel %vm1165, %v1267, %v1274
        %v1277 = vshrl.u32 %v1124, 16
        %v1279 = vrot.slane %v1277, 7
        %v1280 = vrot.slane %v1279, 4
        %v1282 = vshrl.u32 %v1125, 16
        %v1284 = vrot.slane %v1282, 7
        %v1285 = vshll.u32 %v1125, 16
        %v1287 = vor.u32 %v1284, %v1285
        %v1288 = vsel %vm1165, %v1280, %v1287
        %v1289 = vrot.slane %v1284, 4
        %v1291 = vshrl.u32 %v1126, 16
        %v1293 = vrot.slane %v1291, 7
        %v1294 = vshll.u32 %v1126, 16
        %v1296 = vor.u32 %v1293, %v1294
        %v1297 = vsel %vm1165, %v1289, %v1296
        %v1299 = vshrl.u32 %v1127, 16
        %v1301 = vrot.slane %v1299, 7
        %v1302 = vrot.slane %v1301, 4
        %v1304 = vshrl.u32 %v1128, 16
        %v1306 = vrot.slane %v1304, 7
        %v1307 = vshll.u32 %v1128, 16
        %v1309 = vor.u32 %v1306, %v1307
        %v1310 = vsel %vm1165, %v1302, %v1309
        %v1311 = vrot.slane %v1306, 4
        %v1313 = vshrl.u32 %v1129, 16
        %v1315 = vrot.slane %v1313, 7
        %v1316 = vshll.u32 %v1129, 16
        %v1318 = vor.u32 %v1315, %v1316
        %v1319 = vsel %vm1165, %v1311, %v1318
        %v1321 = vshrl.u32 %v1130, 16
        %v1323 = vrot.slane %v1321, 7
        %v1324 = vrot.slane %v1323, 4
        %v1326 = vshrl.u32 %v1131, 16
        %v1328 = vrot.slane %v1326, 7
        %v1329 = vshll.u32 %v1131, 16
        %v1331 = vor.u32 %v1328, %v1329
        %v1332 = vsel %vm1165, %v1324, %v1331
        %v1333 = vrot.slane %v1328, 4
        %v1335 = vshrl.u32 %v1132, 16
        %v1337 = vrot.slane %v1335, 7
        %v1338 = vshll.u32 %v1132, 16
        %v1340 = vor.u32 %v1337, %v1338
        %v1341 = vsel %vm1165, %v1333, %v1340
        %v1343 = vshrl.u32 %v1133, 16
        %v1345 = vrot.slane %v1343, 7
        %v1346 = vrot.slane %v1345, 4
        %v1348 = vshrl.u32 %v1134, 16
        %v1350 = vrot.slane %v1348, 7
        %v1351 = vshll.u32 %v1134, 16
        %v1353 = vor.u32 %v1350, %v1351
        %v1354 = vsel %vm1165, %v1346, %v1353
        %v1355 = vrot.slane %v1350, 4
        %v1357 = vshrl.u32 %v1135, 16
        %v1359 = vrot.slane %v1357, 7
        %v1360 = vshll.u32 %v1135, 16
        %v1362 = vor.u32 %v1359, %v1360
        %v1363 = vsel %vm1165, %v1355, %v1362
        %v1365 = vshrl.u32 %v1136, 16
        %v1367 = vrot.slane %v1365, 7
        %v1368 = vrot.slane %v1367, 4
        %v1370 = vshrl.u32 %v1137, 16
        %v1372 = vrot.slane %v1370, 7
        %v1373 = vshll.u32 %v1137, 16
        %v1375 = vor.u32 %v1372, %v1373
        %v1376 = vsel %vm1165, %v1368, %v1375
        %v1377 = vrot.slane %v1372, 4
        %v1379 = vshrl.u32 %v1138, 16
        %v1381 = vrot.slane %v1379, 7
        %v1382 = vshll.u32 %v1138, 16
        %v1384 = vor.u32 %v1381, %v1382
        %v1385 = vsel %vm1165, %v1377, %v1384
        %v1387 = vshrl.u32 %v1139, 16
        %v1389 = vrot.slane %v1387, 7
        %v1390 = vrot.slane %v1389, 4
        %v1392 = vshrl.u32 %v1140, 16
        %v1394 = vrot.slane %v1392, 7
        %v1395 = vshll.u32 %v1140, 16
        %v1397 = vor.u32 %v1394, %v1395
        %v1398 = vsel %vm1165, %v1390, %v1397
        %v1399 = vrot.slane %v1394, 4
        %v1401 = vshrl.u32 %v1141, 16
        %v1403 = vrot.slane %v1401, 7
        %v1404 = vshll.u32 %v1141, 16
        %v1406 = vor.u32 %v1403, %v1404
        %v1407 = vsel %vm1165, %v1399, %v1406
        %v1409 = vshrl.u32 %v1142, 16
        %v1411 = vrot.slane %v1409, 7
        %v1412 = vrot.slane %v1411, 4
        %v1414 = vshrl.u32 %v1143, 16
        %v1416 = vrot.slane %v1414, 7
        %v1417 = vshll.u32 %v1143, 16
        %v1419 = vor.u32 %v1416, %v1417
        %v1420 = vsel %vm1165, %v1412, %v1419
        %v1421 = vrot.slane %v1416, 4
        %v1423 = vshrl.u32 %v1144, 16
        %v1425 = vrot.slane %v1423, 7
        %v1426 = vshll.u32 %v1144, 16
        %v1428 = vor.u32 %v1425, %v1426
        %v1429 = vsel %vm1165, %v1421, %v1428
        %v1431 = vshrl.u32 %v1145, 16
        %v1433 = vrot.slane %v1431, 7
        %v1434 = vrot.slane %v1433, 4
        %v1436 = vshrl.u32 %v1146, 16
        %v1438 = vrot.slane %v1436, 7
        %v1439 = vshll.u32 %v1146, 16
        %v1441 = vor.u32 %v1438, %v1439
        %v1442 = vsel %vm1165, %v1434, %v1441
        %v1443 = vrot.slane %v1438, 4
        %v1445 = vshrl.u32 %v1147, 16
        %v1447 = vrot.slane %v1445, 7
        %v1448 = vshll.u32 %v1147, 16
        %v1450 = vor.u32 %v1447, %v1448
        %v1451 = vsel %vm1165, %v1443, %v1450
        %v1453 = vshrl.u32 %v1148, 16
        %v1455 = vrot.slane %v1453, 7
        %v1456 = vrot.slane %v1455, 4
        %v1458 = vshrl.u32 %v1149, 16
        %v1460 = vrot.slane %v1458, 7
        %v1461 = vshll.u32 %v1149, 16
        %v1463 = vor.u32 %v1460, %v1461
        %v1464 = vsel %vm1165, %v1456, %v1463
        %v1465 = vrot.slane %v1460, 4
        %v1467 = vshrl.u32 %v1150, 16
        %v1469 = vrot.slane %v1467, 7
        %v1470 = vshll.u32 %v1150, 16
        %v1472 = vor.u32 %v1469, %v1470
        %v1473 = vsel %vm1165, %v1465, %v1472
        %v1475 = vshrl.u32 %v1151, 16
        %v1477 = vrot.slane %v1475, 7
        %v1478 = vrot.slane %v1477, 4
        %v1480 = vshrl.u32 %v1152, 16
        %v1482 = vrot.slane %v1480, 7
        %v1483 = vshll.u32 %v1152, 16
        %v1485 = vor.u32 %v1482, %v1483
        %v1486 = vsel %vm1165, %v1478, %v1485
        %v1487 = vrot.slane %v1482, 4
        %v1489 = vshrl.u32 %v1153, 16
        %v1491 = vrot.slane %v1489, 7
        %v1492 = vshll.u32 %v1153, 16
        %v1494 = vor.u32 %v1491, %v1492
        %v1495 = vsel %vm1165, %v1487, %v1494
        %v1497 = vshrl.u32 %v1154, 16
        %v1499 = vrot.slane %v1497, 7
        %v1500 = vrot.slane %v1499, 4
        %v1502 = vshrl.u32 %v1155, 16
        %v1504 = vrot.slane %v1502, 7
        %v1505 = vshll.u32 %v1155, 16
        %v1507 = vor.u32 %v1504, %v1505
        %v1508 = vsel %vm1165, %v1500, %v1507
        %v1509 = vrot.slane %v1504, 4
        %v1511 = vshrl.u32 %v1156, 16
        %v1513 = vrot.slane %v1511, 7
        %v1514 = vshll.u32 %v1156, 16
        %v1516 = vor.u32 %v1513, %v1514
        %v1517 = vsel %vm1165, %v1509, %v1516
        %v1519 = vshrl.u32 %v1157, 16
        %v1521 = vrot.slane %v1519, 7
        %v1522 = vrot.slane %v1521, 4
        %v1524 = vshrl.u32 %v1158, 16
        %v1526 = vrot.slane %v1524, 7
        %v1527 = vshll.u32 %v1158, 16
        %v1529 = vor.u32 %v1526, %v1527
        %v1530 = vsel %vm1165, %v1522, %v1529
        %v1531 = vrot.slane %v1526, 4
        %v1533 = vshrl.u32 %v1159, 16
        %v1535 = vrot.slane %v1533, 7
        %v1536 = vshll.u32 %v1159, 16
        %v1538 = vor.u32 %v1535, %v1536
        %v1539 = vsel %vm1165, %v1531, %v1538
        %v1541 = vshrl.u32 %v1160, 16
        %v1543 = vrot.slane %v1541, 7
        %v1544 = vrot.slane %v1543, 4
        %v1546 = vshrl.u32 %v1161, 16
        %v1548 = vrot.slane %v1546, 7
        %v1549 = vshll.u32 %v1161, 16
        %v1551 = vor.u32 %v1548, %v1549
        %v1552 = vsel %vm1165, %v1544, %v1551
        %v1553 = vrot.slane %v1548, 4
        %v1555 = vshrl.u32 %v1162, 16
        %v1557 = vrot.slane %v1555, 7
        %v1558 = vshll.u32 %v1162, 16
        %v1560 = vor.u32 %v1557, %v1558
        %v1561 = vsel %vm1165, %v1553, %v1560
        %1598 = vst.msk [vmem:[#allocation3] sm:$0xf] %vm314, %v1178
        %1599 = vst.msk [vmem:[#allocation3 + $0x4] sm:$0xf] %vm314, %v1187
        %1600 = vst.msk [vmem:[#allocation3 + $0x8] sm:$0xf] %vm314, %v1200
        %1601 = vst.msk [vmem:[#allocation3 + $0xc] sm:$0xf] %vm314, %v1209
        %1602 = vst.msk [vmem:[#allocation3 + $0x10] sm:$0xf] %vm314, %v1222
        %1603 = vst.msk [vmem:[#allocation3 + $0x14] sm:$0xf] %vm314, %v1231
        %1604 = vst.msk [vmem:[#allocation3 + $0x18] sm:$0xf] %vm314, %v1244
        %1605 = vst.msk [vmem:[#allocation3 + $0x1c] sm:$0xf] %vm314, %v1253
        %1606 = vst.msk [vmem:[#allocation3 + $0x20] sm:$0xf] %vm314, %v1266
        %1607 = vst.msk [vmem:[#allocation3 + $0x24] sm:$0xf] %vm314, %v1275
        %1608 = vst.msk [vmem:[#allocation3 + $0x28] sm:$0xf] %vm314, %v1288
        %1609 = vst.msk [vmem:[#allocation3 + $0x2c] sm:$0xf] %vm314, %v1297
        %1610 = vst.msk [vmem:[#allocation3 + $0x30] sm:$0xf] %vm314, %v1310
        %1611 = vst.msk [vmem:[#allocation3 + $0x34] sm:$0xf] %vm314, %v1319
        %1612 = vst.msk [vmem:[#allocation3 + $0x38] sm:$0xf] %vm314, %v1332
        %1613 = vst.msk [vmem:[#allocation3 + $0x3c] sm:$0xf] %vm314, %v1341
        %1614 = vst.msk [vmem:[#allocation3 + $0x40] sm:$0xf] %vm314, %v1354
        %1615 = vst.msk [vmem:[#allocation3 + $0x44] sm:$0xf] %vm314, %v1363
        %1616 = vst.msk [vmem:[#allocation3 + $0x48] sm:$0xf] %vm314, %v1376
        %1617 = vst.msk [vmem:[#allocation3 + $0x4c] sm:$0xf] %vm314, %v1385
        %1618 = vst.msk [vmem:[#allocation3 + $0x50] sm:$0xf] %vm314, %v1398
        %1619 = vst.msk [vmem:[#allocation3 + $0x54] sm:$0xf] %vm314, %v1407
        %1620 = vst.msk [vmem:[#allocation3 + $0x58] sm:$0xf] %vm314, %v1420
        %1621 = vst.msk [vmem:[#allocation3 + $0x5c] sm:$0xf] %vm314, %v1429
        %1622 = vst.msk [vmem:[#allocation3 + $0x60] sm:$0xf] %vm314, %v1442
        %1623 = vst.msk [vmem:[#allocation3 + $0x64] sm:$0xf] %vm314, %v1451
        %1624 = vst.msk [vmem:[#allocation3 + $0x68] sm:$0xf] %vm314, %v1464
        %1625 = vst.msk [vmem:[#allocation3 + $0x6c] sm:$0xf] %vm314, %v1473
        %1626 = vst.msk [vmem:[#allocation3 + $0x70] sm:$0xf] %vm314, %v1486
        %1627 = vst.msk [vmem:[#allocation3 + $0x74] sm:$0xf] %vm314, %v1495
        %1628 = vst.msk [vmem:[#allocation3 + $0x78] sm:$0xf] %vm314, %v1508
        %1629 = vst.msk [vmem:[#allocation3 + $0x7c] sm:$0xf] %vm314, %v1517
        %1630 = vst.msk [vmem:[#allocation3 + $0x80] sm:$0xf] %vm314, %v1530
        %1631 = vst.msk [vmem:[#allocation3 + $0x84] sm:$0xf] %vm314, %v1539
        %1632 = vst.msk [vmem:[#allocation3 + $0x88] sm:$0xf] %vm314, %v1552
        %1633 = vst.msk [vmem:[#allocation3 + $0x8c] sm:$0xf] %vm314, %v1561
        %v1634 = vld [vmem:[#allocation2 + $0x4] sm:$0xf]
        %v1635 = vld [vmem:[#allocation2 + $0x8] sm:$0xf]
        %v1636 = vld [vmem:[#allocation2 + $0x14] sm:$0xf]
        %v1637 = vld [vmem:[#allocation2 + $0x18] sm:$0xf]
        %v1638 = vld [vmem:[#allocation2 + $0x24] sm:$0xf]
        %v1639 = vld [vmem:[#allocation2 + $0x28] sm:$0xf]
        %v1640 = vld [vmem:[#allocation2 + $0x34] sm:$0xf]
        %v1641 = vld [vmem:[#allocation2 + $0x38] sm:$0xf]
        %v1642 = vld [vmem:[#allocation2 + $0x44] sm:$0xf]
        %v1643 = vld [vmem:[#allocation2 + $0x48] sm:$0xf]
        %v1644 = vld [vmem:[#allocation2 + $0x54] sm:$0xf]
        %v1645 = vld [vmem:[#allocation2 + $0x58] sm:$0xf]
        %v1646 = vld [vmem:[#allocation2 + $0x64] sm:$0xf]
        %v1647 = vld [vmem:[#allocation2 + $0x68] sm:$0xf]
        %v1648 = vld [vmem:[#allocation2 + $0x74] sm:$0xf]
        %v1649 = vld [vmem:[#allocation2 + $0x78] sm:$0xf]
        %v1650 = vld [vmem:[#allocation2 + $0x84] sm:$0xf]
        %v1651 = vld [vmem:[#allocation2 + $0x88] sm:$0xf]
        %v1652 = vld [vmem:[#allocation2 + $0x94] sm:$0xf]
        %v1653 = vld [vmem:[#allocation2 + $0x98] sm:$0xf]
        %v1654 = vld [vmem:[#allocation2 + $0xa4] sm:$0xf]
        %v1655 = vld [vmem:[#allocation2 + $0xa8] sm:$0xf]
        %v1656 = vld [vmem:[#allocation2 + $0xb4] sm:$0xf]
        %v1657 = vld [vmem:[#allocation2 + $0xb8] sm:$0xf]
        %v1658 = vld [vmem:[#allocation2 + $0xc4] sm:$0xf]
        %v1659 = vld [vmem:[#allocation2 + $0xc8] sm:$0xf]
        %v1660 = vld [vmem:[#allocation2 + $0xd4] sm:$0xf]
        %v1661 = vld [vmem:[#allocation2 + $0xd8] sm:$0xf]
        %v1662 = vld [vmem:[#allocation2 + $0xe4] sm:$0xf]
        %v1663 = vld [vmem:[#allocation2 + $0xe8] sm:$0xf]
        %v1664 = vld [vmem:[#allocation2 + $0xf4] sm:$0xf]
        %v1665 = vld [vmem:[#allocation2 + $0xf8] sm:$0xf]
        %v1666 = vld [vmem:[#allocation2 + $0x104] sm:$0xf]
        %v1667 = vld [vmem:[#allocation2 + $0x108] sm:$0xf]
        %v1668 = vld [vmem:[#allocation2 + $0x114] sm:$0xf]
        %v1669 = vld [vmem:[#allocation2 + $0x118] sm:$0xf]
        %1706 = vrot.lane.b32.xlu0 %v1634, 36
        %v1707 = vpop.permute.xlu0 %1706
        %1708 = vrot.lane.b32.xlu0 %v1635, 36
        %v1709 = vpop.permute.xlu0 %1708
        %1710 = vrot.lane.b32.xlu0 %v1636, 36
        %v1711 = vpop.permute.xlu0 %1710
        %1712 = vrot.lane.b32.xlu0 %v1637, 36
        %v1713 = vpop.permute.xlu0 %1712
        %1714 = vrot.lane.b32.xlu0 %v1638, 36
        %v1715 = vpop.permute.xlu0 %1714
        %1716 = vrot.lane.b32.xlu0 %v1639, 36
        %v1717 = vpop.permute.xlu0 %1716
        %1718 = vrot.lane.b32.xlu0 %v1640, 36
        %v1719 = vpop.permute.xlu0 %1718
        %1720 = vrot.lane.b32.xlu0 %v1641, 36
        %v1721 = vpop.permute.xlu0 %1720
        %1722 = vrot.lane.b32.xlu0 %v1642, 36
        %v1723 = vpop.permute.xlu0 %1722
        %1724 = vrot.lane.b32.xlu0 %v1643, 36
        %v1725 = vpop.permute.xlu0 %1724
        %1726 = vrot.lane.b32.xlu0 %v1644, 36
        %v1727 = vpop.permute.xlu0 %1726
        %1728 = vrot.lane.b32.xlu0 %v1645, 36
        %v1729 = vpop.permute.xlu0 %1728
        %1730 = vrot.lane.b32.xlu0 %v1646, 36
        %v1731 = vpop.permute.xlu0 %1730
        %1732 = vrot.lane.b32.xlu0 %v1647, 36
        %v1733 = vpop.permute.xlu0 %1732
        %1734 = vrot.lane.b32.xlu0 %v1648, 36
        %v1735 = vpop.permute.xlu0 %1734
        %1736 = vrot.lane.b32.xlu0 %v1649, 36
        %v1737 = vpop.permute.xlu0 %1736
        %1738 = vrot.lane.b32.xlu0 %v1650, 36
        %v1739 = vpop.permute.xlu0 %1738
        %1740 = vrot.lane.b32.xlu0 %v1651, 36
        %v1741 = vpop.permute.xlu0 %1740
        %1742 = vrot.lane.b32.xlu0 %v1652, 36
        %v1743 = vpop.permute.xlu0 %1742
        %1744 = vrot.lane.b32.xlu0 %v1653, 36
        %v1745 = vpop.permute.xlu0 %1744
        %1746 = vrot.lane.b32.xlu0 %v1654, 36
        %v1747 = vpop.permute.xlu0 %1746
        %1748 = vrot.lane.b32.xlu0 %v1655, 36
        %v1749 = vpop.permute.xlu0 %1748
        %1750 = vrot.lane.b32.xlu0 %v1656, 36
        %v1751 = vpop.permute.xlu0 %1750
        %1752 = vrot.lane.b32.xlu0 %v1657, 36
        %v1753 = vpop.permute.xlu0 %1752
        %1754 = vrot.lane.b32.xlu0 %v1658, 36
        %v1755 = vpop.permute.xlu0 %1754
        %1756 = vrot.lane.b32.xlu0 %v1659, 36
        %v1757 = vpop.permute.xlu0 %1756
        %1758 = vrot.lane.b32.xlu0 %v1660, 36
        %v1759 = vpop.permute.xlu0 %1758
        %1760 = vrot.lane.b32.xlu0 %v1661, 36
        %v1761 = vpop.permute.xlu0 %1760
        %1762 = vrot.lane.b32.xlu0 %v1662, 36
        %v1763 = vpop.permute.xlu0 %1762
        %1764 = vrot.lane.b32.xlu0 %v1663, 36
        %v1765 = vpop.permute.xlu0 %1764
        %1766 = vrot.lane.b32.xlu0 %v1664, 36
        %v1767 = vpop.permute.xlu0 %1766
        %1768 = vrot.lane.b32.xlu0 %v1665, 36
        %v1769 = vpop.permute.xlu0 %1768
        %1770 = vrot.lane.b32.xlu0 %v1666, 36
        %v1771 = vpop.permute.xlu0 %1770
        %1772 = vrot.lane.b32.xlu0 %v1667, 36
        %v1773 = vpop.permute.xlu0 %1772
        %1774 = vrot.lane.b32.xlu0 %v1668, 36
        %v1775 = vpop.permute.xlu0 %1774
        %1776 = vrot.lane.b32.xlu0 %v1669, 36
        %v1777 = vpop.permute.xlu0 %1776
        %vm1814 = vcmask 584992
        %1815 = vst.msk [vmem:[#allocation3] sm:$0xf] %vm1814, %v1707
        %1816 = vst.msk [vmem:[#allocation3 + $0x4] sm:$0xf] %vm1814, %v1709
        %1817 = vst.msk [vmem:[#allocation3 + $0x8] sm:$0xf] %vm1814, %v1711
        %1818 = vst.msk [vmem:[#allocation3 + $0xc] sm:$0xf] %vm1814, %v1713
        %1819 = vst.msk [vmem:[#allocation3 + $0x10] sm:$0xf] %vm1814, %v1715
        %1820 = vst.msk [vmem:[#allocation3 + $0x14] sm:$0xf] %vm1814, %v1717
        %1821 = vst.msk [vmem:[#allocation3 + $0x18] sm:$0xf] %vm1814, %v1719
        %1822 = vst.msk [vmem:[#allocation3 + $0x1c] sm:$0xf] %vm1814, %v1721
        %1823 = vst.msk [vmem:[#allocation3 + $0x20] sm:$0xf] %vm1814, %v1723
        %1824 = vst.msk [vmem:[#allocation3 + $0x24] sm:$0xf] %vm1814, %v1725
        %1825 = vst.msk [vmem:[#allocation3 + $0x28] sm:$0xf] %vm1814, %v1727
        %1826 = vst.msk [vmem:[#allocation3 + $0x2c] sm:$0xf] %vm1814, %v1729
        %1827 = vst.msk [vmem:[#allocation3 + $0x30] sm:$0xf] %vm1814, %v1731
        %1828 = vst.msk [vmem:[#allocation3 + $0x34] sm:$0xf] %vm1814, %v1733
        %1829 = vst.msk [vmem:[#allocation3 + $0x38] sm:$0xf] %vm1814, %v1735
        %1830 = vst.msk [vmem:[#allocation3 + $0x3c] sm:$0xf] %vm1814, %v1737
        %1831 = vst.msk [vmem:[#allocation3 + $0x40] sm:$0xf] %vm1814, %v1739
        %1832 = vst.msk [vmem:[#allocation3 + $0x44] sm:$0xf] %vm1814, %v1741
        %1833 = vst.msk [vmem:[#allocation3 + $0x48] sm:$0xf] %vm1814, %v1743
        %1834 = vst.msk [vmem:[#allocation3 + $0x4c] sm:$0xf] %vm1814, %v1745
        %1835 = vst.msk [vmem:[#allocation3 + $0x50] sm:$0xf] %vm1814, %v1747
        %1836 = vst.msk [vmem:[#allocation3 + $0x54] sm:$0xf] %vm1814, %v1749
        %1837 = vst.msk [vmem:[#allocation3 + $0x58] sm:$0xf] %vm1814, %v1751
        %1838 = vst.msk [vmem:[#allocation3 + $0x5c] sm:$0xf] %vm1814, %v1753
        %1839 = vst.msk [vmem:[#allocation3 + $0x60] sm:$0xf] %vm1814, %v1755
        %1840 = vst.msk [vmem:[#allocation3 + $0x64] sm:$0xf] %vm1814, %v1757
        %1841 = vst.msk [vmem:[#allocation3 + $0x68] sm:$0xf] %vm1814, %v1759
        %1842 = vst.msk [vmem:[#allocation3 + $0x6c] sm:$0xf] %vm1814, %v1761
        %1843 = vst.msk [vmem:[#allocation3 + $0x70] sm:$0xf] %vm1814, %v1763
        %1844 = vst.msk [vmem:[#allocation3 + $0x74] sm:$0xf] %vm1814, %v1765
        %1845 = vst.msk [vmem:[#allocation3 + $0x78] sm:$0xf] %vm1814, %v1767
        %1846 = vst.msk [vmem:[#allocation3 + $0x7c] sm:$0xf] %vm1814, %v1769
        %1847 = vst.msk [vmem:[#allocation3 + $0x80] sm:$0xf] %vm1814, %v1771
        %1848 = vst.msk [vmem:[#allocation3 + $0x84] sm:$0xf] %vm1814, %v1773
        %1849 = vst.msk [vmem:[#allocation3 + $0x88] sm:$0xf] %vm1814, %v1775
        %1850 = vst.msk [vmem:[#allocation3 + $0x8c] sm:$0xf] %vm1814, %v1777
        %v1851 = vld [vmem:[#allocation2 + $0x4] sm:$0xf]
        %v1852 = vld [vmem:[#allocation2 + $0x8] sm:$0xf]
        %v1853 = vld [vmem:[#allocation2 + $0xc] sm:$0x1]
        %v1854 = vld [vmem:[#allocation2 + $0x14] sm:$0xf]
        %v1855 = vld [vmem:[#allocation2 + $0x18] sm:$0xf]
        %v1856 = vld [vmem:[#allocation2 + $0x1c] sm:$0x1]
        %v1857 = vld [vmem:[#allocation2 + $0x24] sm:$0xf]
        %v1858 = vld [vmem:[#allocation2 + $0x28] sm:$0xf]
        %v1859 = vld [vmem:[#allocation2 + $0x2c] sm:$0x1]
        %v1860 = vld [vmem:[#allocation2 + $0x34] sm:$0xf]
        %v1861 = vld [vmem:[#allocation2 + $0x38] sm:$0xf]
        %v1862 = vld [vmem:[#allocation2 + $0x3c] sm:$0x1]
        %v1863 = vld [vmem:[#allocation2 + $0x44] sm:$0xf]
        %v1864 = vld [vmem:[#allocation2 + $0x48] sm:$0xf]
        %v1865 = vld [vmem:[#allocation2 + $0x4c] sm:$0x1]
        %v1866 = vld [vmem:[#allocation2 + $0x54] sm:$0xf]
        %v1867 = vld [vmem:[#allocation2 + $0x58] sm:$0xf]
        %v1868 = vld [vmem:[#allocation2 + $0x5c] sm:$0x1]
        %v1869 = vld [vmem:[#allocation2 + $0x64] sm:$0xf]
        %v1870 = vld [vmem:[#allocation2 + $0x68] sm:$0xf]
        %v1871 = vld [vmem:[#allocation2 + $0x6c] sm:$0x1]
        %v1872 = vld [vmem:[#allocation2 + $0x74] sm:$0xf]
        %v1873 = vld [vmem:[#allocation2 + $0x78] sm:$0xf]
        %v1874 = vld [vmem:[#allocation2 + $0x7c] sm:$0x1]
        %v1875 = vld [vmem:[#allocation2 + $0x84] sm:$0xf]
        %v1876 = vld [vmem:[#allocation2 + $0x88] sm:$0xf]
        %v1877 = vld [vmem:[#allocation2 + $0x8c] sm:$0x1]
        %v1878 = vld [vmem:[#allocation2 + $0x94] sm:$0xf]
        %v1879 = vld [vmem:[#allocation2 + $0x98] sm:$0xf]
        %v1880 = vld [vmem:[#allocation2 + $0x9c] sm:$0x1]
        %v1881 = vld [vmem:[#allocation2 + $0xa4] sm:$0xf]
        %v1882 = vld [vmem:[#allocation2 + $0xa8] sm:$0xf]
        %v1883 = vld [vmem:[#allocation2 + $0xac] sm:$0x1]
        %v1884 = vld [vmem:[#allocation2 + $0xb4] sm:$0xf]
        %v1885 = vld [vmem:[#allocation2 + $0xb8] sm:$0xf]
        %v1886 = vld [vmem:[#allocation2 + $0xbc] sm:$0x1]
        %v1887 = vld [vmem:[#allocation2 + $0xc4] sm:$0xf]
        %v1888 = vld [vmem:[#allocation2 + $0xc8] sm:$0xf]
        %v1889 = vld [vmem:[#allocation2 + $0xcc] sm:$0x1]
        %v1890 = vld [vmem:[#allocation2 + $0xd4] sm:$0xf]
        %v1891 = vld [vmem:[#allocation2 + $0xd8] sm:$0xf]
        %v1892 = vld [vmem:[#allocation2 + $0xdc] sm:$0x1]
        %v1893 = vld [vmem:[#allocation2 + $0xe4] sm:$0xf]
        %v1894 = vld [vmem:[#allocation2 + $0xe8] sm:$0xf]
        %v1895 = vld [vmem:[#allocation2 + $0xec] sm:$0x1]
        %v1896 = vld [vmem:[#allocation2 + $0xf4] sm:$0xf]
        %v1897 = vld [vmem:[#allocation2 + $0xf8] sm:$0xf]
        %v1898 = vld [vmem:[#allocation2 + $0xfc] sm:$0x1]
        %v1899 = vld [vmem:[#allocation2 + $0x104] sm:$0xf]
        %v1900 = vld [vmem:[#allocation2 + $0x108] sm:$0xf]
        %v1901 = vld [vmem:[#allocation2 + $0x10c] sm:$0x1]
        %v1902 = vld [vmem:[#allocation2 + $0x114] sm:$0xf]
        %v1903 = vld [vmem:[#allocation2 + $0x118] sm:$0xf]
        %v1904 = vld [vmem:[#allocation2 + $0x11c] sm:$0x1]
        %vm1905 = vsmask.f32 3328
        %vm1906 = vsmask.f32 7440
        %vm1907 = vmor %vm1905, %vm1906
        %v1909 = vshrl.u32 %v1851, 16
        %v1911 = vrot.slane %v1909, 4
        %v1912 = vshll.u32 %v1851, 16
        %v1914 = vrot.slane %v1912, 5
        %v1915 = vor.u32 %v1911, %v1914
        %v1916 = vrot.slane %v1915, 4
        %v1918 = vshll.u32 %v1852, 16
        %v1920 = vrot.slane %v1918, 5
        %v1921 = vsel %vm1907, %v1916, %v1920
        %v1922 = vshrl.u32 %v1852, 16
        %v1924 = vrot.slane %v1922, 4
        %v1925 = vor.u32 %v1924, %v1920
        %v1926 = vrot.slane %v1925, 4
        %v1928 = vshll.u32 %v1853, 16
        %v1930 = vrot.slane %v1928, 5
        %v1931 = vsel %vm1907, %v1926, %v1930
        %v1933 = vshrl.u32 %v1854, 16
        %v1935 = vrot.slane %v1933, 4
        %v1936 = vshll.u32 %v1854, 16
        %v1938 = vrot.slane %v1936, 5
        %v1939 = vor.u32 %v1935, %v1938
        %v1940 = vrot.slane %v1939, 4
        %v1942 = vshll.u32 %v1855, 16
        %v1944 = vrot.slane %v1942, 5
        %v1945 = vsel %vm1907, %v1940, %v1944
        %v1946 = vshrl.u32 %v1855, 16
        %v1948 = vrot.slane %v1946, 4
        %v1949 = vor.u32 %v1948, %v1944
        %v1950 = vrot.slane %v1949, 4
        %v1952 = vshll.u32 %v1856, 16
        %v1954 = vrot.slane %v1952, 5
        %v1955 = vsel %vm1907, %v1950, %v1954
        %v1957 = vshrl.u32 %v1857, 16
        %v1959 = vrot.slane %v1957, 4
        %v1960 = vshll.u32 %v1857, 16
        %v1962 = vrot.slane %v1960, 5
        %v1963 = vor.u32 %v1959, %v1962
        %v1964 = vrot.slane %v1963, 4
        %v1966 = vshll.u32 %v1858, 16
        %v1968 = vrot.slane %v1966, 5
        %v1969 = vsel %vm1907, %v1964, %v1968
        %v1970 = vshrl.u32 %v1858, 16
        %v1972 = vrot.slane %v1970, 4
        %v1973 = vor.u32 %v1972, %v1968
        %v1974 = vrot.slane %v1973, 4
        %v1976 = vshll.u32 %v1859, 16
        %v1978 = vrot.slane %v1976, 5
        %v1979 = vsel %vm1907, %v1974, %v1978
        %v1981 = vshrl.u32 %v1860, 16
        %v1983 = vrot.slane %v1981, 4
        %v1984 = vshll.u32 %v1860, 16
        %v1986 = vrot.slane %v1984, 5
        %v1987 = vor.u32 %v1983, %v1986
        %v1988 = vrot.slane %v1987, 4
        %v1990 = vshll.u32 %v1861, 16
        %v1992 = vrot.slane %v1990, 5
        %v1993 = vsel %vm1907, %v1988, %v1992
        %v1994 = vshrl.u32 %v1861, 16
        %v1996 = vrot.slane %v1994, 4
        %v1997 = vor.u32 %v1996, %v1992
        %v1998 = vrot.slane %v1997, 4
        %v2000 = vshll.u32 %v1862, 16
        %v2002 = vrot.slane %v2000, 5
        %v2003 = vsel %vm1907, %v1998, %v2002
        %v2005 = vshrl.u32 %v1863, 16
        %v2007 = vrot.slane %v2005, 4
        %v2008 = vshll.u32 %v1863, 16
        %v2010 = vrot.slane %v2008, 5
        %v2011 = vor.u32 %v2007, %v2010
        %v2012 = vrot.slane %v2011, 4
        %v2014 = vshll.u32 %v1864, 16
        %v2016 = vrot.slane %v2014, 5
        %v2017 = vsel %vm1907, %v2012, %v2016
        %v2018 = vshrl.u32 %v1864, 16
        %v2020 = vrot.slane %v2018, 4
        %v2021 = vor.u32 %v2020, %v2016
        %v2022 = vrot.slane %v2021, 4
        %v2024 = vshll.u32 %v1865, 16
        %v2026 = vrot.slane %v2024, 5
        %v2027 = vsel %vm1907, %v2022, %v2026
        %v2029 = vshrl.u32 %v1866, 16
        %v2031 = vrot.slane %v2029, 4
        %v2032 = vshll.u32 %v1866, 16
        %v2034 = vrot.slane %v2032, 5
        %v2035 = vor.u32 %v2031, %v2034
        %v2036 = vrot.slane %v2035, 4
        %v2038 = vshll.u32 %v1867, 16
        %v2040 = vrot.slane %v2038, 5
        %v2041 = vsel %vm1907, %v2036, %v2040
        %v2042 = vshrl.u32 %v1867, 16
        %v2044 = vrot.slane %v2042, 4
        %v2045 = vor.u32 %v2044, %v2040
        %v2046 = vrot.slane %v2045, 4
        %v2048 = vshll.u32 %v1868, 16
        %v2050 = vrot.slane %v2048, 5
        %v2051 = vsel %vm1907, %v2046, %v2050
        %v2053 = vshrl.u32 %v1869, 16
        %v2055 = vrot.slane %v2053, 4
        %v2056 = vshll.u32 %v1869, 16
        %v2058 = vrot.slane %v2056, 5
        %v2059 = vor.u32 %v2055, %v2058
        %v2060 = vrot.slane %v2059, 4
        %v2062 = vshll.u32 %v1870, 16
        %v2064 = vrot.slane %v2062, 5
        %v2065 = vsel %vm1907, %v2060, %v2064
        %v2066 = vshrl.u32 %v1870, 16
        %v2068 = vrot.slane %v2066, 4
        %v2069 = vor.u32 %v2068, %v2064
        %v2070 = vrot.slane %v2069, 4
        %v2072 = vshll.u32 %v1871, 16
        %v2074 = vrot.slane %v2072, 5
        %v2075 = vsel %vm1907, %v2070, %v2074
        %v2077 = vshrl.u32 %v1872, 16
        %v2079 = vrot.slane %v2077, 4
        %v2080 = vshll.u32 %v1872, 16
        %v2082 = vrot.slane %v2080, 5
        %v2083 = vor.u32 %v2079, %v2082
        %v2084 = vrot.slane %v2083, 4
        %v2086 = vshll.u32 %v1873, 16
        %v2088 = vrot.slane %v2086, 5
        %v2089 = vsel %vm1907, %v2084, %v2088
        %v2090 = vshrl.u32 %v1873, 16
        %v2092 = vrot.slane %v2090, 4
        %v2093 = vor.u32 %v2092, %v2088
        %v2094 = vrot.slane %v2093, 4
        %v2096 = vshll.u32 %v1874, 16
        %v2098 = vrot.slane %v2096, 5
        %v2099 = vsel %vm1907, %v2094, %v2098
        %v2101 = vshrl.u32 %v1875, 16
        %v2103 = vrot.slane %v2101, 4
        %v2104 = vshll.u32 %v1875, 16
        %v2106 = vrot.slane %v2104, 5
        %v2107 = vor.u32 %v2103, %v2106
        %v2108 = vrot.slane %v2107, 4
        %v2110 = vshll.u32 %v1876, 16
        %v2112 = vrot.slane %v2110, 5
        %v2113 = vsel %vm1907, %v2108, %v2112
        %v2114 = vshrl.u32 %v1876, 16
        %v2116 = vrot.slane %v2114, 4
        %v2117 = vor.u32 %v2116, %v2112
        %v2118 = vrot.slane %v2117, 4
        %v2120 = vshll.u32 %v1877, 16
        %v2122 = vrot.slane %v2120, 5
        %v2123 = vsel %vm1907, %v2118, %v2122
        %v2125 = vshrl.u32 %v1878, 16
        %v2127 = vrot.slane %v2125, 4
        %v2128 = vshll.u32 %v1878, 16
        %v2130 = vrot.slane %v2128, 5
        %v2131 = vor.u32 %v2127, %v2130
        %v2132 = vrot.slane %v2131, 4
        %v2134 = vshll.u32 %v1879, 16
        %v2136 = vrot.slane %v2134, 5
        %v2137 = vsel %vm1907, %v2132, %v2136
        %v2138 = vshrl.u32 %v1879, 16
        %v2140 = vrot.slane %v2138, 4
        %v2141 = vor.u32 %v2140, %v2136
        %v2142 = vrot.slane %v2141, 4
        %v2144 = vshll.u32 %v1880, 16
        %v2146 = vrot.slane %v2144, 5
        %v2147 = vsel %vm1907, %v2142, %v2146
        %v2149 = vshrl.u32 %v1881, 16
        %v2151 = vrot.slane %v2149, 4
        %v2152 = vshll.u32 %v1881, 16
        %v2154 = vrot.slane %v2152, 5
        %v2155 = vor.u32 %v2151, %v2154
        %v2156 = vrot.slane %v2155, 4
        %v2158 = vshll.u32 %v1882, 16
        %v2160 = vrot.slane %v2158, 5
        %v2161 = vsel %vm1907, %v2156, %v2160
        %v2162 = vshrl.u32 %v1882, 16
        %v2164 = vrot.slane %v2162, 4
        %v2165 = vor.u32 %v2164, %v2160
        %v2166 = vrot.slane %v2165, 4
        %v2168 = vshll.u32 %v1883, 16
        %v2170 = vrot.slane %v2168, 5
        %v2171 = vsel %vm1907, %v2166, %v2170
        %v2173 = vshrl.u32 %v1884, 16
        %v2175 = vrot.slane %v2173, 4
        %v2176 = vshll.u32 %v1884, 16
        %v2178 = vrot.slane %v2176, 5
        %v2179 = vor.u32 %v2175, %v2178
        %v2180 = vrot.slane %v2179, 4
        %v2182 = vshll.u32 %v1885, 16
        %v2184 = vrot.slane %v2182, 5
        %v2185 = vsel %vm1907, %v2180, %v2184
        %v2186 = vshrl.u32 %v1885, 16
        %v2188 = vrot.slane %v2186, 4
        %v2189 = vor.u32 %v2188, %v2184
        %v2190 = vrot.slane %v2189, 4
        %v2192 = vshll.u32 %v1886, 16
        %v2194 = vrot.slane %v2192, 5
        %v2195 = vsel %vm1907, %v2190, %v2194
        %v2197 = vshrl.u32 %v1887, 16
        %v2199 = vrot.slane %v2197, 4
        %v2200 = vshll.u32 %v1887, 16
        %v2202 = vrot.slane %v2200, 5
        %v2203 = vor.u32 %v2199, %v2202
        %v2204 = vrot.slane %v2203, 4
        %v2206 = vshll.u32 %v1888, 16
        %v2208 = vrot.slane %v2206, 5
        %v2209 = vsel %vm1907, %v2204, %v2208
        %v2210 = vshrl.u32 %v1888, 16
        %v2212 = vrot.slane %v2210, 4
        %v2213 = vor.u32 %v2212, %v2208
        %v2214 = vrot.slane %v2213, 4
        %v2216 = vshll.u32 %v1889, 16
        %v2218 = vrot.slane %v2216, 5
        %v2219 = vsel %vm1907, %v2214, %v2218
        %v2221 = vshrl.u32 %v1890, 16
        %v2223 = vrot.slane %v2221, 4
        %v2224 = vshll.u32 %v1890, 16
        %v2226 = vrot.slane %v2224, 5
        %v2227 = vor.u32 %v2223, %v2226
        %v2228 = vrot.slane %v2227, 4
        %v2230 = vshll.u32 %v1891, 16
        %v2232 = vrot.slane %v2230, 5
        %v2233 = vsel %vm1907, %v2228, %v2232
        %v2234 = vshrl.u32 %v1891, 16
        %v2236 = vrot.slane %v2234, 4
        %v2237 = vor.u32 %v2236, %v2232
        %v2238 = vrot.slane %v2237, 4
        %v2240 = vshll.u32 %v1892, 16
        %v2242 = vrot.slane %v2240, 5
        %v2243 = vsel %vm1907, %v2238, %v2242
        %v2245 = vshrl.u32 %v1893, 16
        %v2247 = vrot.slane %v2245, 4
        %v2248 = vshll.u32 %v1893, 16
        %v2250 = vrot.slane %v2248, 5
        %v2251 = vor.u32 %v2247, %v2250
        %v2252 = vrot.slane %v2251, 4
        %v2254 = vshll.u32 %v1894, 16
        %v2256 = vrot.slane %v2254, 5
        %v2257 = vsel %vm1907, %v2252, %v2256
        %v2258 = vshrl.u32 %v1894, 16
        %v2260 = vrot.slane %v2258, 4
        %v2261 = vor.u32 %v2260, %v2256
        %v2262 = vrot.slane %v2261, 4
        %v2264 = vshll.u32 %v1895, 16
        %v2266 = vrot.slane %v2264, 5
        %v2267 = vsel %vm1907, %v2262, %v2266
        %v2269 = vshrl.u32 %v1896, 16
        %v2271 = vrot.slane %v2269, 4
        %v2272 = vshll.u32 %v1896, 16
        %v2274 = vrot.slane %v2272, 5
        %v2275 = vor.u32 %v2271, %v2274
        %v2276 = vrot.slane %v2275, 4
        %v2278 = vshll.u32 %v1897, 16
        %v2280 = vrot.slane %v2278, 5
        %v2281 = vsel %vm1907, %v2276, %v2280
        %v2282 = vshrl.u32 %v1897, 16
        %v2284 = vrot.slane %v2282, 4
        %v2285 = vor.u32 %v2284, %v2280
        %v2286 = vrot.slane %v2285, 4
        %v2288 = vshll.u32 %v1898, 16
        %v2290 = vrot.slane %v2288, 5
        %v2291 = vsel %vm1907, %v2286, %v2290
        %v2293 = vshrl.u32 %v1899, 16
        %v2295 = vrot.slane %v2293, 4
        %v2296 = vshll.u32 %v1899, 16
        %v2298 = vrot.slane %v2296, 5
        %v2299 = vor.u32 %v2295, %v2298
        %v2300 = vrot.slane %v2299, 4
        %v2302 = vshll.u32 %v1900, 16
        %v2304 = vrot.slane %v2302, 5
        %v2305 = vsel %vm1907, %v2300, %v2304
        %v2306 = vshrl.u32 %v1900, 16
        %v2308 = vrot.slane %v2306, 4
        %v2309 = vor.u32 %v2308, %v2304
        %v2310 = vrot.slane %v2309, 4
        %v2312 = vshll.u32 %v1901, 16
        %v2314 = vrot.slane %v2312, 5
        %v2315 = vsel %vm1907, %v2310, %v2314
        %v2317 = vshrl.u32 %v1902, 16
        %v2319 = vrot.slane %v2317, 4
        %v2320 = vshll.u32 %v1902, 16
        %v2322 = vrot.slane %v2320, 5
        %v2323 = vor.u32 %v2319, %v2322
        %v2324 = vrot.slane %v2323, 4
        %v2326 = vshll.u32 %v1903, 16
        %v2328 = vrot.slane %v2326, 5
        %v2329 = vsel %vm1907, %v2324, %v2328
        %v2330 = vshrl.u32 %v1903, 16
        %v2332 = vrot.slane %v2330, 4
        %v2333 = vor.u32 %v2332, %v2328
        %v2334 = vrot.slane %v2333, 4
        %v2336 = vshll.u32 %v1904, 16
        %v2338 = vrot.slane %v2336, 5
        %v2339 = vsel %vm1907, %v2334, %v2338
        %2340 = vrot.lane.b32.xlu0 %v1921, 72
        %v2341 = vpop.permute.xlu0 %2340
        %2342 = vrot.lane.b32.xlu0 %v1931, 72
        %v2343 = vpop.permute.xlu0 %2342
        %2344 = vrot.lane.b32.xlu0 %v1945, 72
        %v2345 = vpop.permute.xlu0 %2344
        %2346 = vrot.lane.b32.xlu0 %v1955, 72
        %v2347 = vpop.permute.xlu0 %2346
        %2348 = vrot.lane.b32.xlu0 %v1969, 72
        %v2349 = vpop.permute.xlu0 %2348
        %2350 = vrot.lane.b32.xlu0 %v1979, 72
        %v2351 = vpop.permute.xlu0 %2350
        %2352 = vrot.lane.b32.xlu0 %v1993, 72
        %v2353 = vpop.permute.xlu0 %2352
        %2354 = vrot.lane.b32.xlu0 %v2003, 72
        %v2355 = vpop.permute.xlu0 %2354
        %2356 = vrot.lane.b32.xlu0 %v2017, 72
        %v2357 = vpop.permute.xlu0 %2356
        %2358 = vrot.lane.b32.xlu0 %v2027, 72
        %v2359 = vpop.permute.xlu0 %2358
        %2360 = vrot.lane.b32.xlu0 %v2041, 72
        %v2361 = vpop.permute.xlu0 %2360
        %2362 = vrot.lane.b32.xlu0 %v2051, 72
        %v2363 = vpop.permute.xlu0 %2362
        %2364 = vrot.lane.b32.xlu0 %v2065, 72
        %v2365 = vpop.permute.xlu0 %2364
        %2366 = vrot.lane.b32.xlu0 %v2075, 72
        %v2367 = vpop.permute.xlu0 %2366
        %2368 = vrot.lane.b32.xlu0 %v2089, 72
        %v2369 = vpop.permute.xlu0 %2368
        %2370 = vrot.lane.b32.xlu0 %v2099, 72
        %v2371 = vpop.permute.xlu0 %2370
        %2372 = vrot.lane.b32.xlu0 %v2113, 72
        %v2373 = vpop.permute.xlu0 %2372
        %2374 = vrot.lane.b32.xlu0 %v2123, 72
        %v2375 = vpop.permute.xlu0 %2374
        %2376 = vrot.lane.b32.xlu0 %v2137, 72
        %v2377 = vpop.permute.xlu0 %2376
        %2378 = vrot.lane.b32.xlu0 %v2147, 72
        %v2379 = vpop.permute.xlu0 %2378
        %2380 = vrot.lane.b32.xlu0 %v2161, 72
        %v2381 = vpop.permute.xlu0 %2380
        %2382 = vrot.lane.b32.xlu0 %v2171, 72
        %v2383 = vpop.permute.xlu0 %2382
        %2384 = vrot.lane.b32.xlu0 %v2185, 72
        %v2385 = vpop.permute.xlu0 %2384
        %2386 = vrot.lane.b32.xlu0 %v2195, 72
        %v2387 = vpop.permute.xlu0 %2386
        %2388 = vrot.lane.b32.xlu0 %v2209, 72
        %v2389 = vpop.permute.xlu0 %2388
        %2390 = vrot.lane.b32.xlu0 %v2219, 72
        %v2391 = vpop.permute.xlu0 %2390
        %2392 = vrot.lane.b32.xlu0 %v2233, 72
        %v2393 = vpop.permute.xlu0 %2392
        %2394 = vrot.lane.b32.xlu0 %v2243, 72
        %v2395 = vpop.permute.xlu0 %2394
        %2396 = vrot.lane.b32.xlu0 %v2257, 72
        %v2397 = vpop.permute.xlu0 %2396
        %2398 = vrot.lane.b32.xlu0 %v2267, 72
        %v2399 = vpop.permute.xlu0 %2398
        %2400 = vrot.lane.b32.xlu0 %v2281, 72
        %v2401 = vpop.permute.xlu0 %2400
        %2402 = vrot.lane.b32.xlu0 %v2291, 72
        %v2403 = vpop.permute.xlu0 %2402
        %2404 = vrot.lane.b32.xlu0 %v2305, 72
        %v2405 = vpop.permute.xlu0 %2404
        %2406 = vrot.lane.b32.xlu0 %v2315, 72
        %v2407 = vpop.permute.xlu0 %2406
        %2408 = vrot.lane.b32.xlu0 %v2329, 72
        %v2409 = vpop.permute.xlu0 %2408
        %2410 = vrot.lane.b32.xlu0 %v2339, 72
        %v2411 = vpop.permute.xlu0 %2410
        %vm2448 = vcmask 880192
        %2449 = vst.msk [vmem:[#allocation3] sm:$0xf] %vm2448, %v2341
        %2450 = vst.msk [vmem:[#allocation3 + $0x4] sm:$0xf] %vm2448, %v2343
        %2451 = vst.msk [vmem:[#allocation3 + $0x8] sm:$0xf] %vm2448, %v2345
        %2452 = vst.msk [vmem:[#allocation3 + $0xc] sm:$0xf] %vm2448, %v2347
        %2453 = vst.msk [vmem:[#allocation3 + $0x10] sm:$0xf] %vm2448, %v2349
        %2454 = vst.msk [vmem:[#allocation3 + $0x14] sm:$0xf] %vm2448, %v2351
        %2455 = vst.msk [vmem:[#allocation3 + $0x18] sm:$0xf] %vm2448, %v2353
        %2456 = vst.msk [vmem:[#allocation3 + $0x1c] sm:$0xf] %vm2448, %v2355
        %2457 = vst.msk [vmem:[#allocation3 + $0x20] sm:$0xf] %vm2448, %v2357
        %2458 = vst.msk [vmem:[#allocation3 + $0x24] sm:$0xf] %vm2448, %v2359
        %2459 = vst.msk [vmem:[#allocation3 + $0x28] sm:$0xf] %vm2448, %v2361
        %2460 = vst.msk [vmem:[#allocation3 + $0x2c] sm:$0xf] %vm2448, %v2363
        %2461 = vst.msk [vmem:[#allocation3 + $0x30] sm:$0xf] %vm2448, %v2365
        %2462 = vst.msk [vmem:[#allocation3 + $0x34] sm:$0xf] %vm2448, %v2367
        %2463 = vst.msk [vmem:[#allocation3 + $0x38] sm:$0xf] %vm2448, %v2369
        %2464 = vst.msk [vmem:[#allocation3 + $0x3c] sm:$0xf] %vm2448, %v2371
        %2465 = vst.msk [vmem:[#allocation3 + $0x40] sm:$0xf] %vm2448, %v2373
        %2466 = vst.msk [vmem:[#allocation3 + $0x44] sm:$0xf] %vm2448, %v2375
        %2467 = vst.msk [vmem:[#allocation3 + $0x48] sm:$0xf] %vm2448, %v2377
        %2468 = vst.msk [vmem:[#allocation3 + $0x4c] sm:$0xf] %vm2448, %v2379
        %2469 = vst.msk [vmem:[#allocation3 + $0x50] sm:$0xf] %vm2448, %v2381
        %2470 = vst.msk [vmem:[#allocation3 + $0x54] sm:$0xf] %vm2448, %v2383
        %2471 = vst.msk [vmem:[#allocation3 + $0x58] sm:$0xf] %vm2448, %v2385
        %2472 = vst.msk [vmem:[#allocation3 + $0x5c] sm:$0xf] %vm2448, %v2387
        %2473 = vst.msk [vmem:[#allocation3 + $0x60] sm:$0xf] %vm2448, %v2389
        %2474 = vst.msk [vmem:[#allocation3 + $0x64] sm:$0xf] %vm2448, %v2391
        %2475 = vst.msk [vmem:[#allocation3 + $0x68] sm:$0xf] %vm2448, %v2393
        %2476 = vst.msk [vmem:[#allocation3 + $0x6c] sm:$0xf] %vm2448, %v2395
        %2477 = vst.msk [vmem:[#allocation3 + $0x70] sm:$0xf] %vm2448, %v2397
        %2478 = vst.msk [vmem:[#allocation3 + $0x74] sm:$0xf] %vm2448, %v2399
        %2479 = vst.msk [vmem:[#allocation3 + $0x78] sm:$0xf] %vm2448, %v2401
        %2480 = vst.msk [vmem:[#allocation3 + $0x7c] sm:$0xf] %vm2448, %v2403
        %2481 = vst.msk [vmem:[#allocation3 + $0x80] sm:$0xf] %vm2448, %v2405
        %2482 = vst.msk [vmem:[#allocation3 + $0x84] sm:$0xf] %vm2448, %v2407
        %2483 = vst.msk [vmem:[#allocation3 + $0x88] sm:$0xf] %vm2448, %v2409
        %2484 = vst.msk [vmem:[#allocation3 + $0x8c] sm:$0xf] %vm2448, %v2411
        %v2485 = vld [vmem:[%s3] sm:$0x1]
        %v2486 = vld [vmem:[#allocation3] sm:$0xf]
        %v2487 = vld [vmem:[#allocation3 + $0x4] sm:$0xf]
        %v2488 = vld [vmem:[#allocation3 + $0x8] sm:$0xf]
        %v2489 = vld [vmem:[#allocation3 + $0xc] sm:$0xf]
        %v2490 = vld [vmem:[#allocation3 + $0x10] sm:$0xf]
        %v2491 = vld [vmem:[#allocation3 + $0x14] sm:$0xf]
        %v2492 = vld [vmem:[#allocation3 + $0x18] sm:$0xf]
        %v2493 = vld [vmem:[#allocation3 + $0x1c] sm:$0xf]
        %v2494 = vld [vmem:[#allocation3 + $0x20] sm:$0xf]
        %v2495 = vld [vmem:[#allocation3 + $0x24] sm:$0xf]
        %v2496 = vld [vmem:[#allocation3 + $0x28] sm:$0xf]
        %v2497 = vld [vmem:[#allocation3 + $0x2c] sm:$0xf]
        %v2498 = vld [vmem:[#allocation3 + $0x30] sm:$0xf]
        %v2499 = vld [vmem:[#allocation3 + $0x34] sm:$0xf]
        %v2500 = vld [vmem:[#allocation3 + $0x38] sm:$0xf]
        %v2501 = vld [vmem:[#allocation3 + $0x3c] sm:$0xf]
        %v2502 = vld [vmem:[%s2] sm:$0xf]
        %v2503 = vld [vmem:[%s2 + $0x4] sm:$0xf]
        %v2504 = vld [vmem:[%s2 + $0x8] sm:$0xf]
        %v2505 = vld [vmem:[%s2 + $0xc] sm:$0xf]
        %v2506 = vld [vmem:[%s2 + $0x10] sm:$0xf]
        %v2507 = vld [vmem:[%s2 + $0x14] sm:$0xf]
        %v2508 = vld [vmem:[%s2 + $0x18] sm:$0xf]
        %v2509 = vld [vmem:[%s2 + $0x1c] sm:$0xf]
        %v2510 = vld [vmem:[%s2 + $0x20] sm:$0xf]
        %v2511 = vld [vmem:[%s2 + $0x24] sm:$0xf]
        %v2512 = vld [vmem:[%s2 + $0x28] sm:$0xf]
        %v2513 = vld [vmem:[%s2 + $0x2c] sm:$0xf]
        %v2514 = vld [vmem:[%s2 + $0x30] sm:$0xf]
        %v2515 = vld [vmem:[%s2 + $0x34] sm:$0xf]
        %v2516 = vld [vmem:[%s2 + $0x38] sm:$0xf]
        %v2517 = vld [vmem:[%s2 + $0x3c] sm:$0xf]
        %v2518 = vld [vmem:[#allocation3 + $0x40] sm:$0xf]
        %v2519 = vld [vmem:[#allocation3 + $0x44] sm:$0xf]
        %s2520 = scalar_lea.vmem %s2, 64
        %v2521 = vld [vmem:[%s2520] sm:$0xf]
        %v2522 = vld [vmem:[%s2520 + $0x4] sm:$0xf]
        %v2523 = vld [vmem:[%s2520 + $0x8] sm:$0xf]
        %v2524 = vld [vmem:[%s2520 + $0xc] sm:$0xf]
        %v2525 = vld [vmem:[%s2520 + $0x10] sm:$0xf]
        %v2526 = vld [vmem:[%s2520 + $0x14] sm:$0xf]
        %v2527 = vld [vmem:[%s2520 + $0x18] sm:$0xf]
        %v2528 = vld [vmem:[%s2520 + $0x1c] sm:$0xf]
        %v2529 = vld [vmem:[%s2520 + $0x20] sm:$0xf]
        %v2530 = vld [vmem:[%s2520 + $0x24] sm:$0xf]
        %v2531 = vld [vmem:[%s2520 + $0x28] sm:$0xf]
        %v2532 = vld [vmem:[%s2520 + $0x2c] sm:$0xf]
        %v2533 = vld [vmem:[%s2520 + $0x30] sm:$0xf]
        %v2534 = vld [vmem:[%s2520 + $0x34] sm:$0xf]
        %v2535 = vld [vmem:[%s2520 + $0x38] sm:$0xf]
        %v2536 = vld [vmem:[%s2520 + $0x3c] sm:$0xf]
        %v2553 = vunpack.c.l.b16 %v2488
        %v2554 = vunpack.c.l.b16 %v2489
        %v2555 = vunpack.c.l.b16 %v2490
        %v2556 = vunpack.c.l.b16 %v2491
        %v2557 = vunpack.c.l.b16 %v2492
        %v2558 = vunpack.c.l.b16 %v2493
        %v2559 = vunpack.c.l.b16 %v2494
        %v2560 = vunpack.c.l.b16 %v2495
        %v2561 = vunpack.c.l.b16 %v2496
        %v2562 = vunpack.c.l.b16 %v2497
        %v2563 = vunpack.c.l.b16 %v2498
        %v2564 = vunpack.c.l.b16 %v2499
        %v2565 = vunpack.c.l.b16 %v2500
        %v2566 = vunpack.c.l.b16 %v2501
        %v2567 = vunpack.c.l.b16 %v2518
        %v2568 = vunpack.c.l.b16 %v2519
        %v2569 = vpack.c.b16 %v2554, %v2553
        %v2570 = vpack.c.b16 %v2556, %v2555
        %v2571 = vpack.c.b16 %v2558, %v2557
        %v2572 = vpack.c.b16 %v2560, %v2559
        %v2573 = vpack.c.b16 %v2562, %v2561
        %v2574 = vpack.c.b16 %v2564, %v2563
        %v2575 = vpack.c.b16 %v2566, %v2565
        %v2576 = vpack.c.b16 %v2568, %v2567
        %v2601 = vunpack.c.l.b16 %v2521
        %v2602 = vunpack.c.l.b16 %v2522
        %v2603 = vunpack.c.l.b16 %v2523
        %v2604 = vunpack.c.l.b16 %v2524
        %v2605 = vunpack.c.l.b16 %v2525
        %v2606 = vunpack.c.l.b16 %v2526
        %v2607 = vunpack.c.l.b16 %v2527
        %v2608 = vunpack.c.l.b16 %v2528
        %v2609 = vunpack.c.l.b16 %v2529
        %v2610 = vunpack.c.l.b16 %v2530
        %v2611 = vunpack.c.l.b16 %v2531
        %v2612 = vunpack.c.l.b16 %v2532
        %v2613 = vunpack.c.l.b16 %v2533
        %v2614 = vunpack.c.l.b16 %v2534
        %v2615 = vunpack.c.l.b16 %v2535
        %v2616 = vunpack.c.l.b16 %v2536
        %v2617 = vpack.c.b16 %v2602, %v2601
        %v2618 = vpack.c.b16 %v2604, %v2603
        %v2619 = vpack.c.b16 %v2606, %v2605
        %v2620 = vpack.c.b16 %v2608, %v2607
        %v2621 = vpack.c.b16 %v2610, %v2609
        %v2622 = vpack.c.b16 %v2612, %v2611
        %v2623 = vpack.c.b16 %v2614, %v2613
        %v2624 = vpack.c.b16 %v2616, %v2615
        %2633 = vmatpush.bf16.msra.mxu0 %v2624
        %2634 = vmatpush.bf16.msra.mxu0 %v2623
        %2635 = vmatpush.bf16.msra.mxu0 %v2622
        %2636 = vmatpush.bf16.msra.mxu0 %v2621
        %2637 = vmatpush.bf16.msra.mxu0 %v2620
        %2638 = vmatpush.bf16.msra.mxu0 %v2619
        %2639 = vmatpush.bf16.msra.mxu0 %v2618
        %2640 = vmatpush.bf16.msra.mxu0 %v2617
        %2641 = vmatmul.bf16.gmra.mxu0 %v2569
        %v2642 = vpop.f32.mrf.mxu0
        %v2643 = vadd.f32 0.0, %v2642
        %v2644 = vpop.f32.mrf.mxu0
        %v2645 = vadd.f32 0.0, %v2644
        %2646 = vmatmul.bf16.gmra.mxu0 %v2570
        %v2647 = vpop.f32.mrf.mxu0
        %v2648 = vadd.f32 0.0, %v2647
        %v2649 = vpop.f32.mrf.mxu0
        %v2650 = vadd.f32 0.0, %v2649
        %2651 = vmatmul.bf16.gmra.mxu0 %v2571
        %v2652 = vpop.f32.mrf.mxu0
        %v2653 = vadd.f32 0.0, %v2652
        %v2654 = vpop.f32.mrf.mxu0
        %v2655 = vadd.f32 0.0, %v2654
        %2656 = vmatmul.bf16.gmra.mxu0 %v2572
        %v2657 = vpop.f32.mrf.mxu0
        %v2658 = vadd.f32 0.0, %v2657
        %v2659 = vpop.f32.mrf.mxu0
        %v2660 = vadd.f32 0.0, %v2659
        %2661 = vmatmul.bf16.gmra.mxu0 %v2573
        %v2662 = vpop.f32.mrf.mxu0
        %v2663 = vadd.f32 0.0, %v2662
        %v2664 = vpop.f32.mrf.mxu0
        %v2665 = vadd.f32 0.0, %v2664
        %2666 = vmatmul.bf16.gmra.mxu0 %v2574
        %v2667 = vpop.f32.mrf.mxu0
        %v2668 = vadd.f32 0.0, %v2667
        %v2669 = vpop.f32.mrf.mxu0
        %v2670 = vadd.f32 0.0, %v2669
        %2671 = vmatmul.bf16.gmra.mxu0 %v2575
        %v2672 = vpop.f32.mrf.mxu0
        %v2673 = vadd.f32 0.0, %v2672
        %v2674 = vpop.f32.mrf.mxu0
        %v2675 = vadd.f32 0.0, %v2674
        %2676 = vmatmul.bf16.gmra.mxu0 %v2576
        %v2677 = vpop.f32.mrf.mxu0
        %v2678 = vadd.f32 0.0, %v2677
        %v2679 = vpop.f32.mrf.mxu0
        %v2680 = vadd.f32 0.0, %v2679
        %2681 = vdwg.mxu0
        %v2684 = vunpack.c.l.b16 %v2486
        %v2685 = vunpack.c.l.b16 %v2487
        %v2686 = vpack.c.b16 %v2685, %v2684
        %v2704 = vunpack.c.l.b16 %v2502
        %v2705 = vunpack.c.l.b16 %v2503
        %v2706 = vunpack.c.l.b16 %v2504
        %v2707 = vunpack.c.l.b16 %v2505
        %v2708 = vunpack.c.l.b16 %v2506
        %v2709 = vunpack.c.l.b16 %v2507
        %v2710 = vunpack.c.l.b16 %v2508
        %v2711 = vunpack.c.l.b16 %v2509
        %v2712 = vunpack.c.l.b16 %v2510
        %v2713 = vunpack.c.l.b16 %v2511
        %v2714 = vunpack.c.l.b16 %v2512
        %v2715 = vunpack.c.l.b16 %v2513
        %v2716 = vunpack.c.l.b16 %v2514
        %v2717 = vunpack.c.l.b16 %v2515
        %v2718 = vunpack.c.l.b16 %v2516
        %v2719 = vunpack.c.l.b16 %v2517
        %v2720 = vpack.c.b16 %v2705, %v2704
        %v2721 = vpack.c.b16 %v2707, %v2706
        %v2722 = vpack.c.b16 %v2709, %v2708
        %v2723 = vpack.c.b16 %v2711, %v2710
        %v2724 = vpack.c.b16 %v2713, %v2712
        %v2725 = vpack.c.b16 %v2715, %v2714
        %v2726 = vpack.c.b16 %v2717, %v2716
        %v2727 = vpack.c.b16 %v2719, %v2718
        %2736 = vmatpush.bf16.msra.mxu0 %v2727
        %2737 = vmatpush.bf16.msra.mxu0 %v2726
        %2738 = vmatpush.bf16.msra.mxu0 %v2725
        %2739 = vmatpush.bf16.msra.mxu0 %v2724
        %2740 = vmatpush.bf16.msra.mxu0 %v2723
        %2741 = vmatpush.bf16.msra.mxu0 %v2722
        %2742 = vmatpush.bf16.msra.mxu0 %v2721
        %2743 = vmatpush.bf16.msra.mxu0 %v2720
        %2744 = vmatmul.bf16.gmra.mxu0 %v2686
        %v2745 = vpop.f32.mrf.mxu0
        %v2746 = vadd.f32 %v2643, %v2745
        %v2747 = vpop.f32.mrf.mxu0
        %v2748 = vadd.f32 %v2645, %v2747
        %2749 = vmatmul.bf16.gmra.mxu0 %v2569
        %v2750 = vpop.f32.mrf.mxu0
        %v2751 = vadd.f32 %v2648, %v2750
        %v2752 = vpop.f32.mrf.mxu0
        %v2753 = vadd.f32 %v2650, %v2752
        %2754 = vmatmul.bf16.gmra.mxu0 %v2570
        %v2755 = vpop.f32.mrf.mxu0
        %v2756 = vadd.f32 %v2653, %v2755
        %v2757 = vpop.f32.mrf.mxu0
        %v2758 = vadd.f32 %v2655, %v2757
        %2759 = vmatmul.bf16.gmra.mxu0 %v2571
        %v2760 = vpop.f32.mrf.mxu0
        %v2761 = vadd.f32 %v2658, %v2760
        %v2762 = vpop.f32.mrf.mxu0
        %v2763 = vadd.f32 %v2660, %v2762
        %2764 = vmatmul.bf16.gmra.mxu0 %v2572
        %v2765 = vpop.f32.mrf.mxu0
        %v2766 = vadd.f32 %v2663, %v2765
        %v2767 = vpop.f32.mrf.mxu0
        %v2768 = vadd.f32 %v2665, %v2767
        %2769 = vmatmul.bf16.gmra.mxu0 %v2573
        %v2770 = vpop.f32.mrf.mxu0
        %v2771 = vadd.f32 %v2668, %v2770
        %v2772 = vpop.f32.mrf.mxu0
        %v2773 = vadd.f32 %v2670, %v2772
        %2774 = vmatmul.bf16.gmra.mxu0 %v2574
        %v2775 = vpop.f32.mrf.mxu0
        %v2776 = vadd.f32 %v2673, %v2775
        %v2777 = vpop.f32.mrf.mxu0
        %v2778 = vadd.f32 %v2675, %v2777
        %2779 = vmatmul.bf16.gmra.mxu0 %v2575
        %v2780 = vpop.f32.mrf.mxu0
        %v2781 = vadd.f32 %v2678, %v2780
        %v2782 = vpop.f32.mrf.mxu0
        %v2783 = vadd.f32 %v2680, %v2782
        %2784 = vdwg.mxu0
        %v2785 = vld [vmem:[#allocation3 + $0x10] sm:$0xf]
        %v2786 = vld [vmem:[#allocation3 + $0x14] sm:$0xf]
        %v2787 = vld [vmem:[#allocation3 + $0x18] sm:$0xf]
        %v2788 = vld [vmem:[#allocation3 + $0x1c] sm:$0xf]
        %v2789 = vld [vmem:[#allocation3 + $0x20] sm:$0xf]
        %v2790 = vld [vmem:[#allocation3 + $0x24] sm:$0xf]
        %v2791 = vld [vmem:[#allocation3 + $0x28] sm:$0xf]
        %v2792 = vld [vmem:[#allocation3 + $0x2c] sm:$0xf]
        %v2793 = vld [vmem:[#allocation3 + $0x30] sm:$0xf]
        %v2794 = vld [vmem:[#allocation3 + $0x34] sm:$0xf]
        %v2795 = vld [vmem:[#allocation3 + $0x38] sm:$0xf]
        %v2796 = vld [vmem:[#allocation3 + $0x3c] sm:$0xf]
        %v2797 = vld [vmem:[#allocation3 + $0x40] sm:$0xf]
        %v2798 = vld [vmem:[#allocation3 + $0x44] sm:$0xf]
        %v2799 = vld [vmem:[#allocation3 + $0x48] sm:$0xf]
        %v2800 = vld [vmem:[#allocation3 + $0x4c] sm:$0xf]
        %s2801 = scalar_lea.vmem %s2, 128
        %v2802 = vld [vmem:[%s2801] sm:$0xf]
        %v2803 = vld [vmem:[%s2801 + $0x4] sm:$0xf]
        %v2804 = vld [vmem:[%s2801 + $0x8] sm:$0xf]
        %v2805 = vld [vmem:[%s2801 + $0xc] sm:$0xf]
        %v2806 = vld [vmem:[%s2801 + $0x10] sm:$0xf]
        %v2807 = vld [vmem:[%s2801 + $0x14] sm:$0xf]
        %v2808 = vld [vmem:[%s2801 + $0x18] sm:$0xf]
        %v2809 = vld [vmem:[%s2801 + $0x1c] sm:$0xf]
        %v2810 = vld [vmem:[%s2801 + $0x20] sm:$0xf]
        %v2811 = vld [vmem:[%s2801 + $0x24] sm:$0xf]
        %v2812 = vld [vmem:[%s2801 + $0x28] sm:$0xf]
        %v2813 = vld [vmem:[%s2801 + $0x2c] sm:$0xf]
        %v2814 = vld [vmem:[%s2801 + $0x30] sm:$0xf]
        %v2815 = vld [vmem:[%s2801 + $0x34] sm:$0xf]
        %v2816 = vld [vmem:[%s2801 + $0x38] sm:$0xf]
        %v2817 = vld [vmem:[%s2801 + $0x3c] sm:$0xf]
        %v2834 = vunpack.c.l.b16 %v2785
        %v2835 = vunpack.c.l.b16 %v2786
        %v2836 = vunpack.c.l.b16 %v2787
        %v2837 = vunpack.c.l.b16 %v2788
        %v2838 = vunpack.c.l.b16 %v2789
        %v2839 = vunpack.c.l.b16 %v2790
        %v2840 = vunpack.c.l.b16 %v2791
        %v2841 = vunpack.c.l.b16 %v2792
        %v2842 = vunpack.c.l.b16 %v2793
        %v2843 = vunpack.c.l.b16 %v2794
        %v2844 = vunpack.c.l.b16 %v2795
        %v2845 = vunpack.c.l.b16 %v2796
        %v2846 = vunpack.c.l.b16 %v2797
        %v2847 = vunpack.c.l.b16 %v2798
        %v2848 = vunpack.c.l.b16 %v2799
        %v2849 = vunpack.c.l.b16 %v2800
        %v2850 = vpack.c.b16 %v2835, %v2834
        %v2851 = vpack.c.b16 %v2837, %v2836
        %v2852 = vpack.c.b16 %v2839, %v2838
        %v2853 = vpack.c.b16 %v2841, %v2840
        %v2854 = vpack.c.b16 %v2843, %v2842
        %v2855 = vpack.c.b16 %v2845, %v2844
        %v2856 = vpack.c.b16 %v2847, %v2846
        %v2857 = vpack.c.b16 %v2849, %v2848
        %v2882 = vunpack.c.l.b16 %v2802
        %v2883 = vunpack.c.l.b16 %v2803
        %v2884 = vunpack.c.l.b16 %v2804
        %v2885 = vunpack.c.l.b16 %v2805
        %v2886 = vunpack.c.l.b16 %v2806
        %v2887 = vunpack.c.l.b16 %v2807
        %v2888 = vunpack.c.l.b16 %v2808
        %v2889 = vunpack.c.l.b16 %v2809
        %v2890 = vunpack.c.l.b16 %v2810
        %v2891 = vunpack.c.l.b16 %v2811
        %v2892 = vunpack.c.l.b16 %v2812
        %v2893 = vunpack.c.l.b16 %v2813
        %v2894 = vunpack.c.l.b16 %v2814
        %v2895 = vunpack.c.l.b16 %v2815
        %v2896 = vunpack.c.l.b16 %v2816
        %v2897 = vunpack.c.l.b16 %v2817
        %v2898 = vpack.c.b16 %v2883, %v2882
        %v2899 = vpack.c.b16 %v2885, %v2884
        %v2900 = vpack.c.b16 %v2887, %v2886
        %v2901 = vpack.c.b16 %v2889, %v2888
        %v2902 = vpack.c.b16 %v2891, %v2890
        %v2903 = vpack.c.b16 %v2893, %v2892
        %v2904 = vpack.c.b16 %v2895, %v2894
        %v2905 = vpack.c.b16 %v2897, %v2896
        %2914 = vmatpush.bf16.msra.mxu0 %v2905
        %2915 = vmatpush.bf16.msra.mxu0 %v2904
        %2916 = vmatpush.bf16.msra.mxu0 %v2903
        %2917 = vmatpush.bf16.msra.mxu0 %v2902
        %2918 = vmatpush.bf16.msra.mxu0 %v2901
        %2919 = vmatpush.bf16.msra.mxu0 %v2900
        %2920 = vmatpush.bf16.msra.mxu0 %v2899
        %2921 = vmatpush.bf16.msra.mxu0 %v2898
        %2922 = vmatmul.bf16.gmra.mxu0 %v2850
        %v2923 = vpop.f32.mrf.mxu0
        %v2924 = vadd.f32 0.0, %v2923
        %v2925 = vpop.f32.mrf.mxu0
        %v2926 = vadd.f32 0.0, %v2925
        %2927 = vmatmul.bf16.gmra.mxu0 %v2851
        %v2928 = vpop.f32.mrf.mxu0
        %v2929 = vadd.f32 0.0, %v2928
        %v2930 = vpop.f32.mrf.mxu0
        %v2931 = vadd.f32 0.0, %v2930
        %2932 = vmatmul.bf16.gmra.mxu0 %v2852
        %v2933 = vpop.f32.mrf.mxu0
        %v2934 = vadd.f32 0.0, %v2933
        %v2935 = vpop.f32.mrf.mxu0
        %v2936 = vadd.f32 0.0, %v2935
        %2937 = vmatmul.bf16.gmra.mxu0 %v2853
        %v2938 = vpop.f32.mrf.mxu0
        %v2939 = vadd.f32 0.0, %v2938
        %v2940 = vpop.f32.mrf.mxu0
        %v2941 = vadd.f32 0.0, %v2940
        %2942 = vmatmul.bf16.gmra.mxu0 %v2854
        %v2943 = vpop.f32.mrf.mxu0
        %v2944 = vadd.f32 0.0, %v2943
        %v2945 = vpop.f32.mrf.mxu0
        %v2946 = vadd.f32 0.0, %v2945
        %2947 = vmatmul.bf16.gmra.mxu0 %v2855
        %v2948 = vpop.f32.mrf.mxu0
        %v2949 = vadd.f32 0.0, %v2948
        %v2950 = vpop.f32.mrf.mxu0
        %v2951 = vadd.f32 0.0, %v2950
        %2952 = vmatmul.bf16.gmra.mxu0 %v2856
        %v2953 = vpop.f32.mrf.mxu0
        %v2954 = vadd.f32 0.0, %v2953
        %v2955 = vpop.f32.mrf.mxu0
        %v2956 = vadd.f32 0.0, %v2955
        %2957 = vmatmul.bf16.gmra.mxu0 %v2857
        %v2958 = vpop.f32.mrf.mxu0
        %v2959 = vadd.f32 0.0, %v2958
        %v2960 = vpop.f32.mrf.mxu0
        %v2961 = vadd.f32 0.0, %v2960
        %2962 = vdwg.mxu0
        %v2963 = vadd.f32 %v2746, %v2924
        %v2964 = vadd.f32 %v2748, %v2926
        %v2965 = vadd.f32 %v2751, %v2929
        %v2966 = vadd.f32 %v2753, %v2931
        %v2967 = vadd.f32 %v2756, %v2934
        %v2968 = vadd.f32 %v2758, %v2936
        %v2969 = vadd.f32 %v2761, %v2939
        %v2970 = vadd.f32 %v2763, %v2941
        %v2971 = vadd.f32 %v2766, %v2944
        %v2972 = vadd.f32 %v2768, %v2946
        %v2973 = vadd.f32 %v2771, %v2949
        %v2974 = vadd.f32 %v2773, %v2951
        %v2975 = vadd.f32 %v2776, %v2954
        %v2976 = vadd.f32 %v2778, %v2956
        %v2977 = vadd.f32 %v2781, %v2959
        %v2978 = vadd.f32 %v2783, %v2961
        %v2980 = vperm.slane %v2485, 0
        %v2982 = vadd.f32 %v2963, %v2980
        %v2983 = vadd.f32 %v2964, %v2980
        %v2984 = vadd.f32 %v2965, %v2980
        %v2985 = vadd.f32 %v2966, %v2980
        %v2986 = vadd.f32 %v2967, %v2980
        %v2987 = vadd.f32 %v2968, %v2980
        %v2988 = vadd.f32 %v2969, %v2980
        %v2989 = vadd.f32 %v2970, %v2980
        %v2990 = vadd.f32 %v2971, %v2980
        %v2991 = vadd.f32 %v2972, %v2980
        %v2992 = vadd.f32 %v2973, %v2980
        %v2993 = vadd.f32 %v2974, %v2980
        %v2994 = vadd.f32 %v2975, %v2980
        %v2995 = vadd.f32 %v2976, %v2980
        %v2996 = vadd.f32 %v2977, %v2980
        %v2997 = vadd.f32 %v2978, %v2980
        %v2998 = vxor.u32 %v2982, 2147483648
        %v2999 = vxor.u32 %v2983, 2147483648
        %v3000 = vxor.u32 %v2984, 2147483648
        %v3001 = vxor.u32 %v2985, 2147483648
        %v3002 = vxor.u32 %v2986, 2147483648
        %v3003 = vxor.u32 %v2987, 2147483648
        %v3004 = vxor.u32 %v2988, 2147483648
        %v3005 = vxor.u32 %v2989, 2147483648
        %v3006 = vxor.u32 %v2990, 2147483648
        %v3007 = vxor.u32 %v2991, 2147483648
        %v3008 = vxor.u32 %v2992, 2147483648
        %v3009 = vxor.u32 %v2993, 2147483648
        %v3010 = vxor.u32 %v2994, 2147483648
        %v3011 = vxor.u32 %v2995, 2147483648
        %v3012 = vxor.u32 %v2996, 2147483648
        %v3013 = vxor.u32 %v2997, 2147483648
        %v3014 = vmul.f32 %v2998, 1.442695
        %v3015 = vpow.pop %v3014
        %v3016 = vmul.f32 %v2999, 1.442695
        %v3017 = vpow.pop %v3016
        %v3018 = vmul.f32 %v3000, 1.442695
        %v3019 = vpow.pop %v3018
        %v3020 = vmul.f32 %v3001, 1.442695
        %v3021 = vpow.pop %v3020
        %v3022 = vmul.f32 %v3002, 1.442695
        %v3023 = vpow.pop %v3022
        %v3024 = vmul.f32 %v3003, 1.442695
        %v3025 = vpow.pop %v3024
        %v3026 = vmul.f32 %v3004, 1.442695
        %v3027 = vpow.pop %v3026
        %v3028 = vmul.f32 %v3005, 1.442695
        %v3029 = vpow.pop %v3028
        %v3030 = vmul.f32 %v3006, 1.442695
        %v3031 = vpow.pop %v3030
        %v3032 = vmul.f32 %v3007, 1.442695
        %v3033 = vpow.pop %v3032
        %v3034 = vmul.f32 %v3008, 1.442695
        %v3035 = vpow.pop %v3034
        %v3036 = vmul.f32 %v3009, 1.442695
        %v3037 = vpow.pop %v3036
        %v3038 = vmul.f32 %v3010, 1.442695
        %v3039 = vpow.pop %v3038
        %v3040 = vmul.f32 %v3011, 1.442695
        %v3041 = vpow.pop %v3040
        %v3042 = vmul.f32 %v3012, 1.442695
        %v3043 = vpow.pop %v3042
        %v3044 = vmul.f32 %v3013, 1.442695
        %v3045 = vpow.pop %v3044
        %v3046 = vadd.f32 %v3015, 1.0
        %v3047 = vadd.f32 %v3017, 1.0
        %v3048 = vadd.f32 %v3019, 1.0
        %v3049 = vadd.f32 %v3021, 1.0
        %v3050 = vadd.f32 %v3023, 1.0
        %v3051 = vadd.f32 %v3025, 1.0
        %v3052 = vadd.f32 %v3027, 1.0
        %v3053 = vadd.f32 %v3029, 1.0
        %v3054 = vadd.f32 %v3031, 1.0
        %v3055 = vadd.f32 %v3033, 1.0
        %v3056 = vadd.f32 %v3035, 1.0
        %v3057 = vadd.f32 %v3037, 1.0
        %v3058 = vadd.f32 %v3039, 1.0
        %v3059 = vadd.f32 %v3041, 1.0
        %v3060 = vadd.f32 %v3043, 1.0
        %v3061 = vadd.f32 %v3045, 1.0
        %v3062 = vrcp.pop %v3046
        %v3063 = vmul.f32 %v3046, %v3062
        %v3064 = vsub.f32 1.0, %v3063
        %v3065 = vmul.f32 %v3062, %v3064
        %v3066 = vadd.f32 %v3062, %v3065
        %vm3067 = vweird.f32 %v3046
        %vm3068 = vweird.f32 %v3062
        %vm3069 = vmor %vm3067, %vm3068
        %v3070 = vsel %vm3069, %v3062, %v3066
        %v3071 = vand.u32 2147483647, %v3046
        %vm3072 = vcmp.eq.f32.partialorder %v3071, 8.507059e+37
        %v3073 = vand.u32 %v3046, 2147483648
        %v3074 = vor.u32 1.1754944e-38, %v3073
        %v3075 = vsel %vm3072, %v3074, %v3070
        %v3076 = vmul.f32 1.0, %v3075
        %v3077 = vrcp.pop %v3047
        %v3078 = vmul.f32 %v3047, %v3077
        %v3079 = vsub.f32 1.0, %v3078
        %v3080 = vmul.f32 %v3077, %v3079
        %v3081 = vadd.f32 %v3077, %v3080
        %vm3082 = vweird.f32 %v3047
        %vm3083 = vweird.f32 %v3077
        %vm3084 = vmor %vm3082, %vm3083
        %v3085 = vsel %vm3084, %v3077, %v3081
        %v3086 = vand.u32 2147483647, %v3047
        %vm3087 = vcmp.eq.f32.partialorder %v3086, 8.507059e+37
        %v3088 = vand.u32 %v3047, 2147483648
        %v3089 = vor.u32 1.1754944e-38, %v3088
        %v3090 = vsel %vm3087, %v3089, %v3085
        %v3091 = vmul.f32 1.0, %v3090
        %v3092 = vrcp.pop %v3048
        %v3093 = vmul.f32 %v3048, %v3092
        %v3094 = vsub.f32 1.0, %v3093
        %v3095 = vmul.f32 %v3092, %v3094
        %v3096 = vadd.f32 %v3092, %v3095
        %vm3097 = vweird.f32 %v3048
        %vm3098 = vweird.f32 %v3092
        %vm3099 = vmor %vm3097, %vm3098
        %v3100 = vsel %vm3099, %v3092, %v3096
        %v3101 = vand.u32 2147483647, %v3048
        %vm3102 = vcmp.eq.f32.partialorder %v3101, 8.507059e+37
        %v3103 = vand.u32 %v3048, 2147483648
        %v3104 = vor.u32 1.1754944e-38, %v3103
        %v3105 = vsel %vm3102, %v3104, %v3100
        %v3106 = vmul.f32 1.0, %v3105
        %v3107 = vrcp.pop %v3049
        %v3108 = vmul.f32 %v3049, %v3107
        %v3109 = vsub.f32 1.0, %v3108
        %v3110 = vmul.f32 %v3107, %v3109
        %v3111 = vadd.f32 %v3107, %v3110
        %vm3112 = vweird.f32 %v3049
        %vm3113 = vweird.f32 %v3107
        %vm3114 = vmor %vm3112, %vm3113
        %v3115 = vsel %vm3114, %v3107, %v3111
        %v3116 = vand.u32 2147483647, %v3049
        %vm3117 = vcmp.eq.f32.partialorder %v3116, 8.507059e+37
        %v3118 = vand.u32 %v3049, 2147483648
        %v3119 = vor.u32 1.1754944e-38, %v3118
        %v3120 = vsel %vm3117, %v3119, %v3115
        %v3121 = vmul.f32 1.0, %v3120
        %v3122 = vrcp.pop %v3050
        %v3123 = vmul.f32 %v3050, %v3122
        %v3124 = vsub.f32 1.0, %v3123
        %v3125 = vmul.f32 %v3122, %v3124
        %v3126 = vadd.f32 %v3122, %v3125
        %vm3127 = vweird.f32 %v3050
        %vm3128 = vweird.f32 %v3122
        %vm3129 = vmor %vm3127, %vm3128
        %v3130 = vsel %vm3129, %v3122, %v3126
        %v3131 = vand.u32 2147483647, %v3050
        %vm3132 = vcmp.eq.f32.partialorder %v3131, 8.507059e+37
        %v3133 = vand.u32 %v3050, 2147483648
        %v3134 = vor.u32 1.1754944e-38, %v3133
        %v3135 = vsel %vm3132, %v3134, %v3130
        %v3136 = vmul.f32 1.0, %v3135
        %v3137 = vrcp.pop %v3051
        %v3138 = vmul.f32 %v3051, %v3137
        %v3139 = vsub.f32 1.0, %v3138
        %v3140 = vmul.f32 %v3137, %v3139
        %v3141 = vadd.f32 %v3137, %v3140
        %vm3142 = vweird.f32 %v3051
        %vm3143 = vweird.f32 %v3137
        %vm3144 = vmor %vm3142, %vm3143
        %v3145 = vsel %vm3144, %v3137, %v3141
        %v3146 = vand.u32 2147483647, %v3051
        %vm3147 = vcmp.eq.f32.partialorder %v3146, 8.507059e+37
        %v3148 = vand.u32 %v3051, 2147483648
        %v3149 = vor.u32 1.1754944e-38, %v3148
        %v3150 = vsel %vm3147, %v3149, %v3145
        %v3151 = vmul.f32 1.0, %v3150
        %v3152 = vrcp.pop %v3052
        %v3153 = vmul.f32 %v3052, %v3152
        %v3154 = vsub.f32 1.0, %v3153
        %v3155 = vmul.f32 %v3152, %v3154
        %v3156 = vadd.f32 %v3152, %v3155
        %vm3157 = vweird.f32 %v3052
        %vm3158 = vweird.f32 %v3152
        %vm3159 = vmor %vm3157, %vm3158
        %v3160 = vsel %vm3159, %v3152, %v3156
        %v3161 = vand.u32 2147483647, %v3052
        %vm3162 = vcmp.eq.f32.partialorder %v3161, 8.507059e+37
        %v3163 = vand.u32 %v3052, 2147483648
        %v3164 = vor.u32 1.1754944e-38, %v3163
        %v3165 = vsel %vm3162, %v3164, %v3160
        %v3166 = vmul.f32 1.0, %v3165
        %v3167 = vrcp.pop %v3053
        %v3168 = vmul.f32 %v3053, %v3167
        %v3169 = vsub.f32 1.0, %v3168
        %v3170 = vmul.f32 %v3167, %v3169
        %v3171 = vadd.f32 %v3167, %v3170
        %vm3172 = vweird.f32 %v3053
        %vm3173 = vweird.f32 %v3167
        %vm3174 = vmor %vm3172, %vm3173
        %v3175 = vsel %vm3174, %v3167, %v3171
        %v3176 = vand.u32 2147483647, %v3053
        %vm3177 = vcmp.eq.f32.partialorder %v3176, 8.507059e+37
        %v3178 = vand.u32 %v3053, 2147483648
        %v3179 = vor.u32 1.1754944e-38, %v3178
        %v3180 = vsel %vm3177, %v3179, %v3175
        %v3181 = vmul.f32 1.0, %v3180
        %v3182 = vrcp.pop %v3054
        %v3183 = vmul.f32 %v3054, %v3182
        %v3184 = vsub.f32 1.0, %v3183
        %v3185 = vmul.f32 %v3182, %v3184
        %v3186 = vadd.f32 %v3182, %v3185
        %vm3187 = vweird.f32 %v3054
        %vm3188 = vweird.f32 %v3182
        %vm3189 = vmor %vm3187, %vm3188
        %v3190 = vsel %vm3189, %v3182, %v3186
        %v3191 = vand.u32 2147483647, %v3054
        %vm3192 = vcmp.eq.f32.partialorder %v3191, 8.507059e+37
        %v3193 = vand.u32 %v3054, 2147483648
        %v3194 = vor.u32 1.1754944e-38, %v3193
        %v3195 = vsel %vm3192, %v3194, %v3190
        %v3196 = vmul.f32 1.0, %v3195
        %v3197 = vrcp.pop %v3055
        %v3198 = vmul.f32 %v3055, %v3197
        %v3199 = vsub.f32 1.0, %v3198
        %v3200 = vmul.f32 %v3197, %v3199
        %v3201 = vadd.f32 %v3197, %v3200
        %vm3202 = vweird.f32 %v3055
        %vm3203 = vweird.f32 %v3197
        %vm3204 = vmor %vm3202, %vm3203
        %v3205 = vsel %vm3204, %v3197, %v3201
        %v3206 = vand.u32 2147483647, %v3055
        %vm3207 = vcmp.eq.f32.partialorder %v3206, 8.507059e+37
        %v3208 = vand.u32 %v3055, 2147483648
        %v3209 = vor.u32 1.1754944e-38, %v3208
        %v3210 = vsel %vm3207, %v3209, %v3205
        %v3211 = vmul.f32 1.0, %v3210
        %v3212 = vrcp.pop %v3056
        %v3213 = vmul.f32 %v3056, %v3212
        %v3214 = vsub.f32 1.0, %v3213
        %v3215 = vmul.f32 %v3212, %v3214
        %v3216 = vadd.f32 %v3212, %v3215
        %vm3217 = vweird.f32 %v3056
        %vm3218 = vweird.f32 %v3212
        %vm3219 = vmor %vm3217, %vm3218
        %v3220 = vsel %vm3219, %v3212, %v3216
        %v3221 = vand.u32 2147483647, %v3056
        %vm3222 = vcmp.eq.f32.partialorder %v3221, 8.507059e+37
        %v3223 = vand.u32 %v3056, 2147483648
        %v3224 = vor.u32 1.1754944e-38, %v3223
        %v3225 = vsel %vm3222, %v3224, %v3220
        %v3226 = vmul.f32 1.0, %v3225
        %v3227 = vrcp.pop %v3057
        %v3228 = vmul.f32 %v3057, %v3227
        %v3229 = vsub.f32 1.0, %v3228
        %v3230 = vmul.f32 %v3227, %v3229
        %v3231 = vadd.f32 %v3227, %v3230
        %vm3232 = vweird.f32 %v3057
        %vm3233 = vweird.f32 %v3227
        %vm3234 = vmor %vm3232, %vm3233
        %v3235 = vsel %vm3234, %v3227, %v3231
        %v3236 = vand.u32 2147483647, %v3057
        %vm3237 = vcmp.eq.f32.partialorder %v3236, 8.507059e+37
        %v3238 = vand.u32 %v3057, 2147483648
        %v3239 = vor.u32 1.1754944e-38, %v3238
        %v3240 = vsel %vm3237, %v3239, %v3235
        %v3241 = vmul.f32 1.0, %v3240
        %v3242 = vrcp.pop %v3058
        %v3243 = vmul.f32 %v3058, %v3242
        %v3244 = vsub.f32 1.0, %v3243
        %v3245 = vmul.f32 %v3242, %v3244
        %v3246 = vadd.f32 %v3242, %v3245
        %vm3247 = vweird.f32 %v3058
        %vm3248 = vweird.f32 %v3242
        %vm3249 = vmor %vm3247, %vm3248
        %v3250 = vsel %vm3249, %v3242, %v3246
        %v3251 = vand.u32 2147483647, %v3058
        %vm3252 = vcmp.eq.f32.partialorder %v3251, 8.507059e+37
        %v3253 = vand.u32 %v3058, 2147483648
        %v3254 = vor.u32 1.1754944e-38, %v3253
        %v3255 = vsel %vm3252, %v3254, %v3250
        %v3256 = vmul.f32 1.0, %v3255
        %v3257 = vrcp.pop %v3059
        %v3258 = vmul.f32 %v3059, %v3257
        %v3259 = vsub.f32 1.0, %v3258
        %v3260 = vmul.f32 %v3257, %v3259
        %v3261 = vadd.f32 %v3257, %v3260
        %vm3262 = vweird.f32 %v3059
        %vm3263 = vweird.f32 %v3257
        %vm3264 = vmor %vm3262, %vm3263
        %v3265 = vsel %vm3264, %v3257, %v3261
        %v3266 = vand.u32 2147483647, %v3059
        %vm3267 = vcmp.eq.f32.partialorder %v3266, 8.507059e+37
        %v3268 = vand.u32 %v3059, 2147483648
        %v3269 = vor.u32 1.1754944e-38, %v3268
        %v3270 = vsel %vm3267, %v3269, %v3265
        %v3271 = vmul.f32 1.0, %v3270
        %v3272 = vrcp.pop %v3060
        %v3273 = vmul.f32 %v3060, %v3272
        %v3274 = vsub.f32 1.0, %v3273
        %v3275 = vmul.f32 %v3272, %v3274
        %v3276 = vadd.f32 %v3272, %v3275
        %vm3277 = vweird.f32 %v3060
        %vm3278 = vweird.f32 %v3272
        %vm3279 = vmor %vm3277, %vm3278
        %v3280 = vsel %vm3279, %v3272, %v3276
        %v3281 = vand.u32 2147483647, %v3060
        %vm3282 = vcmp.eq.f32.partialorder %v3281, 8.507059e+37
        %v3283 = vand.u32 %v3060, 2147483648
        %v3284 = vor.u32 1.1754944e-38, %v3283
        %v3285 = vsel %vm3282, %v3284, %v3280
        %v3286 = vmul.f32 1.0, %v3285
        %v3287 = vrcp.pop %v3061
        %v3288 = vmul.f32 %v3061, %v3287
        %v3289 = vsub.f32 1.0, %v3288
        %v3290 = vmul.f32 %v3287, %v3289
        %v3291 = vadd.f32 %v3287, %v3290
        %vm3292 = vweird.f32 %v3061
        %vm3293 = vweird.f32 %v3287
        %vm3294 = vmor %vm3292, %vm3293
        %v3295 = vsel %vm3294, %v3287, %v3291
        %v3296 = vand.u32 2147483647, %v3061
        %vm3297 = vcmp.eq.f32.partialorder %v3296, 8.507059e+37
        %v3298 = vand.u32 %v3061, 2147483648
        %v3299 = vor.u32 1.1754944e-38, %v3298
        %v3300 = vsel %vm3297, %v3299, %v3295
        %v3301 = vmul.f32 1.0, %v3300
        %v3302 = vtanh.pop %v2982
        %v3303 = vtanh.pop %v2983
        %v3304 = vtanh.pop %v2984
        %v3305 = vtanh.pop %v2985
        %v3306 = vtanh.pop %v2986
        %v3307 = vtanh.pop %v2987
        %v3308 = vtanh.pop %v2988
        %v3309 = vtanh.pop %v2989
        %v3310 = vtanh.pop %v2990
        %v3311 = vtanh.pop %v2991
        %v3312 = vtanh.pop %v2992
        %v3313 = vtanh.pop %v2993
        %v3314 = vtanh.pop %v2994
        %v3315 = vtanh.pop %v2995
        %v3316 = vtanh.pop %v2996
        %v3317 = vtanh.pop %v2997
        %v3318 = vld [vmem:[#allocation4] sm:$0xff]
        %v3319 = vld [vmem:[#allocation4 + $0x8] sm:$0xff]
        %v3320 = vld [vmem:[#allocation4 + $0x10] sm:$0xff]
        %v3321 = vld [vmem:[#allocation4 + $0x18] sm:$0xff]
        %v3322 = vld [vmem:[#allocation4 + $0x20] sm:$0xff]
        %v3323 = vld [vmem:[#allocation4 + $0x28] sm:$0xff]
        %v3324 = vld [vmem:[#allocation4 + $0x30] sm:$0xff]
        %v3325 = vld [vmem:[#allocation4 + $0x38] sm:$0xff]
        %v3326 = vld [vmem:[#allocation4 + $0x40] sm:$0xff]
        %v3327 = vld [vmem:[#allocation4 + $0x48] sm:$0xff]
        %v3328 = vld [vmem:[#allocation4 + $0x50] sm:$0xff]
        %v3329 = vld [vmem:[#allocation4 + $0x58] sm:$0xff]
        %v3330 = vld [vmem:[#allocation4 + $0x60] sm:$0xff]
        %v3331 = vld [vmem:[#allocation4 + $0x68] sm:$0xff]
        %v3332 = vld [vmem:[#allocation4 + $0x70] sm:$0xff]
        %v3333 = vld [vmem:[#allocation4 + $0x78] sm:$0xff]
        %3350 = vrot.lane.b32.xlu0 %v3318, 32
        %v3351 = vpop.permute.xlu0 %3350
        %3352 = vrot.lane.b32.xlu0 %v3319, 32
        %v3353 = vpop.permute.xlu0 %3352
        %3354 = vrot.lane.b32.xlu0 %v3320, 32
        %v3355 = vpop.permute.xlu0 %3354
        %3356 = vrot.lane.b32.xlu0 %v3321, 32
        %v3357 = vpop.permute.xlu0 %3356
        %3358 = vrot.lane.b32.xlu0 %v3322, 32
        %v3359 = vpop.permute.xlu0 %3358
        %3360 = vrot.lane.b32.xlu0 %v3323, 32
        %v3361 = vpop.permute.xlu0 %3360
        %3362 = vrot.lane.b32.xlu0 %v3324, 32
        %v3363 = vpop.permute.xlu0 %3362
        %3364 = vrot.lane.b32.xlu0 %v3325, 32
        %v3365 = vpop.permute.xlu0 %3364
        %3366 = vrot.lane.b32.xlu0 %v3326, 32
        %v3367 = vpop.permute.xlu0 %3366
        %3368 = vrot.lane.b32.xlu0 %v3327, 32
        %v3369 = vpop.permute.xlu0 %3368
        %3370 = vrot.lane.b32.xlu0 %v3328, 32
        %v3371 = vpop.permute.xlu0 %3370
        %3372 = vrot.lane.b32.xlu0 %v3329, 32
        %v3373 = vpop.permute.xlu0 %3372
        %3374 = vrot.lane.b32.xlu0 %v3330, 32
        %v3375 = vpop.permute.xlu0 %3374
        %3376 = vrot.lane.b32.xlu0 %v3331, 32
        %v3377 = vpop.permute.xlu0 %3376
        %3378 = vrot.lane.b32.xlu0 %v3332, 32
        %v3379 = vpop.permute.xlu0 %3378
        %3380 = vrot.lane.b32.xlu0 %v3333, 32
        %v3381 = vpop.permute.xlu0 %3380
        %v3398 = vmul.f32 %v3076, %v3351
        %v3399 = vmul.f32 %v3091, %v3353
        %v3400 = vmul.f32 %v3106, %v3355
        %v3401 = vmul.f32 %v3121, %v3357
        %v3402 = vmul.f32 %v3136, %v3359
        %v3403 = vmul.f32 %v3151, %v3361
        %v3404 = vmul.f32 %v3166, %v3363
        %v3405 = vmul.f32 %v3181, %v3365
        %v3406 = vmul.f32 %v3196, %v3367
        %v3407 = vmul.f32 %v3211, %v3369
        %v3408 = vmul.f32 %v3226, %v3371
        %v3409 = vmul.f32 %v3241, %v3373
        %v3410 = vmul.f32 %v3256, %v3375
        %v3411 = vmul.f32 %v3271, %v3377
        %v3412 = vmul.f32 %v3286, %v3379
        %v3413 = vmul.f32 %v3301, %v3381
        %3430 = vrot.lane.b32.xlu0 %v3302, 64
        %v3431 = vpop.permute.xlu0 %3430
        %3432 = vrot.lane.b32.xlu0 %v3303, 64
        %v3433 = vpop.permute.xlu0 %3432
        %3434 = vrot.lane.b32.xlu0 %v3304, 64
        %v3435 = vpop.permute.xlu0 %3434
        %3436 = vrot.lane.b32.xlu0 %v3305, 64
        %v3437 = vpop.permute.xlu0 %3436
        %3438 = vrot.lane.b32.xlu0 %v3306, 64
        %v3439 = vpop.permute.xlu0 %3438
        %3440 = vrot.lane.b32.xlu0 %v3307, 64
        %v3441 = vpop.permute.xlu0 %3440
        %3442 = vrot.lane.b32.xlu0 %v3308, 64
        %v3443 = vpop.permute.xlu0 %3442
        %3444 = vrot.lane.b32.xlu0 %v3309, 64
        %v3445 = vpop.permute.xlu0 %3444
        %3446 = vrot.lane.b32.xlu0 %v3310, 64
        %v3447 = vpop.permute.xlu0 %3446
        %3448 = vrot.lane.b32.xlu0 %v3311, 64
        %v3449 = vpop.permute.xlu0 %3448
        %3450 = vrot.lane.b32.xlu0 %v3312, 64
        %v3451 = vpop.permute.xlu0 %3450
        %3452 = vrot.lane.b32.xlu0 %v3313, 64
        %v3453 = vpop.permute.xlu0 %3452
        %3454 = vrot.lane.b32.xlu0 %v3314, 64
        %v3455 = vpop.permute.xlu0 %3454
        %3456 = vrot.lane.b32.xlu0 %v3315, 64
        %v3457 = vpop.permute.xlu0 %3456
        %3458 = vrot.lane.b32.xlu0 %v3316, 64
        %v3459 = vpop.permute.xlu0 %3458
        %3460 = vrot.lane.b32.xlu0 %v3317, 64
        %v3461 = vpop.permute.xlu0 %3460
        %v3478 = vmul.f32 %v3076, %v3431
        %v3479 = vmul.f32 %v3091, %v3433
        %v3480 = vmul.f32 %v3106, %v3435
        %v3481 = vmul.f32 %v3121, %v3437
        %v3482 = vmul.f32 %v3136, %v3439
        %v3483 = vmul.f32 %v3151, %v3441
        %v3484 = vmul.f32 %v3166, %v3443
        %v3485 = vmul.f32 %v3181, %v3445
        %v3486 = vmul.f32 %v3196, %v3447
        %v3487 = vmul.f32 %v3211, %v3449
        %v3488 = vmul.f32 %v3226, %v3451
        %v3489 = vmul.f32 %v3241, %v3453
        %v3490 = vmul.f32 %v3256, %v3455
        %v3491 = vmul.f32 %v3271, %v3457
        %v3492 = vmul.f32 %v3286, %v3459
        %v3493 = vmul.f32 %v3301, %v3461
        %3510 = vrot.lane.b32.xlu0 %v3478, 32
        %v3511 = vpop.permute.xlu0 %3510
        %3512 = vrot.lane.b32.xlu0 %v3479, 32
        %v3513 = vpop.permute.xlu0 %3512
        %3514 = vrot.lane.b32.xlu0 %v3480, 32
        %v3515 = vpop.permute.xlu0 %3514
        %3516 = vrot.lane.b32.xlu0 %v3481, 32
        %v3517 = vpop.permute.xlu0 %3516
        %3518 = vrot.lane.b32.xlu0 %v3482, 32
        %v3519 = vpop.permute.xlu0 %3518
        %3520 = vrot.lane.b32.xlu0 %v3483, 32
        %v3521 = vpop.permute.xlu0 %3520
        %3522 = vrot.lane.b32.xlu0 %v3484, 32
        %v3523 = vpop.permute.xlu0 %3522
        %3524 = vrot.lane.b32.xlu0 %v3485, 32
        %v3525 = vpop.permute.xlu0 %3524
        %3526 = vrot.lane.b32.xlu0 %v3486, 32
        %v3527 = vpop.permute.xlu0 %3526
        %3528 = vrot.lane.b32.xlu0 %v3487, 32
        %v3529 = vpop.permute.xlu0 %3528
        %3530 = vrot.lane.b32.xlu0 %v3488, 32
        %v3531 = vpop.permute.xlu0 %3530
        %3532 = vrot.lane.b32.xlu0 %v3489, 32
        %v3533 = vpop.permute.xlu0 %3532
        %3534 = vrot.lane.b32.xlu0 %v3490, 32
        %v3535 = vpop.permute.xlu0 %3534
        %3536 = vrot.lane.b32.xlu0 %v3491, 32
        %v3537 = vpop.permute.xlu0 %3536
        %3538 = vrot.lane.b32.xlu0 %v3492, 32
        %v3539 = vpop.permute.xlu0 %3538
        %3540 = vrot.lane.b32.xlu0 %v3493, 32
        %v3541 = vpop.permute.xlu0 %3540
        %v3558 = vadd.f32 %v3398, %v3511
        %v3559 = vadd.f32 %v3399, %v3513
        %v3560 = vadd.f32 %v3400, %v3515
        %v3561 = vadd.f32 %v3401, %v3517
        %v3562 = vadd.f32 %v3402, %v3519
        %v3563 = vadd.f32 %v3403, %v3521
        %v3564 = vadd.f32 %v3404, %v3523
        %v3565 = vadd.f32 %v3405, %v3525
        %v3566 = vadd.f32 %v3406, %v3527
        %v3567 = vadd.f32 %v3407, %v3529
        %v3568 = vadd.f32 %v3408, %v3531
        %v3569 = vadd.f32 %v3409, %v3533
        %v3570 = vadd.f32 %v3410, %v3535
        %v3571 = vadd.f32 %v3411, %v3537
        %v3572 = vadd.f32 %v3412, %v3539
        %v3573 = vadd.f32 %v3413, %v3541
        %v3574 = vtanh.pop %v3558
        %v3575 = vtanh.pop %v3559
        %v3576 = vtanh.pop %v3560
        %v3577 = vtanh.pop %v3561
        %v3578 = vtanh.pop %v3562
        %v3579 = vtanh.pop %v3563
        %v3580 = vtanh.pop %v3564
        %v3581 = vtanh.pop %v3565
        %v3582 = vtanh.pop %v3566
        %v3583 = vtanh.pop %v3567
        %v3584 = vtanh.pop %v3568
        %v3585 = vtanh.pop %v3569
        %v3586 = vtanh.pop %v3570
        %v3587 = vtanh.pop %v3571
        %v3588 = vtanh.pop %v3572
        %v3589 = vtanh.pop %v3573
        %3606 = vrot.lane.b32.xlu0 %v3574, 64
        %v3607 = vpop.permute.xlu0 %3606
        %3608 = vrot.lane.b32.xlu0 %v3575, 64
        %v3609 = vpop.permute.xlu0 %3608
        %3610 = vrot.lane.b32.xlu0 %v3576, 64
        %v3611 = vpop.permute.xlu0 %3610
        %3612 = vrot.lane.b32.xlu0 %v3577, 64
        %v3613 = vpop.permute.xlu0 %3612
        %3614 = vrot.lane.b32.xlu0 %v3578, 64
        %v3615 = vpop.permute.xlu0 %3614
        %3616 = vrot.lane.b32.xlu0 %v3579, 64
        %v3617 = vpop.permute.xlu0 %3616
        %3618 = vrot.lane.b32.xlu0 %v3580, 64
        %v3619 = vpop.permute.xlu0 %3618
        %3620 = vrot.lane.b32.xlu0 %v3581, 64
        %v3621 = vpop.permute.xlu0 %3620
        %3622 = vrot.lane.b32.xlu0 %v3582, 64
        %v3623 = vpop.permute.xlu0 %3622
        %3624 = vrot.lane.b32.xlu0 %v3583, 64
        %v3625 = vpop.permute.xlu0 %3624
        %3626 = vrot.lane.b32.xlu0 %v3584, 64
        %v3627 = vpop.permute.xlu0 %3626
        %3628 = vrot.lane.b32.xlu0 %v3585, 64
        %v3629 = vpop.permute.xlu0 %3628
        %3630 = vrot.lane.b32.xlu0 %v3586, 64
        %v3631 = vpop.permute.xlu0 %3630
        %3632 = vrot.lane.b32.xlu0 %v3587, 64
        %v3633 = vpop.permute.xlu0 %3632
        %3634 = vrot.lane.b32.xlu0 %v3588, 64
        %v3635 = vpop.permute.xlu0 %3634
        %3636 = vrot.lane.b32.xlu0 %v3589, 64
        %v3637 = vpop.permute.xlu0 %3636
        %v3654 = vmul.f32 %v3076, %v3607
        %v3655 = vmul.f32 %v3091, %v3609
        %v3656 = vmul.f32 %v3106, %v3611
        %v3657 = vmul.f32 %v3121, %v3613
        %v3658 = vmul.f32 %v3136, %v3615
        %v3659 = vmul.f32 %v3151, %v3617
        %v3660 = vmul.f32 %v3166, %v3619
        %v3661 = vmul.f32 %v3181, %v3621
        %v3662 = vmul.f32 %v3196, %v3623
        %v3663 = vmul.f32 %v3211, %v3625
        %v3664 = vmul.f32 %v3226, %v3627
        %v3665 = vmul.f32 %v3241, %v3629
        %v3666 = vmul.f32 %v3256, %v3631
        %v3667 = vmul.f32 %v3271, %v3633
        %v3668 = vmul.f32 %v3286, %v3635
        %v3669 = vmul.f32 %v3301, %v3637
        %3686 = vrot.lane.b32.xlu0 %v3558, 96
        %v3687 = vpop.permute.xlu0 %3686
        %3688 = vrot.lane.b32.xlu0 %v3559, 96
        %v3689 = vpop.permute.xlu0 %3688
        %3690 = vrot.lane.b32.xlu0 %v3560, 96
        %v3691 = vpop.permute.xlu0 %3690
        %3692 = vrot.lane.b32.xlu0 %v3561, 96
        %v3693 = vpop.permute.xlu0 %3692
        %3694 = vrot.lane.b32.xlu0 %v3562, 96
        %v3695 = vpop.permute.xlu0 %3694
        %3696 = vrot.lane.b32.xlu0 %v3563, 96
        %v3697 = vpop.permute.xlu0 %3696
        %3698 = vrot.lane.b32.xlu0 %v3564, 96
        %v3699 = vpop.permute.xlu0 %3698
        %3700 = vrot.lane.b32.xlu0 %v3565, 96
        %v3701 = vpop.permute.xlu0 %3700
        %3702 = vrot.lane.b32.xlu0 %v3566, 96
        %v3703 = vpop.permute.xlu0 %3702
        %3704 = vrot.lane.b32.xlu0 %v3567, 96
        %v3705 = vpop.permute.xlu0 %3704
        %3706 = vrot.lane.b32.xlu0 %v3568, 96
        %v3707 = vpop.permute.xlu0 %3706
        %3708 = vrot.lane.b32.xlu0 %v3569, 96
        %v3709 = vpop.permute.xlu0 %3708
        %3710 = vrot.lane.b32.xlu0 %v3570, 96
        %v3711 = vpop.permute.xlu0 %3710
        %3712 = vrot.lane.b32.xlu0 %v3571, 96
        %v3713 = vpop.permute.xlu0 %3712
        %3714 = vrot.lane.b32.xlu0 %v3572, 96
        %v3715 = vpop.permute.xlu0 %3714
        %3716 = vrot.lane.b32.xlu0 %v3573, 96
        %v3717 = vpop.permute.xlu0 %3716
        %3734 = vst.msk [vmem:[#allocation4] sm:$0xff] %vm423, %v3687
        %3735 = vst.msk [vmem:[#allocation4 + $0x8] sm:$0xff] %vm423, %v3689
        %3736 = vst.msk [vmem:[#allocation4 + $0x10] sm:$0xff] %vm423, %v3691
        %3737 = vst.msk [vmem:[#allocation4 + $0x18] sm:$0xff] %vm423, %v3693
        %3738 = vst.msk [vmem:[#allocation4 + $0x20] sm:$0xff] %vm423, %v3695
        %3739 = vst.msk [vmem:[#allocation4 + $0x28] sm:$0xff] %vm423, %v3697
        %3740 = vst.msk [vmem:[#allocation4 + $0x30] sm:$0xff] %vm423, %v3699
        %3741 = vst.msk [vmem:[#allocation4 + $0x38] sm:$0xff] %vm423, %v3701
        %3742 = vst.msk [vmem:[#allocation4 + $0x40] sm:$0xff] %vm423, %v3703
        %3743 = vst.msk [vmem:[#allocation4 + $0x48] sm:$0xff] %vm423, %v3705
        %3744 = vst.msk [vmem:[#allocation4 + $0x50] sm:$0xff] %vm423, %v3707
        %3745 = vst.msk [vmem:[#allocation4 + $0x58] sm:$0xff] %vm423, %v3709
        %3746 = vst.msk [vmem:[#allocation4 + $0x60] sm:$0xff] %vm423, %v3711
        %3747 = vst.msk [vmem:[#allocation4 + $0x68] sm:$0xff] %vm423, %v3713
        %3748 = vst.msk [vmem:[#allocation4 + $0x70] sm:$0xff] %vm423, %v3715
        %3749 = vst.msk [vmem:[#allocation4 + $0x78] sm:$0xff] %vm423, %v3717
        %v3750 = vpack.c.bf16 %v3654, %v3654
        %v3751 = vpack.c.bf16 %v3655, %v3655
        %v3752 = vpack.c.bf16 %v3656, %v3656
        %v3753 = vpack.c.bf16 %v3657, %v3657
        %v3754 = vpack.c.bf16 %v3658, %v3658
        %v3755 = vpack.c.bf16 %v3659, %v3659
        %v3756 = vpack.c.bf16 %v3660, %v3660
        %v3757 = vpack.c.bf16 %v3661, %v3661
        %v3758 = vpack.c.bf16 %v3662, %v3662
        %v3759 = vpack.c.bf16 %v3663, %v3663
        %v3760 = vpack.c.bf16 %v3664, %v3664
        %v3761 = vpack.c.bf16 %v3665, %v3665
        %v3762 = vpack.c.bf16 %v3666, %v3666
        %v3763 = vpack.c.bf16 %v3667, %v3667
        %v3764 = vpack.c.bf16 %v3668, %v3668
        %v3765 = vpack.c.bf16 %v3669, %v3669
        %3782 = vrot.lane.b32.xlu0 %v3750, 32
        %v3783 = vpop.permute.xlu0 %3782
        %3784 = vrot.lane.b32.xlu0 %v3751, 32
        %v3785 = vpop.permute.xlu0 %3784
        %3786 = vrot.lane.b32.xlu0 %v3752, 32
        %v3787 = vpop.permute.xlu0 %3786
        %3788 = vrot.lane.b32.xlu0 %v3753, 32
        %v3789 = vpop.permute.xlu0 %3788
        %3790 = vrot.lane.b32.xlu0 %v3754, 32
        %v3791 = vpop.permute.xlu0 %3790
        %3792 = vrot.lane.b32.xlu0 %v3755, 32
        %v3793 = vpop.permute.xlu0 %3792
        %3794 = vrot.lane.b32.xlu0 %v3756, 32
        %v3795 = vpop.permute.xlu0 %3794
        %3796 = vrot.lane.b32.xlu0 %v3757, 32
        %v3797 = vpop.permute.xlu0 %3796
        %3798 = vrot.lane.b32.xlu0 %v3758, 32
        %v3799 = vpop.permute.xlu0 %3798
        %3800 = vrot.lane.b32.xlu0 %v3759, 32
        %v3801 = vpop.permute.xlu0 %3800
        %3802 = vrot.lane.b32.xlu0 %v3760, 32
        %v3803 = vpop.permute.xlu0 %3802
        %3804 = vrot.lane.b32.xlu0 %v3761, 32
        %v3805 = vpop.permute.xlu0 %3804
        %3806 = vrot.lane.b32.xlu0 %v3762, 32
        %v3807 = vpop.permute.xlu0 %3806
        %3808 = vrot.lane.b32.xlu0 %v3763, 32
        %v3809 = vpop.permute.xlu0 %3808
        %3810 = vrot.lane.b32.xlu0 %v3764, 32
        %v3811 = vpop.permute.xlu0 %3810
        %3812 = vrot.lane.b32.xlu0 %v3765, 32
        %v3813 = vpop.permute.xlu0 %3812
        %s3830 = scalar_lea.vmem [#allocation2], 16
        %vm3831 = vcmask 257024
        %3832 = vst.msk [vmem:[%s3830 + $0x4] sm:$0xf] %vm3831, %v3783
        %3833 = vst.msk [vmem:[%s3830 + $0x8] sm:$0xf] %vm3831, %v3785
        %3834 = vst.msk [vmem:[%s3830 + $0x14] sm:$0xf] %vm3831, %v3787
        %3835 = vst.msk [vmem:[%s3830 + $0x18] sm:$0xf] %vm3831, %v3789
        %3836 = vst.msk [vmem:[%s3830 + $0x24] sm:$0xf] %vm3831, %v3791
        %3837 = vst.msk [vmem:[%s3830 + $0x28] sm:$0xf] %vm3831, %v3793
        %3838 = vst.msk [vmem:[%s3830 + $0x34] sm:$0xf] %vm3831, %v3795
        %3839 = vst.msk [vmem:[%s3830 + $0x38] sm:$0xf] %vm3831, %v3797
        %3840 = vst.msk [vmem:[%s3830 + $0x44] sm:$0xf] %vm3831, %v3799
        %3841 = vst.msk [vmem:[%s3830 + $0x48] sm:$0xf] %vm3831, %v3801
        %3842 = vst.msk [vmem:[%s3830 + $0x54] sm:$0xf] %vm3831, %v3803
        %3843 = vst.msk [vmem:[%s3830 + $0x58] sm:$0xf] %vm3831, %v3805
        %3844 = vst.msk [vmem:[%s3830 + $0x64] sm:$0xf] %vm3831, %v3807
        %3845 = vst.msk [vmem:[%s3830 + $0x68] sm:$0xf] %vm3831, %v3809
        %3846 = vst.msk [vmem:[%s3830 + $0x74] sm:$0xf] %vm3831, %v3811
        %3847 = vst.msk [vmem:[%s3830 + $0x78] sm:$0xf] %vm3831, %v3813
        %v3848 = vld [vmem:[#allocation3 + $0x40] sm:$0xf]
        %v3849 = vld [vmem:[#allocation3 + $0x44] sm:$0xf]
        %v3850 = vld [vmem:[#allocation3 + $0x48] sm:$0xf]
        %v3851 = vld [vmem:[#allocation3 + $0x4c] sm:$0xf]
        %v3852 = vld [vmem:[#allocation3 + $0x50] sm:$0xf]
        %v3853 = vld [vmem:[#allocation3 + $0x54] sm:$0xf]
        %v3854 = vld [vmem:[#allocation3 + $0x58] sm:$0xf]
        %v3855 = vld [vmem:[#allocation3 + $0x5c] sm:$0xf]
        %v3856 = vld [vmem:[#allocation3 + $0x60] sm:$0xf]
        %v3857 = vld [vmem:[#allocation3 + $0x64] sm:$0xf]
        %v3858 = vld [vmem:[#allocation3 + $0x68] sm:$0xf]
        %v3859 = vld [vmem:[#allocation3 + $0x6c] sm:$0xf]
        %v3860 = vld [vmem:[#allocation3 + $0x70] sm:$0xf]
        %v3861 = vld [vmem:[#allocation3 + $0x74] sm:$0xf]
        %v3862 = vld [vmem:[#allocation3 + $0x78] sm:$0xf]
        %v3863 = vld [vmem:[#allocation3 + $0x7c] sm:$0xf]
        %v3864 = vld [vmem:[%s2] sm:$0xf]
        %v3865 = vld [vmem:[%s2 + $0x4] sm:$0xf]
        %v3866 = vld [vmem:[%s2 + $0x8] sm:$0xf]
        %v3867 = vld [vmem:[%s2 + $0xc] sm:$0xf]
        %v3868 = vld [vmem:[%s2 + $0x10] sm:$0xf]
        %v3869 = vld [vmem:[%s2 + $0x14] sm:$0xf]
        %v3870 = vld [vmem:[%s2 + $0x18] sm:$0xf]
        %v3871 = vld [vmem:[%s2 + $0x1c] sm:$0xf]
        %v3872 = vld [vmem:[%s2 + $0x20] sm:$0xf]
        %v3873 = vld [vmem:[%s2 + $0x24] sm:$0xf]
        %v3874 = vld [vmem:[%s2 + $0x28] sm:$0xf]
        %v3875 = vld [vmem:[%s2 + $0x2c] sm:$0xf]
        %v3876 = vld [vmem:[%s2 + $0x30] sm:$0xf]
        %v3877 = vld [vmem:[%s2 + $0x34] sm:$0xf]
        %v3878 = vld [vmem:[%s2 + $0x38] sm:$0xf]
        %v3879 = vld [vmem:[%s2 + $0x3c] sm:$0xf]
        %v3880 = vld [vmem:[#allocation3 + $0x80] sm:$0xf]
        %v3881 = vld [vmem:[#allocation3 + $0x84] sm:$0xf]
        %v3882 = vld [vmem:[%s2520] sm:$0xf]
        %v3883 = vld [vmem:[%s2520 + $0x4] sm:$0xf]
        %v3884 = vld [vmem:[%s2520 + $0x8] sm:$0xf]
        %v3885 = vld [vmem:[%s2520 + $0xc] sm:$0xf]
        %v3886 = vld [vmem:[%s2520 + $0x10] sm:$0xf]
        %v3887 = vld [vmem:[%s2520 + $0x14] sm:$0xf]
        %v3888 = vld [vmem:[%s2520 + $0x18] sm:$0xf]
        %v3889 = vld [vmem:[%s2520 + $0x1c] sm:$0xf]
        %v3890 = vld [vmem:[%s2520 + $0x20] sm:$0xf]
        %v3891 = vld [vmem:[%s2520 + $0x24] sm:$0xf]
        %v3892 = vld [vmem:[%s2520 + $0x28] sm:$0xf]
        %v3893 = vld [vmem:[%s2520 + $0x2c] sm:$0xf]
        %v3894 = vld [vmem:[%s2520 + $0x30] sm:$0xf]
        %v3895 = vld [vmem:[%s2520 + $0x34] sm:$0xf]
        %v3896 = vld [vmem:[%s2520 + $0x38] sm:$0xf]
        %v3897 = vld [vmem:[%s2520 + $0x3c] sm:$0xf]
        %v3914 = vunpack.c.l.b16 %v3850
        %v3915 = vunpack.c.l.b16 %v3851
        %v3916 = vunpack.c.l.b16 %v3852
        %v3917 = vunpack.c.l.b16 %v3853
        %v3918 = vunpack.c.l.b16 %v3854
        %v3919 = vunpack.c.l.b16 %v3855
        %v3920 = vunpack.c.l.b16 %v3856
        %v3921 = vunpack.c.l.b16 %v3857
        %v3922 = vunpack.c.l.b16 %v3858
        %v3923 = vunpack.c.l.b16 %v3859
        %v3924 = vunpack.c.l.b16 %v3860
        %v3925 = vunpack.c.l.b16 %v3861
        %v3926 = vunpack.c.l.b16 %v3862
        %v3927 = vunpack.c.l.b16 %v3863
        %v3928 = vunpack.c.l.b16 %v3880
        %v3929 = vunpack.c.l.b16 %v3881
        %v3930 = vpack.c.b16 %v3915, %v3914
        %v3931 = vpack.c.b16 %v3917, %v3916
        %v3932 = vpack.c.b16 %v3919, %v3918
        %v3933 = vpack.c.b16 %v3921, %v3920
        %v3934 = vpack.c.b16 %v3923, %v3922
        %v3935 = vpack.c.b16 %v3925, %v3924
        %v3936 = vpack.c.b16 %v3927, %v3926
        %v3937 = vpack.c.b16 %v3929, %v3928
        %v3962 = vunpack.c.l.b16 %v3882
        %v3963 = vunpack.c.l.b16 %v3883
        %v3964 = vunpack.c.l.b16 %v3884
        %v3965 = vunpack.c.l.b16 %v3885
        %v3966 = vunpack.c.l.b16 %v3886
        %v3967 = vunpack.c.l.b16 %v3887
        %v3968 = vunpack.c.l.b16 %v3888
        %v3969 = vunpack.c.l.b16 %v3889
        %v3970 = vunpack.c.l.b16 %v3890
        %v3971 = vunpack.c.l.b16 %v3891
        %v3972 = vunpack.c.l.b16 %v3892
        %v3973 = vunpack.c.l.b16 %v3893
        %v3974 = vunpack.c.l.b16 %v3894
        %v3975 = vunpack.c.l.b16 %v3895
        %v3976 = vunpack.c.l.b16 %v3896
        %v3977 = vunpack.c.l.b16 %v3897
        %v3978 = vpack.c.b16 %v3963, %v3962
        %v3979 = vpack.c.b16 %v3965, %v3964
        %v3980 = vpack.c.b16 %v3967, %v3966
        %v3981 = vpack.c.b16 %v3969, %v3968
        %v3982 = vpack.c.b16 %v3971, %v3970
        %v3983 = vpack.c.b16 %v3973, %v3972
        %v3984 = vpack.c.b16 %v3975, %v3974
        %v3985 = vpack.c.b16 %v3977, %v3976
        %3994 = vmatpush.bf16.msra.mxu0 %v3985
        %3995 = vmatpush.bf16.msra.mxu0 %v3984
        %3996 = vmatpush.bf16.msra.mxu0 %v3983
        %3997 = vmatpush.bf16.msra.mxu0 %v3982
        %3998 = vmatpush.bf16.msra.mxu0 %v3981
        %3999 = vmatpush.bf16.msra.mxu0 %v3980
        %4000 = vmatpush.bf16.msra.mxu0 %v3979
        %4001 = vmatpush.bf16.msra.mxu0 %v3978
        %4002 = vmatmul.bf16.gmra.mxu0 %v3930
        %v4003 = vpop.f32.mrf.mxu0
        %v4004 = vadd.f32 0.0, %v4003
        %v4005 = vpop.f32.mrf.mxu0
        %v4006 = vadd.f32 0.0, %v4005
        %4007 = vmatmul.bf16.gmra.mxu0 %v3931
        %v4008 = vpop.f32.mrf.mxu0
        %v4009 = vadd.f32 0.0, %v4008
        %v4010 = vpop.f32.mrf.mxu0
        %v4011 = vadd.f32 0.0, %v4010
        %4012 = vmatmul.bf16.gmra.mxu0 %v3932
        %v4013 = vpop.f32.mrf.mxu0
        %v4014 = vadd.f32 0.0, %v4013
        %v4015 = vpop.f32.mrf.mxu0
        %v4016 = vadd.f32 0.0, %v4015
        %4017 = vmatmul.bf16.gmra.mxu0 %v3933
        %v4018 = vpop.f32.mrf.mxu0
        %v4019 = vadd.f32 0.0, %v4018
        %v4020 = vpop.f32.mrf.mxu0
        %v4021 = vadd.f32 0.0, %v4020
        %4022 = vmatmul.bf16.gmra.mxu0 %v3934
        %v4023 = vpop.f32.mrf.mxu0
        %v4024 = vadd.f32 0.0, %v4023
        %v4025 = vpop.f32.mrf.mxu0
        %v4026 = vadd.f32 0.0, %v4025
        %4027 = vmatmul.bf16.gmra.mxu0 %v3935
        %v4028 = vpop.f32.mrf.mxu0
        %v4029 = vadd.f32 0.0, %v4028
        %v4030 = vpop.f32.mrf.mxu0
        %v4031 = vadd.f32 0.0, %v4030
        %4032 = vmatmul.bf16.gmra.mxu0 %v3936
        %v4033 = vpop.f32.mrf.mxu0
        %v4034 = vadd.f32 0.0, %v4033
        %v4035 = vpop.f32.mrf.mxu0
        %v4036 = vadd.f32 0.0, %v4035
        %4037 = vmatmul.bf16.gmra.mxu0 %v3937
        %v4038 = vpop.f32.mrf.mxu0
        %v4039 = vadd.f32 0.0, %v4038
        %v4040 = vpop.f32.mrf.mxu0
        %v4041 = vadd.f32 0.0, %v4040
        %4042 = vdwg.mxu0
        %v4045 = vunpack.c.l.b16 %v3848
        %v4046 = vunpack.c.l.b16 %v3849
        %v4047 = vpack.c.b16 %v4046, %v4045
        %v4065 = vunpack.c.l.b16 %v3864
        %v4066 = vunpack.c.l.b16 %v3865
        %v4067 = vunpack.c.l.b16 %v3866
        %v4068 = vunpack.c.l.b16 %v3867
        %v4069 = vunpack.c.l.b16 %v3868
        %v4070 = vunpack.c.l.b16 %v3869
        %v4071 = vunpack.c.l.b16 %v3870
        %v4072 = vunpack.c.l.b16 %v3871
        %v4073 = vunpack.c.l.b16 %v3872
        %v4074 = vunpack.c.l.b16 %v3873
        %v4075 = vunpack.c.l.b16 %v3874
        %v4076 = vunpack.c.l.b16 %v3875
        %v4077 = vunpack.c.l.b16 %v3876
        %v4078 = vunpack.c.l.b16 %v3877
        %v4079 = vunpack.c.l.b16 %v3878
        %v4080 = vunpack.c.l.b16 %v3879
        %v4081 = vpack.c.b16 %v4066, %v4065
        %v4082 = vpack.c.b16 %v4068, %v4067
        %v4083 = vpack.c.b16 %v4070, %v4069
        %v4084 = vpack.c.b16 %v4072, %v4071
        %v4085 = vpack.c.b16 %v4074, %v4073
        %v4086 = vpack.c.b16 %v4076, %v4075
        %v4087 = vpack.c.b16 %v4078, %v4077
        %v4088 = vpack.c.b16 %v4080, %v4079
        %4097 = vmatpush.bf16.msra.mxu0 %v4088
        %4098 = vmatpush.bf16.msra.mxu0 %v4087
        %4099 = vmatpush.bf16.msra.mxu0 %v4086
        %4100 = vmatpush.bf16.msra.mxu0 %v4085
        %4101 = vmatpush.bf16.msra.mxu0 %v4084
        %4102 = vmatpush.bf16.msra.mxu0 %v4083
        %4103 = vmatpush.bf16.msra.mxu0 %v4082
        %4104 = vmatpush.bf16.msra.mxu0 %v4081
        %4105 = vmatmul.bf16.gmra.mxu0 %v4047
        %v4106 = vpop.f32.mrf.mxu0
        %v4107 = vadd.f32 %v4004, %v4106
        %v4108 = vpop.f32.mrf.mxu0
        %v4109 = vadd.f32 %v4006, %v4108
        %4110 = vmatmul.bf16.gmra.mxu0 %v3930
        %v4111 = vpop.f32.mrf.mxu0
        %v4112 = vadd.f32 %v4009, %v4111
        %v4113 = vpop.f32.mrf.mxu0
        %v4114 = vadd.f32 %v4011, %v4113
        %4115 = vmatmul.bf16.gmra.mxu0 %v3931
        %v4116 = vpop.f32.mrf.mxu0
        %v4117 = vadd.f32 %v4014, %v4116
        %v4118 = vpop.f32.mrf.mxu0
        %v4119 = vadd.f32 %v4016, %v4118
        %4120 = vmatmul.bf16.gmra.mxu0 %v3932
        %v4121 = vpop.f32.mrf.mxu0
        %v4122 = vadd.f32 %v4019, %v4121
        %v4123 = vpop.f32.mrf.mxu0
        %v4124 = vadd.f32 %v4021, %v4123
        %4125 = vmatmul.bf16.gmra.mxu0 %v3933
        %v4126 = vpop.f32.mrf.mxu0
        %v4127 = vadd.f32 %v4024, %v4126
        %v4128 = vpop.f32.mrf.mxu0
        %v4129 = vadd.f32 %v4026, %v4128
        %4130 = vmatmul.bf16.gmra.mxu0 %v3934
        %v4131 = vpop.f32.mrf.mxu0
        %v4132 = vadd.f32 %v4029, %v4131
        %v4133 = vpop.f32.mrf.mxu0
        %v4134 = vadd.f32 %v4031, %v4133
        %4135 = vmatmul.bf16.gmra.mxu0 %v3935
        %v4136 = vpop.f32.mrf.mxu0
        %v4137 = vadd.f32 %v4034, %v4136
        %v4138 = vpop.f32.mrf.mxu0
        %v4139 = vadd.f32 %v4036, %v4138
        %4140 = vmatmul.bf16.gmra.mxu0 %v3936
        %v4141 = vpop.f32.mrf.mxu0
        %v4142 = vadd.f32 %v4039, %v4141
        %v4143 = vpop.f32.mrf.mxu0
        %v4144 = vadd.f32 %v4041, %v4143
        %4145 = vdwg.mxu0
        %v4146 = vld [vmem:[#allocation3 + $0x50] sm:$0xf]
        %v4147 = vld [vmem:[#allocation3 + $0x54] sm:$0xf]
        %v4148 = vld [vmem:[#allocation3 + $0x58] sm:$0xf]
        %v4149 = vld [vmem:[#allocation3 + $0x5c] sm:$0xf]
        %v4150 = vld [vmem:[#allocation3 + $0x60] sm:$0xf]
        %v4151 = vld [vmem:[#allocation3 + $0x64] sm:$0xf]
        %v4152 = vld [vmem:[#allocation3 + $0x68] sm:$0xf]
        %v4153 = vld [vmem:[#allocation3 + $0x6c] sm:$0xf]
        %v4154 = vld [vmem:[#allocation3 + $0x70] sm:$0xf]
        %v4155 = vld [vmem:[#allocation3 + $0x74] sm:$0xf]
        %v4156 = vld [vmem:[#allocation3 + $0x78] sm:$0xf]
        %v4157 = vld [vmem:[#allocation3 + $0x7c] sm:$0xf]
        %v4158 = vld [vmem:[#allocation3 + $0x80] sm:$0xf]
        %v4159 = vld [vmem:[#allocation3 + $0x84] sm:$0xf]
        %v4160 = vld [vmem:[#allocation3 + $0x88] sm:$0xf]
        %v4161 = vld [vmem:[#allocation3 + $0x8c] sm:$0xf]
        %v4162 = vld [vmem:[%s2801] sm:$0xf]
        %v4163 = vld [vmem:[%s2801 + $0x4] sm:$0xf]
        %v4164 = vld [vmem:[%s2801 + $0x8] sm:$0xf]
        %v4165 = vld [vmem:[%s2801 + $0xc] sm:$0xf]
        %v4166 = vld [vmem:[%s2801 + $0x10] sm:$0xf]
        %v4167 = vld [vmem:[%s2801 + $0x14] sm:$0xf]
        %v4168 = vld [vmem:[%s2801 + $0x18] sm:$0xf]
        %v4169 = vld [vmem:[%s2801 + $0x1c] sm:$0xf]
        %v4170 = vld [vmem:[%s2801 + $0x20] sm:$0xf]
        %v4171 = vld [vmem:[%s2801 + $0x24] sm:$0xf]
        %v4172 = vld [vmem:[%s2801 + $0x28] sm:$0xf]
        %v4173 = vld [vmem:[%s2801 + $0x2c] sm:$0xf]
        %v4174 = vld [vmem:[%s2801 + $0x30] sm:$0xf]
        %v4175 = vld [vmem:[%s2801 + $0x34] sm:$0xf]
        %v4176 = vld [vmem:[%s2801 + $0x38] sm:$0xf]
        %v4177 = vld [vmem:[%s2801 + $0x3c] sm:$0xf]
        %v4194 = vunpack.c.l.b16 %v4146
        %v4195 = vunpack.c.l.b16 %v4147
        %v4196 = vunpack.c.l.b16 %v4148
        %v4197 = vunpack.c.l.b16 %v4149
        %v4198 = vunpack.c.l.b16 %v4150
        %v4199 = vunpack.c.l.b16 %v4151
        %v4200 = vunpack.c.l.b16 %v4152
        %v4201 = vunpack.c.l.b16 %v4153
        %v4202 = vunpack.c.l.b16 %v4154
        %v4203 = vunpack.c.l.b16 %v4155
        %v4204 = vunpack.c.l.b16 %v4156
        %v4205 = vunpack.c.l.b16 %v4157
        %v4206 = vunpack.c.l.b16 %v4158
        %v4207 = vunpack.c.l.b16 %v4159
        %v4208 = vunpack.c.l.b16 %v4160
        %v4209 = vunpack.c.l.b16 %v4161
        %v4210 = vpack.c.b16 %v4195, %v4194
        %v4211 = vpack.c.b16 %v4197, %v4196
        %v4212 = vpack.c.b16 %v4199, %v4198
        %v4213 = vpack.c.b16 %v4201, %v4200
        %v4214 = vpack.c.b16 %v4203, %v4202
        %v4215 = vpack.c.b16 %v4205, %v4204
        %v4216 = vpack.c.b16 %v4207, %v4206
        %v4217 = vpack.c.b16 %v4209, %v4208
        %v4242 = vunpack.c.l.b16 %v4162
        %v4243 = vunpack.c.l.b16 %v4163
        %v4244 = vunpack.c.l.b16 %v4164
        %v4245 = vunpack.c.l.b16 %v4165
        %v4246 = vunpack.c.l.b16 %v4166
        %v4247 = vunpack.c.l.b16 %v4167
        %v4248 = vunpack.c.l.b16 %v4168
        %v4249 = vunpack.c.l.b16 %v4169
        %v4250 = vunpack.c.l.b16 %v4170
        %v4251 = vunpack.c.l.b16 %v4171
        %v4252 = vunpack.c.l.b16 %v4172
        %v4253 = vunpack.c.l.b16 %v4173
        %v4254 = vunpack.c.l.b16 %v4174
        %v4255 = vunpack.c.l.b16 %v4175
        %v4256 = vunpack.c.l.b16 %v4176
        %v4257 = vunpack.c.l.b16 %v4177
        %v4258 = vpack.c.b16 %v4243, %v4242
        %v4259 = vpack.c.b16 %v4245, %v4244
        %v4260 = vpack.c.b16 %v4247, %v4246
        %v4261 = vpack.c.b16 %v4249, %v4248
        %v4262 = vpack.c.b16 %v4251, %v4250
        %v4263 = vpack.c.b16 %v4253, %v4252
        %v4264 = vpack.c.b16 %v4255, %v4254
        %v4265 = vpack.c.b16 %v4257, %v4256
        %4274 = vmatpush.bf16.msra.mxu0 %v4265
        %4275 = vmatpush.bf16.msra.mxu0 %v4264
        %4276 = vmatpush.bf16.msra.mxu0 %v4263
        %4277 = vmatpush.bf16.msra.mxu0 %v4262
        %4278 = vmatpush.bf16.msra.mxu0 %v4261
        %4279 = vmatpush.bf16.msra.mxu0 %v4260
        %4280 = vmatpush.bf16.msra.mxu0 %v4259
        %4281 = vmatpush.bf16.msra.mxu0 %v4258
        %4282 = vmatmul.bf16.gmra.mxu0 %v4210
        %v4283 = vpop.f32.mrf.mxu0
        %v4284 = vadd.f32 0.0, %v4283
        %v4285 = vpop.f32.mrf.mxu0
        %v4286 = vadd.f32 0.0, %v4285
        %4287 = vmatmul.bf16.gmra.mxu0 %v4211
        %v4288 = vpop.f32.mrf.mxu0
        %v4289 = vadd.f32 0.0, %v4288
        %v4290 = vpop.f32.mrf.mxu0
        %v4291 = vadd.f32 0.0, %v4290
        %4292 = vmatmul.bf16.gmra.mxu0 %v4212
        %v4293 = vpop.f32.mrf.mxu0
        %v4294 = vadd.f32 0.0, %v4293
        %v4295 = vpop.f32.mrf.mxu0
        %v4296 = vadd.f32 0.0, %v4295
        %4297 = vmatmul.bf16.gmra.mxu0 %v4213
        %v4298 = vpop.f32.mrf.mxu0
        %v4299 = vadd.f32 0.0, %v4298
        %v4300 = vpop.f32.mrf.mxu0
        %v4301 = vadd.f32 0.0, %v4300
        %4302 = vmatmul.bf16.gmra.mxu0 %v4214
        %v4303 = vpop.f32.mrf.mxu0
        %v4304 = vadd.f32 0.0, %v4303
        %v4305 = vpop.f32.mrf.mxu0
        %v4306 = vadd.f32 0.0, %v4305
        %4307 = vmatmul.bf16.gmra.mxu0 %v4215
        %v4308 = vpop.f32.mrf.mxu0
        %v4309 = vadd.f32 0.0, %v4308
        %v4310 = vpop.f32.mrf.mxu0
        %v4311 = vadd.f32 0.0, %v4310
        %4312 = vmatmul.bf16.gmra.mxu0 %v4216
        %v4313 = vpop.f32.mrf.mxu0
        %v4314 = vadd.f32 0.0, %v4313
        %v4315 = vpop.f32.mrf.mxu0
        %v4316 = vadd.f32 0.0, %v4315
        %4317 = vmatmul.bf16.gmra.mxu0 %v4217
        %v4318 = vpop.f32.mrf.mxu0
        %v4319 = vadd.f32 0.0, %v4318
        %v4320 = vpop.f32.mrf.mxu0
        %v4321 = vadd.f32 0.0, %v4320
        %4322 = vdwg.mxu0
        %v4323 = vadd.f32 %v4107, %v4284
        %v4324 = vadd.f32 %v4109, %v4286
        %v4325 = vadd.f32 %v4112, %v4289
        %v4326 = vadd.f32 %v4114, %v4291
        %v4327 = vadd.f32 %v4117, %v4294
        %v4328 = vadd.f32 %v4119, %v4296
        %v4329 = vadd.f32 %v4122, %v4299
        %v4330 = vadd.f32 %v4124, %v4301
        %v4331 = vadd.f32 %v4127, %v4304
        %v4332 = vadd.f32 %v4129, %v4306
        %v4333 = vadd.f32 %v4132, %v4309
        %v4334 = vadd.f32 %v4134, %v4311
        %v4335 = vadd.f32 %v4137, %v4314
        %v4336 = vadd.f32 %v4139, %v4316
        %v4337 = vadd.f32 %v4142, %v4319
        %v4338 = vadd.f32 %v4144, %v4321
        %v4339 = vadd.f32 %v4323, %v2980
        %v4340 = vadd.f32 %v4324, %v2980
        %v4341 = vadd.f32 %v4325, %v2980
        %v4342 = vadd.f32 %v4326, %v2980
        %v4343 = vadd.f32 %v4327, %v2980
        %v4344 = vadd.f32 %v4328, %v2980
        %v4345 = vadd.f32 %v4329, %v2980
        %v4346 = vadd.f32 %v4330, %v2980
        %v4347 = vadd.f32 %v4331, %v2980
        %v4348 = vadd.f32 %v4332, %v2980
        %v4349 = vadd.f32 %v4333, %v2980
        %v4350 = vadd.f32 %v4334, %v2980
        %v4351 = vadd.f32 %v4335, %v2980
        %v4352 = vadd.f32 %v4336, %v2980
        %v4353 = vadd.f32 %v4337, %v2980
        %v4354 = vadd.f32 %v4338, %v2980
        %v4355 = vxor.u32 %v4339, 2147483648
        %v4356 = vxor.u32 %v4340, 2147483648
        %v4357 = vxor.u32 %v4341, 2147483648
        %v4358 = vxor.u32 %v4342, 2147483648
        %v4359 = vxor.u32 %v4343, 2147483648
        %v4360 = vxor.u32 %v4344, 2147483648
        %v4361 = vxor.u32 %v4345, 2147483648
        %v4362 = vxor.u32 %v4346, 2147483648
        %v4363 = vxor.u32 %v4347, 2147483648
        %v4364 = vxor.u32 %v4348, 2147483648
        %v4365 = vxor.u32 %v4349, 2147483648
        %v4366 = vxor.u32 %v4350, 2147483648
        %v4367 = vxor.u32 %v4351, 2147483648
        %v4368 = vxor.u32 %v4352, 2147483648
        %v4369 = vxor.u32 %v4353, 2147483648
        %v4370 = vxor.u32 %v4354, 2147483648
        %v4371 = vmul.f32 %v4355, 1.442695
        %v4372 = vpow.pop %v4371
        %v4373 = vmul.f32 %v4356, 1.442695
        %v4374 = vpow.pop %v4373
        %v4375 = vmul.f32 %v4357, 1.442695
        %v4376 = vpow.pop %v4375
        %v4377 = vmul.f32 %v4358, 1.442695
        %v4378 = vpow.pop %v4377
        %v4379 = vmul.f32 %v4359, 1.442695
        %v4380 = vpow.pop %v4379
        %v4381 = vmul.f32 %v4360, 1.442695
        %v4382 = vpow.pop %v4381
        %v4383 = vmul.f32 %v4361, 1.442695
        %v4384 = vpow.pop %v4383
        %v4385 = vmul.f32 %v4362, 1.442695
        %v4386 = vpow.pop %v4385
        %v4387 = vmul.f32 %v4363, 1.442695
        %v4388 = vpow.pop %v4387
        %v4389 = vmul.f32 %v4364, 1.442695
        %v4390 = vpow.pop %v4389
        %v4391 = vmul.f32 %v4365, 1.442695
        %v4392 = vpow.pop %v4391
        %v4393 = vmul.f32 %v4366, 1.442695
        %v4394 = vpow.pop %v4393
        %v4395 = vmul.f32 %v4367, 1.442695
        %v4396 = vpow.pop %v4395
        %v4397 = vmul.f32 %v4368, 1.442695
        %v4398 = vpow.pop %v4397
        %v4399 = vmul.f32 %v4369, 1.442695
        %v4400 = vpow.pop %v4399
        %v4401 = vmul.f32 %v4370, 1.442695
        %v4402 = vpow.pop %v4401
        %v4403 = vadd.f32 %v4372, 1.0
        %v4404 = vadd.f32 %v4374, 1.0
        %v4405 = vadd.f32 %v4376, 1.0
        %v4406 = vadd.f32 %v4378, 1.0
        %v4407 = vadd.f32 %v4380, 1.0
        %v4408 = vadd.f32 %v4382, 1.0
        %v4409 = vadd.f32 %v4384, 1.0
        %v4410 = vadd.f32 %v4386, 1.0
        %v4411 = vadd.f32 %v4388, 1.0
        %v4412 = vadd.f32 %v4390, 1.0
        %v4413 = vadd.f32 %v4392, 1.0
        %v4414 = vadd.f32 %v4394, 1.0
        %v4415 = vadd.f32 %v4396, 1.0
        %v4416 = vadd.f32 %v4398, 1.0
        %v4417 = vadd.f32 %v4400, 1.0
        %v4418 = vadd.f32 %v4402, 1.0
        %v4419 = vrcp.pop %v4403
        %v4420 = vmul.f32 %v4403, %v4419
        %v4421 = vsub.f32 1.0, %v4420
        %v4422 = vmul.f32 %v4419, %v4421
        %v4423 = vadd.f32 %v4419, %v4422
        %vm4424 = vweird.f32 %v4403
        %vm4425 = vweird.f32 %v4419
        %vm4426 = vmor %vm4424, %vm4425
        %v4427 = vsel %vm4426, %v4419, %v4423
        %v4428 = vand.u32 2147483647, %v4403
        %vm4429 = vcmp.eq.f32.partialorder %v4428, 8.507059e+37
        %v4430 = vand.u32 %v4403, 2147483648
        %v4431 = vor.u32 1.1754944e-38, %v4430
        %v4432 = vsel %vm4429, %v4431, %v4427
        %v4433 = vmul.f32 1.0, %v4432
        %v4434 = vrcp.pop %v4404
        %v4435 = vmul.f32 %v4404, %v4434
        %v4436 = vsub.f32 1.0, %v4435
        %v4437 = vmul.f32 %v4434, %v4436
        %v4438 = vadd.f32 %v4434, %v4437
        %vm4439 = vweird.f32 %v4404
        %vm4440 = vweird.f32 %v4434
        %vm4441 = vmor %vm4439, %vm4440
        %v4442 = vsel %vm4441, %v4434, %v4438
        %v4443 = vand.u32 2147483647, %v4404
        %vm4444 = vcmp.eq.f32.partialorder %v4443, 8.507059e+37
        %v4445 = vand.u32 %v4404, 2147483648
        %v4446 = vor.u32 1.1754944e-38, %v4445
        %v4447 = vsel %vm4444, %v4446, %v4442
        %v4448 = vmul.f32 1.0, %v4447
        %v4449 = vrcp.pop %v4405
        %v4450 = vmul.f32 %v4405, %v4449
        %v4451 = vsub.f32 1.0, %v4450
        %v4452 = vmul.f32 %v4449, %v4451
        %v4453 = vadd.f32 %v4449, %v4452
        %vm4454 = vweird.f32 %v4405
        %vm4455 = vweird.f32 %v4449
        %vm4456 = vmor %vm4454, %vm4455
        %v4457 = vsel %vm4456, %v4449, %v4453
        %v4458 = vand.u32 2147483647, %v4405
        %vm4459 = vcmp.eq.f32.partialorder %v4458, 8.507059e+37
        %v4460 = vand.u32 %v4405, 2147483648
        %v4461 = vor.u32 1.1754944e-38, %v4460
        %v4462 = vsel %vm4459, %v4461, %v4457
        %v4463 = vmul.f32 1.0, %v4462
        %v4464 = vrcp.pop %v4406
        %v4465 = vmul.f32 %v4406, %v4464
        %v4466 = vsub.f32 1.0, %v4465
        %v4467 = vmul.f32 %v4464, %v4466
        %v4468 = vadd.f32 %v4464, %v4467
        %vm4469 = vweird.f32 %v4406
        %vm4470 = vweird.f32 %v4464
        %vm4471 = vmor %vm4469, %vm4470
        %v4472 = vsel %vm4471, %v4464, %v4468
        %v4473 = vand.u32 2147483647, %v4406
        %vm4474 = vcmp.eq.f32.partialorder %v4473, 8.507059e+37
        %v4475 = vand.u32 %v4406, 2147483648
        %v4476 = vor.u32 1.1754944e-38, %v4475
        %v4477 = vsel %vm4474, %v4476, %v4472
        %v4478 = vmul.f32 1.0, %v4477
        %v4479 = vrcp.pop %v4407
        %v4480 = vmul.f32 %v4407, %v4479
        %v4481 = vsub.f32 1.0, %v4480
        %v4482 = vmul.f32 %v4479, %v4481
        %v4483 = vadd.f32 %v4479, %v4482
        %vm4484 = vweird.f32 %v4407
        %vm4485 = vweird.f32 %v4479
        %vm4486 = vmor %vm4484, %vm4485
        %v4487 = vsel %vm4486, %v4479, %v4483
        %v4488 = vand.u32 2147483647, %v4407
        %vm4489 = vcmp.eq.f32.partialorder %v4488, 8.507059e+37
        %v4490 = vand.u32 %v4407, 2147483648
        %v4491 = vor.u32 1.1754944e-38, %v4490
        %v4492 = vsel %vm4489, %v4491, %v4487
        %v4493 = vmul.f32 1.0, %v4492
        %v4494 = vrcp.pop %v4408
        %v4495 = vmul.f32 %v4408, %v4494
        %v4496 = vsub.f32 1.0, %v4495
        %v4497 = vmul.f32 %v4494, %v4496
        %v4498 = vadd.f32 %v4494, %v4497
        %vm4499 = vweird.f32 %v4408
        %vm4500 = vweird.f32 %v4494
        %vm4501 = vmor %vm4499, %vm4500
        %v4502 = vsel %vm4501, %v4494, %v4498
        %v4503 = vand.u32 2147483647, %v4408
        %vm4504 = vcmp.eq.f32.partialorder %v4503, 8.507059e+37
        %v4505 = vand.u32 %v4408, 2147483648
        %v4506 = vor.u32 1.1754944e-38, %v4505
        %v4507 = vsel %vm4504, %v4506, %v4502
        %v4508 = vmul.f32 1.0, %v4507
        %v4509 = vrcp.pop %v4409
        %v4510 = vmul.f32 %v4409, %v4509
        %v4511 = vsub.f32 1.0, %v4510
        %v4512 = vmul.f32 %v4509, %v4511
        %v4513 = vadd.f32 %v4509, %v4512
        %vm4514 = vweird.f32 %v4409
        %vm4515 = vweird.f32 %v4509
        %vm4516 = vmor %vm4514, %vm4515
        %v4517 = vsel %vm4516, %v4509, %v4513
        %v4518 = vand.u32 2147483647, %v4409
        %vm4519 = vcmp.eq.f32.partialorder %v4518, 8.507059e+37
        %v4520 = vand.u32 %v4409, 2147483648
        %v4521 = vor.u32 1.1754944e-38, %v4520
        %v4522 = vsel %vm4519, %v4521, %v4517
        %v4523 = vmul.f32 1.0, %v4522
        %v4524 = vrcp.pop %v4410
        %v4525 = vmul.f32 %v4410, %v4524
        %v4526 = vsub.f32 1.0, %v4525
        %v4527 = vmul.f32 %v4524, %v4526
        %v4528 = vadd.f32 %v4524, %v4527
        %vm4529 = vweird.f32 %v4410
        %vm4530 = vweird.f32 %v4524
        %vm4531 = vmor %vm4529, %vm4530
        %v4532 = vsel %vm4531, %v4524, %v4528
        %v4533 = vand.u32 2147483647, %v4410
        %vm4534 = vcmp.eq.f32.partialorder %v4533, 8.507059e+37
        %v4535 = vand.u32 %v4410, 2147483648
        %v4536 = vor.u32 1.1754944e-38, %v4535
        %v4537 = vsel %vm4534, %v4536, %v4532
        %v4538 = vmul.f32 1.0, %v4537
        %v4539 = vrcp.pop %v4411
        %v4540 = vmul.f32 %v4411, %v4539
        %v4541 = vsub.f32 1.0, %v4540
        %v4542 = vmul.f32 %v4539, %v4541
        %v4543 = vadd.f32 %v4539, %v4542
        %vm4544 = vweird.f32 %v4411
        %vm4545 = vweird.f32 %v4539
        %vm4546 = vmor %vm4544, %vm4545
        %v4547 = vsel %vm4546, %v4539, %v4543
        %v4548 = vand.u32 2147483647, %v4411
        %vm4549 = vcmp.eq.f32.partialorder %v4548, 8.507059e+37
        %v4550 = vand.u32 %v4411, 2147483648
        %v4551 = vor.u32 1.1754944e-38, %v4550
        %v4552 = vsel %vm4549, %v4551, %v4547
        %v4553 = vmul.f32 1.0, %v4552
        %v4554 = vrcp.pop %v4412
        %v4555 = vmul.f32 %v4412, %v4554
        %v4556 = vsub.f32 1.0, %v4555
        %v4557 = vmul.f32 %v4554, %v4556
        %v4558 = vadd.f32 %v4554, %v4557
        %vm4559 = vweird.f32 %v4412
        %vm4560 = vweird.f32 %v4554
        %vm4561 = vmor %vm4559, %vm4560
        %v4562 = vsel %vm4561, %v4554, %v4558
        %v4563 = vand.u32 2147483647, %v4412
        %vm4564 = vcmp.eq.f32.partialorder %v4563, 8.507059e+37
        %v4565 = vand.u32 %v4412, 2147483648
        %v4566 = vor.u32 1.1754944e-38, %v4565
        %v4567 = vsel %vm4564, %v4566, %v4562
        %v4568 = vmul.f32 1.0, %v4567
        %v4569 = vrcp.pop %v4413
        %v4570 = vmul.f32 %v4413, %v4569
        %v4571 = vsub.f32 1.0, %v4570
        %v4572 = vmul.f32 %v4569, %v4571
        %v4573 = vadd.f32 %v4569, %v4572
        %vm4574 = vweird.f32 %v4413
        %vm4575 = vweird.f32 %v4569
        %vm4576 = vmor %vm4574, %vm4575
        %v4577 = vsel %vm4576, %v4569, %v4573
        %v4578 = vand.u32 2147483647, %v4413
        %vm4579 = vcmp.eq.f32.partialorder %v4578, 8.507059e+37
        %v4580 = vand.u32 %v4413, 2147483648
        %v4581 = vor.u32 1.1754944e-38, %v4580
        %v4582 = vsel %vm4579, %v4581, %v4577
        %v4583 = vmul.f32 1.0, %v4582
        %v4584 = vrcp.pop %v4414
        %v4585 = vmul.f32 %v4414, %v4584
        %v4586 = vsub.f32 1.0, %v4585
        %v4587 = vmul.f32 %v4584, %v4586
        %v4588 = vadd.f32 %v4584, %v4587
        %vm4589 = vweird.f32 %v4414
        %vm4590 = vweird.f32 %v4584
        %vm4591 = vmor %vm4589, %vm4590
        %v4592 = vsel %vm4591, %v4584, %v4588
        %v4593 = vand.u32 2147483647, %v4414
        %vm4594 = vcmp.eq.f32.partialorder %v4593, 8.507059e+37
        %v4595 = vand.u32 %v4414, 2147483648
        %v4596 = vor.u32 1.1754944e-38, %v4595
        %v4597 = vsel %vm4594, %v4596, %v4592
        %v4598 = vmul.f32 1.0, %v4597
        %v4599 = vrcp.pop %v4415
        %v4600 = vmul.f32 %v4415, %v4599
        %v4601 = vsub.f32 1.0, %v4600
        %v4602 = vmul.f32 %v4599, %v4601
        %v4603 = vadd.f32 %v4599, %v4602
        %vm4604 = vweird.f32 %v4415
        %vm4605 = vweird.f32 %v4599
        %vm4606 = vmor %vm4604, %vm4605
        %v4607 = vsel %vm4606, %v4599, %v4603
        %v4608 = vand.u32 2147483647, %v4415
        %vm4609 = vcmp.eq.f32.partialorder %v4608, 8.507059e+37
        %v4610 = vand.u32 %v4415, 2147483648
        %v4611 = vor.u32 1.1754944e-38, %v4610
        %v4612 = vsel %vm4609, %v4611, %v4607
        %v4613 = vmul.f32 1.0, %v4612
        %v4614 = vrcp.pop %v4416
        %v4615 = vmul.f32 %v4416, %v4614
        %v4616 = vsub.f32 1.0, %v4615
        %v4617 = vmul.f32 %v4614, %v4616
        %v4618 = vadd.f32 %v4614, %v4617
        %vm4619 = vweird.f32 %v4416
        %vm4620 = vweird.f32 %v4614
        %vm4621 = vmor %vm4619, %vm4620
        %v4622 = vsel %vm4621, %v4614, %v4618
        %v4623 = vand.u32 2147483647, %v4416
        %vm4624 = vcmp.eq.f32.partialorder %v4623, 8.507059e+37
        %v4625 = vand.u32 %v4416, 2147483648
        %v4626 = vor.u32 1.1754944e-38, %v4625
        %v4627 = vsel %vm4624, %v4626, %v4622
        %v4628 = vmul.f32 1.0, %v4627
        %v4629 = vrcp.pop %v4417
        %v4630 = vmul.f32 %v4417, %v4629
        %v4631 = vsub.f32 1.0, %v4630
        %v4632 = vmul.f32 %v4629, %v4631
        %v4633 = vadd.f32 %v4629, %v4632
        %vm4634 = vweird.f32 %v4417
        %vm4635 = vweird.f32 %v4629
        %vm4636 = vmor %vm4634, %vm4635
        %v4637 = vsel %vm4636, %v4629, %v4633
        %v4638 = vand.u32 2147483647, %v4417
        %vm4639 = vcmp.eq.f32.partialorder %v4638, 8.507059e+37
        %v4640 = vand.u32 %v4417, 2147483648
        %v4641 = vor.u32 1.1754944e-38, %v4640
        %v4642 = vsel %vm4639, %v4641, %v4637
        %v4643 = vmul.f32 1.0, %v4642
        %v4644 = vrcp.pop %v4418
        %v4645 = vmul.f32 %v4418, %v4644
        %v4646 = vsub.f32 1.0, %v4645
        %v4647 = vmul.f32 %v4644, %v4646
        %v4648 = vadd.f32 %v4644, %v4647
        %vm4649 = vweird.f32 %v4418
        %vm4650 = vweird.f32 %v4644
        %vm4651 = vmor %vm4649, %vm4650
        %v4652 = vsel %vm4651, %v4644, %v4648
        %v4653 = vand.u32 2147483647, %v4418
        %vm4654 = vcmp.eq.f32.partialorder %v4653, 8.507059e+37
        %v4655 = vand.u32 %v4418, 2147483648
        %v4656 = vor.u32 1.1754944e-38, %v4655
        %v4657 = vsel %vm4654, %v4656, %v4652
        %v4658 = vmul.f32 1.0, %v4657
        %v4659 = vtanh.pop %v4339
        %v4660 = vtanh.pop %v4340
        %v4661 = vtanh.pop %v4341
        %v4662 = vtanh.pop %v4342
        %v4663 = vtanh.pop %v4343
        %v4664 = vtanh.pop %v4344
        %v4665 = vtanh.pop %v4345
        %v4666 = vtanh.pop %v4346
        %v4667 = vtanh.pop %v4347
        %v4668 = vtanh.pop %v4348
        %v4669 = vtanh.pop %v4349
        %v4670 = vtanh.pop %v4350
        %v4671 = vtanh.pop %v4351
        %v4672 = vtanh.pop %v4352
        %v4673 = vtanh.pop %v4353
        %v4674 = vtanh.pop %v4354
        %v4675 = vld [vmem:[#allocation4 + $0x80] sm:$0xff]
        %v4676 = vld [vmem:[#allocation4 + $0x88] sm:$0xff]
        %v4677 = vld [vmem:[#allocation4 + $0x90] sm:$0xff]
        %v4678 = vld [vmem:[#allocation4 + $0x98] sm:$0xff]
        %v4679 = vld [vmem:[#allocation4 + $0xa0] sm:$0xff]
        %v4680 = vld [vmem:[#allocation4 + $0xa8] sm:$0xff]
        %v4681 = vld [vmem:[#allocation4 + $0xb0] sm:$0xff]
        %v4682 = vld [vmem:[#allocation4 + $0xb8] sm:$0xff]
        %v4683 = vld [vmem:[#allocation4 + $0xc0] sm:$0xff]
        %v4684 = vld [vmem:[#allocation4 + $0xc8] sm:$0xff]
        %v4685 = vld [vmem:[#allocation4 + $0xd0] sm:$0xff]
        %v4686 = vld [vmem:[#allocation4 + $0xd8] sm:$0xff]
        %v4687 = vld [vmem:[#allocation4 + $0xe0] sm:$0xff]
        %v4688 = vld [vmem:[#allocation4 + $0xe8] sm:$0xff]
        %v4689 = vld [vmem:[#allocation4 + $0xf0] sm:$0xff]
        %v4690 = vld [vmem:[#allocation4 + $0xf8] sm:$0xff]
        %4707 = vrot.lane.b32.xlu0 %v4675, 32
        %v4708 = vpop.permute.xlu0 %4707
        %4709 = vrot.lane.b32.xlu0 %v4676, 32
        %v4710 = vpop.permute.xlu0 %4709
        %4711 = vrot.lane.b32.xlu0 %v4677, 32
        %v4712 = vpop.permute.xlu0 %4711
        %4713 = vrot.lane.b32.xlu0 %v4678, 32
        %v4714 = vpop.permute.xlu0 %4713
        %4715 = vrot.lane.b32.xlu0 %v4679, 32
        %v4716 = vpop.permute.xlu0 %4715
        %4717 = vrot.lane.b32.xlu0 %v4680, 32
        %v4718 = vpop.permute.xlu0 %4717
        %4719 = vrot.lane.b32.xlu0 %v4681, 32
        %v4720 = vpop.permute.xlu0 %4719
        %4721 = vrot.lane.b32.xlu0 %v4682, 32
        %v4722 = vpop.permute.xlu0 %4721
        %4723 = vrot.lane.b32.xlu0 %v4683, 32
        %v4724 = vpop.permute.xlu0 %4723
        %4725 = vrot.lane.b32.xlu0 %v4684, 32
        %v4726 = vpop.permute.xlu0 %4725
        %4727 = vrot.lane.b32.xlu0 %v4685, 32
        %v4728 = vpop.permute.xlu0 %4727
        %4729 = vrot.lane.b32.xlu0 %v4686, 32
        %v4730 = vpop.permute.xlu0 %4729
        %4731 = vrot.lane.b32.xlu0 %v4687, 32
        %v4732 = vpop.permute.xlu0 %4731
        %4733 = vrot.lane.b32.xlu0 %v4688, 32
        %v4734 = vpop.permute.xlu0 %4733
        %4735 = vrot.lane.b32.xlu0 %v4689, 32
        %v4736 = vpop.permute.xlu0 %4735
        %4737 = vrot.lane.b32.xlu0 %v4690, 32
        %v4738 = vpop.permute.xlu0 %4737
        %v4755 = vmul.f32 %v4433, %v4708
        %v4756 = vmul.f32 %v4448, %v4710
        %v4757 = vmul.f32 %v4463, %v4712
        %v4758 = vmul.f32 %v4478, %v4714
        %v4759 = vmul.f32 %v4493, %v4716
        %v4760 = vmul.f32 %v4508, %v4718
        %v4761 = vmul.f32 %v4523, %v4720
        %v4762 = vmul.f32 %v4538, %v4722
        %v4763 = vmul.f32 %v4553, %v4724
        %v4764 = vmul.f32 %v4568, %v4726
        %v4765 = vmul.f32 %v4583, %v4728
        %v4766 = vmul.f32 %v4598, %v4730
        %v4767 = vmul.f32 %v4613, %v4732
        %v4768 = vmul.f32 %v4628, %v4734
        %v4769 = vmul.f32 %v4643, %v4736
        %v4770 = vmul.f32 %v4658, %v4738
        %4787 = vrot.lane.b32.xlu0 %v4659, 64
        %v4788 = vpop.permute.xlu0 %4787
        %4789 = vrot.lane.b32.xlu0 %v4660, 64
        %v4790 = vpop.permute.xlu0 %4789
        %4791 = vrot.lane.b32.xlu0 %v4661, 64
        %v4792 = vpop.permute.xlu0 %4791
        %4793 = vrot.lane.b32.xlu0 %v4662, 64
        %v4794 = vpop.permute.xlu0 %4793
        %4795 = vrot.lane.b32.xlu0 %v4663, 64
        %v4796 = vpop.permute.xlu0 %4795
        %4797 = vrot.lane.b32.xlu0 %v4664, 64
        %v4798 = vpop.permute.xlu0 %4797
        %4799 = vrot.lane.b32.xlu0 %v4665, 64
        %v4800 = vpop.permute.xlu0 %4799
        %4801 = vrot.lane.b32.xlu0 %v4666, 64
        %v4802 = vpop.permute.xlu0 %4801
        %4803 = vrot.lane.b32.xlu0 %v4667, 64
        %v4804 = vpop.permute.xlu0 %4803
        %4805 = vrot.lane.b32.xlu0 %v4668, 64
        %v4806 = vpop.permute.xlu0 %4805
        %4807 = vrot.lane.b32.xlu0 %v4669, 64
        %v4808 = vpop.permute.xlu0 %4807
        %4809 = vrot.lane.b32.xlu0 %v4670, 64
        %v4810 = vpop.permute.xlu0 %4809
        %4811 = vrot.lane.b32.xlu0 %v4671, 64
        %v4812 = vpop.permute.xlu0 %4811
        %4813 = vrot.lane.b32.xlu0 %v4672, 64
        %v4814 = vpop.permute.xlu0 %4813
        %4815 = vrot.lane.b32.xlu0 %v4673, 64
        %v4816 = vpop.permute.xlu0 %4815
        %4817 = vrot.lane.b32.xlu0 %v4674, 64
        %v4818 = vpop.permute.xlu0 %4817
        %v4835 = vmul.f32 %v4433, %v4788
        %v4836 = vmul.f32 %v4448, %v4790
        %v4837 = vmul.f32 %v4463, %v4792
        %v4838 = vmul.f32 %v4478, %v4794
        %v4839 = vmul.f32 %v4493, %v4796
        %v4840 = vmul.f32 %v4508, %v4798
        %v4841 = vmul.f32 %v4523, %v4800
        %v4842 = vmul.f32 %v4538, %v4802
        %v4843 = vmul.f32 %v4553, %v4804
        %v4844 = vmul.f32 %v4568, %v4806
        %v4845 = vmul.f32 %v4583, %v4808
        %v4846 = vmul.f32 %v4598, %v4810
        %v4847 = vmul.f32 %v4613, %v4812
        %v4848 = vmul.f32 %v4628, %v4814
        %v4849 = vmul.f32 %v4643, %v4816
        %v4850 = vmul.f32 %v4658, %v4818
        %4867 = vrot.lane.b32.xlu0 %v4835, 32
        %v4868 = vpop.permute.xlu0 %4867
        %4869 = vrot.lane.b32.xlu0 %v4836, 32
        %v4870 = vpop.permute.xlu0 %4869
        %4871 = vrot.lane.b32.xlu0 %v4837, 32
        %v4872 = vpop.permute.xlu0 %4871
        %4873 = vrot.lane.b32.xlu0 %v4838, 32
        %v4874 = vpop.permute.xlu0 %4873
        %4875 = vrot.lane.b32.xlu0 %v4839, 32
        %v4876 = vpop.permute.xlu0 %4875
        %4877 = vrot.lane.b32.xlu0 %v4840, 32
        %v4878 = vpop.permute.xlu0 %4877
        %4879 = vrot.lane.b32.xlu0 %v4841, 32
        %v4880 = vpop.permute.xlu0 %4879
        %4881 = vrot.lane.b32.xlu0 %v4842, 32
        %v4882 = vpop.permute.xlu0 %4881
        %4883 = vrot.lane.b32.xlu0 %v4843, 32
        %v4884 = vpop.permute.xlu0 %4883
        %4885 = vrot.lane.b32.xlu0 %v4844, 32
        %v4886 = vpop.permute.xlu0 %4885
        %4887 = vrot.lane.b32.xlu0 %v4845, 32
        %v4888 = vpop.permute.xlu0 %4887
        %4889 = vrot.lane.b32.xlu0 %v4846, 32
        %v4890 = vpop.permute.xlu0 %4889
        %4891 = vrot.lane.b32.xlu0 %v4847, 32
        %v4892 = vpop.permute.xlu0 %4891
        %4893 = vrot.lane.b32.xlu0 %v4848, 32
        %v4894 = vpop.permute.xlu0 %4893
        %4895 = vrot.lane.b32.xlu0 %v4849, 32
        %v4896 = vpop.permute.xlu0 %4895
        %4897 = vrot.lane.b32.xlu0 %v4850, 32
        %v4898 = vpop.permute.xlu0 %4897
        %v4915 = vadd.f32 %v4755, %v4868
        %v4916 = vadd.f32 %v4756, %v4870
        %v4917 = vadd.f32 %v4757, %v4872
        %v4918 = vadd.f32 %v4758, %v4874
        %v4919 = vadd.f32 %v4759, %v4876
        %v4920 = vadd.f32 %v4760, %v4878
        %v4921 = vadd.f32 %v4761, %v4880
        %v4922 = vadd.f32 %v4762, %v4882
        %v4923 = vadd.f32 %v4763, %v4884
        %v4924 = vadd.f32 %v4764, %v4886
        %v4925 = vadd.f32 %v4765, %v4888
        %v4926 = vadd.f32 %v4766, %v4890
        %v4927 = vadd.f32 %v4767, %v4892
        %v4928 = vadd.f32 %v4768, %v4894
        %v4929 = vadd.f32 %v4769, %v4896
        %v4930 = vadd.f32 %v4770, %v4898
        %v4931 = vtanh.pop %v4915
        %v4932 = vtanh.pop %v4916
        %v4933 = vtanh.pop %v4917
        %v4934 = vtanh.pop %v4918
        %v4935 = vtanh.pop %v4919
        %v4936 = vtanh.pop %v4920
        %v4937 = vtanh.pop %v4921
        %v4938 = vtanh.pop %v4922
        %v4939 = vtanh.pop %v4923
        %v4940 = vtanh.pop %v4924
        %v4941 = vtanh.pop %v4925
        %v4942 = vtanh.pop %v4926
        %v4943 = vtanh.pop %v4927
        %v4944 = vtanh.pop %v4928
        %v4945 = vtanh.pop %v4929
        %v4946 = vtanh.pop %v4930
        %4963 = vrot.lane.b32.xlu0 %v4931, 64
        %v4964 = vpop.permute.xlu0 %4963
        %4965 = vrot.lane.b32.xlu0 %v4932, 64
        %v4966 = vpop.permute.xlu0 %4965
        %4967 = vrot.lane.b32.xlu0 %v4933, 64
        %v4968 = vpop.permute.xlu0 %4967
        %4969 = vrot.lane.b32.xlu0 %v4934, 64
        %v4970 = vpop.permute.xlu0 %4969
        %4971 = vrot.lane.b32.xlu0 %v4935, 64
        %v4972 = vpop.permute.xlu0 %4971
        %4973 = vrot.lane.b32.xlu0 %v4936, 64
        %v4974 = vpop.permute.xlu0 %4973
        %4975 = vrot.lane.b32.xlu0 %v4937, 64
        %v4976 = vpop.permute.xlu0 %4975
        %4977 = vrot.lane.b32.xlu0 %v4938, 64
        %v4978 = vpop.permute.xlu0 %4977
        %4979 = vrot.lane.b32.xlu0 %v4939, 64
        %v4980 = vpop.permute.xlu0 %4979
        %4981 = vrot.lane.b32.xlu0 %v4940, 64
        %v4982 = vpop.permute.xlu0 %4981
        %4983 = vrot.lane.b32.xlu0 %v4941, 64
        %v4984 = vpop.permute.xlu0 %4983
        %4985 = vrot.lane.b32.xlu0 %v4942, 64
        %v4986 = vpop.permute.xlu0 %4985
        %4987 = vrot.lane.b32.xlu0 %v4943, 64
        %v4988 = vpop.permute.xlu0 %4987
        %4989 = vrot.lane.b32.xlu0 %v4944, 64
        %v4990 = vpop.permute.xlu0 %4989
        %4991 = vrot.lane.b32.xlu0 %v4945, 64
        %v4992 = vpop.permute.xlu0 %4991
        %4993 = vrot.lane.b32.xlu0 %v4946, 64
        %v4994 = vpop.permute.xlu0 %4993
        %v5011 = vmul.f32 %v4433, %v4964
        %v5012 = vmul.f32 %v4448, %v4966
        %v5013 = vmul.f32 %v4463, %v4968
        %v5014 = vmul.f32 %v4478, %v4970
        %v5015 = vmul.f32 %v4493, %v4972
        %v5016 = vmul.f32 %v4508, %v4974
        %v5017 = vmul.f32 %v4523, %v4976
        %v5018 = vmul.f32 %v4538, %v4978
        %v5019 = vmul.f32 %v4553, %v4980
        %v5020 = vmul.f32 %v4568, %v4982
        %v5021 = vmul.f32 %v4583, %v4984
        %v5022 = vmul.f32 %v4598, %v4986
        %v5023 = vmul.f32 %v4613, %v4988
        %v5024 = vmul.f32 %v4628, %v4990
        %v5025 = vmul.f32 %v4643, %v4992
        %v5026 = vmul.f32 %v4658, %v4994
        %5043 = vrot.lane.b32.xlu0 %v4915, 96
        %v5044 = vpop.permute.xlu0 %5043
        %5045 = vrot.lane.b32.xlu0 %v4916, 96
        %v5046 = vpop.permute.xlu0 %5045
        %5047 = vrot.lane.b32.xlu0 %v4917, 96
        %v5048 = vpop.permute.xlu0 %5047
        %5049 = vrot.lane.b32.xlu0 %v4918, 96
        %v5050 = vpop.permute.xlu0 %5049
        %5051 = vrot.lane.b32.xlu0 %v4919, 96
        %v5052 = vpop.permute.xlu0 %5051
        %5053 = vrot.lane.b32.xlu0 %v4920, 96
        %v5054 = vpop.permute.xlu0 %5053
        %5055 = vrot.lane.b32.xlu0 %v4921, 96
        %v5056 = vpop.permute.xlu0 %5055
        %5057 = vrot.lane.b32.xlu0 %v4922, 96
        %v5058 = vpop.permute.xlu0 %5057
        %5059 = vrot.lane.b32.xlu0 %v4923, 96
        %v5060 = vpop.permute.xlu0 %5059
        %5061 = vrot.lane.b32.xlu0 %v4924, 96
        %v5062 = vpop.permute.xlu0 %5061
        %5063 = vrot.lane.b32.xlu0 %v4925, 96
        %v5064 = vpop.permute.xlu0 %5063
        %5065 = vrot.lane.b32.xlu0 %v4926, 96
        %v5066 = vpop.permute.xlu0 %5065
        %5067 = vrot.lane.b32.xlu0 %v4927, 96
        %v5068 = vpop.permute.xlu0 %5067
        %5069 = vrot.lane.b32.xlu0 %v4928, 96
        %v5070 = vpop.permute.xlu0 %5069
        %5071 = vrot.lane.b32.xlu0 %v4929, 96
        %v5072 = vpop.permute.xlu0 %5071
        %5073 = vrot.lane.b32.xlu0 %v4930, 96
        %v5074 = vpop.permute.xlu0 %5073
        %5091 = vst.msk [vmem:[#allocation4 + $0x80] sm:$0xff] %vm423, %v5044
        %5092 = vst.msk [vmem:[#allocation4 + $0x88] sm:$0xff] %vm423, %v5046
        %5093 = vst.msk [vmem:[#allocation4 + $0x90] sm:$0xff] %vm423, %v5048
        %5094 = vst.msk [vmem:[#allocation4 + $0x98] sm:$0xff] %vm423, %v5050
        %5095 = vst.msk [vmem:[#allocation4 + $0xa0] sm:$0xff] %vm423, %v5052
        %5096 = vst.msk [vmem:[#allocation4 + $0xa8] sm:$0xff] %vm423, %v5054
        %5097 = vst.msk [vmem:[#allocation4 + $0xb0] sm:$0xff] %vm423, %v5056
        %5098 = vst.msk [vmem:[#allocation4 + $0xb8] sm:$0xff] %vm423, %v5058
        %5099 = vst.msk [vmem:[#allocation4 + $0xc0] sm:$0xff] %vm423, %v5060
        %5100 = vst.msk [vmem:[#allocation4 + $0xc8] sm:$0xff] %vm423, %v5062
        %5101 = vst.msk [vmem:[#allocation4 + $0xd0] sm:$0xff] %vm423, %v5064
        %5102 = vst.msk [vmem:[#allocation4 + $0xd8] sm:$0xff] %vm423, %v5066
        %5103 = vst.msk [vmem:[#allocation4 + $0xe0] sm:$0xff] %vm423, %v5068
        %5104 = vst.msk [vmem:[#allocation4 + $0xe8] sm:$0xff] %vm423, %v5070
        %5105 = vst.msk [vmem:[#allocation4 + $0xf0] sm:$0xff] %vm423, %v5072
        %5106 = vst.msk [vmem:[#allocation4 + $0xf8] sm:$0xff] %vm423, %v5074
        %v5107 = vpack.c.bf16 %v5011, %v5011
        %v5108 = vpack.c.bf16 %v5012, %v5012
        %v5109 = vpack.c.bf16 %v5013, %v5013
        %v5110 = vpack.c.bf16 %v5014, %v5014
        %v5111 = vpack.c.bf16 %v5015, %v5015
        %v5112 = vpack.c.bf16 %v5016, %v5016
        %v5113 = vpack.c.bf16 %v5017, %v5017
        %v5114 = vpack.c.bf16 %v5018, %v5018
        %v5115 = vpack.c.bf16 %v5019, %v5019
        %v5116 = vpack.c.bf16 %v5020, %v5020
        %v5117 = vpack.c.bf16 %v5021, %v5021
        %v5118 = vpack.c.bf16 %v5022, %v5022
        %v5119 = vpack.c.bf16 %v5023, %v5023
        %v5120 = vpack.c.bf16 %v5024, %v5024
        %v5121 = vpack.c.bf16 %v5025, %v5025
        %v5122 = vpack.c.bf16 %v5026, %v5026
        %5139 = vrot.lane.b32.xlu0 %v5107, 32
        %v5140 = vpop.permute.xlu0 %5139
        %5141 = vrot.lane.b32.xlu0 %v5108, 32
        %v5142 = vpop.permute.xlu0 %5141
        %5143 = vrot.lane.b32.xlu0 %v5109, 32
        %v5144 = vpop.permute.xlu0 %5143
        %5145 = vrot.lane.b32.xlu0 %v5110, 32
        %v5146 = vpop.permute.xlu0 %5145
        %5147 = vrot.lane.b32.xlu0 %v5111, 32
        %v5148 = vpop.permute.xlu0 %5147
        %5149 = vrot.lane.b32.xlu0 %v5112, 32
        %v5150 = vpop.permute.xlu0 %5149
        %5151 = vrot.lane.b32.xlu0 %v5113, 32
        %v5152 = vpop.permute.xlu0 %5151
        %5153 = vrot.lane.b32.xlu0 %v5114, 32
        %v5154 = vpop.permute.xlu0 %5153
        %5155 = vrot.lane.b32.xlu0 %v5115, 32
        %v5156 = vpop.permute.xlu0 %5155
        %5157 = vrot.lane.b32.xlu0 %v5116, 32
        %v5158 = vpop.permute.xlu0 %5157
        %5159 = vrot.lane.b32.xlu0 %v5117, 32
        %v5160 = vpop.permute.xlu0 %5159
        %5161 = vrot.lane.b32.xlu0 %v5118, 32
        %v5162 = vpop.permute.xlu0 %5161
        %5163 = vrot.lane.b32.xlu0 %v5119, 32
        %v5164 = vpop.permute.xlu0 %5163
        %5165 = vrot.lane.b32.xlu0 %v5120, 32
        %v5166 = vpop.permute.xlu0 %5165
        %5167 = vrot.lane.b32.xlu0 %v5121, 32
        %v5168 = vpop.permute.xlu0 %5167
        %5169 = vrot.lane.b32.xlu0 %v5122, 32
        %v5170 = vpop.permute.xlu0 %5169
        %s5187 = scalar_lea.vmem [#allocation2], 144
        %5188 = vst.msk [vmem:[%s5187 + $0x4] sm:$0xf] %vm3831, %v5140
        %5189 = vst.msk [vmem:[%s5187 + $0x8] sm:$0xf] %vm3831, %v5142
        %5190 = vst.msk [vmem:[%s5187 + $0x14] sm:$0xf] %vm3831, %v5144
        %5191 = vst.msk [vmem:[%s5187 + $0x18] sm:$0xf] %vm3831, %v5146
        %5192 = vst.msk [vmem:[%s5187 + $0x24] sm:$0xf] %vm3831, %v5148
        %5193 = vst.msk [vmem:[%s5187 + $0x28] sm:$0xf] %vm3831, %v5150
        %5194 = vst.msk [vmem:[%s5187 + $0x34] sm:$0xf] %vm3831, %v5152
        %5195 = vst.msk [vmem:[%s5187 + $0x38] sm:$0xf] %vm3831, %v5154
        %5196 = vst.msk [vmem:[%s5187 + $0x44] sm:$0xf] %vm3831, %v5156
        %5197 = vst.msk [vmem:[%s5187 + $0x48] sm:$0xf] %vm3831, %v5158
        %5198 = vst.msk [vmem:[%s5187 + $0x54] sm:$0xf] %vm3831, %v5160
        %5199 = vst.msk [vmem:[%s5187 + $0x58] sm:$0xf] %vm3831, %v5162
        %5200 = vst.msk [vmem:[%s5187 + $0x64] sm:$0xf] %vm3831, %v5164
        %5201 = vst.msk [vmem:[%s5187 + $0x68] sm:$0xf] %vm3831, %v5166
        %5202 = vst.msk [vmem:[%s5187 + $0x74] sm:$0xf] %vm3831, %v5168
        %5203 = vst.msk [vmem:[%s5187 + $0x78] sm:$0xf] %vm3831, %v5170
        %v5204 = vld [vmem:[%s3830 + $0x4] sm:$0xf]
        %v5205 = vld [vmem:[%s3830 + $0x8] sm:$0xf]
        %v5206 = vld [vmem:[%s3830 + $0x14] sm:$0xf]
        %v5207 = vld [vmem:[%s3830 + $0x18] sm:$0xf]
        %v5208 = vld [vmem:[%s3830 + $0x24] sm:$0xf]
        %v5209 = vld [vmem:[%s3830 + $0x28] sm:$0xf]
        %v5210 = vld [vmem:[%s3830 + $0x34] sm:$0xf]
        %v5211 = vld [vmem:[%s3830 + $0x38] sm:$0xf]
        %v5212 = vld [vmem:[%s3830 + $0x44] sm:$0xf]
        %v5213 = vld [vmem:[%s3830 + $0x48] sm:$0xf]
        %v5214 = vld [vmem:[%s3830 + $0x54] sm:$0xf]
        %v5215 = vld [vmem:[%s3830 + $0x58] sm:$0xf]
        %v5216 = vld [vmem:[%s3830 + $0x64] sm:$0xf]
        %v5217 = vld [vmem:[%s3830 + $0x68] sm:$0xf]
        %v5218 = vld [vmem:[%s3830 + $0x74] sm:$0xf]
        %v5219 = vld [vmem:[%s3830 + $0x78] sm:$0xf]
        %v5220 = vld [vmem:[%s3830 + $0x84] sm:$0xf]
        %v5221 = vld [vmem:[%s3830 + $0x88] sm:$0xf]
        %v5222 = vld [vmem:[%s3830 + $0x94] sm:$0xf]
        %v5223 = vld [vmem:[%s3830 + $0x98] sm:$0xf]
        %v5224 = vld [vmem:[%s3830 + $0xa4] sm:$0xf]
        %v5225 = vld [vmem:[%s3830 + $0xa8] sm:$0xf]
        %v5226 = vld [vmem:[%s3830 + $0xb4] sm:$0xf]
        %v5227 = vld [vmem:[%s3830 + $0xb8] sm:$0xf]
        %v5228 = vld [vmem:[%s3830 + $0xc4] sm:$0xf]
        %v5229 = vld [vmem:[%s3830 + $0xc8] sm:$0xf]
        %v5230 = vld [vmem:[%s3830 + $0xd4] sm:$0xf]
        %v5231 = vld [vmem:[%s3830 + $0xd8] sm:$0xf]
        %v5232 = vld [vmem:[%s3830 + $0xe4] sm:$0xf]
        %v5233 = vld [vmem:[%s3830 + $0xe8] sm:$0xf]
        %v5234 = vld [vmem:[%s3830 + $0xf4] sm:$0xf]
        %v5235 = vld [vmem:[%s3830 + $0xf8] sm:$0xf]
        %5268 = vrot.lane.b32.xlu0 %v5204, 32
        %v5269 = vpop.permute.xlu0 %5268
        %5270 = vrot.lane.b32.xlu0 %v5205, 32
        %v5271 = vpop.permute.xlu0 %5270
        %5272 = vrot.lane.b32.xlu0 %v5206, 32
        %v5273 = vpop.permute.xlu0 %5272
        %5274 = vrot.lane.b32.xlu0 %v5207, 32
        %v5275 = vpop.permute.xlu0 %5274
        %5276 = vrot.lane.b32.xlu0 %v5208, 32
        %v5277 = vpop.permute.xlu0 %5276
        %5278 = vrot.lane.b32.xlu0 %v5209, 32
        %v5279 = vpop.permute.xlu0 %5278
        %5280 = vrot.lane.b32.xlu0 %v5210, 32
        %v5281 = vpop.permute.xlu0 %5280
        %5282 = vrot.lane.b32.xlu0 %v5211, 32
        %v5283 = vpop.permute.xlu0 %5282
        %5284 = vrot.lane.b32.xlu0 %v5212, 32
        %v5285 = vpop.permute.xlu0 %5284
        %5286 = vrot.lane.b32.xlu0 %v5213, 32
        %v5287 = vpop.permute.xlu0 %5286
        %5288 = vrot.lane.b32.xlu0 %v5214, 32
        %v5289 = vpop.permute.xlu0 %5288
        %5290 = vrot.lane.b32.xlu0 %v5215, 32
        %v5291 = vpop.permute.xlu0 %5290
        %5292 = vrot.lane.b32.xlu0 %v5216, 32
        %v5293 = vpop.permute.xlu0 %5292
        %5294 = vrot.lane.b32.xlu0 %v5217, 32
        %v5295 = vpop.permute.xlu0 %5294
        %5296 = vrot.lane.b32.xlu0 %v5218, 32
        %v5297 = vpop.permute.xlu0 %5296
        %5298 = vrot.lane.b32.xlu0 %v5219, 32
        %v5299 = vpop.permute.xlu0 %5298
        %5300 = vrot.lane.b32.xlu0 %v5220, 32
        %v5301 = vpop.permute.xlu0 %5300
        %5302 = vrot.lane.b32.xlu0 %v5221, 32
        %v5303 = vpop.permute.xlu0 %5302
        %5304 = vrot.lane.b32.xlu0 %v5222, 32
        %v5305 = vpop.permute.xlu0 %5304
        %5306 = vrot.lane.b32.xlu0 %v5223, 32
        %v5307 = vpop.permute.xlu0 %5306
        %5308 = vrot.lane.b32.xlu0 %v5224, 32
        %v5309 = vpop.permute.xlu0 %5308
        %5310 = vrot.lane.b32.xlu0 %v5225, 32
        %v5311 = vpop.permute.xlu0 %5310
        %5312 = vrot.lane.b32.xlu0 %v5226, 32
        %v5313 = vpop.permute.xlu0 %5312
        %5314 = vrot.lane.b32.xlu0 %v5227, 32
        %v5315 = vpop.permute.xlu0 %5314
        %5316 = vrot.lane.b32.xlu0 %v5228, 32
        %v5317 = vpop.permute.xlu0 %5316
        %5318 = vrot.lane.b32.xlu0 %v5229, 32
        %v5319 = vpop.permute.xlu0 %5318
        %5320 = vrot.lane.b32.xlu0 %v5230, 32
        %v5321 = vpop.permute.xlu0 %5320
        %5322 = vrot.lane.b32.xlu0 %v5231, 32
        %v5323 = vpop.permute.xlu0 %5322
        %5324 = vrot.lane.b32.xlu0 %v5232, 32
        %v5325 = vpop.permute.xlu0 %5324
        %5326 = vrot.lane.b32.xlu0 %v5233, 32
        %v5327 = vpop.permute.xlu0 %5326
        %5328 = vrot.lane.b32.xlu0 %v5234, 32
        %v5329 = vpop.permute.xlu0 %5328
        %5330 = vrot.lane.b32.xlu0 %v5235, 32
        %v5331 = vpop.permute.xlu0 %5330
        %s5364 = scalar_lea.vmem [#allocation5], 16
        %vm5365 = vcmask 519424
        %5366 = vst.msk [vmem:[%s5364 + $0x4] sm:$0xf] %vm5365, %v5269
        %5367 = vst.msk [vmem:[%s5364 + $0x8] sm:$0xf] %vm5365, %v5271
        %5368 = vst.msk [vmem:[%s5364 + $0x14] sm:$0xf] %vm5365, %v5273
        %5369 = vst.msk [vmem:[%s5364 + $0x18] sm:$0xf] %vm5365, %v5275
        %5370 = vst.msk [vmem:[%s5364 + $0x24] sm:$0xf] %vm5365, %v5277
        %5371 = vst.msk [vmem:[%s5364 + $0x28] sm:$0xf] %vm5365, %v5279
        %5372 = vst.msk [vmem:[%s5364 + $0x34] sm:$0xf] %vm5365, %v5281
        %5373 = vst.msk [vmem:[%s5364 + $0x38] sm:$0xf] %vm5365, %v5283
        %5374 = vst.msk [vmem:[%s5364 + $0x44] sm:$0xf] %vm5365, %v5285
        %5375 = vst.msk [vmem:[%s5364 + $0x48] sm:$0xf] %vm5365, %v5287
        %5376 = vst.msk [vmem:[%s5364 + $0x54] sm:$0xf] %vm5365, %v5289
        %5377 = vst.msk [vmem:[%s5364 + $0x58] sm:$0xf] %vm5365, %v5291
        %5378 = vst.msk [vmem:[%s5364 + $0x64] sm:$0xf] %vm5365, %v5293
        %5379 = vst.msk [vmem:[%s5364 + $0x68] sm:$0xf] %vm5365, %v5295
        %5380 = vst.msk [vmem:[%s5364 + $0x74] sm:$0xf] %vm5365, %v5297
        %5381 = vst.msk [vmem:[%s5364 + $0x78] sm:$0xf] %vm5365, %v5299
        %5382 = vst.msk [vmem:[%s5364 + $0x84] sm:$0xf] %vm5365, %v5301
        %5383 = vst.msk [vmem:[%s5364 + $0x88] sm:$0xf] %vm5365, %v5303
        %5384 = vst.msk [vmem:[%s5364 + $0x94] sm:$0xf] %vm5365, %v5305
        %5385 = vst.msk [vmem:[%s5364 + $0x98] sm:$0xf] %vm5365, %v5307
        %5386 = vst.msk [vmem:[%s5364 + $0xa4] sm:$0xf] %vm5365, %v5309
        %5387 = vst.msk [vmem:[%s5364 + $0xa8] sm:$0xf] %vm5365, %v5311
        %5388 = vst.msk [vmem:[%s5364 + $0xb4] sm:$0xf] %vm5365, %v5313
        %5389 = vst.msk [vmem:[%s5364 + $0xb8] sm:$0xf] %vm5365, %v5315
        %5390 = vst.msk [vmem:[%s5364 + $0xc4] sm:$0xf] %vm5365, %v5317
        %5391 = vst.msk [vmem:[%s5364 + $0xc8] sm:$0xf] %vm5365, %v5319
        %5392 = vst.msk [vmem:[%s5364 + $0xd4] sm:$0xf] %vm5365, %v5321
        %5393 = vst.msk [vmem:[%s5364 + $0xd8] sm:$0xf] %vm5365, %v5323
        %5394 = vst.msk [vmem:[%s5364 + $0xe4] sm:$0xf] %vm5365, %v5325
        %5395 = vst.msk [vmem:[%s5364 + $0xe8] sm:$0xf] %vm5365, %v5327
        %5396 = vst.msk [vmem:[%s5364 + $0xf4] sm:$0xf] %vm5365, %v5329
        %5397 = vst.msk [vmem:[%s5364 + $0xf8] sm:$0xf] %vm5365, %v5331
        %v5398 = vld [vmem:[#allocation5] sm:$0x8]
        %v5399 = vld [vmem:[#allocation5 + $0x4] sm:$0xf]
        %v5400 = vld [vmem:[#allocation5 + $0x8] sm:$0xf]
        %v5401 = vld [vmem:[#allocation5 + $0x10] sm:$0x8]
        %v5402 = vld [vmem:[#allocation5 + $0x14] sm:$0xf]
        %v5403 = vld [vmem:[#allocation5 + $0x18] sm:$0xf]
        %v5404 = vld [vmem:[#allocation5 + $0x20] sm:$0x8]
        %v5405 = vld [vmem:[#allocation5 + $0x24] sm:$0xf]
        %v5406 = vld [vmem:[#allocation5 + $0x28] sm:$0xf]
        %v5407 = vld [vmem:[#allocation5 + $0x30] sm:$0x8]
        %v5408 = vld [vmem:[#allocation5 + $0x34] sm:$0xf]
        %v5409 = vld [vmem:[#allocation5 + $0x38] sm:$0xf]
        %v5410 = vld [vmem:[#allocation5 + $0x40] sm:$0x8]
        %v5411 = vld [vmem:[#allocation5 + $0x44] sm:$0xf]
        %v5412 = vld [vmem:[#allocation5 + $0x48] sm:$0xf]
        %v5413 = vld [vmem:[#allocation5 + $0x50] sm:$0x8]
        %v5414 = vld [vmem:[#allocation5 + $0x54] sm:$0xf]
        %v5415 = vld [vmem:[#allocation5 + $0x58] sm:$0xf]
        %v5416 = vld [vmem:[#allocation5 + $0x60] sm:$0x8]
        %v5417 = vld [vmem:[#allocation5 + $0x64] sm:$0xf]
        %v5418 = vld [vmem:[#allocation5 + $0x68] sm:$0xf]
        %v5419 = vld [vmem:[#allocation5 + $0x70] sm:$0x8]
        %v5420 = vld [vmem:[#allocation5 + $0x74] sm:$0xf]
        %v5421 = vld [vmem:[#allocation5 + $0x78] sm:$0xf]
        %v5422 = vld [vmem:[#allocation5 + $0x80] sm:$0x8]
        %v5423 = vld [vmem:[#allocation5 + $0x84] sm:$0xf]
        %v5424 = vld [vmem:[#allocation5 + $0x88] sm:$0xf]
        %v5425 = vld [vmem:[#allocation5 + $0x90] sm:$0x8]
        %v5426 = vld [vmem:[#allocation5 + $0x94] sm:$0xf]
        %v5427 = vld [vmem:[#allocation5 + $0x98] sm:$0xf]
        %v5428 = vld [vmem:[#allocation5 + $0xa0] sm:$0x8]
        %v5429 = vld [vmem:[#allocation5 + $0xa4] sm:$0xf]
        %v5430 = vld [vmem:[#allocation5 + $0xa8] sm:$0xf]
        %v5431 = vld [vmem:[#allocation5 + $0xb0] sm:$0x8]
        %v5432 = vld [vmem:[#allocation5 + $0xb4] sm:$0xf]
        %v5433 = vld [vmem:[#allocation5 + $0xb8] sm:$0xf]
        %v5434 = vld [vmem:[#allocation5 + $0xc0] sm:$0x8]
        %v5435 = vld [vmem:[#allocation5 + $0xc4] sm:$0xf]
        %v5436 = vld [vmem:[#allocation5 + $0xc8] sm:$0xf]
        %v5437 = vld [vmem:[#allocation5 + $0xd0] sm:$0x8]
        %v5438 = vld [vmem:[#allocation5 + $0xd4] sm:$0xf]
        %v5439 = vld [vmem:[#allocation5 + $0xd8] sm:$0xf]
        %v5440 = vld [vmem:[#allocation5 + $0xe0] sm:$0x8]
        %v5441 = vld [vmem:[#allocation5 + $0xe4] sm:$0xf]
        %v5442 = vld [vmem:[#allocation5 + $0xe8] sm:$0xf]
        %v5443 = vld [vmem:[#allocation5 + $0xf0] sm:$0x8]
        %v5444 = vld [vmem:[#allocation5 + $0xf4] sm:$0xf]
        %v5445 = vld [vmem:[#allocation5 + $0xf8] sm:$0xf]
        %v5446 = vld [vmem:[#allocation5 + $0x100] sm:$0x8]
        %v5447 = vld [vmem:[#allocation5 + $0x104] sm:$0xf]
        %v5448 = vld [vmem:[#allocation5 + $0x108] sm:$0xf]
        %v5449 = vld [vmem:[#allocation5 + $0x110] sm:$0x8]
        %v5450 = vld [vmem:[#allocation5 + $0x114] sm:$0xf]
        %v5451 = vld [vmem:[#allocation5 + $0x118] sm:$0xf]
        %v5453 = vshrl.u32 %v5398, 16
        %v5455 = vrot.slane %v5453, 7
        %v5456 = vrot.slane %v5455, 4
        %v5458 = vshrl.u32 %v5399, 16
        %v5460 = vrot.slane %v5458, 7
        %v5461 = vshll.u32 %v5399, 16
        %v5463 = vor.u32 %v5460, %v5461
        %v5464 = vsel %vm1165, %v5456, %v5463
        %v5465 = vrot.slane %v5460, 4
        %v5467 = vshrl.u32 %v5400, 16
        %v5469 = vrot.slane %v5467, 7
        %v5470 = vshll.u32 %v5400, 16
        %v5472 = vor.u32 %v5469, %v5470
        %v5473 = vsel %vm1165, %v5465, %v5472
        %v5475 = vshrl.u32 %v5401, 16
        %v5477 = vrot.slane %v5475, 7
        %v5478 = vrot.slane %v5477, 4
        %v5480 = vshrl.u32 %v5402, 16
        %v5482 = vrot.slane %v5480, 7
        %v5483 = vshll.u32 %v5402, 16
        %v5485 = vor.u32 %v5482, %v5483
        %v5486 = vsel %vm1165, %v5478, %v5485
        %v5487 = vrot.slane %v5482, 4
        %v5489 = vshrl.u32 %v5403, 16
        %v5491 = vrot.slane %v5489, 7
        %v5492 = vshll.u32 %v5403, 16
        %v5494 = vor.u32 %v5491, %v5492
        %v5495 = vsel %vm1165, %v5487, %v5494
        %v5497 = vshrl.u32 %v5404, 16
        %v5499 = vrot.slane %v5497, 7
        %v5500 = vrot.slane %v5499, 4
        %v5502 = vshrl.u32 %v5405, 16
        %v5504 = vrot.slane %v5502, 7
        %v5505 = vshll.u32 %v5405, 16
        %v5507 = vor.u32 %v5504, %v5505
        %v5508 = vsel %vm1165, %v5500, %v5507
        %v5509 = vrot.slane %v5504, 4
        %v5511 = vshrl.u32 %v5406, 16
        %v5513 = vrot.slane %v5511, 7
        %v5514 = vshll.u32 %v5406, 16
        %v5516 = vor.u32 %v5513, %v5514
        %v5517 = vsel %vm1165, %v5509, %v5516
        %v5519 = vshrl.u32 %v5407, 16
        %v5521 = vrot.slane %v5519, 7
        %v5522 = vrot.slane %v5521, 4
        %v5524 = vshrl.u32 %v5408, 16
        %v5526 = vrot.slane %v5524, 7
        %v5527 = vshll.u32 %v5408, 16
        %v5529 = vor.u32 %v5526, %v5527
        %v5530 = vsel %vm1165, %v5522, %v5529
        %v5531 = vrot.slane %v5526, 4
        %v5533 = vshrl.u32 %v5409, 16
        %v5535 = vrot.slane %v5533, 7
        %v5536 = vshll.u32 %v5409, 16
        %v5538 = vor.u32 %v5535, %v5536
        %v5539 = vsel %vm1165, %v5531, %v5538
        %v5541 = vshrl.u32 %v5410, 16
        %v5543 = vrot.slane %v5541, 7
        %v5544 = vrot.slane %v5543, 4
        %v5546 = vshrl.u32 %v5411, 16
        %v5548 = vrot.slane %v5546, 7
        %v5549 = vshll.u32 %v5411, 16
        %v5551 = vor.u32 %v5548, %v5549
        %v5552 = vsel %vm1165, %v5544, %v5551
        %v5553 = vrot.slane %v5548, 4
        %v5555 = vshrl.u32 %v5412, 16
        %v5557 = vrot.slane %v5555, 7
        %v5558 = vshll.u32 %v5412, 16
        %v5560 = vor.u32 %v5557, %v5558
        %v5561 = vsel %vm1165, %v5553, %v5560
        %v5563 = vshrl.u32 %v5413, 16
        %v5565 = vrot.slane %v5563, 7
        %v5566 = vrot.slane %v5565, 4
        %v5568 = vshrl.u32 %v5414, 16
        %v5570 = vrot.slane %v5568, 7
        %v5571 = vshll.u32 %v5414, 16
        %v5573 = vor.u32 %v5570, %v5571
        %v5574 = vsel %vm1165, %v5566, %v5573
        %v5575 = vrot.slane %v5570, 4
        %v5577 = vshrl.u32 %v5415, 16
        %v5579 = vrot.slane %v5577, 7
        %v5580 = vshll.u32 %v5415, 16
        %v5582 = vor.u32 %v5579, %v5580
        %v5583 = vsel %vm1165, %v5575, %v5582
        %v5585 = vshrl.u32 %v5416, 16
        %v5587 = vrot.slane %v5585, 7
        %v5588 = vrot.slane %v5587, 4
        %v5590 = vshrl.u32 %v5417, 16
        %v5592 = vrot.slane %v5590, 7
        %v5593 = vshll.u32 %v5417, 16
        %v5595 = vor.u32 %v5592, %v5593
        %v5596 = vsel %vm1165, %v5588, %v5595
        %v5597 = vrot.slane %v5592, 4
        %v5599 = vshrl.u32 %v5418, 16
        %v5601 = vrot.slane %v5599, 7
        %v5602 = vshll.u32 %v5418, 16
        %v5604 = vor.u32 %v5601, %v5602
        %v5605 = vsel %vm1165, %v5597, %v5604
        %v5607 = vshrl.u32 %v5419, 16
        %v5609 = vrot.slane %v5607, 7
        %v5610 = vrot.slane %v5609, 4
        %v5612 = vshrl.u32 %v5420, 16
        %v5614 = vrot.slane %v5612, 7
        %v5615 = vshll.u32 %v5420, 16
        %v5617 = vor.u32 %v5614, %v5615
        %v5618 = vsel %vm1165, %v5610, %v5617
        %v5619 = vrot.slane %v5614, 4
        %v5621 = vshrl.u32 %v5421, 16
        %v5623 = vrot.slane %v5621, 7
        %v5624 = vshll.u32 %v5421, 16
        %v5626 = vor.u32 %v5623, %v5624
        %v5627 = vsel %vm1165, %v5619, %v5626
        %v5629 = vshrl.u32 %v5422, 16
        %v5631 = vrot.slane %v5629, 7
        %v5632 = vrot.slane %v5631, 4
        %v5634 = vshrl.u32 %v5423, 16
        %v5636 = vrot.slane %v5634, 7
        %v5637 = vshll.u32 %v5423, 16
        %v5639 = vor.u32 %v5636, %v5637
        %v5640 = vsel %vm1165, %v5632, %v5639
        %v5641 = vrot.slane %v5636, 4
        %v5643 = vshrl.u32 %v5424, 16
        %v5645 = vrot.slane %v5643, 7
        %v5646 = vshll.u32 %v5424, 16
        %v5648 = vor.u32 %v5645, %v5646
        %v5649 = vsel %vm1165, %v5641, %v5648
        %v5651 = vshrl.u32 %v5425, 16
        %v5653 = vrot.slane %v5651, 7
        %v5654 = vrot.slane %v5653, 4
        %v5656 = vshrl.u32 %v5426, 16
        %v5658 = vrot.slane %v5656, 7
        %v5659 = vshll.u32 %v5426, 16
        %v5661 = vor.u32 %v5658, %v5659
        %v5662 = vsel %vm1165, %v5654, %v5661
        %v5663 = vrot.slane %v5658, 4
        %v5665 = vshrl.u32 %v5427, 16
        %v5667 = vrot.slane %v5665, 7
        %v5668 = vshll.u32 %v5427, 16
        %v5670 = vor.u32 %v5667, %v5668
        %v5671 = vsel %vm1165, %v5663, %v5670
        %v5673 = vshrl.u32 %v5428, 16
        %v5675 = vrot.slane %v5673, 7
        %v5676 = vrot.slane %v5675, 4
        %v5678 = vshrl.u32 %v5429, 16
        %v5680 = vrot.slane %v5678, 7
        %v5681 = vshll.u32 %v5429, 16
        %v5683 = vor.u32 %v5680, %v5681
        %v5684 = vsel %vm1165, %v5676, %v5683
        %v5685 = vrot.slane %v5680, 4
        %v5687 = vshrl.u32 %v5430, 16
        %v5689 = vrot.slane %v5687, 7
        %v5690 = vshll.u32 %v5430, 16
        %v5692 = vor.u32 %v5689, %v5690
        %v5693 = vsel %vm1165, %v5685, %v5692
        %v5695 = vshrl.u32 %v5431, 16
        %v5697 = vrot.slane %v5695, 7
        %v5698 = vrot.slane %v5697, 4
        %v5700 = vshrl.u32 %v5432, 16
        %v5702 = vrot.slane %v5700, 7
        %v5703 = vshll.u32 %v5432, 16
        %v5705 = vor.u32 %v5702, %v5703
        %v5706 = vsel %vm1165, %v5698, %v5705
        %v5707 = vrot.slane %v5702, 4
        %v5709 = vshrl.u32 %v5433, 16
        %v5711 = vrot.slane %v5709, 7
        %v5712 = vshll.u32 %v5433, 16
        %v5714 = vor.u32 %v5711, %v5712
        %v5715 = vsel %vm1165, %v5707, %v5714
        %v5717 = vshrl.u32 %v5434, 16
        %v5719 = vrot.slane %v5717, 7
        %v5720 = vrot.slane %v5719, 4
        %v5722 = vshrl.u32 %v5435, 16
        %v5724 = vrot.slane %v5722, 7
        %v5725 = vshll.u32 %v5435, 16
        %v5727 = vor.u32 %v5724, %v5725
        %v5728 = vsel %vm1165, %v5720, %v5727
        %v5729 = vrot.slane %v5724, 4
        %v5731 = vshrl.u32 %v5436, 16
        %v5733 = vrot.slane %v5731, 7
        %v5734 = vshll.u32 %v5436, 16
        %v5736 = vor.u32 %v5733, %v5734
        %v5737 = vsel %vm1165, %v5729, %v5736
        %v5739 = vshrl.u32 %v5437, 16
        %v5741 = vrot.slane %v5739, 7
        %v5742 = vrot.slane %v5741, 4
        %v5744 = vshrl.u32 %v5438, 16
        %v5746 = vrot.slane %v5744, 7
        %v5747 = vshll.u32 %v5438, 16
        %v5749 = vor.u32 %v5746, %v5747
        %v5750 = vsel %vm1165, %v5742, %v5749
        %v5751 = vrot.slane %v5746, 4
        %v5753 = vshrl.u32 %v5439, 16
        %v5755 = vrot.slane %v5753, 7
        %v5756 = vshll.u32 %v5439, 16
        %v5758 = vor.u32 %v5755, %v5756
        %v5759 = vsel %vm1165, %v5751, %v5758
        %v5761 = vshrl.u32 %v5440, 16
        %v5763 = vrot.slane %v5761, 7
        %v5764 = vrot.slane %v5763, 4
        %v5766 = vshrl.u32 %v5441, 16
        %v5768 = vrot.slane %v5766, 7
        %v5769 = vshll.u32 %v5441, 16
        %v5771 = vor.u32 %v5768, %v5769
        %v5772 = vsel %vm1165, %v5764, %v5771
        %v5773 = vrot.slane %v5768, 4
        %v5775 = vshrl.u32 %v5442, 16
        %v5777 = vrot.slane %v5775, 7
        %v5778 = vshll.u32 %v5442, 16
        %v5780 = vor.u32 %v5777, %v5778
        %v5781 = vsel %vm1165, %v5773, %v5780
        %v5783 = vshrl.u32 %v5443, 16
        %v5785 = vrot.slane %v5783, 7
        %v5786 = vrot.slane %v5785, 4
        %v5788 = vshrl.u32 %v5444, 16
        %v5790 = vrot.slane %v5788, 7
        %v5791 = vshll.u32 %v5444, 16
        %v5793 = vor.u32 %v5790, %v5791
        %v5794 = vsel %vm1165, %v5786, %v5793
        %v5795 = vrot.slane %v5790, 4
        %v5797 = vshrl.u32 %v5445, 16
        %v5799 = vrot.slane %v5797, 7
        %v5800 = vshll.u32 %v5445, 16
        %v5802 = vor.u32 %v5799, %v5800
        %v5803 = vsel %vm1165, %v5795, %v5802
        %v5805 = vshrl.u32 %v5446, 16
        %v5807 = vrot.slane %v5805, 7
        %v5808 = vrot.slane %v5807, 4
        %v5810 = vshrl.u32 %v5447, 16
        %v5812 = vrot.slane %v5810, 7
        %v5813 = vshll.u32 %v5447, 16
        %v5815 = vor.u32 %v5812, %v5813
        %v5816 = vsel %vm1165, %v5808, %v5815
        %v5817 = vrot.slane %v5812, 4
        %v5819 = vshrl.u32 %v5448, 16
        %v5821 = vrot.slane %v5819, 7
        %v5822 = vshll.u32 %v5448, 16
        %v5824 = vor.u32 %v5821, %v5822
        %v5825 = vsel %vm1165, %v5817, %v5824
        %v5827 = vshrl.u32 %v5449, 16
        %v5829 = vrot.slane %v5827, 7
        %v5830 = vrot.slane %v5829, 4
        %v5832 = vshrl.u32 %v5450, 16
        %v5834 = vrot.slane %v5832, 7
        %v5835 = vshll.u32 %v5450, 16
        %v5837 = vor.u32 %v5834, %v5835
        %v5838 = vsel %vm1165, %v5830, %v5837
        %v5839 = vrot.slane %v5834, 4
        %v5841 = vshrl.u32 %v5451, 16
        %v5843 = vrot.slane %v5841, 7
        %v5844 = vshll.u32 %v5451, 16
        %v5846 = vor.u32 %v5843, %v5844
        %v5847 = vsel %vm1165, %v5839, %v5846
        %5884 = vst.msk [vmem:[#allocation6] sm:$0xf] %vm456, %v5464
        %5885 = vst.msk [vmem:[#allocation6 + $0x8] sm:$0xf] %vm456, %v5473
        %5886 = vst.msk [vmem:[#allocation6 + $0x10] sm:$0xf] %vm456, %v5486
        %5887 = vst.msk [vmem:[#allocation6 + $0x18] sm:$0xf] %vm456, %v5495
        %5888 = vst.msk [vmem:[#allocation6 + $0x20] sm:$0xf] %vm456, %v5508
        %5889 = vst.msk [vmem:[#allocation6 + $0x28] sm:$0xf] %vm456, %v5517
        %5890 = vst.msk [vmem:[#allocation6 + $0x30] sm:$0xf] %vm456, %v5530
        %5891 = vst.msk [vmem:[#allocation6 + $0x38] sm:$0xf] %vm456, %v5539
        %5892 = vst.msk [vmem:[#allocation6 + $0x40] sm:$0xf] %vm456, %v5552
        %5893 = vst.msk [vmem:[#allocation6 + $0x48] sm:$0xf] %vm456, %v5561
        %5894 = vst.msk [vmem:[#allocation6 + $0x50] sm:$0xf] %vm456, %v5574
        %5895 = vst.msk [vmem:[#allocation6 + $0x58] sm:$0xf] %vm456, %v5583
        %5896 = vst.msk [vmem:[#allocation6 + $0x60] sm:$0xf] %vm456, %v5596
        %5897 = vst.msk [vmem:[#allocation6 + $0x68] sm:$0xf] %vm456, %v5605
        %5898 = vst.msk [vmem:[#allocation6 + $0x70] sm:$0xf] %vm456, %v5618
        %5899 = vst.msk [vmem:[#allocation6 + $0x78] sm:$0xf] %vm456, %v5627
        %5900 = vst.msk [vmem:[#allocation6 + $0x80] sm:$0xf] %vm456, %v5640
        %5901 = vst.msk [vmem:[#allocation6 + $0x88] sm:$0xf] %vm456, %v5649
        %5902 = vst.msk [vmem:[#allocation6 + $0x90] sm:$0xf] %vm456, %v5662
        %5903 = vst.msk [vmem:[#allocation6 + $0x98] sm:$0xf] %vm456, %v5671
        %5904 = vst.msk [vmem:[#allocation6 + $0xa0] sm:$0xf] %vm456, %v5684
        %5905 = vst.msk [vmem:[#allocation6 + $0xa8] sm:$0xf] %vm456, %v5693
        %5906 = vst.msk [vmem:[#allocation6 + $0xb0] sm:$0xf] %vm456, %v5706
        %5907 = vst.msk [vmem:[#allocation6 + $0xb8] sm:$0xf] %vm456, %v5715
        %5908 = vst.msk [vmem:[#allocation6 + $0xc0] sm:$0xf] %vm456, %v5728
        %5909 = vst.msk [vmem:[#allocation6 + $0xc8] sm:$0xf] %vm456, %v5737
        %5910 = vst.msk [vmem:[#allocation6 + $0xd0] sm:$0xf] %vm456, %v5750
        %5911 = vst.msk [vmem:[#allocation6 + $0xd8] sm:$0xf] %vm456, %v5759
        %5912 = vst.msk [vmem:[#allocation6 + $0xe0] sm:$0xf] %vm456, %v5772
        %5913 = vst.msk [vmem:[#allocation6 + $0xe8] sm:$0xf] %vm456, %v5781
        %5914 = vst.msk [vmem:[#allocation6 + $0xf0] sm:$0xf] %vm456, %v5794
        %5915 = vst.msk [vmem:[#allocation6 + $0xf8] sm:$0xf] %vm456, %v5803
        %5916 = vst.msk [vmem:[#allocation6 + $0x100] sm:$0xf] %vm456, %v5816
        %5917 = vst.msk [vmem:[#allocation6 + $0x108] sm:$0xf] %vm456, %v5825
        %5918 = vst.msk [vmem:[#allocation6 + $0x110] sm:$0xf] %vm456, %v5838
        %5919 = vst.msk [vmem:[#allocation6 + $0x118] sm:$0xf] %vm456, %v5847
        %v5920 = vld [vmem:[#allocation5 + $0x4] sm:$0xf]
        %v5921 = vld [vmem:[#allocation5 + $0x8] sm:$0xf]
        %v5922 = vld [vmem:[#allocation5 + $0x14] sm:$0xf]
        %v5923 = vld [vmem:[#allocation5 + $0x18] sm:$0xf]
        %v5924 = vld [vmem:[#allocation5 + $0x24] sm:$0xf]
        %v5925 = vld [vmem:[#allocation5 + $0x28] sm:$0xf]
        %v5926 = vld [vmem:[#allocation5 + $0x34] sm:$0xf]
        %v5927 = vld [vmem:[#allocation5 + $0x38] sm:$0xf]
        %v5928 = vld [vmem:[#allocation5 + $0x44] sm:$0xf]
        %v5929 = vld [vmem:[#allocation5 + $0x48] sm:$0xf]
        %v5930 = vld [vmem:[#allocation5 + $0x54] sm:$0xf]
        %v5931 = vld [vmem:[#allocation5 + $0x58] sm:$0xf]
        %v5932 = vld [vmem:[#allocation5 + $0x64] sm:$0xf]
        %v5933 = vld [vmem:[#allocation5 + $0x68] sm:$0xf]
        %v5934 = vld [vmem:[#allocation5 + $0x74] sm:$0xf]
        %v5935 = vld [vmem:[#allocation5 + $0x78] sm:$0xf]
        %v5936 = vld [vmem:[#allocation5 + $0x84] sm:$0xf]
        %v5937 = vld [vmem:[#allocation5 + $0x88] sm:$0xf]
        %v5938 = vld [vmem:[#allocation5 + $0x94] sm:$0xf]
        %v5939 = vld [vmem:[#allocation5 + $0x98] sm:$0xf]
        %v5940 = vld [vmem:[#allocation5 + $0xa4] sm:$0xf]
        %v5941 = vld [vmem:[#allocation5 + $0xa8] sm:$0xf]
        %v5942 = vld [vmem:[#allocation5 + $0xb4] sm:$0xf]
        %v5943 = vld [vmem:[#allocation5 + $0xb8] sm:$0xf]
        %v5944 = vld [vmem:[#allocation5 + $0xc4] sm:$0xf]
        %v5945 = vld [vmem:[#allocation5 + $0xc8] sm:$0xf]
        %v5946 = vld [vmem:[#allocation5 + $0xd4] sm:$0xf]
        %v5947 = vld [vmem:[#allocation5 + $0xd8] sm:$0xf]
        %v5948 = vld [vmem:[#allocation5 + $0xe4] sm:$0xf]
        %v5949 = vld [vmem:[#allocation5 + $0xe8] sm:$0xf]
        %v5950 = vld [vmem:[#allocation5 + $0xf4] sm:$0xf]
        %v5951 = vld [vmem:[#allocation5 + $0xf8] sm:$0xf]
        %v5952 = vld [vmem:[#allocation5 + $0x104] sm:$0xf]
        %v5953 = vld [vmem:[#allocation5 + $0x108] sm:$0xf]
        %v5954 = vld [vmem:[#allocation5 + $0x114] sm:$0xf]
        %v5955 = vld [vmem:[#allocation5 + $0x118] sm:$0xf]
        %5992 = vrot.lane.b32.xlu0 %v5920, 64
        %v5993 = vpop.permute.xlu0 %5992
        %5994 = vrot.lane.b32.xlu0 %v5921, 64
        %v5995 = vpop.permute.xlu0 %5994
        %5996 = vrot.lane.b32.xlu0 %v5922, 64
        %v5997 = vpop.permute.xlu0 %5996
        %5998 = vrot.lane.b32.xlu0 %v5923, 64
        %v5999 = vpop.permute.xlu0 %5998
        %6000 = vrot.lane.b32.xlu0 %v5924, 64
        %v6001 = vpop.permute.xlu0 %6000
        %6002 = vrot.lane.b32.xlu0 %v5925, 64
        %v6003 = vpop.permute.xlu0 %6002
        %6004 = vrot.lane.b32.xlu0 %v5926, 64
        %v6005 = vpop.permute.xlu0 %6004
        %6006 = vrot.lane.b32.xlu0 %v5927, 64
        %v6007 = vpop.permute.xlu0 %6006
        %6008 = vrot.lane.b32.xlu0 %v5928, 64
        %v6009 = vpop.permute.xlu0 %6008
        %6010 = vrot.lane.b32.xlu0 %v5929, 64
        %v6011 = vpop.permute.xlu0 %6010
        %6012 = vrot.lane.b32.xlu0 %v5930, 64
        %v6013 = vpop.permute.xlu0 %6012
        %6014 = vrot.lane.b32.xlu0 %v5931, 64
        %v6015 = vpop.permute.xlu0 %6014
        %6016 = vrot.lane.b32.xlu0 %v5932, 64
        %v6017 = vpop.permute.xlu0 %6016
        %6018 = vrot.lane.b32.xlu0 %v5933, 64
        %v6019 = vpop.permute.xlu0 %6018
        %6020 = vrot.lane.b32.xlu0 %v5934, 64
        %v6021 = vpop.permute.xlu0 %6020
        %6022 = vrot.lane.b32.xlu0 %v5935, 64
        %v6023 = vpop.permute.xlu0 %6022
        %6024 = vrot.lane.b32.xlu0 %v5936, 64
        %v6025 = vpop.permute.xlu0 %6024
        %6026 = vrot.lane.b32.xlu0 %v5937, 64
        %v6027 = vpop.permute.xlu0 %6026
        %6028 = vrot.lane.b32.xlu0 %v5938, 64
        %v6029 = vpop.permute.xlu0 %6028
        %6030 = vrot.lane.b32.xlu0 %v5939, 64
        %v6031 = vpop.permute.xlu0 %6030
        %6032 = vrot.lane.b32.xlu0 %v5940, 64
        %v6033 = vpop.permute.xlu0 %6032
        %6034 = vrot.lane.b32.xlu0 %v5941, 64
        %v6035 = vpop.permute.xlu0 %6034
        %6036 = vrot.lane.b32.xlu0 %v5942, 64
        %v6037 = vpop.permute.xlu0 %6036
        %6038 = vrot.lane.b32.xlu0 %v5943, 64
        %v6039 = vpop.permute.xlu0 %6038
        %6040 = vrot.lane.b32.xlu0 %v5944, 64
        %v6041 = vpop.permute.xlu0 %6040
        %6042 = vrot.lane.b32.xlu0 %v5945, 64
        %v6043 = vpop.permute.xlu0 %6042
        %6044 = vrot.lane.b32.xlu0 %v5946, 64
        %v6045 = vpop.permute.xlu0 %6044
        %6046 = vrot.lane.b32.xlu0 %v5947, 64
        %v6047 = vpop.permute.xlu0 %6046
        %6048 = vrot.lane.b32.xlu0 %v5948, 64
        %v6049 = vpop.permute.xlu0 %6048
        %6050 = vrot.lane.b32.xlu0 %v5949, 64
        %v6051 = vpop.permute.xlu0 %6050
        %6052 = vrot.lane.b32.xlu0 %v5950, 64
        %v6053 = vpop.permute.xlu0 %6052
        %6054 = vrot.lane.b32.xlu0 %v5951, 64
        %v6055 = vpop.permute.xlu0 %6054
        %6056 = vrot.lane.b32.xlu0 %v5952, 64
        %v6057 = vpop.permute.xlu0 %6056
        %6058 = vrot.lane.b32.xlu0 %v5953, 64
        %v6059 = vpop.permute.xlu0 %6058
        %6060 = vrot.lane.b32.xlu0 %v5954, 64
        %v6061 = vpop.permute.xlu0 %6060
        %6062 = vrot.lane.b32.xlu0 %v5955, 64
        %v6063 = vpop.permute.xlu0 %6062
        %vm6100 = vcmask 1043968
        %6101 = vst.msk [vmem:[#allocation6] sm:$0xf] %vm6100, %v5993
        %6102 = vst.msk [vmem:[#allocation6 + $0x8] sm:$0xf] %vm6100, %v5995
        %6103 = vst.msk [vmem:[#allocation6 + $0x10] sm:$0xf] %vm6100, %v5997
        %6104 = vst.msk [vmem:[#allocation6 + $0x18] sm:$0xf] %vm6100, %v5999
        %6105 = vst.msk [vmem:[#allocation6 + $0x20] sm:$0xf] %vm6100, %v6001
        %6106 = vst.msk [vmem:[#allocation6 + $0x28] sm:$0xf] %vm6100, %v6003
        %6107 = vst.msk [vmem:[#allocation6 + $0x30] sm:$0xf] %vm6100, %v6005
        %6108 = vst.msk [vmem:[#allocation6 + $0x38] sm:$0xf] %vm6100, %v6007
        %6109 = vst.msk [vmem:[#allocation6 + $0x40] sm:$0xf] %vm6100, %v6009
        %6110 = vst.msk [vmem:[#allocation6 + $0x48] sm:$0xf] %vm6100, %v6011
        %6111 = vst.msk [vmem:[#allocation6 + $0x50] sm:$0xf] %vm6100, %v6013
        %6112 = vst.msk [vmem:[#allocation6 + $0x58] sm:$0xf] %vm6100, %v6015
        %6113 = vst.msk [vmem:[#allocation6 + $0x60] sm:$0xf] %vm6100, %v6017
        %6114 = vst.msk [vmem:[#allocation6 + $0x68] sm:$0xf] %vm6100, %v6019
        %6115 = vst.msk [vmem:[#allocation6 + $0x70] sm:$0xf] %vm6100, %v6021
        %6116 = vst.msk [vmem:[#allocation6 + $0x78] sm:$0xf] %vm6100, %v6023
        %6117 = vst.msk [vmem:[#allocation6 + $0x80] sm:$0xf] %vm6100, %v6025
        %6118 = vst.msk [vmem:[#allocation6 + $0x88] sm:$0xf] %vm6100, %v6027
        %6119 = vst.msk [vmem:[#allocation6 + $0x90] sm:$0xf] %vm6100, %v6029
        %6120 = vst.msk [vmem:[#allocation6 + $0x98] sm:$0xf] %vm6100, %v6031
        %6121 = vst.msk [vmem:[#allocation6 + $0xa0] sm:$0xf] %vm6100, %v6033
        %6122 = vst.msk [vmem:[#allocation6 + $0xa8] sm:$0xf] %vm6100, %v6035
        %6123 = vst.msk [vmem:[#allocation6 + $0xb0] sm:$0xf] %vm6100, %v6037
        %6124 = vst.msk [vmem:[#allocation6 + $0xb8] sm:$0xf] %vm6100, %v6039
        %6125 = vst.msk [vmem:[#allocation6 + $0xc0] sm:$0xf] %vm6100, %v6041
        %6126 = vst.msk [vmem:[#allocation6 + $0xc8] sm:$0xf] %vm6100, %v6043
        %6127 = vst.msk [vmem:[#allocation6 + $0xd0] sm:$0xf] %vm6100, %v6045
        %6128 = vst.msk [vmem:[#allocation6 + $0xd8] sm:$0xf] %vm6100, %v6047
        %6129 = vst.msk [vmem:[#allocation6 + $0xe0] sm:$0xf] %vm6100, %v6049
        %6130 = vst.msk [vmem:[#allocation6 + $0xe8] sm:$0xf] %vm6100, %v6051
        %6131 = vst.msk [vmem:[#allocation6 + $0xf0] sm:$0xf] %vm6100, %v6053
        %6132 = vst.msk [vmem:[#allocation6 + $0xf8] sm:$0xf] %vm6100, %v6055
        %6133 = vst.msk [vmem:[#allocation6 + $0x100] sm:$0xf] %vm6100, %v6057
        %6134 = vst.msk [vmem:[#allocation6 + $0x108] sm:$0xf] %vm6100, %v6059
        %6135 = vst.msk [vmem:[#allocation6 + $0x110] sm:$0xf] %vm6100, %v6061
        %6136 = vst.msk [vmem:[#allocation6 + $0x118] sm:$0xf] %vm6100, %v6063
        %v6137 = vld [vmem:[#allocation5 + $0x4] sm:$0xf]
        %v6138 = vld [vmem:[#allocation5 + $0x8] sm:$0xf]
        %v6139 = vld [vmem:[#allocation5 + $0xc] sm:$0x1]
        %v6140 = vld [vmem:[#allocation5 + $0x14] sm:$0xf]
        %v6141 = vld [vmem:[#allocation5 + $0x18] sm:$0xf]
        %v6142 = vld [vmem:[#allocation5 + $0x1c] sm:$0x1]
        %v6143 = vld [vmem:[#allocation5 + $0x24] sm:$0xf]
        %v6144 = vld [vmem:[#allocation5 + $0x28] sm:$0xf]
        %v6145 = vld [vmem:[#allocation5 + $0x2c] sm:$0x1]
        %v6146 = vld [vmem:[#allocation5 + $0x34] sm:$0xf]
        %v6147 = vld [vmem:[#allocation5 + $0x38] sm:$0xf]
        %v6148 = vld [vmem:[#allocation5 + $0x3c] sm:$0x1]
        %v6149 = vld [vmem:[#allocation5 + $0x44] sm:$0xf]
        %v6150 = vld [vmem:[#allocation5 + $0x48] sm:$0xf]
        %v6151 = vld [vmem:[#allocation5 + $0x4c] sm:$0x1]
        %v6152 = vld [vmem:[#allocation5 + $0x54] sm:$0xf]
        %v6153 = vld [vmem:[#allocation5 + $0x58] sm:$0xf]
        %v6154 = vld [vmem:[#allocation5 + $0x5c] sm:$0x1]
        %v6155 = vld [vmem:[#allocation5 + $0x64] sm:$0xf]
        %v6156 = vld [vmem:[#allocation5 + $0x68] sm:$0xf]
        %v6157 = vld [vmem:[#allocation5 + $0x6c] sm:$0x1]
        %v6158 = vld [vmem:[#allocation5 + $0x74] sm:$0xf]
        %v6159 = vld [vmem:[#allocation5 + $0x78] sm:$0xf]
        %v6160 = vld [vmem:[#allocation5 + $0x7c] sm:$0x1]
        %v6161 = vld [vmem:[#allocation5 + $0x84] sm:$0xf]
        %v6162 = vld [vmem:[#allocation5 + $0x88] sm:$0xf]
        %v6163 = vld [vmem:[#allocation5 + $0x8c] sm:$0x1]
        %v6164 = vld [vmem:[#allocation5 + $0x94] sm:$0xf]
        %v6165 = vld [vmem:[#allocation5 + $0x98] sm:$0xf]
        %v6166 = vld [vmem:[#allocation5 + $0x9c] sm:$0x1]
        %v6167 = vld [vmem:[#allocation5 + $0xa4] sm:$0xf]
        %v6168 = vld [vmem:[#allocation5 + $0xa8] sm:$0xf]
        %v6169 = vld [vmem:[#allocation5 + $0xac] sm:$0x1]
        %v6170 = vld [vmem:[#allocation5 + $0xb4] sm:$0xf]
        %v6171 = vld [vmem:[#allocation5 + $0xb8] sm:$0xf]
        %v6172 = vld [vmem:[#allocation5 + $0xbc] sm:$0x1]
        %v6173 = vld [vmem:[#allocation5 + $0xc4] sm:$0xf]
        %v6174 = vld [vmem:[#allocation5 + $0xc8] sm:$0xf]
        %v6175 = vld [vmem:[#allocation5 + $0xcc] sm:$0x1]
        %v6176 = vld [vmem:[#allocation5 + $0xd4] sm:$0xf]
        %v6177 = vld [vmem:[#allocation5 + $0xd8] sm:$0xf]
        %v6178 = vld [vmem:[#allocation5 + $0xdc] sm:$0x1]
        %v6179 = vld [vmem:[#allocation5 + $0xe4] sm:$0xf]
        %v6180 = vld [vmem:[#allocation5 + $0xe8] sm:$0xf]
        %v6181 = vld [vmem:[#allocation5 + $0xec] sm:$0x1]
        %v6182 = vld [vmem:[#allocation5 + $0xf4] sm:$0xf]
        %v6183 = vld [vmem:[#allocation5 + $0xf8] sm:$0xf]
        %v6184 = vld [vmem:[#allocation5 + $0xfc] sm:$0x1]
        %v6185 = vld [vmem:[#allocation5 + $0x104] sm:$0xf]
        %v6186 = vld [vmem:[#allocation5 + $0x108] sm:$0xf]
        %v6187 = vld [vmem:[#allocation5 + $0x10c] sm:$0x1]
        %v6188 = vld [vmem:[#allocation5 + $0x114] sm:$0xf]
        %v6189 = vld [vmem:[#allocation5 + $0x118] sm:$0xf]
        %v6190 = vld [vmem:[#allocation5 + $0x11c] sm:$0x1]
        %v6192 = vshrl.u32 %v6137, 16
        %v6194 = vrot.slane %v6192, 4
        %v6195 = vshll.u32 %v6137, 16
        %v6197 = vrot.slane %v6195, 5
        %v6198 = vor.u32 %v6194, %v6197
        %v6199 = vrot.slane %v6198, 4
        %v6201 = vshll.u32 %v6138, 16
        %v6203 = vrot.slane %v6201, 5
        %v6204 = vsel %vm1907, %v6199, %v6203
        %v6205 = vshrl.u32 %v6138, 16
        %v6207 = vrot.slane %v6205, 4
        %v6208 = vor.u32 %v6207, %v6203
        %v6209 = vrot.slane %v6208, 4
        %v6211 = vshll.u32 %v6139, 16
        %v6213 = vrot.slane %v6211, 5
        %v6214 = vsel %vm1907, %v6209, %v6213
        %v6216 = vshrl.u32 %v6140, 16
        %v6218 = vrot.slane %v6216, 4
        %v6219 = vshll.u32 %v6140, 16
        %v6221 = vrot.slane %v6219, 5
        %v6222 = vor.u32 %v6218, %v6221
        %v6223 = vrot.slane %v6222, 4
        %v6225 = vshll.u32 %v6141, 16
        %v6227 = vrot.slane %v6225, 5
        %v6228 = vsel %vm1907, %v6223, %v6227
        %v6229 = vshrl.u32 %v6141, 16
        %v6231 = vrot.slane %v6229, 4
        %v6232 = vor.u32 %v6231, %v6227
        %v6233 = vrot.slane %v6232, 4
        %v6235 = vshll.u32 %v6142, 16
        %v6237 = vrot.slane %v6235, 5
        %v6238 = vsel %vm1907, %v6233, %v6237
        %v6240 = vshrl.u32 %v6143, 16
        %v6242 = vrot.slane %v6240, 4
        %v6243 = vshll.u32 %v6143, 16
        %v6245 = vrot.slane %v6243, 5
        %v6246 = vor.u32 %v6242, %v6245
        %v6247 = vrot.slane %v6246, 4
        %v6249 = vshll.u32 %v6144, 16
        %v6251 = vrot.slane %v6249, 5
        %v6252 = vsel %vm1907, %v6247, %v6251
        %v6253 = vshrl.u32 %v6144, 16
        %v6255 = vrot.slane %v6253, 4
        %v6256 = vor.u32 %v6255, %v6251
        %v6257 = vrot.slane %v6256, 4
        %v6259 = vshll.u32 %v6145, 16
        %v6261 = vrot.slane %v6259, 5
        %v6262 = vsel %vm1907, %v6257, %v6261
        %v6264 = vshrl.u32 %v6146, 16
        %v6266 = vrot.slane %v6264, 4
        %v6267 = vshll.u32 %v6146, 16
        %v6269 = vrot.slane %v6267, 5
        %v6270 = vor.u32 %v6266, %v6269
        %v6271 = vrot.slane %v6270, 4
        %v6273 = vshll.u32 %v6147, 16
        %v6275 = vrot.slane %v6273, 5
        %v6276 = vsel %vm1907, %v6271, %v6275
        %v6277 = vshrl.u32 %v6147, 16
        %v6279 = vrot.slane %v6277, 4
        %v6280 = vor.u32 %v6279, %v6275
        %v6281 = vrot.slane %v6280, 4
        %v6283 = vshll.u32 %v6148, 16
        %v6285 = vrot.slane %v6283, 5
        %v6286 = vsel %vm1907, %v6281, %v6285
        %v6288 = vshrl.u32 %v6149, 16
        %v6290 = vrot.slane %v6288, 4
        %v6291 = vshll.u32 %v6149, 16
        %v6293 = vrot.slane %v6291, 5
        %v6294 = vor.u32 %v6290, %v6293
        %v6295 = vrot.slane %v6294, 4
        %v6297 = vshll.u32 %v6150, 16
        %v6299 = vrot.slane %v6297, 5
        %v6300 = vsel %vm1907, %v6295, %v6299
        %v6301 = vshrl.u32 %v6150, 16
        %v6303 = vrot.slane %v6301, 4
        %v6304 = vor.u32 %v6303, %v6299
        %v6305 = vrot.slane %v6304, 4
        %v6307 = vshll.u32 %v6151, 16
        %v6309 = vrot.slane %v6307, 5
        %v6310 = vsel %vm1907, %v6305, %v6309
        %v6312 = vshrl.u32 %v6152, 16
        %v6314 = vrot.slane %v6312, 4
        %v6315 = vshll.u32 %v6152, 16
        %v6317 = vrot.slane %v6315, 5
        %v6318 = vor.u32 %v6314, %v6317
        %v6319 = vrot.slane %v6318, 4
        %v6321 = vshll.u32 %v6153, 16
        %v6323 = vrot.slane %v6321, 5
        %v6324 = vsel %vm1907, %v6319, %v6323
        %v6325 = vshrl.u32 %v6153, 16
        %v6327 = vrot.slane %v6325, 4
        %v6328 = vor.u32 %v6327, %v6323
        %v6329 = vrot.slane %v6328, 4
        %v6331 = vshll.u32 %v6154, 16
        %v6333 = vrot.slane %v6331, 5
        %v6334 = vsel %vm1907, %v6329, %v6333
        %v6336 = vshrl.u32 %v6155, 16
        %v6338 = vrot.slane %v6336, 4
        %v6339 = vshll.u32 %v6155, 16
        %v6341 = vrot.slane %v6339, 5
        %v6342 = vor.u32 %v6338, %v6341
        %v6343 = vrot.slane %v6342, 4
        %v6345 = vshll.u32 %v6156, 16
        %v6347 = vrot.slane %v6345, 5
        %v6348 = vsel %vm1907, %v6343, %v6347
        %v6349 = vshrl.u32 %v6156, 16
        %v6351 = vrot.slane %v6349, 4
        %v6352 = vor.u32 %v6351, %v6347
        %v6353 = vrot.slane %v6352, 4
        %v6355 = vshll.u32 %v6157, 16
        %v6357 = vrot.slane %v6355, 5
        %v6358 = vsel %vm1907, %v6353, %v6357
        %v6360 = vshrl.u32 %v6158, 16
        %v6362 = vrot.slane %v6360, 4
        %v6363 = vshll.u32 %v6158, 16
        %v6365 = vrot.slane %v6363, 5
        %v6366 = vor.u32 %v6362, %v6365
        %v6367 = vrot.slane %v6366, 4
        %v6369 = vshll.u32 %v6159, 16
        %v6371 = vrot.slane %v6369, 5
        %v6372 = vsel %vm1907, %v6367, %v6371
        %v6373 = vshrl.u32 %v6159, 16
        %v6375 = vrot.slane %v6373, 4
        %v6376 = vor.u32 %v6375, %v6371
        %v6377 = vrot.slane %v6376, 4
        %v6379 = vshll.u32 %v6160, 16
        %v6381 = vrot.slane %v6379, 5
        %v6382 = vsel %vm1907, %v6377, %v6381
        %v6384 = vshrl.u32 %v6161, 16
        %v6386 = vrot.slane %v6384, 4
        %v6387 = vshll.u32 %v6161, 16
        %v6389 = vrot.slane %v6387, 5
        %v6390 = vor.u32 %v6386, %v6389
        %v6391 = vrot.slane %v6390, 4
        %v6393 = vshll.u32 %v6162, 16
        %v6395 = vrot.slane %v6393, 5
        %v6396 = vsel %vm1907, %v6391, %v6395
        %v6397 = vshrl.u32 %v6162, 16
        %v6399 = vrot.slane %v6397, 4
        %v6400 = vor.u32 %v6399, %v6395
        %v6401 = vrot.slane %v6400, 4
        %v6403 = vshll.u32 %v6163, 16
        %v6405 = vrot.slane %v6403, 5
        %v6406 = vsel %vm1907, %v6401, %v6405
        %v6408 = vshrl.u32 %v6164, 16
        %v6410 = vrot.slane %v6408, 4
        %v6411 = vshll.u32 %v6164, 16
        %v6413 = vrot.slane %v6411, 5
        %v6414 = vor.u32 %v6410, %v6413
        %v6415 = vrot.slane %v6414, 4
        %v6417 = vshll.u32 %v6165, 16
        %v6419 = vrot.slane %v6417, 5
        %v6420 = vsel %vm1907, %v6415, %v6419
        %v6421 = vshrl.u32 %v6165, 16
        %v6423 = vrot.slane %v6421, 4
        %v6424 = vor.u32 %v6423, %v6419
        %v6425 = vrot.slane %v6424, 4
        %v6427 = vshll.u32 %v6166, 16
        %v6429 = vrot.slane %v6427, 5
        %v6430 = vsel %vm1907, %v6425, %v6429
        %v6432 = vshrl.u32 %v6167, 16
        %v6434 = vrot.slane %v6432, 4
        %v6435 = vshll.u32 %v6167, 16
        %v6437 = vrot.slane %v6435, 5
        %v6438 = vor.u32 %v6434, %v6437
        %v6439 = vrot.slane %v6438, 4
        %v6441 = vshll.u32 %v6168, 16
        %v6443 = vrot.slane %v6441, 5
        %v6444 = vsel %vm1907, %v6439, %v6443
        %v6445 = vshrl.u32 %v6168, 16
        %v6447 = vrot.slane %v6445, 4
        %v6448 = vor.u32 %v6447, %v6443
        %v6449 = vrot.slane %v6448, 4
        %v6451 = vshll.u32 %v6169, 16
        %v6453 = vrot.slane %v6451, 5
        %v6454 = vsel %vm1907, %v6449, %v6453
        %v6456 = vshrl.u32 %v6170, 16
        %v6458 = vrot.slane %v6456, 4
        %v6459 = vshll.u32 %v6170, 16
        %v6461 = vrot.slane %v6459, 5
        %v6462 = vor.u32 %v6458, %v6461
        %v6463 = vrot.slane %v6462, 4
        %v6465 = vshll.u32 %v6171, 16
        %v6467 = vrot.slane %v6465, 5
        %v6468 = vsel %vm1907, %v6463, %v6467
        %v6469 = vshrl.u32 %v6171, 16
        %v6471 = vrot.slane %v6469, 4
        %v6472 = vor.u32 %v6471, %v6467
        %v6473 = vrot.slane %v6472, 4
        %v6475 = vshll.u32 %v6172, 16
        %v6477 = vrot.slane %v6475, 5
        %v6478 = vsel %vm1907, %v6473, %v6477
        %v6480 = vshrl.u32 %v6173, 16
        %v6482 = vrot.slane %v6480, 4
        %v6483 = vshll.u32 %v6173, 16
        %v6485 = vrot.slane %v6483, 5
        %v6486 = vor.u32 %v6482, %v6485
        %v6487 = vrot.slane %v6486, 4
        %v6489 = vshll.u32 %v6174, 16
        %v6491 = vrot.slane %v6489, 5
        %v6492 = vsel %vm1907, %v6487, %v6491
        %v6493 = vshrl.u32 %v6174, 16
        %v6495 = vrot.slane %v6493, 4
        %v6496 = vor.u32 %v6495, %v6491
        %v6497 = vrot.slane %v6496, 4
        %v6499 = vshll.u32 %v6175, 16
        %v6501 = vrot.slane %v6499, 5
        %v6502 = vsel %vm1907, %v6497, %v6501
        %v6504 = vshrl.u32 %v6176, 16
        %v6506 = vrot.slane %v6504, 4
        %v6507 = vshll.u32 %v6176, 16
        %v6509 = vrot.slane %v6507, 5
        %v6510 = vor.u32 %v6506, %v6509
        %v6511 = vrot.slane %v6510, 4
        %v6513 = vshll.u32 %v6177, 16
        %v6515 = vrot.slane %v6513, 5
        %v6516 = vsel %vm1907, %v6511, %v6515
        %v6517 = vshrl.u32 %v6177, 16
        %v6519 = vrot.slane %v6517, 4
        %v6520 = vor.u32 %v6519, %v6515
        %v6521 = vrot.slane %v6520, 4
        %v6523 = vshll.u32 %v6178, 16
        %v6525 = vrot.slane %v6523, 5
        %v6526 = vsel %vm1907, %v6521, %v6525
        %v6528 = vshrl.u32 %v6179, 16
        %v6530 = vrot.slane %v6528, 4
        %v6531 = vshll.u32 %v6179, 16
        %v6533 = vrot.slane %v6531, 5
        %v6534 = vor.u32 %v6530, %v6533
        %v6535 = vrot.slane %v6534, 4
        %v6537 = vshll.u32 %v6180, 16
        %v6539 = vrot.slane %v6537, 5
        %v6540 = vsel %vm1907, %v6535, %v6539
        %v6541 = vshrl.u32 %v6180, 16
        %v6543 = vrot.slane %v6541, 4
        %v6544 = vor.u32 %v6543, %v6539
        %v6545 = vrot.slane %v6544, 4
        %v6547 = vshll.u32 %v6181, 16
        %v6549 = vrot.slane %v6547, 5
        %v6550 = vsel %vm1907, %v6545, %v6549
        %v6552 = vshrl.u32 %v6182, 16
        %v6554 = vrot.slane %v6552, 4
        %v6555 = vshll.u32 %v6182, 16
        %v6557 = vrot.slane %v6555, 5
        %v6558 = vor.u32 %v6554, %v6557
        %v6559 = vrot.slane %v6558, 4
        %v6561 = vshll.u32 %v6183, 16
        %v6563 = vrot.slane %v6561, 5
        %v6564 = vsel %vm1907, %v6559, %v6563
        %v6565 = vshrl.u32 %v6183, 16
        %v6567 = vrot.slane %v6565, 4
        %v6568 = vor.u32 %v6567, %v6563
        %v6569 = vrot.slane %v6568, 4
        %v6571 = vshll.u32 %v6184, 16
        %v6573 = vrot.slane %v6571, 5
        %v6574 = vsel %vm1907, %v6569, %v6573
        %v6576 = vshrl.u32 %v6185, 16
        %v6578 = vrot.slane %v6576, 4
        %v6579 = vshll.u32 %v6185, 16
        %v6581 = vrot.slane %v6579, 5
        %v6582 = vor.u32 %v6578, %v6581
        %v6583 = vrot.slane %v6582, 4
        %v6585 = vshll.u32 %v6186, 16
        %v6587 = vrot.slane %v6585, 5
        %v6588 = vsel %vm1907, %v6583, %v6587
        %v6589 = vshrl.u32 %v6186, 16
        %v6591 = vrot.slane %v6589, 4
        %v6592 = vor.u32 %v6591, %v6587
        %v6593 = vrot.slane %v6592, 4
        %v6595 = vshll.u32 %v6187, 16
        %v6597 = vrot.slane %v6595, 5
        %v6598 = vsel %vm1907, %v6593, %v6597
        %v6600 = vshrl.u32 %v6188, 16
        %v6602 = vrot.slane %v6600, 4
        %v6603 = vshll.u32 %v6188, 16
        %v6605 = vrot.slane %v6603, 5
        %v6606 = vor.u32 %v6602, %v6605
        %v6607 = vrot.slane %v6606, 4
        %v6609 = vshll.u32 %v6189, 16
        %v6611 = vrot.slane %v6609, 5
        %v6612 = vsel %vm1907, %v6607, %v6611
        %v6613 = vshrl.u32 %v6189, 16
        %v6615 = vrot.slane %v6613, 4
        %v6616 = vor.u32 %v6615, %v6611
        %v6617 = vrot.slane %v6616, 4
        %v6619 = vshll.u32 %v6190, 16
        %v6621 = vrot.slane %v6619, 5
        %v6622 = vsel %vm1907, %v6617, %v6621
        %6659 = vst.msk [vmem:[#allocation6 + $0x4] sm:$0xf] %vm456, %v6204
        %6660 = vst.msk [vmem:[#allocation6 + $0xc] sm:$0xf] %vm456, %v6214
        %6661 = vst.msk [vmem:[#allocation6 + $0x14] sm:$0xf] %vm456, %v6228
        %6662 = vst.msk [vmem:[#allocation6 + $0x1c] sm:$0xf] %vm456, %v6238
        %6663 = vst.msk [vmem:[#allocation6 + $0x24] sm:$0xf] %vm456, %v6252
        %6664 = vst.msk [vmem:[#allocation6 + $0x2c] sm:$0xf] %vm456, %v6262
        %6665 = vst.msk [vmem:[#allocation6 + $0x34] sm:$0xf] %vm456, %v6276
        %6666 = vst.msk [vmem:[#allocation6 + $0x3c] sm:$0xf] %vm456, %v6286
        %6667 = vst.msk [vmem:[#allocation6 + $0x44] sm:$0xf] %vm456, %v6300
        %6668 = vst.msk [vmem:[#allocation6 + $0x4c] sm:$0xf] %vm456, %v6310
        %6669 = vst.msk [vmem:[#allocation6 + $0x54] sm:$0xf] %vm456, %v6324
        %6670 = vst.msk [vmem:[#allocation6 + $0x5c] sm:$0xf] %vm456, %v6334
        %6671 = vst.msk [vmem:[#allocation6 + $0x64] sm:$0xf] %vm456, %v6348
        %6672 = vst.msk [vmem:[#allocation6 + $0x6c] sm:$0xf] %vm456, %v6358
        %6673 = vst.msk [vmem:[#allocation6 + $0x74] sm:$0xf] %vm456, %v6372
        %6674 = vst.msk [vmem:[#allocation6 + $0x7c] sm:$0xf] %vm456, %v6382
        %6675 = vst.msk [vmem:[#allocation6 + $0x84] sm:$0xf] %vm456, %v6396
        %6676 = vst.msk [vmem:[#allocation6 + $0x8c] sm:$0xf] %vm456, %v6406
        %6677 = vst.msk [vmem:[#allocation6 + $0x94] sm:$0xf] %vm456, %v6420
        %6678 = vst.msk [vmem:[#allocation6 + $0x9c] sm:$0xf] %vm456, %v6430
        %6679 = vst.msk [vmem:[#allocation6 + $0xa4] sm:$0xf] %vm456, %v6444
        %6680 = vst.msk [vmem:[#allocation6 + $0xac] sm:$0xf] %vm456, %v6454
        %6681 = vst.msk [vmem:[#allocation6 + $0xb4] sm:$0xf] %vm456, %v6468
        %6682 = vst.msk [vmem:[#allocation6 + $0xbc] sm:$0xf] %vm456, %v6478
        %6683 = vst.msk [vmem:[#allocation6 + $0xc4] sm:$0xf] %vm456, %v6492
        %6684 = vst.msk [vmem:[#allocation6 + $0xcc] sm:$0xf] %vm456, %v6502
        %6685 = vst.msk [vmem:[#allocation6 + $0xd4] sm:$0xf] %vm456, %v6516
        %6686 = vst.msk [vmem:[#allocation6 + $0xdc] sm:$0xf] %vm456, %v6526
        %6687 = vst.msk [vmem:[#allocation6 + $0xe4] sm:$0xf] %vm456, %v6540
        %6688 = vst.msk [vmem:[#allocation6 + $0xec] sm:$0xf] %vm456, %v6550
        %6689 = vst.msk [vmem:[#allocation6 + $0xf4] sm:$0xf] %vm456, %v6564
        %6690 = vst.msk [vmem:[#allocation6 + $0xfc] sm:$0xf] %vm456, %v6574
        %6691 = vst.msk [vmem:[#allocation6 + $0x104] sm:$0xf] %vm456, %v6588
        %6692 = vst.msk [vmem:[#allocation6 + $0x10c] sm:$0xf] %vm456, %v6598
        %6693 = vst.msk [vmem:[#allocation6 + $0x114] sm:$0xf] %vm456, %v6612
        %6694 = vst.msk [vmem:[#allocation6 + $0x11c] sm:$0xf] %vm456, %v6622
        %v6695 = vld [vmem:[%s5] sm:$0x1]
        %v6696 = vld [vmem:[#allocation6] sm:$0xff]
        %v6697 = vld [vmem:[#allocation6 + $0x8] sm:$0xff]
        %v6698 = vld [vmem:[#allocation6 + $0x10] sm:$0xff]
        %v6699 = vld [vmem:[#allocation6 + $0x18] sm:$0xff]
        %v6700 = vld [vmem:[#allocation6 + $0x20] sm:$0xff]
        %v6701 = vld [vmem:[#allocation6 + $0x28] sm:$0xff]
        %v6702 = vld [vmem:[#allocation6 + $0x30] sm:$0xff]
        %v6703 = vld [vmem:[#allocation6 + $0x38] sm:$0xff]
        %v6704 = vld [vmem:[#allocation6 + $0x40] sm:$0xff]
        %v6705 = vld [vmem:[#allocation6 + $0x48] sm:$0xff]
        %v6706 = vld [vmem:[#allocation6 + $0x50] sm:$0xff]
        %v6707 = vld [vmem:[#allocation6 + $0x58] sm:$0xff]
        %v6708 = vld [vmem:[#allocation6 + $0x60] sm:$0xff]
        %v6709 = vld [vmem:[#allocation6 + $0x68] sm:$0xff]
        %v6710 = vld [vmem:[#allocation6 + $0x70] sm:$0xff]
        %v6711 = vld [vmem:[#allocation6 + $0x78] sm:$0xff]
        %v6712 = vld [vmem:[%s4] sm:$0xf]
        %v6713 = vld [vmem:[%s4 + $0x4] sm:$0xf]
        %v6714 = vld [vmem:[%s4 + $0x8] sm:$0xf]
        %v6715 = vld [vmem:[%s4 + $0xc] sm:$0xf]
        %v6716 = vld [vmem:[%s4 + $0x10] sm:$0xf]
        %v6717 = vld [vmem:[%s4 + $0x14] sm:$0xf]
        %v6718 = vld [vmem:[%s4 + $0x18] sm:$0xf]
        %v6719 = vld [vmem:[%s4 + $0x1c] sm:$0xf]
        %v6720 = vld [vmem:[%s4 + $0x20] sm:$0xf]
        %v6721 = vld [vmem:[%s4 + $0x24] sm:$0xf]
        %v6722 = vld [vmem:[%s4 + $0x28] sm:$0xf]
        %v6723 = vld [vmem:[%s4 + $0x2c] sm:$0xf]
        %v6724 = vld [vmem:[%s4 + $0x30] sm:$0xf]
        %v6725 = vld [vmem:[%s4 + $0x34] sm:$0xf]
        %v6726 = vld [vmem:[%s4 + $0x38] sm:$0xf]
        %v6727 = vld [vmem:[%s4 + $0x3c] sm:$0xf]
        %v6728 = vld [vmem:[%s4 + $0x40] sm:$0xf]
        %v6729 = vld [vmem:[%s4 + $0x44] sm:$0xf]
        %v6730 = vld [vmem:[%s4 + $0x48] sm:$0xf]
        %v6731 = vld [vmem:[%s4 + $0x4c] sm:$0xf]
        %v6732 = vld [vmem:[%s4 + $0x50] sm:$0xf]
        %v6733 = vld [vmem:[%s4 + $0x54] sm:$0xf]
        %v6734 = vld [vmem:[%s4 + $0x58] sm:$0xf]
        %v6735 = vld [vmem:[%s4 + $0x5c] sm:$0xf]
        %v6736 = vld [vmem:[%s4 + $0x60] sm:$0xf]
        %v6737 = vld [vmem:[%s4 + $0x64] sm:$0xf]
        %v6738 = vld [vmem:[%s4 + $0x68] sm:$0xf]
        %v6739 = vld [vmem:[%s4 + $0x6c] sm:$0xf]
        %v6740 = vld [vmem:[%s4 + $0x70] sm:$0xf]
        %v6741 = vld [vmem:[%s4 + $0x74] sm:$0xf]
        %v6742 = vld [vmem:[%s4 + $0x78] sm:$0xf]
        %v6743 = vld [vmem:[%s4 + $0x7c] sm:$0xf]
        %v6744 = vld [vmem:[#allocation6 + $0x80] sm:$0xff]
        %v6745 = vld [vmem:[#allocation6 + $0x88] sm:$0xff]
        %s6746 = scalar_lea.vmem %s4, 128
        %v6747 = vld [vmem:[%s6746] sm:$0xf]
        %v6748 = vld [vmem:[%s6746 + $0x4] sm:$0xf]
        %v6749 = vld [vmem:[%s6746 + $0x8] sm:$0xf]
        %v6750 = vld [vmem:[%s6746 + $0xc] sm:$0xf]
        %v6751 = vld [vmem:[%s6746 + $0x10] sm:$0xf]
        %v6752 = vld [vmem:[%s6746 + $0x14] sm:$0xf]
        %v6753 = vld [vmem:[%s6746 + $0x18] sm:$0xf]
        %v6754 = vld [vmem:[%s6746 + $0x1c] sm:$0xf]
        %v6755 = vld [vmem:[%s6746 + $0x20] sm:$0xf]
        %v6756 = vld [vmem:[%s6746 + $0x24] sm:$0xf]
        %v6757 = vld [vmem:[%s6746 + $0x28] sm:$0xf]
        %v6758 = vld [vmem:[%s6746 + $0x2c] sm:$0xf]
        %v6759 = vld [vmem:[%s6746 + $0x30] sm:$0xf]
        %v6760 = vld [vmem:[%s6746 + $0x34] sm:$0xf]
        %v6761 = vld [vmem:[%s6746 + $0x38] sm:$0xf]
        %v6762 = vld [vmem:[%s6746 + $0x3c] sm:$0xf]
        %v6763 = vld [vmem:[%s6746 + $0x40] sm:$0xf]
        %v6764 = vld [vmem:[%s6746 + $0x44] sm:$0xf]
        %v6765 = vld [vmem:[%s6746 + $0x48] sm:$0xf]
        %v6766 = vld [vmem:[%s6746 + $0x4c] sm:$0xf]
        %v6767 = vld [vmem:[%s6746 + $0x50] sm:$0xf]
        %v6768 = vld [vmem:[%s6746 + $0x54] sm:$0xf]
        %v6769 = vld [vmem:[%s6746 + $0x58] sm:$0xf]
        %v6770 = vld [vmem:[%s6746 + $0x5c] sm:$0xf]
        %v6771 = vld [vmem:[%s6746 + $0x60] sm:$0xf]
        %v6772 = vld [vmem:[%s6746 + $0x64] sm:$0xf]
        %v6773 = vld [vmem:[%s6746 + $0x68] sm:$0xf]
        %v6774 = vld [vmem:[%s6746 + $0x6c] sm:$0xf]
        %v6775 = vld [vmem:[%s6746 + $0x70] sm:$0xf]
        %v6776 = vld [vmem:[%s6746 + $0x74] sm:$0xf]
        %v6777 = vld [vmem:[%s6746 + $0x78] sm:$0xf]
        %v6778 = vld [vmem:[%s6746 + $0x7c] sm:$0xf]
        %v6795 = vunpack.c.l.b16 %v6698
        %v6796 = vunpack.c.h.b16 %v6698
        %v6797 = vunpack.c.l.b16 %v6699
        %v6798 = vunpack.c.h.b16 %v6699
        %v6799 = vunpack.c.l.b16 %v6700
        %v6800 = vunpack.c.h.b16 %v6700
        %v6801 = vunpack.c.l.b16 %v6701
        %v6802 = vunpack.c.h.b16 %v6701
        %v6803 = vunpack.c.l.b16 %v6702
        %v6804 = vunpack.c.h.b16 %v6702
        %v6805 = vunpack.c.l.b16 %v6703
        %v6806 = vunpack.c.h.b16 %v6703
        %v6807 = vunpack.c.l.b16 %v6704
        %v6808 = vunpack.c.h.b16 %v6704
        %v6809 = vunpack.c.l.b16 %v6705
        %v6810 = vunpack.c.h.b16 %v6705
        %v6811 = vunpack.c.l.b16 %v6706
        %v6812 = vunpack.c.h.b16 %v6706
        %v6813 = vunpack.c.l.b16 %v6707
        %v6814 = vunpack.c.h.b16 %v6707
        %v6815 = vunpack.c.l.b16 %v6708
        %v6816 = vunpack.c.h.b16 %v6708
        %v6817 = vunpack.c.l.b16 %v6709
        %v6818 = vunpack.c.h.b16 %v6709
        %v6819 = vunpack.c.l.b16 %v6710
        %v6820 = vunpack.c.h.b16 %v6710
        %v6821 = vunpack.c.l.b16 %v6711
        %v6822 = vunpack.c.h.b16 %v6711
        %v6823 = vunpack.c.l.b16 %v6744
        %v6824 = vunpack.c.h.b16 %v6744
        %v6825 = vunpack.c.l.b16 %v6745
        %v6826 = vunpack.c.h.b16 %v6745
        %v6827 = vpack.c.b16 %v6797, %v6795
        %v6828 = vpack.c.b16 %v6798, %v6796
        %v6829 = vpack.c.b16 %v6801, %v6799
        %v6830 = vpack.c.b16 %v6802, %v6800
        %v6831 = vpack.c.b16 %v6805, %v6803
        %v6832 = vpack.c.b16 %v6806, %v6804
        %v6833 = vpack.c.b16 %v6809, %v6807
        %v6834 = vpack.c.b16 %v6810, %v6808
        %v6835 = vpack.c.b16 %v6813, %v6811
        %v6836 = vpack.c.b16 %v6814, %v6812
        %v6837 = vpack.c.b16 %v6817, %v6815
        %v6838 = vpack.c.b16 %v6818, %v6816
        %v6839 = vpack.c.b16 %v6821, %v6819
        %v6840 = vpack.c.b16 %v6822, %v6820
        %v6841 = vpack.c.b16 %v6825, %v6823
        %v6842 = vpack.c.b16 %v6826, %v6824
        %v6891 = vunpack.c.l.b16 %v6747
        %v6892 = vunpack.c.l.b16 %v6748
        %v6893 = vunpack.c.l.b16 %v6749
        %v6894 = vunpack.c.l.b16 %v6750
        %v6895 = vunpack.c.l.b16 %v6751
        %v6896 = vunpack.c.l.b16 %v6752
        %v6897 = vunpack.c.l.b16 %v6753
        %v6898 = vunpack.c.l.b16 %v6754
        %v6899 = vunpack.c.l.b16 %v6755
        %v6900 = vunpack.c.l.b16 %v6756
        %v6901 = vunpack.c.l.b16 %v6757
        %v6902 = vunpack.c.l.b16 %v6758
        %v6903 = vunpack.c.l.b16 %v6759
        %v6904 = vunpack.c.l.b16 %v6760
        %v6905 = vunpack.c.l.b16 %v6761
        %v6906 = vunpack.c.l.b16 %v6762
        %v6907 = vunpack.c.l.b16 %v6763
        %v6908 = vunpack.c.l.b16 %v6764
        %v6909 = vunpack.c.l.b16 %v6765
        %v6910 = vunpack.c.l.b16 %v6766
        %v6911 = vunpack.c.l.b16 %v6767
        %v6912 = vunpack.c.l.b16 %v6768
        %v6913 = vunpack.c.l.b16 %v6769
        %v6914 = vunpack.c.l.b16 %v6770
        %v6915 = vunpack.c.l.b16 %v6771
        %v6916 = vunpack.c.l.b16 %v6772
        %v6917 = vunpack.c.l.b16 %v6773
        %v6918 = vunpack.c.l.b16 %v6774
        %v6919 = vunpack.c.l.b16 %v6775
        %v6920 = vunpack.c.l.b16 %v6776
        %v6921 = vunpack.c.l.b16 %v6777
        %v6922 = vunpack.c.l.b16 %v6778
        %v6923 = vpack.c.b16 %v6892, %v6891
        %v6924 = vpack.c.b16 %v6894, %v6893
        %v6925 = vpack.c.b16 %v6896, %v6895
        %v6926 = vpack.c.b16 %v6898, %v6897
        %v6927 = vpack.c.b16 %v6900, %v6899
        %v6928 = vpack.c.b16 %v6902, %v6901
        %v6929 = vpack.c.b16 %v6904, %v6903
        %v6930 = vpack.c.b16 %v6906, %v6905
        %v6931 = vpack.c.b16 %v6908, %v6907
        %v6932 = vpack.c.b16 %v6910, %v6909
        %v6933 = vpack.c.b16 %v6912, %v6911
        %v6934 = vpack.c.b16 %v6914, %v6913
        %v6935 = vpack.c.b16 %v6916, %v6915
        %v6936 = vpack.c.b16 %v6918, %v6917
        %v6937 = vpack.c.b16 %v6920, %v6919
        %v6938 = vpack.c.b16 %v6922, %v6921
        %6955 = vmatpush.bf16.msra.mxu0 %v6930
        %6956 = vmatpush.bf16.msra.mxu0 %v6929
        %6957 = vmatpush.bf16.msra.mxu0 %v6928
        %6958 = vmatpush.bf16.msra.mxu0 %v6927
        %6959 = vmatpush.bf16.msra.mxu0 %v6926
        %6960 = vmatpush.bf16.msra.mxu0 %v6925
        %6961 = vmatpush.bf16.msra.mxu0 %v6924
        %6962 = vmatpush.bf16.msra.mxu0 %v6923
        %6963 = vmatmul.bf16.gmra.mxu0 %v6827
        %v6964 = vpop.f32.mrf.mxu0
        %v6965 = vadd.f32 0.0, %v6964
        %v6966 = vpop.f32.mrf.mxu0
        %v6967 = vadd.f32 0.0, %v6966
        %6968 = vmatmul.bf16.gmra.mxu0 %v6829
        %v6969 = vpop.f32.mrf.mxu0
        %v6970 = vadd.f32 0.0, %v6969
        %v6971 = vpop.f32.mrf.mxu0
        %v6972 = vadd.f32 0.0, %v6971
        %6973 = vmatmul.bf16.gmra.mxu0 %v6831
        %v6974 = vpop.f32.mrf.mxu0
        %v6975 = vadd.f32 0.0, %v6974
        %v6976 = vpop.f32.mrf.mxu0
        %v6977 = vadd.f32 0.0, %v6976
        %6978 = vmatmul.bf16.gmra.mxu0 %v6833
        %v6979 = vpop.f32.mrf.mxu0
        %v6980 = vadd.f32 0.0, %v6979
        %v6981 = vpop.f32.mrf.mxu0
        %v6982 = vadd.f32 0.0, %v6981
        %6983 = vmatmul.bf16.gmra.mxu0 %v6835
        %v6984 = vpop.f32.mrf.mxu0
        %v6985 = vadd.f32 0.0, %v6984
        %v6986 = vpop.f32.mrf.mxu0
        %v6987 = vadd.f32 0.0, %v6986
        %6988 = vmatmul.bf16.gmra.mxu0 %v6837
        %v6989 = vpop.f32.mrf.mxu0
        %v6990 = vadd.f32 0.0, %v6989
        %v6991 = vpop.f32.mrf.mxu0
        %v6992 = vadd.f32 0.0, %v6991
        %6993 = vmatmul.bf16.gmra.mxu0 %v6839
        %v6994 = vpop.f32.mrf.mxu0
        %v6995 = vadd.f32 0.0, %v6994
        %v6996 = vpop.f32.mrf.mxu0
        %v6997 = vadd.f32 0.0, %v6996
        %6998 = vmatmul.bf16.gmra.mxu0 %v6841
        %v6999 = vpop.f32.mrf.mxu0
        %v7000 = vadd.f32 0.0, %v6999
        %v7001 = vpop.f32.mrf.mxu0
        %v7002 = vadd.f32 0.0, %v7001
        %7003 = vdwg.mxu0
        %7004 = vmatpush.bf16.msra.mxu0 %v6938
        %7005 = vmatpush.bf16.msra.mxu0 %v6937
        %7006 = vmatpush.bf16.msra.mxu0 %v6936
        %7007 = vmatpush.bf16.msra.mxu0 %v6935
        %7008 = vmatpush.bf16.msra.mxu0 %v6934
        %7009 = vmatpush.bf16.msra.mxu0 %v6933
        %7010 = vmatpush.bf16.msra.mxu0 %v6932
        %7011 = vmatpush.bf16.msra.mxu0 %v6931
        %7012 = vmatmul.bf16.gmra.mxu0 %v6828
        %v7013 = vpop.f32.mrf.mxu0
        %v7014 = vadd.f32 %v6965, %v7013
        %v7015 = vpop.f32.mrf.mxu0
        %v7016 = vadd.f32 %v6967, %v7015
        %7017 = vmatmul.bf16.gmra.mxu0 %v6830
        %v7018 = vpop.f32.mrf.mxu0
        %v7019 = vadd.f32 %v6970, %v7018
        %v7020 = vpop.f32.mrf.mxu0
        %v7021 = vadd.f32 %v6972, %v7020
        %7022 = vmatmul.bf16.gmra.mxu0 %v6832
        %v7023 = vpop.f32.mrf.mxu0
        %v7024 = vadd.f32 %v6975, %v7023
        %v7025 = vpop.f32.mrf.mxu0
        %v7026 = vadd.f32 %v6977, %v7025
        %7027 = vmatmul.bf16.gmra.mxu0 %v6834
        %v7028 = vpop.f32.mrf.mxu0
        %v7029 = vadd.f32 %v6980, %v7028
        %v7030 = vpop.f32.mrf.mxu0
        %v7031 = vadd.f32 %v6982, %v7030
        %7032 = vmatmul.bf16.gmra.mxu0 %v6836
        %v7033 = vpop.f32.mrf.mxu0
        %v7034 = vadd.f32 %v6985, %v7033
        %v7035 = vpop.f32.mrf.mxu0
        %v7036 = vadd.f32 %v6987, %v7035
        %7037 = vmatmul.bf16.gmra.mxu0 %v6838
        %v7038 = vpop.f32.mrf.mxu0
        %v7039 = vadd.f32 %v6990, %v7038
        %v7040 = vpop.f32.mrf.mxu0
        %v7041 = vadd.f32 %v6992, %v7040
        %7042 = vmatmul.bf16.gmra.mxu0 %v6840
        %v7043 = vpop.f32.mrf.mxu0
        %v7044 = vadd.f32 %v6995, %v7043
        %v7045 = vpop.f32.mrf.mxu0
        %v7046 = vadd.f32 %v6997, %v7045
        %7047 = vmatmul.bf16.gmra.mxu0 %v6842
        %v7048 = vpop.f32.mrf.mxu0
        %v7049 = vadd.f32 %v7000, %v7048
        %v7050 = vpop.f32.mrf.mxu0
        %v7051 = vadd.f32 %v7002, %v7050
        %7052 = vdwg.mxu0
        %v7055 = vunpack.c.l.b16 %v6696
        %v7056 = vunpack.c.h.b16 %v6696
        %v7057 = vunpack.c.l.b16 %v6697
        %v7058 = vunpack.c.h.b16 %v6697
        %v7059 = vpack.c.b16 %v7057, %v7055
        %v7060 = vpack.c.b16 %v7058, %v7056
        %v7095 = vunpack.c.l.b16 %v6712
        %v7096 = vunpack.c.l.b16 %v6713
        %v7097 = vunpack.c.l.b16 %v6714
        %v7098 = vunpack.c.l.b16 %v6715
        %v7099 = vunpack.c.l.b16 %v6716
        %v7100 = vunpack.c.l.b16 %v6717
        %v7101 = vunpack.c.l.b16 %v6718
        %v7102 = vunpack.c.l.b16 %v6719
        %v7103 = vunpack.c.l.b16 %v6720
        %v7104 = vunpack.c.l.b16 %v6721
        %v7105 = vunpack.c.l.b16 %v6722
        %v7106 = vunpack.c.l.b16 %v6723
        %v7107 = vunpack.c.l.b16 %v6724
        %v7108 = vunpack.c.l.b16 %v6725
        %v7109 = vunpack.c.l.b16 %v6726
        %v7110 = vunpack.c.l.b16 %v6727
        %v7111 = vunpack.c.l.b16 %v6728
        %v7112 = vunpack.c.l.b16 %v6729
        %v7113 = vunpack.c.l.b16 %v6730
        %v7114 = vunpack.c.l.b16 %v6731
        %v7115 = vunpack.c.l.b16 %v6732
        %v7116 = vunpack.c.l.b16 %v6733
        %v7117 = vunpack.c.l.b16 %v6734
        %v7118 = vunpack.c.l.b16 %v6735
        %v7119 = vunpack.c.l.b16 %v6736
        %v7120 = vunpack.c.l.b16 %v6737
        %v7121 = vunpack.c.l.b16 %v6738
        %v7122 = vunpack.c.l.b16 %v6739
        %v7123 = vunpack.c.l.b16 %v6740
        %v7124 = vunpack.c.l.b16 %v6741
        %v7125 = vunpack.c.l.b16 %v6742
        %v7126 = vunpack.c.l.b16 %v6743
        %v7127 = vpack.c.b16 %v7096, %v7095
        %v7128 = vpack.c.b16 %v7098, %v7097
        %v7129 = vpack.c.b16 %v7100, %v7099
        %v7130 = vpack.c.b16 %v7102, %v7101
        %v7131 = vpack.c.b16 %v7104, %v7103
        %v7132 = vpack.c.b16 %v7106, %v7105
        %v7133 = vpack.c.b16 %v7108, %v7107
        %v7134 = vpack.c.b16 %v7110, %v7109
        %v7135 = vpack.c.b16 %v7112, %v7111
        %v7136 = vpack.c.b16 %v7114, %v7113
        %v7137 = vpack.c.b16 %v7116, %v7115
        %v7138 = vpack.c.b16 %v7118, %v7117
        %v7139 = vpack.c.b16 %v7120, %v7119
        %v7140 = vpack.c.b16 %v7122, %v7121
        %v7141 = vpack.c.b16 %v7124, %v7123
        %v7142 = vpack.c.b16 %v7126, %v7125
        %7159 = vmatpush.bf16.msra.mxu0 %v7134
        %7160 = vmatpush.bf16.msra.mxu0 %v7133
        %7161 = vmatpush.bf16.msra.mxu0 %v7132
        %7162 = vmatpush.bf16.msra.mxu0 %v7131
        %7163 = vmatpush.bf16.msra.mxu0 %v7130
        %7164 = vmatpush.bf16.msra.mxu0 %v7129
        %7165 = vmatpush.bf16.msra.mxu0 %v7128
        %7166 = vmatpush.bf16.msra.mxu0 %v7127
        %7167 = vmatmul.bf16.gmra.mxu0 %v7059
        %v7168 = vpop.f32.mrf.mxu0
        %v7169 = vadd.f32 %v7014, %v7168
        %v7170 = vpop.f32.mrf.mxu0
        %v7171 = vadd.f32 %v7016, %v7170
        %7172 = vmatmul.bf16.gmra.mxu0 %v6827
        %v7173 = vpop.f32.mrf.mxu0
        %v7174 = vadd.f32 %v7019, %v7173
        %v7175 = vpop.f32.mrf.mxu0
        %v7176 = vadd.f32 %v7021, %v7175
        %7177 = vmatmul.bf16.gmra.mxu0 %v6829
        %v7178 = vpop.f32.mrf.mxu0
        %v7179 = vadd.f32 %v7024, %v7178
        %v7180 = vpop.f32.mrf.mxu0
        %v7181 = vadd.f32 %v7026, %v7180
        %7182 = vmatmul.bf16.gmra.mxu0 %v6831
        %v7183 = vpop.f32.mrf.mxu0
        %v7184 = vadd.f32 %v7029, %v7183
        %v7185 = vpop.f32.mrf.mxu0
        %v7186 = vadd.f32 %v7031, %v7185
        %7187 = vmatmul.bf16.gmra.mxu0 %v6833
        %v7188 = vpop.f32.mrf.mxu0
        %v7189 = vadd.f32 %v7034, %v7188
        %v7190 = vpop.f32.mrf.mxu0
        %v7191 = vadd.f32 %v7036, %v7190
        %7192 = vmatmul.bf16.gmra.mxu0 %v6835
        %v7193 = vpop.f32.mrf.mxu0
        %v7194 = vadd.f32 %v7039, %v7193
        %v7195 = vpop.f32.mrf.mxu0
        %v7196 = vadd.f32 %v7041, %v7195
        %7197 = vmatmul.bf16.gmra.mxu0 %v6837
        %v7198 = vpop.f32.mrf.mxu0
        %v7199 = vadd.f32 %v7044, %v7198
        %v7200 = vpop.f32.mrf.mxu0
        %v7201 = vadd.f32 %v7046, %v7200
        %7202 = vmatmul.bf16.gmra.mxu0 %v6839
        %v7203 = vpop.f32.mrf.mxu0
        %v7204 = vadd.f32 %v7049, %v7203
        %v7205 = vpop.f32.mrf.mxu0
        %v7206 = vadd.f32 %v7051, %v7205
        %7207 = vdwg.mxu0
        %7208 = vmatpush.bf16.msra.mxu0 %v7142
        %7209 = vmatpush.bf16.msra.mxu0 %v7141
        %7210 = vmatpush.bf16.msra.mxu0 %v7140
        %7211 = vmatpush.bf16.msra.mxu0 %v7139
        %7212 = vmatpush.bf16.msra.mxu0 %v7138
        %7213 = vmatpush.bf16.msra.mxu0 %v7137
        %7214 = vmatpush.bf16.msra.mxu0 %v7136
        %7215 = vmatpush.bf16.msra.mxu0 %v7135
        %7216 = vmatmul.bf16.gmra.mxu0 %v7060
        %v7217 = vpop.f32.mrf.mxu0
        %v7218 = vadd.f32 %v7169, %v7217
        %v7219 = vpop.f32.mrf.mxu0
        %v7220 = vadd.f32 %v7171, %v7219
        %7221 = vmatmul.bf16.gmra.mxu0 %v6828
        %v7222 = vpop.f32.mrf.mxu0
        %v7223 = vadd.f32 %v7174, %v7222
        %v7224 = vpop.f32.mrf.mxu0
        %v7225 = vadd.f32 %v7176, %v7224
        %7226 = vmatmul.bf16.gmra.mxu0 %v6830
        %v7227 = vpop.f32.mrf.mxu0
        %v7228 = vadd.f32 %v7179, %v7227
        %v7229 = vpop.f32.mrf.mxu0
        %v7230 = vadd.f32 %v7181, %v7229
        %7231 = vmatmul.bf16.gmra.mxu0 %v6832
        %v7232 = vpop.f32.mrf.mxu0
        %v7233 = vadd.f32 %v7184, %v7232
        %v7234 = vpop.f32.mrf.mxu0
        %v7235 = vadd.f32 %v7186, %v7234
        %7236 = vmatmul.bf16.gmra.mxu0 %v6834
        %v7237 = vpop.f32.mrf.mxu0
        %v7238 = vadd.f32 %v7189, %v7237
        %v7239 = vpop.f32.mrf.mxu0
        %v7240 = vadd.f32 %v7191, %v7239
        %7241 = vmatmul.bf16.gmra.mxu0 %v6836
        %v7242 = vpop.f32.mrf.mxu0
        %v7243 = vadd.f32 %v7194, %v7242
        %v7244 = vpop.f32.mrf.mxu0
        %v7245 = vadd.f32 %v7196, %v7244
        %7246 = vmatmul.bf16.gmra.mxu0 %v6838
        %v7247 = vpop.f32.mrf.mxu0
        %v7248 = vadd.f32 %v7199, %v7247
        %v7249 = vpop.f32.mrf.mxu0
        %v7250 = vadd.f32 %v7201, %v7249
        %7251 = vmatmul.bf16.gmra.mxu0 %v6840
        %v7252 = vpop.f32.mrf.mxu0
        %v7253 = vadd.f32 %v7204, %v7252
        %v7254 = vpop.f32.mrf.mxu0
        %v7255 = vadd.f32 %v7206, %v7254
        %7256 = vdwg.mxu0
        %v7257 = vld [vmem:[#allocation6 + $0x20] sm:$0xff]
        %v7258 = vld [vmem:[#allocation6 + $0x28] sm:$0xff]
        %v7259 = vld [vmem:[#allocation6 + $0x30] sm:$0xff]
        %v7260 = vld [vmem:[#allocation6 + $0x38] sm:$0xff]
        %v7261 = vld [vmem:[#allocation6 + $0x40] sm:$0xff]
        %v7262 = vld [vmem:[#allocation6 + $0x48] sm:$0xff]
        %v7263 = vld [vmem:[#allocation6 + $0x50] sm:$0xff]
        %v7264 = vld [vmem:[#allocation6 + $0x58] sm:$0xff]
        %v7265 = vld [vmem:[#allocation6 + $0x60] sm:$0xff]
        %v7266 = vld [vmem:[#allocation6 + $0x68] sm:$0xff]
        %v7267 = vld [vmem:[#allocation6 + $0x70] sm:$0xff]
        %v7268 = vld [vmem:[#allocation6 + $0x78] sm:$0xff]
        %v7269 = vld [vmem:[#allocation6 + $0x80] sm:$0xff]
        %v7270 = vld [vmem:[#allocation6 + $0x88] sm:$0xff]
        %v7271 = vld [vmem:[#allocation6 + $0x90] sm:$0xff]
        %v7272 = vld [vmem:[#allocation6 + $0x98] sm:$0xff]
        %s7273 = scalar_lea.vmem %s4, 256
        %v7274 = vld [vmem:[%s7273] sm:$0xf]
        %v7275 = vld [vmem:[%s7273 + $0x4] sm:$0xf]
        %v7276 = vld [vmem:[%s7273 + $0x8] sm:$0xf]
        %v7277 = vld [vmem:[%s7273 + $0xc] sm:$0xf]
        %v7278 = vld [vmem:[%s7273 + $0x10] sm:$0xf]
        %v7279 = vld [vmem:[%s7273 + $0x14] sm:$0xf]
        %v7280 = vld [vmem:[%s7273 + $0x18] sm:$0xf]
        %v7281 = vld [vmem:[%s7273 + $0x1c] sm:$0xf]
        %v7282 = vld [vmem:[%s7273 + $0x20] sm:$0xf]
        %v7283 = vld [vmem:[%s7273 + $0x24] sm:$0xf]
        %v7284 = vld [vmem:[%s7273 + $0x28] sm:$0xf]
        %v7285 = vld [vmem:[%s7273 + $0x2c] sm:$0xf]
        %v7286 = vld [vmem:[%s7273 + $0x30] sm:$0xf]
        %v7287 = vld [vmem:[%s7273 + $0x34] sm:$0xf]
        %v7288 = vld [vmem:[%s7273 + $0x38] sm:$0xf]
        %v7289 = vld [vmem:[%s7273 + $0x3c] sm:$0xf]
        %v7290 = vld [vmem:[%s7273 + $0x40] sm:$0xf]
        %v7291 = vld [vmem:[%s7273 + $0x44] sm:$0xf]
        %v7292 = vld [vmem:[%s7273 + $0x48] sm:$0xf]
        %v7293 = vld [vmem:[%s7273 + $0x4c] sm:$0xf]
        %v7294 = vld [vmem:[%s7273 + $0x50] sm:$0xf]
        %v7295 = vld [vmem:[%s7273 + $0x54] sm:$0xf]
        %v7296 = vld [vmem:[%s7273 + $0x58] sm:$0xf]
        %v7297 = vld [vmem:[%s7273 + $0x5c] sm:$0xf]
        %v7298 = vld [vmem:[%s7273 + $0x60] sm:$0xf]
        %v7299 = vld [vmem:[%s7273 + $0x64] sm:$0xf]
        %v7300 = vld [vmem:[%s7273 + $0x68] sm:$0xf]
        %v7301 = vld [vmem:[%s7273 + $0x6c] sm:$0xf]
        %v7302 = vld [vmem:[%s7273 + $0x70] sm:$0xf]
        %v7303 = vld [vmem:[%s7273 + $0x74] sm:$0xf]
        %v7304 = vld [vmem:[%s7273 + $0x78] sm:$0xf]
        %v7305 = vld [vmem:[%s7273 + $0x7c] sm:$0xf]
        %v7322 = vunpack.c.l.b16 %v7257
        %v7323 = vunpack.c.h.b16 %v7257
        %v7324 = vunpack.c.l.b16 %v7258
        %v7325 = vunpack.c.h.b16 %v7258
        %v7326 = vunpack.c.l.b16 %v7259
        %v7327 = vunpack.c.h.b16 %v7259
        %v7328 = vunpack.c.l.b16 %v7260
        %v7329 = vunpack.c.h.b16 %v7260
        %v7330 = vunpack.c.l.b16 %v7261
        %v7331 = vunpack.c.h.b16 %v7261
        %v7332 = vunpack.c.l.b16 %v7262
        %v7333 = vunpack.c.h.b16 %v7262
        %v7334 = vunpack.c.l.b16 %v7263
        %v7335 = vunpack.c.h.b16 %v7263
        %v7336 = vunpack.c.l.b16 %v7264
        %v7337 = vunpack.c.h.b16 %v7264
        %v7338 = vunpack.c.l.b16 %v7265
        %v7339 = vunpack.c.h.b16 %v7265
        %v7340 = vunpack.c.l.b16 %v7266
        %v7341 = vunpack.c.h.b16 %v7266
        %v7342 = vunpack.c.l.b16 %v7267
        %v7343 = vunpack.c.h.b16 %v7267
        %v7344 = vunpack.c.l.b16 %v7268
        %v7345 = vunpack.c.h.b16 %v7268
        %v7346 = vunpack.c.l.b16 %v7269
        %v7347 = vunpack.c.h.b16 %v7269
        %v7348 = vunpack.c.l.b16 %v7270
        %v7349 = vunpack.c.h.b16 %v7270
        %v7350 = vunpack.c.l.b16 %v7271
        %v7351 = vunpack.c.h.b16 %v7271
        %v7352 = vunpack.c.l.b16 %v7272
        %v7353 = vunpack.c.h.b16 %v7272
        %v7354 = vpack.c.b16 %v7324, %v7322
        %v7355 = vpack.c.b16 %v7325, %v7323
        %v7356 = vpack.c.b16 %v7328, %v7326
        %v7357 = vpack.c.b16 %v7329, %v7327
        %v7358 = vpack.c.b16 %v7332, %v7330
        %v7359 = vpack.c.b16 %v7333, %v7331
        %v7360 = vpack.c.b16 %v7336, %v7334
        %v7361 = vpack.c.b16 %v7337, %v7335
        %v7362 = vpack.c.b16 %v7340, %v7338
        %v7363 = vpack.c.b16 %v7341, %v7339
        %v7364 = vpack.c.b16 %v7344, %v7342
        %v7365 = vpack.c.b16 %v7345, %v7343
        %v7366 = vpack.c.b16 %v7348, %v7346
        %v7367 = vpack.c.b16 %v7349, %v7347
        %v7368 = vpack.c.b16 %v7352, %v7350
        %v7369 = vpack.c.b16 %v7353, %v7351
        %v7418 = vunpack.c.l.b16 %v7274
        %v7419 = vunpack.c.l.b16 %v7275
        %v7420 = vunpack.c.l.b16 %v7276
        %v7421 = vunpack.c.l.b16 %v7277
        %v7422 = vunpack.c.l.b16 %v7278
        %v7423 = vunpack.c.l.b16 %v7279
        %v7424 = vunpack.c.l.b16 %v7280
        %v7425 = vunpack.c.l.b16 %v7281
        %v7426 = vunpack.c.l.b16 %v7282
        %v7427 = vunpack.c.l.b16 %v7283
        %v7428 = vunpack.c.l.b16 %v7284
        %v7429 = vunpack.c.l.b16 %v7285
        %v7430 = vunpack.c.l.b16 %v7286
        %v7431 = vunpack.c.l.b16 %v7287
        %v7432 = vunpack.c.l.b16 %v7288
        %v7433 = vunpack.c.l.b16 %v7289
        %v7434 = vunpack.c.l.b16 %v7290
        %v7435 = vunpack.c.l.b16 %v7291
        %v7436 = vunpack.c.l.b16 %v7292
        %v7437 = vunpack.c.l.b16 %v7293
        %v7438 = vunpack.c.l.b16 %v7294
        %v7439 = vunpack.c.l.b16 %v7295
        %v7440 = vunpack.c.l.b16 %v7296
        %v7441 = vunpack.c.l.b16 %v7297
        %v7442 = vunpack.c.l.b16 %v7298
        %v7443 = vunpack.c.l.b16 %v7299
        %v7444 = vunpack.c.l.b16 %v7300
        %v7445 = vunpack.c.l.b16 %v7301
        %v7446 = vunpack.c.l.b16 %v7302
        %v7447 = vunpack.c.l.b16 %v7303
        %v7448 = vunpack.c.l.b16 %v7304
        %v7449 = vunpack.c.l.b16 %v7305
        %v7450 = vpack.c.b16 %v7419, %v7418
        %v7451 = vpack.c.b16 %v7421, %v7420
        %v7452 = vpack.c.b16 %v7423, %v7422
        %v7453 = vpack.c.b16 %v7425, %v7424
        %v7454 = vpack.c.b16 %v7427, %v7426
        %v7455 = vpack.c.b16 %v7429, %v7428
        %v7456 = vpack.c.b16 %v7431, %v7430
        %v7457 = vpack.c.b16 %v7433, %v7432
        %v7458 = vpack.c.b16 %v7435, %v7434
        %v7459 = vpack.c.b16 %v7437, %v7436
        %v7460 = vpack.c.b16 %v7439, %v7438
        %v7461 = vpack.c.b16 %v7441, %v7440
        %v7462 = vpack.c.b16 %v7443, %v7442
        %v7463 = vpack.c.b16 %v7445, %v7444
        %v7464 = vpack.c.b16 %v7447, %v7446
        %v7465 = vpack.c.b16 %v7449, %v7448
        %7482 = vmatpush.bf16.msra.mxu0 %v7457
        %7483 = vmatpush.bf16.msra.mxu0 %v7456
        %7484 = vmatpush.bf16.msra.mxu0 %v7455
        %7485 = vmatpush.bf16.msra.mxu0 %v7454
        %7486 = vmatpush.bf16.msra.mxu0 %v7453
        %7487 = vmatpush.bf16.msra.mxu0 %v7452
        %7488 = vmatpush.bf16.msra.mxu0 %v7451
        %7489 = vmatpush.bf16.msra.mxu0 %v7450
        %7490 = vmatmul.bf16.gmra.mxu0 %v7354
        %v7491 = vpop.f32.mrf.mxu0
        %v7492 = vadd.f32 0.0, %v7491
        %v7493 = vpop.f32.mrf.mxu0
        %v7494 = vadd.f32 0.0, %v7493
        %7495 = vmatmul.bf16.gmra.mxu0 %v7356
        %v7496 = vpop.f32.mrf.mxu0
        %v7497 = vadd.f32 0.0, %v7496
        %v7498 = vpop.f32.mrf.mxu0
        %v7499 = vadd.f32 0.0, %v7498
        %7500 = vmatmul.bf16.gmra.mxu0 %v7358
        %v7501 = vpop.f32.mrf.mxu0
        %v7502 = vadd.f32 0.0, %v7501
        %v7503 = vpop.f32.mrf.mxu0
        %v7504 = vadd.f32 0.0, %v7503
        %7505 = vmatmul.bf16.gmra.mxu0 %v7360
        %v7506 = vpop.f32.mrf.mxu0
        %v7507 = vadd.f32 0.0, %v7506
        %v7508 = vpop.f32.mrf.mxu0
        %v7509 = vadd.f32 0.0, %v7508
        %7510 = vmatmul.bf16.gmra.mxu0 %v7362
        %v7511 = vpop.f32.mrf.mxu0
        %v7512 = vadd.f32 0.0, %v7511
        %v7513 = vpop.f32.mrf.mxu0
        %v7514 = vadd.f32 0.0, %v7513
        %7515 = vmatmul.bf16.gmra.mxu0 %v7364
        %v7516 = vpop.f32.mrf.mxu0
        %v7517 = vadd.f32 0.0, %v7516
        %v7518 = vpop.f32.mrf.mxu0
        %v7519 = vadd.f32 0.0, %v7518
        %7520 = vmatmul.bf16.gmra.mxu0 %v7366
        %v7521 = vpop.f32.mrf.mxu0
        %v7522 = vadd.f32 0.0, %v7521
        %v7523 = vpop.f32.mrf.mxu0
        %v7524 = vadd.f32 0.0, %v7523
        %7525 = vmatmul.bf16.gmra.mxu0 %v7368
        %v7526 = vpop.f32.mrf.mxu0
        %v7527 = vadd.f32 0.0, %v7526
        %v7528 = vpop.f32.mrf.mxu0
        %v7529 = vadd.f32 0.0, %v7528
        %7530 = vdwg.mxu0
        %7531 = vmatpush.bf16.msra.mxu0 %v7465
        %7532 = vmatpush.bf16.msra.mxu0 %v7464
        %7533 = vmatpush.bf16.msra.mxu0 %v7463
        %7534 = vmatpush.bf16.msra.mxu0 %v7462
        %7535 = vmatpush.bf16.msra.mxu0 %v7461
        %7536 = vmatpush.bf16.msra.mxu0 %v7460
        %7537 = vmatpush.bf16.msra.mxu0 %v7459
        %7538 = vmatpush.bf16.msra.mxu0 %v7458
        %7539 = vmatmul.bf16.gmra.mxu0 %v7355
        %v7540 = vpop.f32.mrf.mxu0
        %v7541 = vadd.f32 %v7492, %v7540
        %v7542 = vpop.f32.mrf.mxu0
        %v7543 = vadd.f32 %v7494, %v7542
        %7544 = vmatmul.bf16.gmra.mxu0 %v7357
        %v7545 = vpop.f32.mrf.mxu0
        %v7546 = vadd.f32 %v7497, %v7545
        %v7547 = vpop.f32.mrf.mxu0
        %v7548 = vadd.f32 %v7499, %v7547
        %7549 = vmatmul.bf16.gmra.mxu0 %v7359
        %v7550 = vpop.f32.mrf.mxu0
        %v7551 = vadd.f32 %v7502, %v7550
        %v7552 = vpop.f32.mrf.mxu0
        %v7553 = vadd.f32 %v7504, %v7552
        %7554 = vmatmul.bf16.gmra.mxu0 %v7361
        %v7555 = vpop.f32.mrf.mxu0
        %v7556 = vadd.f32 %v7507, %v7555
        %v7557 = vpop.f32.mrf.mxu0
        %v7558 = vadd.f32 %v7509, %v7557
        %7559 = vmatmul.bf16.gmra.mxu0 %v7363
        %v7560 = vpop.f32.mrf.mxu0
        %v7561 = vadd.f32 %v7512, %v7560
        %v7562 = vpop.f32.mrf.mxu0
        %v7563 = vadd.f32 %v7514, %v7562
        %7564 = vmatmul.bf16.gmra.mxu0 %v7365
        %v7565 = vpop.f32.mrf.mxu0
        %v7566 = vadd.f32 %v7517, %v7565
        %v7567 = vpop.f32.mrf.mxu0
        %v7568 = vadd.f32 %v7519, %v7567
        %7569 = vmatmul.bf16.gmra.mxu0 %v7367
        %v7570 = vpop.f32.mrf.mxu0
        %v7571 = vadd.f32 %v7522, %v7570
        %v7572 = vpop.f32.mrf.mxu0
        %v7573 = vadd.f32 %v7524, %v7572
        %7574 = vmatmul.bf16.gmra.mxu0 %v7369
        %v7575 = vpop.f32.mrf.mxu0
        %v7576 = vadd.f32 %v7527, %v7575
        %v7577 = vpop.f32.mrf.mxu0
        %v7578 = vadd.f32 %v7529, %v7577
        %7579 = vdwg.mxu0
        %v7580 = vadd.f32 %v7218, %v7541
        %v7581 = vadd.f32 %v7220, %v7543
        %v7582 = vadd.f32 %v7223, %v7546
        %v7583 = vadd.f32 %v7225, %v7548
        %v7584 = vadd.f32 %v7228, %v7551
        %v7585 = vadd.f32 %v7230, %v7553
        %v7586 = vadd.f32 %v7233, %v7556
        %v7587 = vadd.f32 %v7235, %v7558
        %v7588 = vadd.f32 %v7238, %v7561
        %v7589 = vadd.f32 %v7240, %v7563
        %v7590 = vadd.f32 %v7243, %v7566
        %v7591 = vadd.f32 %v7245, %v7568
        %v7592 = vadd.f32 %v7248, %v7571
        %v7593 = vadd.f32 %v7250, %v7573
        %v7594 = vadd.f32 %v7253, %v7576
        %v7595 = vadd.f32 %v7255, %v7578
        %v7597 = vperm.slane %v6695, 0
        %v7599 = vadd.f32 %v7580, %v7597
        %v7600 = vadd.f32 %v7581, %v7597
        %v7601 = vadd.f32 %v7582, %v7597
        %v7602 = vadd.f32 %v7583, %v7597
        %v7603 = vadd.f32 %v7584, %v7597
        %v7604 = vadd.f32 %v7585, %v7597
        %v7605 = vadd.f32 %v7586, %v7597
        %v7606 = vadd.f32 %v7587, %v7597
        %v7607 = vadd.f32 %v7588, %v7597
        %v7608 = vadd.f32 %v7589, %v7597
        %v7609 = vadd.f32 %v7590, %v7597
        %v7610 = vadd.f32 %v7591, %v7597
        %v7611 = vadd.f32 %v7592, %v7597
        %v7612 = vadd.f32 %v7593, %v7597
        %v7613 = vadd.f32 %v7594, %v7597
        %v7614 = vadd.f32 %v7595, %v7597
        %v7615 = vxor.u32 %v7599, 2147483648
        %v7616 = vxor.u32 %v7600, 2147483648
        %v7617 = vxor.u32 %v7601, 2147483648
        %v7618 = vxor.u32 %v7602, 2147483648
        %v7619 = vxor.u32 %v7603, 2147483648
        %v7620 = vxor.u32 %v7604, 2147483648
        %v7621 = vxor.u32 %v7605, 2147483648
        %v7622 = vxor.u32 %v7606, 2147483648
        %v7623 = vxor.u32 %v7607, 2147483648
        %v7624 = vxor.u32 %v7608, 2147483648
        %v7625 = vxor.u32 %v7609, 2147483648
        %v7626 = vxor.u32 %v7610, 2147483648
        %v7627 = vxor.u32 %v7611, 2147483648
        %v7628 = vxor.u32 %v7612, 2147483648
        %v7629 = vxor.u32 %v7613, 2147483648
        %v7630 = vxor.u32 %v7614, 2147483648
        %v7631 = vmul.f32 %v7615, 1.442695
        %v7632 = vpow.pop %v7631
        %v7633 = vmul.f32 %v7616, 1.442695
        %v7634 = vpow.pop %v7633
        %v7635 = vmul.f32 %v7617, 1.442695
        %v7636 = vpow.pop %v7635
        %v7637 = vmul.f32 %v7618, 1.442695
        %v7638 = vpow.pop %v7637
        %v7639 = vmul.f32 %v7619, 1.442695
        %v7640 = vpow.pop %v7639
        %v7641 = vmul.f32 %v7620, 1.442695
        %v7642 = vpow.pop %v7641
        %v7643 = vmul.f32 %v7621, 1.442695
        %v7644 = vpow.pop %v7643
        %v7645 = vmul.f32 %v7622, 1.442695
        %v7646 = vpow.pop %v7645
        %v7647 = vmul.f32 %v7623, 1.442695
        %v7648 = vpow.pop %v7647
        %v7649 = vmul.f32 %v7624, 1.442695
        %v7650 = vpow.pop %v7649
        %v7651 = vmul.f32 %v7625, 1.442695
        %v7652 = vpow.pop %v7651
        %v7653 = vmul.f32 %v7626, 1.442695
        %v7654 = vpow.pop %v7653
        %v7655 = vmul.f32 %v7627, 1.442695
        %v7656 = vpow.pop %v7655
        %v7657 = vmul.f32 %v7628, 1.442695
        %v7658 = vpow.pop %v7657
        %v7659 = vmul.f32 %v7629, 1.442695
        %v7660 = vpow.pop %v7659
        %v7661 = vmul.f32 %v7630, 1.442695
        %v7662 = vpow.pop %v7661
        %v7663 = vadd.f32 %v7632, 1.0
        %v7664 = vadd.f32 %v7634, 1.0
        %v7665 = vadd.f32 %v7636, 1.0
        %v7666 = vadd.f32 %v7638, 1.0
        %v7667 = vadd.f32 %v7640, 1.0
        %v7668 = vadd.f32 %v7642, 1.0
        %v7669 = vadd.f32 %v7644, 1.0
        %v7670 = vadd.f32 %v7646, 1.0
        %v7671 = vadd.f32 %v7648, 1.0
        %v7672 = vadd.f32 %v7650, 1.0
        %v7673 = vadd.f32 %v7652, 1.0
        %v7674 = vadd.f32 %v7654, 1.0
        %v7675 = vadd.f32 %v7656, 1.0
        %v7676 = vadd.f32 %v7658, 1.0
        %v7677 = vadd.f32 %v7660, 1.0
        %v7678 = vadd.f32 %v7662, 1.0
        %v7679 = vrcp.pop %v7663
        %v7680 = vmul.f32 %v7663, %v7679
        %v7681 = vsub.f32 1.0, %v7680
        %v7682 = vmul.f32 %v7679, %v7681
        %v7683 = vadd.f32 %v7679, %v7682
        %vm7684 = vweird.f32 %v7663
        %vm7685 = vweird.f32 %v7679
        %vm7686 = vmor %vm7684, %vm7685
        %v7687 = vsel %vm7686, %v7679, %v7683
        %v7688 = vand.u32 2147483647, %v7663
        %vm7689 = vcmp.eq.f32.partialorder %v7688, 8.507059e+37
        %v7690 = vand.u32 %v7663, 2147483648
        %v7691 = vor.u32 1.1754944e-38, %v7690
        %v7692 = vsel %vm7689, %v7691, %v7687
        %v7693 = vmul.f32 1.0, %v7692
        %v7694 = vrcp.pop %v7664
        %v7695 = vmul.f32 %v7664, %v7694
        %v7696 = vsub.f32 1.0, %v7695
        %v7697 = vmul.f32 %v7694, %v7696
        %v7698 = vadd.f32 %v7694, %v7697
        %vm7699 = vweird.f32 %v7664
        %vm7700 = vweird.f32 %v7694
        %vm7701 = vmor %vm7699, %vm7700
        %v7702 = vsel %vm7701, %v7694, %v7698
        %v7703 = vand.u32 2147483647, %v7664
        %vm7704 = vcmp.eq.f32.partialorder %v7703, 8.507059e+37
        %v7705 = vand.u32 %v7664, 2147483648
        %v7706 = vor.u32 1.1754944e-38, %v7705
        %v7707 = vsel %vm7704, %v7706, %v7702
        %v7708 = vmul.f32 1.0, %v7707
        %v7709 = vrcp.pop %v7665
        %v7710 = vmul.f32 %v7665, %v7709
        %v7711 = vsub.f32 1.0, %v7710
        %v7712 = vmul.f32 %v7709, %v7711
        %v7713 = vadd.f32 %v7709, %v7712
        %vm7714 = vweird.f32 %v7665
        %vm7715 = vweird.f32 %v7709
        %vm7716 = vmor %vm7714, %vm7715
        %v7717 = vsel %vm7716, %v7709, %v7713
        %v7718 = vand.u32 2147483647, %v7665
        %vm7719 = vcmp.eq.f32.partialorder %v7718, 8.507059e+37
        %v7720 = vand.u32 %v7665, 2147483648
        %v7721 = vor.u32 1.1754944e-38, %v7720
        %v7722 = vsel %vm7719, %v7721, %v7717
        %v7723 = vmul.f32 1.0, %v7722
        %v7724 = vrcp.pop %v7666
        %v7725 = vmul.f32 %v7666, %v7724
        %v7726 = vsub.f32 1.0, %v7725
        %v7727 = vmul.f32 %v7724, %v7726
        %v7728 = vadd.f32 %v7724, %v7727
        %vm7729 = vweird.f32 %v7666
        %vm7730 = vweird.f32 %v7724
        %vm7731 = vmor %vm7729, %vm7730
        %v7732 = vsel %vm7731, %v7724, %v7728
        %v7733 = vand.u32 2147483647, %v7666
        %vm7734 = vcmp.eq.f32.partialorder %v7733, 8.507059e+37
        %v7735 = vand.u32 %v7666, 2147483648
        %v7736 = vor.u32 1.1754944e-38, %v7735
        %v7737 = vsel %vm7734, %v7736, %v7732
        %v7738 = vmul.f32 1.0, %v7737
        %v7739 = vrcp.pop %v7667
        %v7740 = vmul.f32 %v7667, %v7739
        %v7741 = vsub.f32 1.0, %v7740
        %v7742 = vmul.f32 %v7739, %v7741
        %v7743 = vadd.f32 %v7739, %v7742
        %vm7744 = vweird.f32 %v7667
        %vm7745 = vweird.f32 %v7739
        %vm7746 = vmor %vm7744, %vm7745
        %v7747 = vsel %vm7746, %v7739, %v7743
        %v7748 = vand.u32 2147483647, %v7667
        %vm7749 = vcmp.eq.f32.partialorder %v7748, 8.507059e+37
        %v7750 = vand.u32 %v7667, 2147483648
        %v7751 = vor.u32 1.1754944e-38, %v7750
        %v7752 = vsel %vm7749, %v7751, %v7747
        %v7753 = vmul.f32 1.0, %v7752
        %v7754 = vrcp.pop %v7668
        %v7755 = vmul.f32 %v7668, %v7754
        %v7756 = vsub.f32 1.0, %v7755
        %v7757 = vmul.f32 %v7754, %v7756
        %v7758 = vadd.f32 %v7754, %v7757
        %vm7759 = vweird.f32 %v7668
        %vm7760 = vweird.f32 %v7754
        %vm7761 = vmor %vm7759, %vm7760
        %v7762 = vsel %vm7761, %v7754, %v7758
        %v7763 = vand.u32 2147483647, %v7668
        %vm7764 = vcmp.eq.f32.partialorder %v7763, 8.507059e+37
        %v7765 = vand.u32 %v7668, 2147483648
        %v7766 = vor.u32 1.1754944e-38, %v7765
        %v7767 = vsel %vm7764, %v7766, %v7762
        %v7768 = vmul.f32 1.0, %v7767
        %v7769 = vrcp.pop %v7669
        %v7770 = vmul.f32 %v7669, %v7769
        %v7771 = vsub.f32 1.0, %v7770
        %v7772 = vmul.f32 %v7769, %v7771
        %v7773 = vadd.f32 %v7769, %v7772
        %vm7774 = vweird.f32 %v7669
        %vm7775 = vweird.f32 %v7769
        %vm7776 = vmor %vm7774, %vm7775
        %v7777 = vsel %vm7776, %v7769, %v7773
        %v7778 = vand.u32 2147483647, %v7669
        %vm7779 = vcmp.eq.f32.partialorder %v7778, 8.507059e+37
        %v7780 = vand.u32 %v7669, 2147483648
        %v7781 = vor.u32 1.1754944e-38, %v7780
        %v7782 = vsel %vm7779, %v7781, %v7777
        %v7783 = vmul.f32 1.0, %v7782
        %v7784 = vrcp.pop %v7670
        %v7785 = vmul.f32 %v7670, %v7784
        %v7786 = vsub.f32 1.0, %v7785
        %v7787 = vmul.f32 %v7784, %v7786
        %v7788 = vadd.f32 %v7784, %v7787
        %vm7789 = vweird.f32 %v7670
        %vm7790 = vweird.f32 %v7784
        %vm7791 = vmor %vm7789, %vm7790
        %v7792 = vsel %vm7791, %v7784, %v7788
        %v7793 = vand.u32 2147483647, %v7670
        %vm7794 = vcmp.eq.f32.partialorder %v7793, 8.507059e+37
        %v7795 = vand.u32 %v7670, 2147483648
        %v7796 = vor.u32 1.1754944e-38, %v7795
        %v7797 = vsel %vm7794, %v7796, %v7792
        %v7798 = vmul.f32 1.0, %v7797
        %v7799 = vrcp.pop %v7671
        %v7800 = vmul.f32 %v7671, %v7799
        %v7801 = vsub.f32 1.0, %v7800
        %v7802 = vmul.f32 %v7799, %v7801
        %v7803 = vadd.f32 %v7799, %v7802
        %vm7804 = vweird.f32 %v7671
        %vm7805 = vweird.f32 %v7799
        %vm7806 = vmor %vm7804, %vm7805
        %v7807 = vsel %vm7806, %v7799, %v7803
        %v7808 = vand.u32 2147483647, %v7671
        %vm7809 = vcmp.eq.f32.partialorder %v7808, 8.507059e+37
        %v7810 = vand.u32 %v7671, 2147483648
        %v7811 = vor.u32 1.1754944e-38, %v7810
        %v7812 = vsel %vm7809, %v7811, %v7807
        %v7813 = vmul.f32 1.0, %v7812
        %v7814 = vrcp.pop %v7672
        %v7815 = vmul.f32 %v7672, %v7814
        %v7816 = vsub.f32 1.0, %v7815
        %v7817 = vmul.f32 %v7814, %v7816
        %v7818 = vadd.f32 %v7814, %v7817
        %vm7819 = vweird.f32 %v7672
        %vm7820 = vweird.f32 %v7814
        %vm7821 = vmor %vm7819, %vm7820
        %v7822 = vsel %vm7821, %v7814, %v7818
        %v7823 = vand.u32 2147483647, %v7672
        %vm7824 = vcmp.eq.f32.partialorder %v7823, 8.507059e+37
        %v7825 = vand.u32 %v7672, 2147483648
        %v7826 = vor.u32 1.1754944e-38, %v7825
        %v7827 = vsel %vm7824, %v7826, %v7822
        %v7828 = vmul.f32 1.0, %v7827
        %v7829 = vrcp.pop %v7673
        %v7830 = vmul.f32 %v7673, %v7829
        %v7831 = vsub.f32 1.0, %v7830
        %v7832 = vmul.f32 %v7829, %v7831
        %v7833 = vadd.f32 %v7829, %v7832
        %vm7834 = vweird.f32 %v7673
        %vm7835 = vweird.f32 %v7829
        %vm7836 = vmor %vm7834, %vm7835
        %v7837 = vsel %vm7836, %v7829, %v7833
        %v7838 = vand.u32 2147483647, %v7673
        %vm7839 = vcmp.eq.f32.partialorder %v7838, 8.507059e+37
        %v7840 = vand.u32 %v7673, 2147483648
        %v7841 = vor.u32 1.1754944e-38, %v7840
        %v7842 = vsel %vm7839, %v7841, %v7837
        %v7843 = vmul.f32 1.0, %v7842
        %v7844 = vrcp.pop %v7674
        %v7845 = vmul.f32 %v7674, %v7844
        %v7846 = vsub.f32 1.0, %v7845
        %v7847 = vmul.f32 %v7844, %v7846
        %v7848 = vadd.f32 %v7844, %v7847
        %vm7849 = vweird.f32 %v7674
        %vm7850 = vweird.f32 %v7844
        %vm7851 = vmor %vm7849, %vm7850
        %v7852 = vsel %vm7851, %v7844, %v7848
        %v7853 = vand.u32 2147483647, %v7674
        %vm7854 = vcmp.eq.f32.partialorder %v7853, 8.507059e+37
        %v7855 = vand.u32 %v7674, 2147483648
        %v7856 = vor.u32 1.1754944e-38, %v7855
        %v7857 = vsel %vm7854, %v7856, %v7852
        %v7858 = vmul.f32 1.0, %v7857
        %v7859 = vrcp.pop %v7675
        %v7860 = vmul.f32 %v7675, %v7859
        %v7861 = vsub.f32 1.0, %v7860
        %v7862 = vmul.f32 %v7859, %v7861
        %v7863 = vadd.f32 %v7859, %v7862
        %vm7864 = vweird.f32 %v7675
        %vm7865 = vweird.f32 %v7859
        %vm7866 = vmor %vm7864, %vm7865
        %v7867 = vsel %vm7866, %v7859, %v7863
        %v7868 = vand.u32 2147483647, %v7675
        %vm7869 = vcmp.eq.f32.partialorder %v7868, 8.507059e+37
        %v7870 = vand.u32 %v7675, 2147483648
        %v7871 = vor.u32 1.1754944e-38, %v7870
        %v7872 = vsel %vm7869, %v7871, %v7867
        %v7873 = vmul.f32 1.0, %v7872
        %v7874 = vrcp.pop %v7676
        %v7875 = vmul.f32 %v7676, %v7874
        %v7876 = vsub.f32 1.0, %v7875
        %v7877 = vmul.f32 %v7874, %v7876
        %v7878 = vadd.f32 %v7874, %v7877
        %vm7879 = vweird.f32 %v7676
        %vm7880 = vweird.f32 %v7874
        %vm7881 = vmor %vm7879, %vm7880
        %v7882 = vsel %vm7881, %v7874, %v7878
        %v7883 = vand.u32 2147483647, %v7676
        %vm7884 = vcmp.eq.f32.partialorder %v7883, 8.507059e+37
        %v7885 = vand.u32 %v7676, 2147483648
        %v7886 = vor.u32 1.1754944e-38, %v7885
        %v7887 = vsel %vm7884, %v7886, %v7882
        %v7888 = vmul.f32 1.0, %v7887
        %v7889 = vrcp.pop %v7677
        %v7890 = vmul.f32 %v7677, %v7889
        %v7891 = vsub.f32 1.0, %v7890
        %v7892 = vmul.f32 %v7889, %v7891
        %v7893 = vadd.f32 %v7889, %v7892
        %vm7894 = vweird.f32 %v7677
        %vm7895 = vweird.f32 %v7889
        %vm7896 = vmor %vm7894, %vm7895
        %v7897 = vsel %vm7896, %v7889, %v7893
        %v7898 = vand.u32 2147483647, %v7677
        %vm7899 = vcmp.eq.f32.partialorder %v7898, 8.507059e+37
        %v7900 = vand.u32 %v7677, 2147483648
        %v7901 = vor.u32 1.1754944e-38, %v7900
        %v7902 = vsel %vm7899, %v7901, %v7897
        %v7903 = vmul.f32 1.0, %v7902
        %v7904 = vrcp.pop %v7678
        %v7905 = vmul.f32 %v7678, %v7904
        %v7906 = vsub.f32 1.0, %v7905
        %v7907 = vmul.f32 %v7904, %v7906
        %v7908 = vadd.f32 %v7904, %v7907
        %vm7909 = vweird.f32 %v7678
        %vm7910 = vweird.f32 %v7904
        %vm7911 = vmor %vm7909, %vm7910
        %v7912 = vsel %vm7911, %v7904, %v7908
        %v7913 = vand.u32 2147483647, %v7678
        %vm7914 = vcmp.eq.f32.partialorder %v7913, 8.507059e+37
        %v7915 = vand.u32 %v7678, 2147483648
        %v7916 = vor.u32 1.1754944e-38, %v7915
        %v7917 = vsel %vm7914, %v7916, %v7912
        %v7918 = vmul.f32 1.0, %v7917
        %v7919 = vtanh.pop %v7599
        %v7920 = vtanh.pop %v7600
        %v7921 = vtanh.pop %v7601
        %v7922 = vtanh.pop %v7602
        %v7923 = vtanh.pop %v7603
        %v7924 = vtanh.pop %v7604
        %v7925 = vtanh.pop %v7605
        %v7926 = vtanh.pop %v7606
        %v7927 = vtanh.pop %v7607
        %v7928 = vtanh.pop %v7608
        %v7929 = vtanh.pop %v7609
        %v7930 = vtanh.pop %v7610
        %v7931 = vtanh.pop %v7611
        %v7932 = vtanh.pop %v7612
        %v7933 = vtanh.pop %v7613
        %v7934 = vtanh.pop %v7614
        %v7935 = vld [vmem:[#allocation7] sm:$0xff]
        %v7936 = vld [vmem:[#allocation7 + $0x8] sm:$0xff]
        %v7937 = vld [vmem:[#allocation7 + $0x10] sm:$0xff]
        %v7938 = vld [vmem:[#allocation7 + $0x18] sm:$0xff]
        %v7939 = vld [vmem:[#allocation7 + $0x20] sm:$0xff]
        %v7940 = vld [vmem:[#allocation7 + $0x28] sm:$0xff]
        %v7941 = vld [vmem:[#allocation7 + $0x30] sm:$0xff]
        %v7942 = vld [vmem:[#allocation7 + $0x38] sm:$0xff]
        %v7943 = vld [vmem:[#allocation7 + $0x40] sm:$0xff]
        %v7944 = vld [vmem:[#allocation7 + $0x48] sm:$0xff]
        %v7945 = vld [vmem:[#allocation7 + $0x50] sm:$0xff]
        %v7946 = vld [vmem:[#allocation7 + $0x58] sm:$0xff]
        %v7947 = vld [vmem:[#allocation7 + $0x60] sm:$0xff]
        %v7948 = vld [vmem:[#allocation7 + $0x68] sm:$0xff]
        %v7949 = vld [vmem:[#allocation7 + $0x70] sm:$0xff]
        %v7950 = vld [vmem:[#allocation7 + $0x78] sm:$0xff]
        %7967 = vrot.lane.b32.xlu0 %v7935, 32
        %v7968 = vpop.permute.xlu0 %7967
        %7969 = vrot.lane.b32.xlu0 %v7936, 32
        %v7970 = vpop.permute.xlu0 %7969
        %7971 = vrot.lane.b32.xlu0 %v7937, 32
        %v7972 = vpop.permute.xlu0 %7971
        %7973 = vrot.lane.b32.xlu0 %v7938, 32
        %v7974 = vpop.permute.xlu0 %7973
        %7975 = vrot.lane.b32.xlu0 %v7939, 32
        %v7976 = vpop.permute.xlu0 %7975
        %7977 = vrot.lane.b32.xlu0 %v7940, 32
        %v7978 = vpop.permute.xlu0 %7977
        %7979 = vrot.lane.b32.xlu0 %v7941, 32
        %v7980 = vpop.permute.xlu0 %7979
        %7981 = vrot.lane.b32.xlu0 %v7942, 32
        %v7982 = vpop.permute.xlu0 %7981
        %7983 = vrot.lane.b32.xlu0 %v7943, 32
        %v7984 = vpop.permute.xlu0 %7983
        %7985 = vrot.lane.b32.xlu0 %v7944, 32
        %v7986 = vpop.permute.xlu0 %7985
        %7987 = vrot.lane.b32.xlu0 %v7945, 32
        %v7988 = vpop.permute.xlu0 %7987
        %7989 = vrot.lane.b32.xlu0 %v7946, 32
        %v7990 = vpop.permute.xlu0 %7989
        %7991 = vrot.lane.b32.xlu0 %v7947, 32
        %v7992 = vpop.permute.xlu0 %7991
        %7993 = vrot.lane.b32.xlu0 %v7948, 32
        %v7994 = vpop.permute.xlu0 %7993
        %7995 = vrot.lane.b32.xlu0 %v7949, 32
        %v7996 = vpop.permute.xlu0 %7995
        %7997 = vrot.lane.b32.xlu0 %v7950, 32
        %v7998 = vpop.permute.xlu0 %7997
        %v8015 = vmul.f32 %v7693, %v7968
        %v8016 = vmul.f32 %v7708, %v7970
        %v8017 = vmul.f32 %v7723, %v7972
        %v8018 = vmul.f32 %v7738, %v7974
        %v8019 = vmul.f32 %v7753, %v7976
        %v8020 = vmul.f32 %v7768, %v7978
        %v8021 = vmul.f32 %v7783, %v7980
        %v8022 = vmul.f32 %v7798, %v7982
        %v8023 = vmul.f32 %v7813, %v7984
        %v8024 = vmul.f32 %v7828, %v7986
        %v8025 = vmul.f32 %v7843, %v7988
        %v8026 = vmul.f32 %v7858, %v7990
        %v8027 = vmul.f32 %v7873, %v7992
        %v8028 = vmul.f32 %v7888, %v7994
        %v8029 = vmul.f32 %v7903, %v7996
        %v8030 = vmul.f32 %v7918, %v7998
        %8047 = vrot.lane.b32.xlu0 %v7919, 64
        %v8048 = vpop.permute.xlu0 %8047
        %8049 = vrot.lane.b32.xlu0 %v7920, 64
        %v8050 = vpop.permute.xlu0 %8049
        %8051 = vrot.lane.b32.xlu0 %v7921, 64
        %v8052 = vpop.permute.xlu0 %8051
        %8053 = vrot.lane.b32.xlu0 %v7922, 64
        %v8054 = vpop.permute.xlu0 %8053
        %8055 = vrot.lane.b32.xlu0 %v7923, 64
        %v8056 = vpop.permute.xlu0 %8055
        %8057 = vrot.lane.b32.xlu0 %v7924, 64
        %v8058 = vpop.permute.xlu0 %8057
        %8059 = vrot.lane.b32.xlu0 %v7925, 64
        %v8060 = vpop.permute.xlu0 %8059
        %8061 = vrot.lane.b32.xlu0 %v7926, 64
        %v8062 = vpop.permute.xlu0 %8061
        %8063 = vrot.lane.b32.xlu0 %v7927, 64
        %v8064 = vpop.permute.xlu0 %8063
        %8065 = vrot.lane.b32.xlu0 %v7928, 64
        %v8066 = vpop.permute.xlu0 %8065
        %8067 = vrot.lane.b32.xlu0 %v7929, 64
        %v8068 = vpop.permute.xlu0 %8067
        %8069 = vrot.lane.b32.xlu0 %v7930, 64
        %v8070 = vpop.permute.xlu0 %8069
        %8071 = vrot.lane.b32.xlu0 %v7931, 64
        %v8072 = vpop.permute.xlu0 %8071
        %8073 = vrot.lane.b32.xlu0 %v7932, 64
        %v8074 = vpop.permute.xlu0 %8073
        %8075 = vrot.lane.b32.xlu0 %v7933, 64
        %v8076 = vpop.permute.xlu0 %8075
        %8077 = vrot.lane.b32.xlu0 %v7934, 64
        %v8078 = vpop.permute.xlu0 %8077
        %v8095 = vmul.f32 %v7693, %v8048
        %v8096 = vmul.f32 %v7708, %v8050
        %v8097 = vmul.f32 %v7723, %v8052
        %v8098 = vmul.f32 %v7738, %v8054
        %v8099 = vmul.f32 %v7753, %v8056
        %v8100 = vmul.f32 %v7768, %v8058
        %v8101 = vmul.f32 %v7783, %v8060
        %v8102 = vmul.f32 %v7798, %v8062
        %v8103 = vmul.f32 %v7813, %v8064
        %v8104 = vmul.f32 %v7828, %v8066
        %v8105 = vmul.f32 %v7843, %v8068
        %v8106 = vmul.f32 %v7858, %v8070
        %v8107 = vmul.f32 %v7873, %v8072
        %v8108 = vmul.f32 %v7888, %v8074
        %v8109 = vmul.f32 %v7903, %v8076
        %v8110 = vmul.f32 %v7918, %v8078
        %8127 = vrot.lane.b32.xlu0 %v8095, 32
        %v8128 = vpop.permute.xlu0 %8127
        %8129 = vrot.lane.b32.xlu0 %v8096, 32
        %v8130 = vpop.permute.xlu0 %8129
        %8131 = vrot.lane.b32.xlu0 %v8097, 32
        %v8132 = vpop.permute.xlu0 %8131
        %8133 = vrot.lane.b32.xlu0 %v8098, 32
        %v8134 = vpop.permute.xlu0 %8133
        %8135 = vrot.lane.b32.xlu0 %v8099, 32
        %v8136 = vpop.permute.xlu0 %8135
        %8137 = vrot.lane.b32.xlu0 %v8100, 32
        %v8138 = vpop.permute.xlu0 %8137
        %8139 = vrot.lane.b32.xlu0 %v8101, 32
        %v8140 = vpop.permute.xlu0 %8139
        %8141 = vrot.lane.b32.xlu0 %v8102, 32
        %v8142 = vpop.permute.xlu0 %8141
        %8143 = vrot.lane.b32.xlu0 %v8103, 32
        %v8144 = vpop.permute.xlu0 %8143
        %8145 = vrot.lane.b32.xlu0 %v8104, 32
        %v8146 = vpop.permute.xlu0 %8145
        %8147 = vrot.lane.b32.xlu0 %v8105, 32
        %v8148 = vpop.permute.xlu0 %8147
        %8149 = vrot.lane.b32.xlu0 %v8106, 32
        %v8150 = vpop.permute.xlu0 %8149
        %8151 = vrot.lane.b32.xlu0 %v8107, 32
        %v8152 = vpop.permute.xlu0 %8151
        %8153 = vrot.lane.b32.xlu0 %v8108, 32
        %v8154 = vpop.permute.xlu0 %8153
        %8155 = vrot.lane.b32.xlu0 %v8109, 32
        %v8156 = vpop.permute.xlu0 %8155
        %8157 = vrot.lane.b32.xlu0 %v8110, 32
        %v8158 = vpop.permute.xlu0 %8157
        %v8175 = vadd.f32 %v8015, %v8128
        %v8176 = vadd.f32 %v8016, %v8130
        %v8177 = vadd.f32 %v8017, %v8132
        %v8178 = vadd.f32 %v8018, %v8134
        %v8179 = vadd.f32 %v8019, %v8136
        %v8180 = vadd.f32 %v8020, %v8138
        %v8181 = vadd.f32 %v8021, %v8140
        %v8182 = vadd.f32 %v8022, %v8142
        %v8183 = vadd.f32 %v8023, %v8144
        %v8184 = vadd.f32 %v8024, %v8146
        %v8185 = vadd.f32 %v8025, %v8148
        %v8186 = vadd.f32 %v8026, %v8150
        %v8187 = vadd.f32 %v8027, %v8152
        %v8188 = vadd.f32 %v8028, %v8154
        %v8189 = vadd.f32 %v8029, %v8156
        %v8190 = vadd.f32 %v8030, %v8158
        %v8191 = vtanh.pop %v8175
        %v8192 = vtanh.pop %v8176
        %v8193 = vtanh.pop %v8177
        %v8194 = vtanh.pop %v8178
        %v8195 = vtanh.pop %v8179
        %v8196 = vtanh.pop %v8180
        %v8197 = vtanh.pop %v8181
        %v8198 = vtanh.pop %v8182
        %v8199 = vtanh.pop %v8183
        %v8200 = vtanh.pop %v8184
        %v8201 = vtanh.pop %v8185
        %v8202 = vtanh.pop %v8186
        %v8203 = vtanh.pop %v8187
        %v8204 = vtanh.pop %v8188
        %v8205 = vtanh.pop %v8189
        %v8206 = vtanh.pop %v8190
        %8223 = vrot.lane.b32.xlu0 %v8191, 64
        %v8224 = vpop.permute.xlu0 %8223
        %8225 = vrot.lane.b32.xlu0 %v8192, 64
        %v8226 = vpop.permute.xlu0 %8225
        %8227 = vrot.lane.b32.xlu0 %v8193, 64
        %v8228 = vpop.permute.xlu0 %8227
        %8229 = vrot.lane.b32.xlu0 %v8194, 64
        %v8230 = vpop.permute.xlu0 %8229
        %8231 = vrot.lane.b32.xlu0 %v8195, 64
        %v8232 = vpop.permute.xlu0 %8231
        %8233 = vrot.lane.b32.xlu0 %v8196, 64
        %v8234 = vpop.permute.xlu0 %8233
        %8235 = vrot.lane.b32.xlu0 %v8197, 64
        %v8236 = vpop.permute.xlu0 %8235
        %8237 = vrot.lane.b32.xlu0 %v8198, 64
        %v8238 = vpop.permute.xlu0 %8237
        %8239 = vrot.lane.b32.xlu0 %v8199, 64
        %v8240 = vpop.permute.xlu0 %8239
        %8241 = vrot.lane.b32.xlu0 %v8200, 64
        %v8242 = vpop.permute.xlu0 %8241
        %8243 = vrot.lane.b32.xlu0 %v8201, 64
        %v8244 = vpop.permute.xlu0 %8243
        %8245 = vrot.lane.b32.xlu0 %v8202, 64
        %v8246 = vpop.permute.xlu0 %8245
        %8247 = vrot.lane.b32.xlu0 %v8203, 64
        %v8248 = vpop.permute.xlu0 %8247
        %8249 = vrot.lane.b32.xlu0 %v8204, 64
        %v8250 = vpop.permute.xlu0 %8249
        %8251 = vrot.lane.b32.xlu0 %v8205, 64
        %v8252 = vpop.permute.xlu0 %8251
        %8253 = vrot.lane.b32.xlu0 %v8206, 64
        %v8254 = vpop.permute.xlu0 %8253
        %v8271 = vmul.f32 %v7693, %v8224
        %v8272 = vmul.f32 %v7708, %v8226
        %v8273 = vmul.f32 %v7723, %v8228
        %v8274 = vmul.f32 %v7738, %v8230
        %v8275 = vmul.f32 %v7753, %v8232
        %v8276 = vmul.f32 %v7768, %v8234
        %v8277 = vmul.f32 %v7783, %v8236
        %v8278 = vmul.f32 %v7798, %v8238
        %v8279 = vmul.f32 %v7813, %v8240
        %v8280 = vmul.f32 %v7828, %v8242
        %v8281 = vmul.f32 %v7843, %v8244
        %v8282 = vmul.f32 %v7858, %v8246
        %v8283 = vmul.f32 %v7873, %v8248
        %v8284 = vmul.f32 %v7888, %v8250
        %v8285 = vmul.f32 %v7903, %v8252
        %v8286 = vmul.f32 %v7918, %v8254
        %8303 = vrot.lane.b32.xlu0 %v8175, 96
        %v8304 = vpop.permute.xlu0 %8303
        %8305 = vrot.lane.b32.xlu0 %v8176, 96
        %v8306 = vpop.permute.xlu0 %8305
        %8307 = vrot.lane.b32.xlu0 %v8177, 96
        %v8308 = vpop.permute.xlu0 %8307
        %8309 = vrot.lane.b32.xlu0 %v8178, 96
        %v8310 = vpop.permute.xlu0 %8309
        %8311 = vrot.lane.b32.xlu0 %v8179, 96
        %v8312 = vpop.permute.xlu0 %8311
        %8313 = vrot.lane.b32.xlu0 %v8180, 96
        %v8314 = vpop.permute.xlu0 %8313
        %8315 = vrot.lane.b32.xlu0 %v8181, 96
        %v8316 = vpop.permute.xlu0 %8315
        %8317 = vrot.lane.b32.xlu0 %v8182, 96
        %v8318 = vpop.permute.xlu0 %8317
        %8319 = vrot.lane.b32.xlu0 %v8183, 96
        %v8320 = vpop.permute.xlu0 %8319
        %8321 = vrot.lane.b32.xlu0 %v8184, 96
        %v8322 = vpop.permute.xlu0 %8321
        %8323 = vrot.lane.b32.xlu0 %v8185, 96
        %v8324 = vpop.permute.xlu0 %8323
        %8325 = vrot.lane.b32.xlu0 %v8186, 96
        %v8326 = vpop.permute.xlu0 %8325
        %8327 = vrot.lane.b32.xlu0 %v8187, 96
        %v8328 = vpop.permute.xlu0 %8327
        %8329 = vrot.lane.b32.xlu0 %v8188, 96
        %v8330 = vpop.permute.xlu0 %8329
        %8331 = vrot.lane.b32.xlu0 %v8189, 96
        %v8332 = vpop.permute.xlu0 %8331
        %8333 = vrot.lane.b32.xlu0 %v8190, 96
        %v8334 = vpop.permute.xlu0 %8333
        %8351 = vst.msk [vmem:[#allocation7] sm:$0xff] %vm423, %v8304
        %8352 = vst.msk [vmem:[#allocation7 + $0x8] sm:$0xff] %vm423, %v8306
        %8353 = vst.msk [vmem:[#allocation7 + $0x10] sm:$0xff] %vm423, %v8308
        %8354 = vst.msk [vmem:[#allocation7 + $0x18] sm:$0xff] %vm423, %v8310
        %8355 = vst.msk [vmem:[#allocation7 + $0x20] sm:$0xff] %vm423, %v8312
        %8356 = vst.msk [vmem:[#allocation7 + $0x28] sm:$0xff] %vm423, %v8314
        %8357 = vst.msk [vmem:[#allocation7 + $0x30] sm:$0xff] %vm423, %v8316
        %8358 = vst.msk [vmem:[#allocation7 + $0x38] sm:$0xff] %vm423, %v8318
        %8359 = vst.msk [vmem:[#allocation7 + $0x40] sm:$0xff] %vm423, %v8320
        %8360 = vst.msk [vmem:[#allocation7 + $0x48] sm:$0xff] %vm423, %v8322
        %8361 = vst.msk [vmem:[#allocation7 + $0x50] sm:$0xff] %vm423, %v8324
        %8362 = vst.msk [vmem:[#allocation7 + $0x58] sm:$0xff] %vm423, %v8326
        %8363 = vst.msk [vmem:[#allocation7 + $0x60] sm:$0xff] %vm423, %v8328
        %8364 = vst.msk [vmem:[#allocation7 + $0x68] sm:$0xff] %vm423, %v8330
        %8365 = vst.msk [vmem:[#allocation7 + $0x70] sm:$0xff] %vm423, %v8332
        %8366 = vst.msk [vmem:[#allocation7 + $0x78] sm:$0xff] %vm423, %v8334
        %v8367 = vpack.c.bf16 %v8271, %v8271
        %v8368 = vpack.c.bf16 %v8272, %v8272
        %v8369 = vpack.c.bf16 %v8273, %v8273
        %v8370 = vpack.c.bf16 %v8274, %v8274
        %v8371 = vpack.c.bf16 %v8275, %v8275
        %v8372 = vpack.c.bf16 %v8276, %v8276
        %v8373 = vpack.c.bf16 %v8277, %v8277
        %v8374 = vpack.c.bf16 %v8278, %v8278
        %v8375 = vpack.c.bf16 %v8279, %v8279
        %v8376 = vpack.c.bf16 %v8280, %v8280
        %v8377 = vpack.c.bf16 %v8281, %v8281
        %v8378 = vpack.c.bf16 %v8282, %v8282
        %v8379 = vpack.c.bf16 %v8283, %v8283
        %v8380 = vpack.c.bf16 %v8284, %v8284
        %v8381 = vpack.c.bf16 %v8285, %v8285
        %v8382 = vpack.c.bf16 %v8286, %v8286
        %8399 = vrot.lane.b32.xlu0 %v8367, 32
        %v8400 = vpop.permute.xlu0 %8399
        %8401 = vrot.lane.b32.xlu0 %v8368, 32
        %v8402 = vpop.permute.xlu0 %8401
        %8403 = vrot.lane.b32.xlu0 %v8369, 32
        %v8404 = vpop.permute.xlu0 %8403
        %8405 = vrot.lane.b32.xlu0 %v8370, 32
        %v8406 = vpop.permute.xlu0 %8405
        %8407 = vrot.lane.b32.xlu0 %v8371, 32
        %v8408 = vpop.permute.xlu0 %8407
        %8409 = vrot.lane.b32.xlu0 %v8372, 32
        %v8410 = vpop.permute.xlu0 %8409
        %8411 = vrot.lane.b32.xlu0 %v8373, 32
        %v8412 = vpop.permute.xlu0 %8411
        %8413 = vrot.lane.b32.xlu0 %v8374, 32
        %v8414 = vpop.permute.xlu0 %8413
        %8415 = vrot.lane.b32.xlu0 %v8375, 32
        %v8416 = vpop.permute.xlu0 %8415
        %8417 = vrot.lane.b32.xlu0 %v8376, 32
        %v8418 = vpop.permute.xlu0 %8417
        %8419 = vrot.lane.b32.xlu0 %v8377, 32
        %v8420 = vpop.permute.xlu0 %8419
        %8421 = vrot.lane.b32.xlu0 %v8378, 32
        %v8422 = vpop.permute.xlu0 %8421
        %8423 = vrot.lane.b32.xlu0 %v8379, 32
        %v8424 = vpop.permute.xlu0 %8423
        %8425 = vrot.lane.b32.xlu0 %v8380, 32
        %v8426 = vpop.permute.xlu0 %8425
        %8427 = vrot.lane.b32.xlu0 %v8381, 32
        %v8428 = vpop.permute.xlu0 %8427
        %8429 = vrot.lane.b32.xlu0 %v8382, 32
        %v8430 = vpop.permute.xlu0 %8429
        %8447 = vst.msk [vmem:[%s5364 + $0x4] sm:$0xf] %vm3831, %v8400
        %8448 = vst.msk [vmem:[%s5364 + $0x8] sm:$0xf] %vm3831, %v8402
        %8449 = vst.msk [vmem:[%s5364 + $0x14] sm:$0xf] %vm3831, %v8404
        %8450 = vst.msk [vmem:[%s5364 + $0x18] sm:$0xf] %vm3831, %v8406
        %8451 = vst.msk [vmem:[%s5364 + $0x24] sm:$0xf] %vm3831, %v8408
        %8452 = vst.msk [vmem:[%s5364 + $0x28] sm:$0xf] %vm3831, %v8410
        %8453 = vst.msk [vmem:[%s5364 + $0x34] sm:$0xf] %vm3831, %v8412
        %8454 = vst.msk [vmem:[%s5364 + $0x38] sm:$0xf] %vm3831, %v8414
        %8455 = vst.msk [vmem:[%s5364 + $0x44] sm:$0xf] %vm3831, %v8416
        %8456 = vst.msk [vmem:[%s5364 + $0x48] sm:$0xf] %vm3831, %v8418
        %8457 = vst.msk [vmem:[%s5364 + $0x54] sm:$0xf] %vm3831, %v8420
        %8458 = vst.msk [vmem:[%s5364 + $0x58] sm:$0xf] %vm3831, %v8422
        %8459 = vst.msk [vmem:[%s5364 + $0x64] sm:$0xf] %vm3831, %v8424
        %8460 = vst.msk [vmem:[%s5364 + $0x68] sm:$0xf] %vm3831, %v8426
        %8461 = vst.msk [vmem:[%s5364 + $0x74] sm:$0xf] %vm3831, %v8428
        %8462 = vst.msk [vmem:[%s5364 + $0x78] sm:$0xf] %vm3831, %v8430
        %p8463 = scmp.ge.s32.totalorder %s1108, 0
        // Predicated region
        $region48: #{tpu_custom_call.1} parent=44 // pred_check
          %p8464 = pneg %p8463
        $region49: #{tpu_custom_call.1} parent=44 // pred_check_branch
          %8466 = sbr.rel (%p8464) target = $region51
        $region50: #{tpu_custom_call.1} parent=44 // pred_region
          %8483 = vrot.lane.b32.xlu0 %v8271, 32
          %v8484 = vpop.permute.xlu0 %8483
          %8485 = vrot.lane.b32.xlu0 %v8272, 32
          %v8486 = vpop.permute.xlu0 %8485
          %8487 = vrot.lane.b32.xlu0 %v8273, 32
          %v8488 = vpop.permute.xlu0 %8487
          %8489 = vrot.lane.b32.xlu0 %v8274, 32
          %v8490 = vpop.permute.xlu0 %8489
          %8491 = vrot.lane.b32.xlu0 %v8275, 32
          %v8492 = vpop.permute.xlu0 %8491
          %8493 = vrot.lane.b32.xlu0 %v8276, 32
          %v8494 = vpop.permute.xlu0 %8493
          %8495 = vrot.lane.b32.xlu0 %v8277, 32
          %v8496 = vpop.permute.xlu0 %8495
          %8497 = vrot.lane.b32.xlu0 %v8278, 32
          %v8498 = vpop.permute.xlu0 %8497
          %8499 = vrot.lane.b32.xlu0 %v8279, 32
          %v8500 = vpop.permute.xlu0 %8499
          %8501 = vrot.lane.b32.xlu0 %v8280, 32
          %v8502 = vpop.permute.xlu0 %8501
          %8503 = vrot.lane.b32.xlu0 %v8281, 32
          %v8504 = vpop.permute.xlu0 %8503
          %8505 = vrot.lane.b32.xlu0 %v8282, 32
          %v8506 = vpop.permute.xlu0 %8505
          %8507 = vrot.lane.b32.xlu0 %v8283, 32
          %v8508 = vpop.permute.xlu0 %8507
          %8509 = vrot.lane.b32.xlu0 %v8284, 32
          %v8510 = vpop.permute.xlu0 %8509
          %8511 = vrot.lane.b32.xlu0 %v8285, 32
          %v8512 = vpop.permute.xlu0 %8511
          %8513 = vrot.lane.b32.xlu0 %v8286, 32
          %v8514 = vpop.permute.xlu0 %8513
          %s8531 = smul.u32 %s1108, 256
          %s8532 = scalar_lea.vmem %s302, %s8531
          %8533 = vst.msk [vmem:[%s8532] sm:$0xff] %vm423, %v8484
          %8534 = vst.msk [vmem:[%s8532 + $0x8] sm:$0xff] %vm423, %v8486
          %8535 = vst.msk [vmem:[%s8532 + $0x10] sm:$0xff] %vm423, %v8488
          %8536 = vst.msk [vmem:[%s8532 + $0x18] sm:$0xff] %vm423, %v8490
          %8537 = vst.msk [vmem:[%s8532 + $0x20] sm:$0xff] %vm423, %v8492
          %8538 = vst.msk [vmem:[%s8532 + $0x28] sm:$0xff] %vm423, %v8494
          %8539 = vst.msk [vmem:[%s8532 + $0x30] sm:$0xff] %vm423, %v8496
          %8540 = vst.msk [vmem:[%s8532 + $0x38] sm:$0xff] %vm423, %v8498
          %8541 = vst.msk [vmem:[%s8532 + $0x40] sm:$0xff] %vm423, %v8500
          %8542 = vst.msk [vmem:[%s8532 + $0x48] sm:$0xff] %vm423, %v8502
          %8543 = vst.msk [vmem:[%s8532 + $0x50] sm:$0xff] %vm423, %v8504
          %8544 = vst.msk [vmem:[%s8532 + $0x58] sm:$0xff] %vm423, %v8506
          %8545 = vst.msk [vmem:[%s8532 + $0x60] sm:$0xff] %vm423, %v8508
          %8546 = vst.msk [vmem:[%s8532 + $0x68] sm:$0xff] %vm423, %v8510
          %8547 = vst.msk [vmem:[%s8532 + $0x70] sm:$0xff] %vm423, %v8512
          %8548 = vst.msk [vmem:[%s8532 + $0x78] sm:$0xff] %vm423, %v8514
        $region51: #{tpu_custom_call.1} parent=44 // pred_fallthru
          _
        %p8549 = scmp.eq.s32.totalorder %s1103, 1
        // Predicated region
        $region52: #{tpu_custom_call.1} parent=44 // pred_check
          %p8550 = pneg %p8549
        $region53: #{tpu_custom_call.1} parent=44 // pred_check_branch
          %8552 = sbr.rel (%p8550) target = $region55
        $region54: #{tpu_custom_call.1} parent=44 // pred_region
          %8569 = vrot.lane.b32.xlu0 %v8271, 32
          %v8570 = vpop.permute.xlu0 %8569
          %8571 = vrot.lane.b32.xlu0 %v8272, 32
          %v8572 = vpop.permute.xlu0 %8571
          %8573 = vrot.lane.b32.xlu0 %v8273, 32
          %v8574 = vpop.permute.xlu0 %8573
          %8575 = vrot.lane.b32.xlu0 %v8274, 32
          %v8576 = vpop.permute.xlu0 %8575
          %8577 = vrot.lane.b32.xlu0 %v8275, 32
          %v8578 = vpop.permute.xlu0 %8577
          %8579 = vrot.lane.b32.xlu0 %v8276, 32
          %v8580 = vpop.permute.xlu0 %8579
          %8581 = vrot.lane.b32.xlu0 %v8277, 32
          %v8582 = vpop.permute.xlu0 %8581
          %8583 = vrot.lane.b32.xlu0 %v8278, 32
          %v8584 = vpop.permute.xlu0 %8583
          %8585 = vrot.lane.b32.xlu0 %v8279, 32
          %v8586 = vpop.permute.xlu0 %8585
          %8587 = vrot.lane.b32.xlu0 %v8280, 32
          %v8588 = vpop.permute.xlu0 %8587
          %8589 = vrot.lane.b32.xlu0 %v8281, 32
          %v8590 = vpop.permute.xlu0 %8589
          %8591 = vrot.lane.b32.xlu0 %v8282, 32
          %v8592 = vpop.permute.xlu0 %8591
          %8593 = vrot.lane.b32.xlu0 %v8283, 32
          %v8594 = vpop.permute.xlu0 %8593
          %8595 = vrot.lane.b32.xlu0 %v8284, 32
          %v8596 = vpop.permute.xlu0 %8595
          %8597 = vrot.lane.b32.xlu0 %v8285, 32
          %v8598 = vpop.permute.xlu0 %8597
          %8599 = vrot.lane.b32.xlu0 %v8286, 32
          %v8600 = vpop.permute.xlu0 %8599
          %8617 = vst.msk [vmem:[%s307] sm:$0xff] %vm423, %v8570
          %8618 = vst.msk [vmem:[%s307 + $0x8] sm:$0xff] %vm423, %v8572
          %8619 = vst.msk [vmem:[%s307 + $0x10] sm:$0xff] %vm423, %v8574
          %8620 = vst.msk [vmem:[%s307 + $0x18] sm:$0xff] %vm423, %v8576
          %8621 = vst.msk [vmem:[%s307 + $0x20] sm:$0xff] %vm423, %v8578
          %8622 = vst.msk [vmem:[%s307 + $0x28] sm:$0xff] %vm423, %v8580
          %8623 = vst.msk [vmem:[%s307 + $0x30] sm:$0xff] %vm423, %v8582
          %8624 = vst.msk [vmem:[%s307 + $0x38] sm:$0xff] %vm423, %v8584
          %8625 = vst.msk [vmem:[%s307 + $0x40] sm:$0xff] %vm423, %v8586
          %8626 = vst.msk [vmem:[%s307 + $0x48] sm:$0xff] %vm423, %v8588
          %8627 = vst.msk [vmem:[%s307 + $0x50] sm:$0xff] %vm423, %v8590
          %8628 = vst.msk [vmem:[%s307 + $0x58] sm:$0xff] %vm423, %v8592
          %8629 = vst.msk [vmem:[%s307 + $0x60] sm:$0xff] %vm423, %v8594
          %8630 = vst.msk [vmem:[%s307 + $0x68] sm:$0xff] %vm423, %v8596
          %8631 = vst.msk [vmem:[%s307 + $0x70] sm:$0xff] %vm423, %v8598
          %8632 = vst.msk [vmem:[%s307 + $0x78] sm:$0xff] %vm423, %v8600
          %8633 = vst.msk [vmem:[%s312] sm:$0xff] %vm423, %v8304
          %8634 = vst.msk [vmem:[%s312 + $0x8] sm:$0xff] %vm423, %v8306
          %8635 = vst.msk [vmem:[%s312 + $0x10] sm:$0xff] %vm423, %v8308
          %8636 = vst.msk [vmem:[%s312 + $0x18] sm:$0xff] %vm423, %v8310
          %8637 = vst.msk [vmem:[%s312 + $0x20] sm:$0xff] %vm423, %v8312
          %8638 = vst.msk [vmem:[%s312 + $0x28] sm:$0xff] %vm423, %v8314
          %8639 = vst.msk [vmem:[%s312 + $0x30] sm:$0xff] %vm423, %v8316
          %8640 = vst.msk [vmem:[%s312 + $0x38] sm:$0xff] %vm423, %v8318
          %8641 = vst.msk [vmem:[%s312 + $0x40] sm:$0xff] %vm423, %v8320
          %8642 = vst.msk [vmem:[%s312 + $0x48] sm:$0xff] %vm423, %v8322
          %8643 = vst.msk [vmem:[%s312 + $0x50] sm:$0xff] %vm423, %v8324
          %8644 = vst.msk [vmem:[%s312 + $0x58] sm:$0xff] %vm423, %v8326
          %8645 = vst.msk [vmem:[%s312 + $0x60] sm:$0xff] %vm423, %v8328
          %8646 = vst.msk [vmem:[%s312 + $0x68] sm:$0xff] %vm423, %v8330
          %8647 = vst.msk [vmem:[%s312 + $0x70] sm:$0xff] %vm423, %v8332
          %8648 = vst.msk [vmem:[%s312 + $0x78] sm:$0xff] %vm423, %v8334
        $region55: #{tpu_custom_call.1} parent=44 // pred_fallthru
          _
        %v8649 = vld [vmem:[#allocation6 + $0x80] sm:$0xff]
        %v8650 = vld [vmem:[#allocation6 + $0x88] sm:$0xff]
        %v8651 = vld [vmem:[#allocation6 + $0x90] sm:$0xff]
        %v8652 = vld [vmem:[#allocation6 + $0x98] sm:$0xff]
        %v8653 = vld [vmem:[#allocation6 + $0xa0] sm:$0xff]
        %v8654 = vld [vmem:[#allocation6 + $0xa8] sm:$0xff]
        %v8655 = vld [vmem:[#allocation6 + $0xb0] sm:$0xff]
        %v8656 = vld [vmem:[#allocation6 + $0xb8] sm:$0xff]
        %v8657 = vld [vmem:[#allocation6 + $0xc0] sm:$0xff]
        %v8658 = vld [vmem:[#allocation6 + $0xc8] sm:$0xff]
        %v8659 = vld [vmem:[#allocation6 + $0xd0] sm:$0xff]
        %v8660 = vld [vmem:[#allocation6 + $0xd8] sm:$0xff]
        %v8661 = vld [vmem:[#allocation6 + $0xe0] sm:$0xff]
        %v8662 = vld [vmem:[#allocation6 + $0xe8] sm:$0xff]
        %v8663 = vld [vmem:[#allocation6 + $0xf0] sm:$0xff]
        %v8664 = vld [vmem:[#allocation6 + $0xf8] sm:$0xff]
        %v8665 = vld [vmem:[%s4] sm:$0xf]
        %v8666 = vld [vmem:[%s4 + $0x4] sm:$0xf]
        %v8667 = vld [vmem:[%s4 + $0x8] sm:$0xf]
        %v8668 = vld [vmem:[%s4 + $0xc] sm:$0xf]
        %v8669 = vld [vmem:[%s4 + $0x10] sm:$0xf]
        %v8670 = vld [vmem:[%s4 + $0x14] sm:$0xf]
        %v8671 = vld [vmem:[%s4 + $0x18] sm:$0xf]
        %v8672 = vld [vmem:[%s4 + $0x1c] sm:$0xf]
        %v8673 = vld [vmem:[%s4 + $0x20] sm:$0xf]
        %v8674 = vld [vmem:[%s4 + $0x24] sm:$0xf]
        %v8675 = vld [vmem:[%s4 + $0x28] sm:$0xf]
        %v8676 = vld [vmem:[%s4 + $0x2c] sm:$0xf]
        %v8677 = vld [vmem:[%s4 + $0x30] sm:$0xf]
        %v8678 = vld [vmem:[%s4 + $0x34] sm:$0xf]
        %v8679 = vld [vmem:[%s4 + $0x38] sm:$0xf]
        %v8680 = vld [vmem:[%s4 + $0x3c] sm:$0xf]
        %v8681 = vld [vmem:[%s4 + $0x40] sm:$0xf]
        %v8682 = vld [vmem:[%s4 + $0x44] sm:$0xf]
        %v8683 = vld [vmem:[%s4 + $0x48] sm:$0xf]
        %v8684 = vld [vmem:[%s4 + $0x4c] sm:$0xf]
        %v8685 = vld [vmem:[%s4 + $0x50] sm:$0xf]
        %v8686 = vld [vmem:[%s4 + $0x54] sm:$0xf]
        %v8687 = vld [vmem:[%s4 + $0x58] sm:$0xf]
        %v8688 = vld [vmem:[%s4 + $0x5c] sm:$0xf]
        %v8689 = vld [vmem:[%s4 + $0x60] sm:$0xf]
        %v8690 = vld [vmem:[%s4 + $0x64] sm:$0xf]
        %v8691 = vld [vmem:[%s4 + $0x68] sm:$0xf]
        %v8692 = vld [vmem:[%s4 + $0x6c] sm:$0xf]
        %v8693 = vld [vmem:[%s4 + $0x70] sm:$0xf]
        %v8694 = vld [vmem:[%s4 + $0x74] sm:$0xf]
        %v8695 = vld [vmem:[%s4 + $0x78] sm:$0xf]
        %v8696 = vld [vmem:[%s4 + $0x7c] sm:$0xf]
        %v8697 = vld [vmem:[#allocation6 + $0x100] sm:$0xff]
        %v8698 = vld [vmem:[#allocation6 + $0x108] sm:$0xff]
        %v8699 = vld [vmem:[%s6746] sm:$0xf]
        %v8700 = vld [vmem:[%s6746 + $0x4] sm:$0xf]
        %v8701 = vld [vmem:[%s6746 + $0x8] sm:$0xf]
        %v8702 = vld [vmem:[%s6746 + $0xc] sm:$0xf]
        %v8703 = vld [vmem:[%s6746 + $0x10] sm:$0xf]
        %v8704 = vld [vmem:[%s6746 + $0x14] sm:$0xf]
        %v8705 = vld [vmem:[%s6746 + $0x18] sm:$0xf]
        %v8706 = vld [vmem:[%s6746 + $0x1c] sm:$0xf]
        %v8707 = vld [vmem:[%s6746 + $0x20] sm:$0xf]
        %v8708 = vld [vmem:[%s6746 + $0x24] sm:$0xf]
        %v8709 = vld [vmem:[%s6746 + $0x28] sm:$0xf]
        %v8710 = vld [vmem:[%s6746 + $0x2c] sm:$0xf]
        %v8711 = vld [vmem:[%s6746 + $0x30] sm:$0xf]
        %v8712 = vld [vmem:[%s6746 + $0x34] sm:$0xf]
        %v8713 = vld [vmem:[%s6746 + $0x38] sm:$0xf]
        %v8714 = vld [vmem:[%s6746 + $0x3c] sm:$0xf]
        %v8715 = vld [vmem:[%s6746 + $0x40] sm:$0xf]
        %v8716 = vld [vmem:[%s6746 + $0x44] sm:$0xf]
        %v8717 = vld [vmem:[%s6746 + $0x48] sm:$0xf]
        %v8718 = vld [vmem:[%s6746 + $0x4c] sm:$0xf]
        %v8719 = vld [vmem:[%s6746 + $0x50] sm:$0xf]
        %v8720 = vld [vmem:[%s6746 + $0x54] sm:$0xf]
        %v8721 = vld [vmem:[%s6746 + $0x58] sm:$0xf]
        %v8722 = vld [vmem:[%s6746 + $0x5c] sm:$0xf]
        %v8723 = vld [vmem:[%s6746 + $0x60] sm:$0xf]
        %v8724 = vld [vmem:[%s6746 + $0x64] sm:$0xf]
        %v8725 = vld [vmem:[%s6746 + $0x68] sm:$0xf]
        %v8726 = vld [vmem:[%s6746 + $0x6c] sm:$0xf]
        %v8727 = vld [vmem:[%s6746 + $0x70] sm:$0xf]
        %v8728 = vld [vmem:[%s6746 + $0x74] sm:$0xf]
        %v8729 = vld [vmem:[%s6746 + $0x78] sm:$0xf]
        %v8730 = vld [vmem:[%s6746 + $0x7c] sm:$0xf]
        %v8747 = vunpack.c.l.b16 %v8651
        %v8748 = vunpack.c.h.b16 %v8651
        %v8749 = vunpack.c.l.b16 %v8652
        %v8750 = vunpack.c.h.b16 %v8652
        %v8751 = vunpack.c.l.b16 %v8653
        %v8752 = vunpack.c.h.b16 %v8653
        %v8753 = vunpack.c.l.b16 %v8654
        %v8754 = vunpack.c.h.b16 %v8654
        %v8755 = vunpack.c.l.b16 %v8655
        %v8756 = vunpack.c.h.b16 %v8655
        %v8757 = vunpack.c.l.b16 %v8656
        %v8758 = vunpack.c.h.b16 %v8656
        %v8759 = vunpack.c.l.b16 %v8657
        %v8760 = vunpack.c.h.b16 %v8657
        %v8761 = vunpack.c.l.b16 %v8658
        %v8762 = vunpack.c.h.b16 %v8658
        %v8763 = vunpack.c.l.b16 %v8659
        %v8764 = vunpack.c.h.b16 %v8659
        %v8765 = vunpack.c.l.b16 %v8660
        %v8766 = vunpack.c.h.b16 %v8660
        %v8767 = vunpack.c.l.b16 %v8661
        %v8768 = vunpack.c.h.b16 %v8661
        %v8769 = vunpack.c.l.b16 %v8662
        %v8770 = vunpack.c.h.b16 %v8662
        %v8771 = vunpack.c.l.b16 %v8663
        %v8772 = vunpack.c.h.b16 %v8663
        %v8773 = vunpack.c.l.b16 %v8664
        %v8774 = vunpack.c.h.b16 %v8664
        %v8775 = vunpack.c.l.b16 %v8697
        %v8776 = vunpack.c.h.b16 %v8697
        %v8777 = vunpack.c.l.b16 %v8698
        %v8778 = vunpack.c.h.b16 %v8698
        %v8779 = vpack.c.b16 %v8749, %v8747
        %v8780 = vpack.c.b16 %v8750, %v8748
        %v8781 = vpack.c.b16 %v8753, %v8751
        %v8782 = vpack.c.b16 %v8754, %v8752
        %v8783 = vpack.c.b16 %v8757, %v8755
        %v8784 = vpack.c.b16 %v8758, %v8756
        %v8785 = vpack.c.b16 %v8761, %v8759
        %v8786 = vpack.c.b16 %v8762, %v8760
        %v8787 = vpack.c.b16 %v8765, %v8763
        %v8788 = vpack.c.b16 %v8766, %v8764
        %v8789 = vpack.c.b16 %v8769, %v8767
        %v8790 = vpack.c.b16 %v8770, %v8768
        %v8791 = vpack.c.b16 %v8773, %v8771
        %v8792 = vpack.c.b16 %v8774, %v8772
        %v8793 = vpack.c.b16 %v8777, %v8775
        %v8794 = vpack.c.b16 %v8778, %v8776
        %v8843 = vunpack.c.l.b16 %v8699
        %v8844 = vunpack.c.l.b16 %v8700
        %v8845 = vunpack.c.l.b16 %v8701
        %v8846 = vunpack.c.l.b16 %v8702
        %v8847 = vunpack.c.l.b16 %v8703
        %v8848 = vunpack.c.l.b16 %v8704
        %v8849 = vunpack.c.l.b16 %v8705
        %v8850 = vunpack.c.l.b16 %v8706
        %v8851 = vunpack.c.l.b16 %v8707
        %v8852 = vunpack.c.l.b16 %v8708
        %v8853 = vunpack.c.l.b16 %v8709
        %v8854 = vunpack.c.l.b16 %v8710
        %v8855 = vunpack.c.l.b16 %v8711
        %v8856 = vunpack.c.l.b16 %v8712
        %v8857 = vunpack.c.l.b16 %v8713
        %v8858 = vunpack.c.l.b16 %v8714
        %v8859 = vunpack.c.l.b16 %v8715
        %v8860 = vunpack.c.l.b16 %v8716
        %v8861 = vunpack.c.l.b16 %v8717
        %v8862 = vunpack.c.l.b16 %v8718
        %v8863 = vunpack.c.l.b16 %v8719
        %v8864 = vunpack.c.l.b16 %v8720
        %v8865 = vunpack.c.l.b16 %v8721
        %v8866 = vunpack.c.l.b16 %v8722
        %v8867 = vunpack.c.l.b16 %v8723
        %v8868 = vunpack.c.l.b16 %v8724
        %v8869 = vunpack.c.l.b16 %v8725
        %v8870 = vunpack.c.l.b16 %v8726
        %v8871 = vunpack.c.l.b16 %v8727
        %v8872 = vunpack.c.l.b16 %v8728
        %v8873 = vunpack.c.l.b16 %v8729
        %v8874 = vunpack.c.l.b16 %v8730
        %v8875 = vpack.c.b16 %v8844, %v8843
        %v8876 = vpack.c.b16 %v8846, %v8845
        %v8877 = vpack.c.b16 %v8848, %v8847
        %v8878 = vpack.c.b16 %v8850, %v8849
        %v8879 = vpack.c.b16 %v8852, %v8851
        %v8880 = vpack.c.b16 %v8854, %v8853
        %v8881 = vpack.c.b16 %v8856, %v8855
        %v8882 = vpack.c.b16 %v8858, %v8857
        %v8883 = vpack.c.b16 %v8860, %v8859
        %v8884 = vpack.c.b16 %v8862, %v8861
        %v8885 = vpack.c.b16 %v8864, %v8863
        %v8886 = vpack.c.b16 %v8866, %v8865
        %v8887 = vpack.c.b16 %v8868, %v8867
        %v8888 = vpack.c.b16 %v8870, %v8869
        %v8889 = vpack.c.b16 %v8872, %v8871
        %v8890 = vpack.c.b16 %v8874, %v8873
        %8907 = vmatpush.bf16.msra.mxu0 %v8882
        %8908 = vmatpush.bf16.msra.mxu0 %v8881
        %8909 = vmatpush.bf16.msra.mxu0 %v8880
        %8910 = vmatpush.bf16.msra.mxu0 %v8879
        %8911 = vmatpush.bf16.msra.mxu0 %v8878
        %8912 = vmatpush.bf16.msra.mxu0 %v8877
        %8913 = vmatpush.bf16.msra.mxu0 %v8876
        %8914 = vmatpush.bf16.msra.mxu0 %v8875
        %8915 = vmatmul.bf16.gmra.mxu0 %v8779
        %v8916 = vpop.f32.mrf.mxu0
        %v8917 = vadd.f32 0.0, %v8916
        %v8918 = vpop.f32.mrf.mxu0
        %v8919 = vadd.f32 0.0, %v8918
        %8920 = vmatmul.bf16.gmra.mxu0 %v8781
        %v8921 = vpop.f32.mrf.mxu0
        %v8922 = vadd.f32 0.0, %v8921
        %v8923 = vpop.f32.mrf.mxu0
        %v8924 = vadd.f32 0.0, %v8923
        %8925 = vmatmul.bf16.gmra.mxu0 %v8783
        %v8926 = vpop.f32.mrf.mxu0
        %v8927 = vadd.f32 0.0, %v8926
        %v8928 = vpop.f32.mrf.mxu0
        %v8929 = vadd.f32 0.0, %v8928
        %8930 = vmatmul.bf16.gmra.mxu0 %v8785
        %v8931 = vpop.f32.mrf.mxu0
        %v8932 = vadd.f32 0.0, %v8931
        %v8933 = vpop.f32.mrf.mxu0
        %v8934 = vadd.f32 0.0, %v8933
        %8935 = vmatmul.bf16.gmra.mxu0 %v8787
        %v8936 = vpop.f32.mrf.mxu0
        %v8937 = vadd.f32 0.0, %v8936
        %v8938 = vpop.f32.mrf.mxu0
        %v8939 = vadd.f32 0.0, %v8938
        %8940 = vmatmul.bf16.gmra.mxu0 %v8789
        %v8941 = vpop.f32.mrf.mxu0
        %v8942 = vadd.f32 0.0, %v8941
        %v8943 = vpop.f32.mrf.mxu0
        %v8944 = vadd.f32 0.0, %v8943
        %8945 = vmatmul.bf16.gmra.mxu0 %v8791
        %v8946 = vpop.f32.mrf.mxu0
        %v8947 = vadd.f32 0.0, %v8946
        %v8948 = vpop.f32.mrf.mxu0
        %v8949 = vadd.f32 0.0, %v8948
        %8950 = vmatmul.bf16.gmra.mxu0 %v8793
        %v8951 = vpop.f32.mrf.mxu0
        %v8952 = vadd.f32 0.0, %v8951
        %v8953 = vpop.f32.mrf.mxu0
        %v8954 = vadd.f32 0.0, %v8953
        %8955 = vdwg.mxu0
        %8956 = vmatpush.bf16.msra.mxu0 %v8890
        %8957 = vmatpush.bf16.msra.mxu0 %v8889
        %8958 = vmatpush.bf16.msra.mxu0 %v8888
        %8959 = vmatpush.bf16.msra.mxu0 %v8887
        %8960 = vmatpush.bf16.msra.mxu0 %v8886
        %8961 = vmatpush.bf16.msra.mxu0 %v8885
        %8962 = vmatpush.bf16.msra.mxu0 %v8884
        %8963 = vmatpush.bf16.msra.mxu0 %v8883
        %8964 = vmatmul.bf16.gmra.mxu0 %v8780
        %v8965 = vpop.f32.mrf.mxu0
        %v8966 = vadd.f32 %v8917, %v8965
        %v8967 = vpop.f32.mrf.mxu0
        %v8968 = vadd.f32 %v8919, %v8967
        %8969 = vmatmul.bf16.gmra.mxu0 %v8782
        %v8970 = vpop.f32.mrf.mxu0
        %v8971 = vadd.f32 %v8922, %v8970
        %v8972 = vpop.f32.mrf.mxu0
        %v8973 = vadd.f32 %v8924, %v8972
        %8974 = vmatmul.bf16.gmra.mxu0 %v8784
        %v8975 = vpop.f32.mrf.mxu0
        %v8976 = vadd.f32 %v8927, %v8975
        %v8977 = vpop.f32.mrf.mxu0
        %v8978 = vadd.f32 %v8929, %v8977
        %8979 = vmatmul.bf16.gmra.mxu0 %v8786
        %v8980 = vpop.f32.mrf.mxu0
        %v8981 = vadd.f32 %v8932, %v8980
        %v8982 = vpop.f32.mrf.mxu0
        %v8983 = vadd.f32 %v8934, %v8982
        %8984 = vmatmul.bf16.gmra.mxu0 %v8788
        %v8985 = vpop.f32.mrf.mxu0
        %v8986 = vadd.f32 %v8937, %v8985
        %v8987 = vpop.f32.mrf.mxu0
        %v8988 = vadd.f32 %v8939, %v8987
        %8989 = vmatmul.bf16.gmra.mxu0 %v8790
        %v8990 = vpop.f32.mrf.mxu0
        %v8991 = vadd.f32 %v8942, %v8990
        %v8992 = vpop.f32.mrf.mxu0
        %v8993 = vadd.f32 %v8944, %v8992
        %8994 = vmatmul.bf16.gmra.mxu0 %v8792
        %v8995 = vpop.f32.mrf.mxu0
        %v8996 = vadd.f32 %v8947, %v8995
        %v8997 = vpop.f32.mrf.mxu0
        %v8998 = vadd.f32 %v8949, %v8997
        %8999 = vmatmul.bf16.gmra.mxu0 %v8794
        %v9000 = vpop.f32.mrf.mxu0
        %v9001 = vadd.f32 %v8952, %v9000
        %v9002 = vpop.f32.mrf.mxu0
        %v9003 = vadd.f32 %v8954, %v9002
        %9004 = vdwg.mxu0
        %v9007 = vunpack.c.l.b16 %v8649
        %v9008 = vunpack.c.h.b16 %v8649
        %v9009 = vunpack.c.l.b16 %v8650
        %v9010 = vunpack.c.h.b16 %v8650
        %v9011 = vpack.c.b16 %v9009, %v9007
        %v9012 = vpack.c.b16 %v9010, %v9008
        %v9047 = vunpack.c.l.b16 %v8665
        %v9048 = vunpack.c.l.b16 %v8666
        %v9049 = vunpack.c.l.b16 %v8667
        %v9050 = vunpack.c.l.b16 %v8668
        %v9051 = vunpack.c.l.b16 %v8669
        %v9052 = vunpack.c.l.b16 %v8670
        %v9053 = vunpack.c.l.b16 %v8671
        %v9054 = vunpack.c.l.b16 %v8672
        %v9055 = vunpack.c.l.b16 %v8673
        %v9056 = vunpack.c.l.b16 %v8674
        %v9057 = vunpack.c.l.b16 %v8675
        %v9058 = vunpack.c.l.b16 %v8676
        %v9059 = vunpack.c.l.b16 %v8677
        %v9060 = vunpack.c.l.b16 %v8678
        %v9061 = vunpack.c.l.b16 %v8679
        %v9062 = vunpack.c.l.b16 %v8680
        %v9063 = vunpack.c.l.b16 %v8681
        %v9064 = vunpack.c.l.b16 %v8682
        %v9065 = vunpack.c.l.b16 %v8683
        %v9066 = vunpack.c.l.b16 %v8684
        %v9067 = vunpack.c.l.b16 %v8685
        %v9068 = vunpack.c.l.b16 %v8686
        %v9069 = vunpack.c.l.b16 %v8687
        %v9070 = vunpack.c.l.b16 %v8688
        %v9071 = vunpack.c.l.b16 %v8689
        %v9072 = vunpack.c.l.b16 %v8690
        %v9073 = vunpack.c.l.b16 %v8691
        %v9074 = vunpack.c.l.b16 %v8692
        %v9075 = vunpack.c.l.b16 %v8693
        %v9076 = vunpack.c.l.b16 %v8694
        %v9077 = vunpack.c.l.b16 %v8695
        %v9078 = vunpack.c.l.b16 %v8696
        %v9079 = vpack.c.b16 %v9048, %v9047
        %v9080 = vpack.c.b16 %v9050, %v9049
        %v9081 = vpack.c.b16 %v9052, %v9051
        %v9082 = vpack.c.b16 %v9054, %v9053
        %v9083 = vpack.c.b16 %v9056, %v9055
        %v9084 = vpack.c.b16 %v9058, %v9057
        %v9085 = vpack.c.b16 %v9060, %v9059
        %v9086 = vpack.c.b16 %v9062, %v9061
        %v9087 = vpack.c.b16 %v9064, %v9063
        %v9088 = vpack.c.b16 %v9066, %v9065
        %v9089 = vpack.c.b16 %v9068, %v9067
        %v9090 = vpack.c.b16 %v9070, %v9069
        %v9091 = vpack.c.b16 %v9072, %v9071
        %v9092 = vpack.c.b16 %v9074, %v9073
        %v9093 = vpack.c.b16 %v9076, %v9075
        %v9094 = vpack.c.b16 %v9078, %v9077
        %9111 = vmatpush.bf16.msra.mxu0 %v9086
        %9112 = vmatpush.bf16.msra.mxu0 %v9085
        %9113 = vmatpush.bf16.msra.mxu0 %v9084
        %9114 = vmatpush.bf16.msra.mxu0 %v9083
        %9115 = vmatpush.bf16.msra.mxu0 %v9082
        %9116 = vmatpush.bf16.msra.mxu0 %v9081
        %9117 = vmatpush.bf16.msra.mxu0 %v9080
        %9118 = vmatpush.bf16.msra.mxu0 %v9079
        %9119 = vmatmul.bf16.gmra.mxu0 %v9011
        %v9120 = vpop.f32.mrf.mxu0
        %v9121 = vadd.f32 %v8966, %v9120
        %v9122 = vpop.f32.mrf.mxu0
        %v9123 = vadd.f32 %v8968, %v9122
        %9124 = vmatmul.bf16.gmra.mxu0 %v8779
        %v9125 = vpop.f32.mrf.mxu0
        %v9126 = vadd.f32 %v8971, %v9125
        %v9127 = vpop.f32.mrf.mxu0
        %v9128 = vadd.f32 %v8973, %v9127
        %9129 = vmatmul.bf16.gmra.mxu0 %v8781
        %v9130 = vpop.f32.mrf.mxu0
        %v9131 = vadd.f32 %v8976, %v9130
        %v9132 = vpop.f32.mrf.mxu0
        %v9133 = vadd.f32 %v8978, %v9132
        %9134 = vmatmul.bf16.gmra.mxu0 %v8783
        %v9135 = vpop.f32.mrf.mxu0
        %v9136 = vadd.f32 %v8981, %v9135
        %v9137 = vpop.f32.mrf.mxu0
        %v9138 = vadd.f32 %v8983, %v9137
        %9139 = vmatmul.bf16.gmra.mxu0 %v8785
        %v9140 = vpop.f32.mrf.mxu0
        %v9141 = vadd.f32 %v8986, %v9140
        %v9142 = vpop.f32.mrf.mxu0
        %v9143 = vadd.f32 %v8988, %v9142
        %9144 = vmatmul.bf16.gmra.mxu0 %v8787
        %v9145 = vpop.f32.mrf.mxu0
        %v9146 = vadd.f32 %v8991, %v9145
        %v9147 = vpop.f32.mrf.mxu0
        %v9148 = vadd.f32 %v8993, %v9147
        %9149 = vmatmul.bf16.gmra.mxu0 %v8789
        %v9150 = vpop.f32.mrf.mxu0
        %v9151 = vadd.f32 %v8996, %v9150
        %v9152 = vpop.f32.mrf.mxu0
        %v9153 = vadd.f32 %v8998, %v9152
        %9154 = vmatmul.bf16.gmra.mxu0 %v8791
        %v9155 = vpop.f32.mrf.mxu0
        %v9156 = vadd.f32 %v9001, %v9155
        %v9157 = vpop.f32.mrf.mxu0
        %v9158 = vadd.f32 %v9003, %v9157
        %9159 = vdwg.mxu0
        %9160 = vmatpush.bf16.msra.mxu0 %v9094
        %9161 = vmatpush.bf16.msra.mxu0 %v9093
        %9162 = vmatpush.bf16.msra.mxu0 %v9092
        %9163 = vmatpush.bf16.msra.mxu0 %v9091
        %9164 = vmatpush.bf16.msra.mxu0 %v9090
        %9165 = vmatpush.bf16.msra.mxu0 %v9089
        %9166 = vmatpush.bf16.msra.mxu0 %v9088
        %9167 = vmatpush.bf16.msra.mxu0 %v9087
        %9168 = vmatmul.bf16.gmra.mxu0 %v9012
        %v9169 = vpop.f32.mrf.mxu0
        %v9170 = vadd.f32 %v9121, %v9169
        %v9171 = vpop.f32.mrf.mxu0
        %v9172 = vadd.f32 %v9123, %v9171
        %9173 = vmatmul.bf16.gmra.mxu0 %v8780
        %v9174 = vpop.f32.mrf.mxu0
        %v9175 = vadd.f32 %v9126, %v9174
        %v9176 = vpop.f32.mrf.mxu0
        %v9177 = vadd.f32 %v9128, %v9176
        %9178 = vmatmul.bf16.gmra.mxu0 %v8782
        %v9179 = vpop.f32.mrf.mxu0
        %v9180 = vadd.f32 %v9131, %v9179
        %v9181 = vpop.f32.mrf.mxu0
        %v9182 = vadd.f32 %v9133, %v9181
        %9183 = vmatmul.bf16.gmra.mxu0 %v8784
        %v9184 = vpop.f32.mrf.mxu0
        %v9185 = vadd.f32 %v9136, %v9184
        %v9186 = vpop.f32.mrf.mxu0
        %v9187 = vadd.f32 %v9138, %v9186
        %9188 = vmatmul.bf16.gmra.mxu0 %v8786
        %v9189 = vpop.f32.mrf.mxu0
        %v9190 = vadd.f32 %v9141, %v9189
        %v9191 = vpop.f32.mrf.mxu0
        %v9192 = vadd.f32 %v9143, %v9191
        %9193 = vmatmul.bf16.gmra.mxu0 %v8788
        %v9194 = vpop.f32.mrf.mxu0
        %v9195 = vadd.f32 %v9146, %v9194
        %v9196 = vpop.f32.mrf.mxu0
        %v9197 = vadd.f32 %v9148, %v9196
        %9198 = vmatmul.bf16.gmra.mxu0 %v8790
        %v9199 = vpop.f32.mrf.mxu0
        %v9200 = vadd.f32 %v9151, %v9199
        %v9201 = vpop.f32.mrf.mxu0
        %v9202 = vadd.f32 %v9153, %v9201
        %9203 = vmatmul.bf16.gmra.mxu0 %v8792
        %v9204 = vpop.f32.mrf.mxu0
        %v9205 = vadd.f32 %v9156, %v9204
        %v9206 = vpop.f32.mrf.mxu0
        %v9207 = vadd.f32 %v9158, %v9206
        %9208 = vdwg.mxu0
        %v9209 = vld [vmem:[#allocation6 + $0xa0] sm:$0xff]
        %v9210 = vld [vmem:[#allocation6 + $0xa8] sm:$0xff]
        %v9211 = vld [vmem:[#allocation6 + $0xb0] sm:$0xff]
        %v9212 = vld [vmem:[#allocation6 + $0xb8] sm:$0xff]
        %v9213 = vld [vmem:[#allocation6 + $0xc0] sm:$0xff]
        %v9214 = vld [vmem:[#allocation6 + $0xc8] sm:$0xff]
        %v9215 = vld [vmem:[#allocation6 + $0xd0] sm:$0xff]
        %v9216 = vld [vmem:[#allocation6 + $0xd8] sm:$0xff]
        %v9217 = vld [vmem:[#allocation6 + $0xe0] sm:$0xff]
        %v9218 = vld [vmem:[#allocation6 + $0xe8] sm:$0xff]
        %v9219 = vld [vmem:[#allocation6 + $0xf0] sm:$0xff]
        %v9220 = vld [vmem:[#allocation6 + $0xf8] sm:$0xff]
        %v9221 = vld [vmem:[#allocation6 + $0x100] sm:$0xff]
        %v9222 = vld [vmem:[#allocation6 + $0x108] sm:$0xff]
        %v9223 = vld [vmem:[#allocation6 + $0x110] sm:$0xff]
        %v9224 = vld [vmem:[#allocation6 + $0x118] sm:$0xff]
        %v9225 = vld [vmem:[%s7273] sm:$0xf]
        %v9226 = vld [vmem:[%s7273 + $0x4] sm:$0xf]
        %v9227 = vld [vmem:[%s7273 + $0x8] sm:$0xf]
        %v9228 = vld [vmem:[%s7273 + $0xc] sm:$0xf]
        %v9229 = vld [vmem:[%s7273 + $0x10] sm:$0xf]
        %v9230 = vld [vmem:[%s7273 + $0x14] sm:$0xf]
        %v9231 = vld [vmem:[%s7273 + $0x18] sm:$0xf]
        %v9232 = vld [vmem:[%s7273 + $0x1c] sm:$0xf]
        %v9233 = vld [vmem:[%s7273 + $0x20] sm:$0xf]
        %v9234 = vld [vmem:[%s7273 + $0x24] sm:$0xf]
        %v9235 = vld [vmem:[%s7273 + $0x28] sm:$0xf]
        %v9236 = vld [vmem:[%s7273 + $0x2c] sm:$0xf]
        %v9237 = vld [vmem:[%s7273 + $0x30] sm:$0xf]
        %v9238 = vld [vmem:[%s7273 + $0x34] sm:$0xf]
        %v9239 = vld [vmem:[%s7273 + $0x38] sm:$0xf]
        %v9240 = vld [vmem:[%s7273 + $0x3c] sm:$0xf]
        %v9241 = vld [vmem:[%s7273 + $0x40] sm:$0xf]
        %v9242 = vld [vmem:[%s7273 + $0x44] sm:$0xf]
        %v9243 = vld [vmem:[%s7273 + $0x48] sm:$0xf]
        %v9244 = vld [vmem:[%s7273 + $0x4c] sm:$0xf]
        %v9245 = vld [vmem:[%s7273 + $0x50] sm:$0xf]
        %v9246 = vld [vmem:[%s7273 + $0x54] sm:$0xf]
        %v9247 = vld [vmem:[%s7273 + $0x58] sm:$0xf]
        %v9248 = vld [vmem:[%s7273 + $0x5c] sm:$0xf]
        %v9249 = vld [vmem:[%s7273 + $0x60] sm:$0xf]
        %v9250 = vld [vmem:[%s7273 + $0x64] sm:$0xf]
        %v9251 = vld [vmem:[%s7273 + $0x68] sm:$0xf]
        %v9252 = vld [vmem:[%s7273 + $0x6c] sm:$0xf]
        %v9253 = vld [vmem:[%s7273 + $0x70] sm:$0xf]
        %v9254 = vld [vmem:[%s7273 + $0x74] sm:$0xf]
        %v9255 = vld [vmem:[%s7273 + $0x78] sm:$0xf]
        %v9256 = vld [vmem:[%s7273 + $0x7c] sm:$0xf]
        %v9273 = vunpack.c.l.b16 %v9209
        %v9274 = vunpack.c.h.b16 %v9209
        %v9275 = vunpack.c.l.b16 %v9210
        %v9276 = vunpack.c.h.b16 %v9210
        %v9277 = vunpack.c.l.b16 %v9211
        %v9278 = vunpack.c.h.b16 %v9211
        %v9279 = vunpack.c.l.b16 %v9212
        %v9280 = vunpack.c.h.b16 %v9212
        %v9281 = vunpack.c.l.b16 %v9213
        %v9282 = vunpack.c.h.b16 %v9213
        %v9283 = vunpack.c.l.b16 %v9214
        %v9284 = vunpack.c.h.b16 %v9214
        %v9285 = vunpack.c.l.b16 %v9215
        %v9286 = vunpack.c.h.b16 %v9215
        %v9287 = vunpack.c.l.b16 %v9216
        %v9288 = vunpack.c.h.b16 %v9216
        %v9289 = vunpack.c.l.b16 %v9217
        %v9290 = vunpack.c.h.b16 %v9217
        %v9291 = vunpack.c.l.b16 %v9218
        %v9292 = vunpack.c.h.b16 %v9218
        %v9293 = vunpack.c.l.b16 %v9219
        %v9294 = vunpack.c.h.b16 %v9219
        %v9295 = vunpack.c.l.b16 %v9220
        %v9296 = vunpack.c.h.b16 %v9220
        %v9297 = vunpack.c.l.b16 %v9221
        %v9298 = vunpack.c.h.b16 %v9221
        %v9299 = vunpack.c.l.b16 %v9222
        %v9300 = vunpack.c.h.b16 %v9222
        %v9301 = vunpack.c.l.b16 %v9223
        %v9302 = vunpack.c.h.b16 %v9223
        %v9303 = vunpack.c.l.b16 %v9224
        %v9304 = vunpack.c.h.b16 %v9224
        %v9305 = vpack.c.b16 %v9275, %v9273
        %v9306 = vpack.c.b16 %v9276, %v9274
        %v9307 = vpack.c.b16 %v9279, %v9277
        %v9308 = vpack.c.b16 %v9280, %v9278
        %v9309 = vpack.c.b16 %v9283, %v9281
        %v9310 = vpack.c.b16 %v9284, %v9282
        %v9311 = vpack.c.b16 %v9287, %v9285
        %v9312 = vpack.c.b16 %v9288, %v9286
        %v9313 = vpack.c.b16 %v9291, %v9289
        %v9314 = vpack.c.b16 %v9292, %v9290
        %v9315 = vpack.c.b16 %v9295, %v9293
        %v9316 = vpack.c.b16 %v9296, %v9294
        %v9317 = vpack.c.b16 %v9299, %v9297
        %v9318 = vpack.c.b16 %v9300, %v9298
        %v9319 = vpack.c.b16 %v9303, %v9301
        %v9320 = vpack.c.b16 %v9304, %v9302
        %v9369 = vunpack.c.l.b16 %v9225
        %v9370 = vunpack.c.l.b16 %v9226
        %v9371 = vunpack.c.l.b16 %v9227
        %v9372 = vunpack.c.l.b16 %v9228
        %v9373 = vunpack.c.l.b16 %v9229
        %v9374 = vunpack.c.l.b16 %v9230
        %v9375 = vunpack.c.l.b16 %v9231
        %v9376 = vunpack.c.l.b16 %v9232
        %v9377 = vunpack.c.l.b16 %v9233
        %v9378 = vunpack.c.l.b16 %v9234
        %v9379 = vunpack.c.l.b16 %v9235
        %v9380 = vunpack.c.l.b16 %v9236
        %v9381 = vunpack.c.l.b16 %v9237
        %v9382 = vunpack.c.l.b16 %v9238
        %v9383 = vunpack.c.l.b16 %v9239
        %v9384 = vunpack.c.l.b16 %v9240
        %v9385 = vunpack.c.l.b16 %v9241
        %v9386 = vunpack.c.l.b16 %v9242
        %v9387 = vunpack.c.l.b16 %v9243
        %v9388 = vunpack.c.l.b16 %v9244
        %v9389 = vunpack.c.l.b16 %v9245
        %v9390 = vunpack.c.l.b16 %v9246
        %v9391 = vunpack.c.l.b16 %v9247
        %v9392 = vunpack.c.l.b16 %v9248
        %v9393 = vunpack.c.l.b16 %v9249
        %v9394 = vunpack.c.l.b16 %v9250
        %v9395 = vunpack.c.l.b16 %v9251
        %v9396 = vunpack.c.l.b16 %v9252
        %v9397 = vunpack.c.l.b16 %v9253
        %v9398 = vunpack.c.l.b16 %v9254
        %v9399 = vunpack.c.l.b16 %v9255
        %v9400 = vunpack.c.l.b16 %v9256
        %v9401 = vpack.c.b16 %v9370, %v9369
        %v9402 = vpack.c.b16 %v9372, %v9371
        %v9403 = vpack.c.b16 %v9374, %v9373
        %v9404 = vpack.c.b16 %v9376, %v9375
        %v9405 = vpack.c.b16 %v9378, %v9377
        %v9406 = vpack.c.b16 %v9380, %v9379
        %v9407 = vpack.c.b16 %v9382, %v9381
        %v9408 = vpack.c.b16 %v9384, %v9383
        %v9409 = vpack.c.b16 %v9386, %v9385
        %v9410 = vpack.c.b16 %v9388, %v9387
        %v9411 = vpack.c.b16 %v9390, %v9389
        %v9412 = vpack.c.b16 %v9392, %v9391
        %v9413 = vpack.c.b16 %v9394, %v9393
        %v9414 = vpack.c.b16 %v9396, %v9395
        %v9415 = vpack.c.b16 %v9398, %v9397
        %v9416 = vpack.c.b16 %v9400, %v9399
        %9433 = vmatpush.bf16.msra.mxu0 %v9408
        %9434 = vmatpush.bf16.msra.mxu0 %v9407
        %9435 = vmatpush.bf16.msra.mxu0 %v9406
        %9436 = vmatpush.bf16.msra.mxu0 %v9405
        %9437 = vmatpush.bf16.msra.mxu0 %v9404
        %9438 = vmatpush.bf16.msra.mxu0 %v9403
        %9439 = vmatpush.bf16.msra.mxu0 %v9402
        %9440 = vmatpush.bf16.msra.mxu0 %v9401
        %9441 = vmatmul.bf16.gmra.mxu0 %v9305
        %v9442 = vpop.f32.mrf.mxu0
        %v9443 = vadd.f32 0.0, %v9442
        %v9444 = vpop.f32.mrf.mxu0
        %v9445 = vadd.f32 0.0, %v9444
        %9446 = vmatmul.bf16.gmra.mxu0 %v9307
        %v9447 = vpop.f32.mrf.mxu0
        %v9448 = vadd.f32 0.0, %v9447
        %v9449 = vpop.f32.mrf.mxu0
        %v9450 = vadd.f32 0.0, %v9449
        %9451 = vmatmul.bf16.gmra.mxu0 %v9309
        %v9452 = vpop.f32.mrf.mxu0
        %v9453 = vadd.f32 0.0, %v9452
        %v9454 = vpop.f32.mrf.mxu0
        %v9455 = vadd.f32 0.0, %v9454
        %9456 = vmatmul.bf16.gmra.mxu0 %v9311
        %v9457 = vpop.f32.mrf.mxu0
        %v9458 = vadd.f32 0.0, %v9457
        %v9459 = vpop.f32.mrf.mxu0
        %v9460 = vadd.f32 0.0, %v9459
        %9461 = vmatmul.bf16.gmra.mxu0 %v9313
        %v9462 = vpop.f32.mrf.mxu0
        %v9463 = vadd.f32 0.0, %v9462
        %v9464 = vpop.f32.mrf.mxu0
        %v9465 = vadd.f32 0.0, %v9464
        %9466 = vmatmul.bf16.gmra.mxu0 %v9315
        %v9467 = vpop.f32.mrf.mxu0
        %v9468 = vadd.f32 0.0, %v9467
        %v9469 = vpop.f32.mrf.mxu0
        %v9470 = vadd.f32 0.0, %v9469
        %9471 = vmatmul.bf16.gmra.mxu0 %v9317
        %v9472 = vpop.f32.mrf.mxu0
        %v9473 = vadd.f32 0.0, %v9472
        %v9474 = vpop.f32.mrf.mxu0
        %v9475 = vadd.f32 0.0, %v9474
        %9476 = vmatmul.bf16.gmra.mxu0 %v9319
        %v9477 = vpop.f32.mrf.mxu0
        %v9478 = vadd.f32 0.0, %v9477
        %v9479 = vpop.f32.mrf.mxu0
        %v9480 = vadd.f32 0.0, %v9479
        %9481 = vdwg.mxu0
        %9482 = vmatpush.bf16.msra.mxu0 %v9416
        %9483 = vmatpush.bf16.msra.mxu0 %v9415
        %9484 = vmatpush.bf16.msra.mxu0 %v9414
        %9485 = vmatpush.bf16.msra.mxu0 %v9413
        %9486 = vmatpush.bf16.msra.mxu0 %v9412
        %9487 = vmatpush.bf16.msra.mxu0 %v9411
        %9488 = vmatpush.bf16.msra.mxu0 %v9410
        %9489 = vmatpush.bf16.msra.mxu0 %v9409
        %9490 = vmatmul.bf16.gmra.mxu0 %v9306
        %v9491 = vpop.f32.mrf.mxu0
        %v9492 = vadd.f32 %v9443, %v9491
        %v9493 = vpop.f32.mrf.mxu0
        %v9494 = vadd.f32 %v9445, %v9493
        %9495 = vmatmul.bf16.gmra.mxu0 %v9308
        %v9496 = vpop.f32.mrf.mxu0
        %v9497 = vadd.f32 %v9448, %v9496
        %v9498 = vpop.f32.mrf.mxu0
        %v9499 = vadd.f32 %v9450, %v9498
        %9500 = vmatmul.bf16.gmra.mxu0 %v9310
        %v9501 = vpop.f32.mrf.mxu0
        %v9502 = vadd.f32 %v9453, %v9501
        %v9503 = vpop.f32.mrf.mxu0
        %v9504 = vadd.f32 %v9455, %v9503
        %9505 = vmatmul.bf16.gmra.mxu0 %v9312
        %v9506 = vpop.f32.mrf.mxu0
        %v9507 = vadd.f32 %v9458, %v9506
        %v9508 = vpop.f32.mrf.mxu0
        %v9509 = vadd.f32 %v9460, %v9508
        %9510 = vmatmul.bf16.gmra.mxu0 %v9314
        %v9511 = vpop.f32.mrf.mxu0
        %v9512 = vadd.f32 %v9463, %v9511
        %v9513 = vpop.f32.mrf.mxu0
        %v9514 = vadd.f32 %v9465, %v9513
        %9515 = vmatmul.bf16.gmra.mxu0 %v9316
        %v9516 = vpop.f32.mrf.mxu0
        %v9517 = vadd.f32 %v9468, %v9516
        %v9518 = vpop.f32.mrf.mxu0
        %v9519 = vadd.f32 %v9470, %v9518
        %9520 = vmatmul.bf16.gmra.mxu0 %v9318
        %v9521 = vpop.f32.mrf.mxu0
        %v9522 = vadd.f32 %v9473, %v9521
        %v9523 = vpop.f32.mrf.mxu0
        %v9524 = vadd.f32 %v9475, %v9523
        %9525 = vmatmul.bf16.gmra.mxu0 %v9320
        %v9526 = vpop.f32.mrf.mxu0
        %v9527 = vadd.f32 %v9478, %v9526
        %v9528 = vpop.f32.mrf.mxu0
        %v9529 = vadd.f32 %v9480, %v9528
        %9530 = vdwg.mxu0
        %v9531 = vadd.f32 %v9170, %v9492
        %v9532 = vadd.f32 %v9172, %v9494
        %v9533 = vadd.f32 %v9175, %v9497
        %v9534 = vadd.f32 %v9177, %v9499
        %v9535 = vadd.f32 %v9180, %v9502
        %v9536 = vadd.f32 %v9182, %v9504
        %v9537 = vadd.f32 %v9185, %v9507
        %v9538 = vadd.f32 %v9187, %v9509
        %v9539 = vadd.f32 %v9190, %v9512
        %v9540 = vadd.f32 %v9192, %v9514
        %v9541 = vadd.f32 %v9195, %v9517
        %v9542 = vadd.f32 %v9197, %v9519
        %v9543 = vadd.f32 %v9200, %v9522
        %v9544 = vadd.f32 %v9202, %v9524
        %v9545 = vadd.f32 %v9205, %v9527
        %v9546 = vadd.f32 %v9207, %v9529
        %v9547 = vadd.f32 %v9531, %v7597
        %v9548 = vadd.f32 %v9532, %v7597
        %v9549 = vadd.f32 %v9533, %v7597
        %v9550 = vadd.f32 %v9534, %v7597
        %v9551 = vadd.f32 %v9535, %v7597
        %v9552 = vadd.f32 %v9536, %v7597
        %v9553 = vadd.f32 %v9537, %v7597
        %v9554 = vadd.f32 %v9538, %v7597
        %v9555 = vadd.f32 %v9539, %v7597
        %v9556 = vadd.f32 %v9540, %v7597
        %v9557 = vadd.f32 %v9541, %v7597
        %v9558 = vadd.f32 %v9542, %v7597
        %v9559 = vadd.f32 %v9543, %v7597
        %v9560 = vadd.f32 %v9544, %v7597
        %v9561 = vadd.f32 %v9545, %v7597
        %v9562 = vadd.f32 %v9546, %v7597
        %v9563 = vxor.u32 %v9547, 2147483648
        %v9564 = vxor.u32 %v9548, 2147483648
        %v9565 = vxor.u32 %v9549, 2147483648
        %v9566 = vxor.u32 %v9550, 2147483648
        %v9567 = vxor.u32 %v9551, 2147483648
        %v9568 = vxor.u32 %v9552, 2147483648
        %v9569 = vxor.u32 %v9553, 2147483648
        %v9570 = vxor.u32 %v9554, 2147483648
        %v9571 = vxor.u32 %v9555, 2147483648
        %v9572 = vxor.u32 %v9556, 2147483648
        %v9573 = vxor.u32 %v9557, 2147483648
        %v9574 = vxor.u32 %v9558, 2147483648
        %v9575 = vxor.u32 %v9559, 2147483648
        %v9576 = vxor.u32 %v9560, 2147483648
        %v9577 = vxor.u32 %v9561, 2147483648
        %v9578 = vxor.u32 %v9562, 2147483648
        %v9579 = vmul.f32 %v9563, 1.442695
        %v9580 = vpow.pop %v9579
        %v9581 = vmul.f32 %v9564, 1.442695
        %v9582 = vpow.pop %v9581
        %v9583 = vmul.f32 %v9565, 1.442695
        %v9584 = vpow.pop %v9583
        %v9585 = vmul.f32 %v9566, 1.442695
        %v9586 = vpow.pop %v9585
        %v9587 = vmul.f32 %v9567, 1.442695
        %v9588 = vpow.pop %v9587
        %v9589 = vmul.f32 %v9568, 1.442695
        %v9590 = vpow.pop %v9589
        %v9591 = vmul.f32 %v9569, 1.442695
        %v9592 = vpow.pop %v9591
        %v9593 = vmul.f32 %v9570, 1.442695
        %v9594 = vpow.pop %v9593
        %v9595 = vmul.f32 %v9571, 1.442695
        %v9596 = vpow.pop %v9595
        %v9597 = vmul.f32 %v9572, 1.442695
        %v9598 = vpow.pop %v9597
        %v9599 = vmul.f32 %v9573, 1.442695
        %v9600 = vpow.pop %v9599
        %v9601 = vmul.f32 %v9574, 1.442695
        %v9602 = vpow.pop %v9601
        %v9603 = vmul.f32 %v9575, 1.442695
        %v9604 = vpow.pop %v9603
        %v9605 = vmul.f32 %v9576, 1.442695
        %v9606 = vpow.pop %v9605
        %v9607 = vmul.f32 %v9577, 1.442695
        %v9608 = vpow.pop %v9607
        %v9609 = vmul.f32 %v9578, 1.442695
        %v9610 = vpow.pop %v9609
        %v9611 = vadd.f32 %v9580, 1.0
        %v9612 = vadd.f32 %v9582, 1.0
        %v9613 = vadd.f32 %v9584, 1.0
        %v9614 = vadd.f32 %v9586, 1.0
        %v9615 = vadd.f32 %v9588, 1.0
        %v9616 = vadd.f32 %v9590, 1.0
        %v9617 = vadd.f32 %v9592, 1.0
        %v9618 = vadd.f32 %v9594, 1.0
        %v9619 = vadd.f32 %v9596, 1.0
        %v9620 = vadd.f32 %v9598, 1.0
        %v9621 = vadd.f32 %v9600, 1.0
        %v9622 = vadd.f32 %v9602, 1.0
        %v9623 = vadd.f32 %v9604, 1.0
        %v9624 = vadd.f32 %v9606, 1.0
        %v9625 = vadd.f32 %v9608, 1.0
        %v9626 = vadd.f32 %v9610, 1.0
        %v9627 = vrcp.pop %v9611
        %v9628 = vmul.f32 %v9611, %v9627
        %v9629 = vsub.f32 1.0, %v9628
        %v9630 = vmul.f32 %v9627, %v9629
        %v9631 = vadd.f32 %v9627, %v9630
        %vm9632 = vweird.f32 %v9611
        %vm9633 = vweird.f32 %v9627
        %vm9634 = vmor %vm9632, %vm9633
        %v9635 = vsel %vm9634, %v9627, %v9631
        %v9636 = vand.u32 2147483647, %v9611
        %vm9637 = vcmp.eq.f32.partialorder %v9636, 8.507059e+37
        %v9638 = vand.u32 %v9611, 2147483648
        %v9639 = vor.u32 1.1754944e-38, %v9638
        %v9640 = vsel %vm9637, %v9639, %v9635
        %v9641 = vmul.f32 1.0, %v9640
        %v9642 = vrcp.pop %v9612
        %v9643 = vmul.f32 %v9612, %v9642
        %v9644 = vsub.f32 1.0, %v9643
        %v9645 = vmul.f32 %v9642, %v9644
        %v9646 = vadd.f32 %v9642, %v9645
        %vm9647 = vweird.f32 %v9612
        %vm9648 = vweird.f32 %v9642
        %vm9649 = vmor %vm9647, %vm9648
        %v9650 = vsel %vm9649, %v9642, %v9646
        %v9651 = vand.u32 2147483647, %v9612
        %vm9652 = vcmp.eq.f32.partialorder %v9651, 8.507059e+37
        %v9653 = vand.u32 %v9612, 2147483648
        %v9654 = vor.u32 1.1754944e-38, %v9653
        %v9655 = vsel %vm9652, %v9654, %v9650
        %v9656 = vmul.f32 1.0, %v9655
        %v9657 = vrcp.pop %v9613
        %v9658 = vmul.f32 %v9613, %v9657
        %v9659 = vsub.f32 1.0, %v9658
        %v9660 = vmul.f32 %v9657, %v9659
        %v9661 = vadd.f32 %v9657, %v9660
        %vm9662 = vweird.f32 %v9613
        %vm9663 = vweird.f32 %v9657
        %vm9664 = vmor %vm9662, %vm9663
        %v9665 = vsel %vm9664, %v9657, %v9661
        %v9666 = vand.u32 2147483647, %v9613
        %vm9667 = vcmp.eq.f32.partialorder %v9666, 8.507059e+37
        %v9668 = vand.u32 %v9613, 2147483648
        %v9669 = vor.u32 1.1754944e-38, %v9668
        %v9670 = vsel %vm9667, %v9669, %v9665
        %v9671 = vmul.f32 1.0, %v9670
        %v9672 = vrcp.pop %v9614
        %v9673 = vmul.f32 %v9614, %v9672
        %v9674 = vsub.f32 1.0, %v9673
        %v9675 = vmul.f32 %v9672, %v9674
        %v9676 = vadd.f32 %v9672, %v9675
        %vm9677 = vweird.f32 %v9614
        %vm9678 = vweird.f32 %v9672
        %vm9679 = vmor %vm9677, %vm9678
        %v9680 = vsel %vm9679, %v9672, %v9676
        %v9681 = vand.u32 2147483647, %v9614
        %vm9682 = vcmp.eq.f32.partialorder %v9681, 8.507059e+37
        %v9683 = vand.u32 %v9614, 2147483648
        %v9684 = vor.u32 1.1754944e-38, %v9683
        %v9685 = vsel %vm9682, %v9684, %v9680
        %v9686 = vmul.f32 1.0, %v9685
        %v9687 = vrcp.pop %v9615
        %v9688 = vmul.f32 %v9615, %v9687
        %v9689 = vsub.f32 1.0, %v9688
        %v9690 = vmul.f32 %v9687, %v9689
        %v9691 = vadd.f32 %v9687, %v9690
        %vm9692 = vweird.f32 %v9615
        %vm9693 = vweird.f32 %v9687
        %vm9694 = vmor %vm9692, %vm9693
        %v9695 = vsel %vm9694, %v9687, %v9691
        %v9696 = vand.u32 2147483647, %v9615
        %vm9697 = vcmp.eq.f32.partialorder %v9696, 8.507059e+37
        %v9698 = vand.u32 %v9615, 2147483648
        %v9699 = vor.u32 1.1754944e-38, %v9698
        %v9700 = vsel %vm9697, %v9699, %v9695
        %v9701 = vmul.f32 1.0, %v9700
        %v9702 = vrcp.pop %v9616
        %v9703 = vmul.f32 %v9616, %v9702
        %v9704 = vsub.f32 1.0, %v9703
        %v9705 = vmul.f32 %v9702, %v9704
        %v9706 = vadd.f32 %v9702, %v9705
        %vm9707 = vweird.f32 %v9616
        %vm9708 = vweird.f32 %v9702
        %vm9709 = vmor %vm9707, %vm9708
        %v9710 = vsel %vm9709, %v9702, %v9706
        %v9711 = vand.u32 2147483647, %v9616
        %vm9712 = vcmp.eq.f32.partialorder %v9711, 8.507059e+37
        %v9713 = vand.u32 %v9616, 2147483648
        %v9714 = vor.u32 1.1754944e-38, %v9713
        %v9715 = vsel %vm9712, %v9714, %v9710
        %v9716 = vmul.f32 1.0, %v9715
        %v9717 = vrcp.pop %v9617
        %v9718 = vmul.f32 %v9617, %v9717
        %v9719 = vsub.f32 1.0, %v9718
        %v9720 = vmul.f32 %v9717, %v9719
        %v9721 = vadd.f32 %v9717, %v9720
        %vm9722 = vweird.f32 %v9617
        %vm9723 = vweird.f32 %v9717
        %vm9724 = vmor %vm9722, %vm9723
        %v9725 = vsel %vm9724, %v9717, %v9721
        %v9726 = vand.u32 2147483647, %v9617
        %vm9727 = vcmp.eq.f32.partialorder %v9726, 8.507059e+37
        %v9728 = vand.u32 %v9617, 2147483648
        %v9729 = vor.u32 1.1754944e-38, %v9728
        %v9730 = vsel %vm9727, %v9729, %v9725
        %v9731 = vmul.f32 1.0, %v9730
        %v9732 = vrcp.pop %v9618
        %v9733 = vmul.f32 %v9618, %v9732
        %v9734 = vsub.f32 1.0, %v9733
        %v9735 = vmul.f32 %v9732, %v9734
        %v9736 = vadd.f32 %v9732, %v9735
        %vm9737 = vweird.f32 %v9618
        %vm9738 = vweird.f32 %v9732
        %vm9739 = vmor %vm9737, %vm9738
        %v9740 = vsel %vm9739, %v9732, %v9736
        %v9741 = vand.u32 2147483647, %v9618
        %vm9742 = vcmp.eq.f32.partialorder %v9741, 8.507059e+37
        %v9743 = vand.u32 %v9618, 2147483648
        %v9744 = vor.u32 1.1754944e-38, %v9743
        %v9745 = vsel %vm9742, %v9744, %v9740
        %v9746 = vmul.f32 1.0, %v9745
        %v9747 = vrcp.pop %v9619
        %v9748 = vmul.f32 %v9619, %v9747
        %v9749 = vsub.f32 1.0, %v9748
        %v9750 = vmul.f32 %v9747, %v9749
        %v9751 = vadd.f32 %v9747, %v9750
        %vm9752 = vweird.f32 %v9619
        %vm9753 = vweird.f32 %v9747
        %vm9754 = vmor %vm9752, %vm9753
        %v9755 = vsel %vm9754, %v9747, %v9751
        %v9756 = vand.u32 2147483647, %v9619
        %vm9757 = vcmp.eq.f32.partialorder %v9756, 8.507059e+37
        %v9758 = vand.u32 %v9619, 2147483648
        %v9759 = vor.u32 1.1754944e-38, %v9758
        %v9760 = vsel %vm9757, %v9759, %v9755
        %v9761 = vmul.f32 1.0, %v9760
        %v9762 = vrcp.pop %v9620
        %v9763 = vmul.f32 %v9620, %v9762
        %v9764 = vsub.f32 1.0, %v9763
        %v9765 = vmul.f32 %v9762, %v9764
        %v9766 = vadd.f32 %v9762, %v9765
        %vm9767 = vweird.f32 %v9620
        %vm9768 = vweird.f32 %v9762
        %vm9769 = vmor %vm9767, %vm9768
        %v9770 = vsel %vm9769, %v9762, %v9766
        %v9771 = vand.u32 2147483647, %v9620
        %vm9772 = vcmp.eq.f32.partialorder %v9771, 8.507059e+37
        %v9773 = vand.u32 %v9620, 2147483648
        %v9774 = vor.u32 1.1754944e-38, %v9773
        %v9775 = vsel %vm9772, %v9774, %v9770
        %v9776 = vmul.f32 1.0, %v9775
        %v9777 = vrcp.pop %v9621
        %v9778 = vmul.f32 %v9621, %v9777
        %v9779 = vsub.f32 1.0, %v9778
        %v9780 = vmul.f32 %v9777, %v9779
        %v9781 = vadd.f32 %v9777, %v9780
        %vm9782 = vweird.f32 %v9621
        %vm9783 = vweird.f32 %v9777
        %vm9784 = vmor %vm9782, %vm9783
        %v9785 = vsel %vm9784, %v9777, %v9781
        %v9786 = vand.u32 2147483647, %v9621
        %vm9787 = vcmp.eq.f32.partialorder %v9786, 8.507059e+37
        %v9788 = vand.u32 %v9621, 2147483648
        %v9789 = vor.u32 1.1754944e-38, %v9788
        %v9790 = vsel %vm9787, %v9789, %v9785
        %v9791 = vmul.f32 1.0, %v9790
        %v9792 = vrcp.pop %v9622
        %v9793 = vmul.f32 %v9622, %v9792
        %v9794 = vsub.f32 1.0, %v9793
        %v9795 = vmul.f32 %v9792, %v9794
        %v9796 = vadd.f32 %v9792, %v9795
        %vm9797 = vweird.f32 %v9622
        %vm9798 = vweird.f32 %v9792
        %vm9799 = vmor %vm9797, %vm9798
        %v9800 = vsel %vm9799, %v9792, %v9796
        %v9801 = vand.u32 2147483647, %v9622
        %vm9802 = vcmp.eq.f32.partialorder %v9801, 8.507059e+37
        %v9803 = vand.u32 %v9622, 2147483648
        %v9804 = vor.u32 1.1754944e-38, %v9803
        %v9805 = vsel %vm9802, %v9804, %v9800
        %v9806 = vmul.f32 1.0, %v9805
        %v9807 = vrcp.pop %v9623
        %v9808 = vmul.f32 %v9623, %v9807
        %v9809 = vsub.f32 1.0, %v9808
        %v9810 = vmul.f32 %v9807, %v9809
        %v9811 = vadd.f32 %v9807, %v9810
        %vm9812 = vweird.f32 %v9623
        %vm9813 = vweird.f32 %v9807
        %vm9814 = vmor %vm9812, %vm9813
        %v9815 = vsel %vm9814, %v9807, %v9811
        %v9816 = vand.u32 2147483647, %v9623
        %vm9817 = vcmp.eq.f32.partialorder %v9816, 8.507059e+37
        %v9818 = vand.u32 %v9623, 2147483648
        %v9819 = vor.u32 1.1754944e-38, %v9818
        %v9820 = vsel %vm9817, %v9819, %v9815
        %v9821 = vmul.f32 1.0, %v9820
        %v9822 = vrcp.pop %v9624
        %v9823 = vmul.f32 %v9624, %v9822
        %v9824 = vsub.f32 1.0, %v9823
        %v9825 = vmul.f32 %v9822, %v9824
        %v9826 = vadd.f32 %v9822, %v9825
        %vm9827 = vweird.f32 %v9624
        %vm9828 = vweird.f32 %v9822
        %vm9829 = vmor %vm9827, %vm9828
        %v9830 = vsel %vm9829, %v9822, %v9826
        %v9831 = vand.u32 2147483647, %v9624
        %vm9832 = vcmp.eq.f32.partialorder %v9831, 8.507059e+37
        %v9833 = vand.u32 %v9624, 2147483648
        %v9834 = vor.u32 1.1754944e-38, %v9833
        %v9835 = vsel %vm9832, %v9834, %v9830
        %v9836 = vmul.f32 1.0, %v9835
        %v9837 = vrcp.pop %v9625
        %v9838 = vmul.f32 %v9625, %v9837
        %v9839 = vsub.f32 1.0, %v9838
        %v9840 = vmul.f32 %v9837, %v9839
        %v9841 = vadd.f32 %v9837, %v9840
        %vm9842 = vweird.f32 %v9625
        %vm9843 = vweird.f32 %v9837
        %vm9844 = vmor %vm9842, %vm9843
        %v9845 = vsel %vm9844, %v9837, %v9841
        %v9846 = vand.u32 2147483647, %v9625
        %vm9847 = vcmp.eq.f32.partialorder %v9846, 8.507059e+37
        %v9848 = vand.u32 %v9625, 2147483648
        %v9849 = vor.u32 1.1754944e-38, %v9848
        %v9850 = vsel %vm9847, %v9849, %v9845
        %v9851 = vmul.f32 1.0, %v9850
        %v9852 = vrcp.pop %v9626
        %v9853 = vmul.f32 %v9626, %v9852
        %v9854 = vsub.f32 1.0, %v9853
        %v9855 = vmul.f32 %v9852, %v9854
        %v9856 = vadd.f32 %v9852, %v9855
        %vm9857 = vweird.f32 %v9626
        %vm9858 = vweird.f32 %v9852
        %vm9859 = vmor %vm9857, %vm9858
        %v9860 = vsel %vm9859, %v9852, %v9856
        %v9861 = vand.u32 2147483647, %v9626
        %vm9862 = vcmp.eq.f32.partialorder %v9861, 8.507059e+37
        %v9863 = vand.u32 %v9626, 2147483648
        %v9864 = vor.u32 1.1754944e-38, %v9863
        %v9865 = vsel %vm9862, %v9864, %v9860
        %v9866 = vmul.f32 1.0, %v9865
        %v9867 = vtanh.pop %v9547
        %v9868 = vtanh.pop %v9548
        %v9869 = vtanh.pop %v9549
        %v9870 = vtanh.pop %v9550
        %v9871 = vtanh.pop %v9551
        %v9872 = vtanh.pop %v9552
        %v9873 = vtanh.pop %v9553
        %v9874 = vtanh.pop %v9554
        %v9875 = vtanh.pop %v9555
        %v9876 = vtanh.pop %v9556
        %v9877 = vtanh.pop %v9557
        %v9878 = vtanh.pop %v9558
        %v9879 = vtanh.pop %v9559
        %v9880 = vtanh.pop %v9560
        %v9881 = vtanh.pop %v9561
        %v9882 = vtanh.pop %v9562
        %v9883 = vld [vmem:[#allocation7 + $0x80] sm:$0xff]
        %v9884 = vld [vmem:[#allocation7 + $0x88] sm:$0xff]
        %v9885 = vld [vmem:[#allocation7 + $0x90] sm:$0xff]
        %v9886 = vld [vmem:[#allocation7 + $0x98] sm:$0xff]
        %v9887 = vld [vmem:[#allocation7 + $0xa0] sm:$0xff]
        %v9888 = vld [vmem:[#allocation7 + $0xa8] sm:$0xff]
        %v9889 = vld [vmem:[#allocation7 + $0xb0] sm:$0xff]
        %v9890 = vld [vmem:[#allocation7 + $0xb8] sm:$0xff]
        %v9891 = vld [vmem:[#allocation7 + $0xc0] sm:$0xff]
        %v9892 = vld [vmem:[#allocation7 + $0xc8] sm:$0xff]
        %v9893 = vld [vmem:[#allocation7 + $0xd0] sm:$0xff]
        %v9894 = vld [vmem:[#allocation7 + $0xd8] sm:$0xff]
        %v9895 = vld [vmem:[#allocation7 + $0xe0] sm:$0xff]
        %v9896 = vld [vmem:[#allocation7 + $0xe8] sm:$0xff]
        %v9897 = vld [vmem:[#allocation7 + $0xf0] sm:$0xff]
        %v9898 = vld [vmem:[#allocation7 + $0xf8] sm:$0xff]
        %9915 = vrot.lane.b32.xlu0 %v9883, 32
        %v9916 = vpop.permute.xlu0 %9915
        %9917 = vrot.lane.b32.xlu0 %v9884, 32
        %v9918 = vpop.permute.xlu0 %9917
        %9919 = vrot.lane.b32.xlu0 %v9885, 32
        %v9920 = vpop.permute.xlu0 %9919
        %9921 = vrot.lane.b32.xlu0 %v9886, 32
        %v9922 = vpop.permute.xlu0 %9921
        %9923 = vrot.lane.b32.xlu0 %v9887, 32
        %v9924 = vpop.permute.xlu0 %9923
        %9925 = vrot.lane.b32.xlu0 %v9888, 32
        %v9926 = vpop.permute.xlu0 %9925
        %9927 = vrot.lane.b32.xlu0 %v9889, 32
        %v9928 = vpop.permute.xlu0 %9927
        %9929 = vrot.lane.b32.xlu0 %v9890, 32
        %v9930 = vpop.permute.xlu0 %9929
        %9931 = vrot.lane.b32.xlu0 %v9891, 32
        %v9932 = vpop.permute.xlu0 %9931
        %9933 = vrot.lane.b32.xlu0 %v9892, 32
        %v9934 = vpop.permute.xlu0 %9933
        %9935 = vrot.lane.b32.xlu0 %v9893, 32
        %v9936 = vpop.permute.xlu0 %9935
        %9937 = vrot.lane.b32.xlu0 %v9894, 32
        %v9938 = vpop.permute.xlu0 %9937
        %9939 = vrot.lane.b32.xlu0 %v9895, 32
        %v9940 = vpop.permute.xlu0 %9939
        %9941 = vrot.lane.b32.xlu0 %v9896, 32
        %v9942 = vpop.permute.xlu0 %9941
        %9943 = vrot.lane.b32.xlu0 %v9897, 32
        %v9944 = vpop.permute.xlu0 %9943
        %9945 = vrot.lane.b32.xlu0 %v9898, 32
        %v9946 = vpop.permute.xlu0 %9945
        %v9963 = vmul.f32 %v9641, %v9916
        %v9964 = vmul.f32 %v9656, %v9918
        %v9965 = vmul.f32 %v9671, %v9920
        %v9966 = vmul.f32 %v9686, %v9922
        %v9967 = vmul.f32 %v9701, %v9924
        %v9968 = vmul.f32 %v9716, %v9926
        %v9969 = vmul.f32 %v9731, %v9928
        %v9970 = vmul.f32 %v9746, %v9930
        %v9971 = vmul.f32 %v9761, %v9932
        %v9972 = vmul.f32 %v9776, %v9934
        %v9973 = vmul.f32 %v9791, %v9936
        %v9974 = vmul.f32 %v9806, %v9938
        %v9975 = vmul.f32 %v9821, %v9940
        %v9976 = vmul.f32 %v9836, %v9942
        %v9977 = vmul.f32 %v9851, %v9944
        %v9978 = vmul.f32 %v9866, %v9946
        %9995 = vrot.lane.b32.xlu0 %v9867, 64
        %v9996 = vpop.permute.xlu0 %9995
        %9997 = vrot.lane.b32.xlu0 %v9868, 64
        %v9998 = vpop.permute.xlu0 %9997
        %9999 = vrot.lane.b32.xlu0 %v9869, 64
        %v10000 = vpop.permute.xlu0 %9999
        %10001 = vrot.lane.b32.xlu0 %v9870, 64
        %v10002 = vpop.permute.xlu0 %10001
        %10003 = vrot.lane.b32.xlu0 %v9871, 64
        %v10004 = vpop.permute.xlu0 %10003
        %10005 = vrot.lane.b32.xlu0 %v9872, 64
        %v10006 = vpop.permute.xlu0 %10005
        %10007 = vrot.lane.b32.xlu0 %v9873, 64
        %v10008 = vpop.permute.xlu0 %10007
        %10009 = vrot.lane.b32.xlu0 %v9874, 64
        %v10010 = vpop.permute.xlu0 %10009
        %10011 = vrot.lane.b32.xlu0 %v9875, 64
        %v10012 = vpop.permute.xlu0 %10011
        %10013 = vrot.lane.b32.xlu0 %v9876, 64
        %v10014 = vpop.permute.xlu0 %10013
        %10015 = vrot.lane.b32.xlu0 %v9877, 64
        %v10016 = vpop.permute.xlu0 %10015
        %10017 = vrot.lane.b32.xlu0 %v9878, 64
        %v10018 = vpop.permute.xlu0 %10017
        %10019 = vrot.lane.b32.xlu0 %v9879, 64
        %v10020 = vpop.permute.xlu0 %10019
        %10021 = vrot.lane.b32.xlu0 %v9880, 64
        %v10022 = vpop.permute.xlu0 %10021
        %10023 = vrot.lane.b32.xlu0 %v9881, 64
        %v10024 = vpop.permute.xlu0 %10023
        %10025 = vrot.lane.b32.xlu0 %v9882, 64
        %v10026 = vpop.permute.xlu0 %10025
        %v10043 = vmul.f32 %v9641, %v9996
        %v10044 = vmul.f32 %v9656, %v9998
        %v10045 = vmul.f32 %v9671, %v10000
        %v10046 = vmul.f32 %v9686, %v10002
        %v10047 = vmul.f32 %v9701, %v10004
        %v10048 = vmul.f32 %v9716, %v10006
        %v10049 = vmul.f32 %v9731, %v10008
        %v10050 = vmul.f32 %v9746, %v10010
        %v10051 = vmul.f32 %v9761, %v10012
        %v10052 = vmul.f32 %v9776, %v10014
        %v10053 = vmul.f32 %v9791, %v10016
        %v10054 = vmul.f32 %v9806, %v10018
        %v10055 = vmul.f32 %v9821, %v10020
        %v10056 = vmul.f32 %v9836, %v10022
        %v10057 = vmul.f32 %v9851, %v10024
        %v10058 = vmul.f32 %v9866, %v10026
        %10075 = vrot.lane.b32.xlu0 %v10043, 32
        %v10076 = vpop.permute.xlu0 %10075
        %10077 = vrot.lane.b32.xlu0 %v10044, 32
        %v10078 = vpop.permute.xlu0 %10077
        %10079 = vrot.lane.b32.xlu0 %v10045, 32
        %v10080 = vpop.permute.xlu0 %10079
        %10081 = vrot.lane.b32.xlu0 %v10046, 32
        %v10082 = vpop.permute.xlu0 %10081
        %10083 = vrot.lane.b32.xlu0 %v10047, 32
        %v10084 = vpop.permute.xlu0 %10083
        %10085 = vrot.lane.b32.xlu0 %v10048, 32
        %v10086 = vpop.permute.xlu0 %10085
        %10087 = vrot.lane.b32.xlu0 %v10049, 32
        %v10088 = vpop.permute.xlu0 %10087
        %10089 = vrot.lane.b32.xlu0 %v10050, 32
        %v10090 = vpop.permute.xlu0 %10089
        %10091 = vrot.lane.b32.xlu0 %v10051, 32
        %v10092 = vpop.permute.xlu0 %10091
        %10093 = vrot.lane.b32.xlu0 %v10052, 32
        %v10094 = vpop.permute.xlu0 %10093
        %10095 = vrot.lane.b32.xlu0 %v10053, 32
        %v10096 = vpop.permute.xlu0 %10095
        %10097 = vrot.lane.b32.xlu0 %v10054, 32
        %v10098 = vpop.permute.xlu0 %10097
        %10099 = vrot.lane.b32.xlu0 %v10055, 32
        %v10100 = vpop.permute.xlu0 %10099
        %10101 = vrot.lane.b32.xlu0 %v10056, 32
        %v10102 = vpop.permute.xlu0 %10101
        %10103 = vrot.lane.b32.xlu0 %v10057, 32
        %v10104 = vpop.permute.xlu0 %10103
        %10105 = vrot.lane.b32.xlu0 %v10058, 32
        %v10106 = vpop.permute.xlu0 %10105
        %v10123 = vadd.f32 %v9963, %v10076
        %v10124 = vadd.f32 %v9964, %v10078
        %v10125 = vadd.f32 %v9965, %v10080
        %v10126 = vadd.f32 %v9966, %v10082
        %v10127 = vadd.f32 %v9967, %v10084
        %v10128 = vadd.f32 %v9968, %v10086
        %v10129 = vadd.f32 %v9969, %v10088
        %v10130 = vadd.f32 %v9970, %v10090
        %v10131 = vadd.f32 %v9971, %v10092
        %v10132 = vadd.f32 %v9972, %v10094
        %v10133 = vadd.f32 %v9973, %v10096
        %v10134 = vadd.f32 %v9974, %v10098
        %v10135 = vadd.f32 %v9975, %v10100
        %v10136 = vadd.f32 %v9976, %v10102
        %v10137 = vadd.f32 %v9977, %v10104
        %v10138 = vadd.f32 %v9978, %v10106
        %v10139 = vtanh.pop %v10123
        %v10140 = vtanh.pop %v10124
        %v10141 = vtanh.pop %v10125
        %v10142 = vtanh.pop %v10126
        %v10143 = vtanh.pop %v10127
        %v10144 = vtanh.pop %v10128
        %v10145 = vtanh.pop %v10129
        %v10146 = vtanh.pop %v10130
        %v10147 = vtanh.pop %v10131
        %v10148 = vtanh.pop %v10132
        %v10149 = vtanh.pop %v10133
        %v10150 = vtanh.pop %v10134
        %v10151 = vtanh.pop %v10135
        %v10152 = vtanh.pop %v10136
        %v10153 = vtanh.pop %v10137
        %v10154 = vtanh.pop %v10138
        %10171 = vrot.lane.b32.xlu0 %v10139, 64
        %v10172 = vpop.permute.xlu0 %10171
        %10173 = vrot.lane.b32.xlu0 %v10140, 64
        %v10174 = vpop.permute.xlu0 %10173
        %10175 = vrot.lane.b32.xlu0 %v10141, 64
        %v10176 = vpop.permute.xlu0 %10175
        %10177 = vrot.lane.b32.xlu0 %v10142, 64
        %v10178 = vpop.permute.xlu0 %10177
        %10179 = vrot.lane.b32.xlu0 %v10143, 64
        %v10180 = vpop.permute.xlu0 %10179
        %10181 = vrot.lane.b32.xlu0 %v10144, 64
        %v10182 = vpop.permute.xlu0 %10181
        %10183 = vrot.lane.b32.xlu0 %v10145, 64
        %v10184 = vpop.permute.xlu0 %10183
        %10185 = vrot.lane.b32.xlu0 %v10146, 64
        %v10186 = vpop.permute.xlu0 %10185
        %10187 = vrot.lane.b32.xlu0 %v10147, 64
        %v10188 = vpop.permute.xlu0 %10187
        %10189 = vrot.lane.b32.xlu0 %v10148, 64
        %v10190 = vpop.permute.xlu0 %10189
        %10191 = vrot.lane.b32.xlu0 %v10149, 64
        %v10192 = vpop.permute.xlu0 %10191
        %10193 = vrot.lane.b32.xlu0 %v10150, 64
        %v10194 = vpop.permute.xlu0 %10193
        %10195 = vrot.lane.b32.xlu0 %v10151, 64
        %v10196 = vpop.permute.xlu0 %10195
        %10197 = vrot.lane.b32.xlu0 %v10152, 64
        %v10198 = vpop.permute.xlu0 %10197
        %10199 = vrot.lane.b32.xlu0 %v10153, 64
        %v10200 = vpop.permute.xlu0 %10199
        %10201 = vrot.lane.b32.xlu0 %v10154, 64
        %v10202 = vpop.permute.xlu0 %10201
        %v10219 = vmul.f32 %v9641, %v10172
        %v10220 = vmul.f32 %v9656, %v10174
        %v10221 = vmul.f32 %v9671, %v10176
        %v10222 = vmul.f32 %v9686, %v10178
        %v10223 = vmul.f32 %v9701, %v10180
        %v10224 = vmul.f32 %v9716, %v10182
        %v10225 = vmul.f32 %v9731, %v10184
        %v10226 = vmul.f32 %v9746, %v10186
        %v10227 = vmul.f32 %v9761, %v10188
        %v10228 = vmul.f32 %v9776, %v10190
        %v10229 = vmul.f32 %v9791, %v10192
        %v10230 = vmul.f32 %v9806, %v10194
        %v10231 = vmul.f32 %v9821, %v10196
        %v10232 = vmul.f32 %v9836, %v10198
        %v10233 = vmul.f32 %v9851, %v10200
        %v10234 = vmul.f32 %v9866, %v10202
        %10251 = vrot.lane.b32.xlu0 %v10123, 96
        %v10252 = vpop.permute.xlu0 %10251
        %10253 = vrot.lane.b32.xlu0 %v10124, 96
        %v10254 = vpop.permute.xlu0 %10253
        %10255 = vrot.lane.b32.xlu0 %v10125, 96
        %v10256 = vpop.permute.xlu0 %10255
        %10257 = vrot.lane.b32.xlu0 %v10126, 96
        %v10258 = vpop.permute.xlu0 %10257
        %10259 = vrot.lane.b32.xlu0 %v10127, 96
        %v10260 = vpop.permute.xlu0 %10259
        %10261 = vrot.lane.b32.xlu0 %v10128, 96
        %v10262 = vpop.permute.xlu0 %10261
        %10263 = vrot.lane.b32.xlu0 %v10129, 96
        %v10264 = vpop.permute.xlu0 %10263
        %10265 = vrot.lane.b32.xlu0 %v10130, 96
        %v10266 = vpop.permute.xlu0 %10265
        %10267 = vrot.lane.b32.xlu0 %v10131, 96
        %v10268 = vpop.permute.xlu0 %10267
        %10269 = vrot.lane.b32.xlu0 %v10132, 96
        %v10270 = vpop.permute.xlu0 %10269
        %10271 = vrot.lane.b32.xlu0 %v10133, 96
        %v10272 = vpop.permute.xlu0 %10271
        %10273 = vrot.lane.b32.xlu0 %v10134, 96
        %v10274 = vpop.permute.xlu0 %10273
        %10275 = vrot.lane.b32.xlu0 %v10135, 96
        %v10276 = vpop.permute.xlu0 %10275
        %10277 = vrot.lane.b32.xlu0 %v10136, 96
        %v10278 = vpop.permute.xlu0 %10277
        %10279 = vrot.lane.b32.xlu0 %v10137, 96
        %v10280 = vpop.permute.xlu0 %10279
        %10281 = vrot.lane.b32.xlu0 %v10138, 96
        %v10282 = vpop.permute.xlu0 %10281
        %10299 = vst.msk [vmem:[#allocation7 + $0x80] sm:$0xff] %vm423, %v10252
        %10300 = vst.msk [vmem:[#allocation7 + $0x88] sm:$0xff] %vm423, %v10254
        %10301 = vst.msk [vmem:[#allocation7 + $0x90] sm:$0xff] %vm423, %v10256
        %10302 = vst.msk [vmem:[#allocation7 + $0x98] sm:$0xff] %vm423, %v10258
        %10303 = vst.msk [vmem:[#allocation7 + $0xa0] sm:$0xff] %vm423, %v10260
        %10304 = vst.msk [vmem:[#allocation7 + $0xa8] sm:$0xff] %vm423, %v10262
        %10305 = vst.msk [vmem:[#allocation7 + $0xb0] sm:$0xff] %vm423, %v10264
        %10306 = vst.msk [vmem:[#allocation7 + $0xb8] sm:$0xff] %vm423, %v10266
        %10307 = vst.msk [vmem:[#allocation7 + $0xc0] sm:$0xff] %vm423, %v10268
        %10308 = vst.msk [vmem:[#allocation7 + $0xc8] sm:$0xff] %vm423, %v10270
        %10309 = vst.msk [vmem:[#allocation7 + $0xd0] sm:$0xff] %vm423, %v10272
        %10310 = vst.msk [vmem:[#allocation7 + $0xd8] sm:$0xff] %vm423, %v10274
        %10311 = vst.msk [vmem:[#allocation7 + $0xe0] sm:$0xff] %vm423, %v10276
        %10312 = vst.msk [vmem:[#allocation7 + $0xe8] sm:$0xff] %vm423, %v10278
        %10313 = vst.msk [vmem:[#allocation7 + $0xf0] sm:$0xff] %vm423, %v10280
        %10314 = vst.msk [vmem:[#allocation7 + $0xf8] sm:$0xff] %vm423, %v10282
        %v10315 = vpack.c.bf16 %v10219, %v10219
        %v10316 = vpack.c.bf16 %v10220, %v10220
        %v10317 = vpack.c.bf16 %v10221, %v10221
        %v10318 = vpack.c.bf16 %v10222, %v10222
        %v10319 = vpack.c.bf16 %v10223, %v10223
        %v10320 = vpack.c.bf16 %v10224, %v10224
        %v10321 = vpack.c.bf16 %v10225, %v10225
        %v10322 = vpack.c.bf16 %v10226, %v10226
        %v10323 = vpack.c.bf16 %v10227, %v10227
        %v10324 = vpack.c.bf16 %v10228, %v10228
        %v10325 = vpack.c.bf16 %v10229, %v10229
        %v10326 = vpack.c.bf16 %v10230, %v10230
        %v10327 = vpack.c.bf16 %v10231, %v10231
        %v10328 = vpack.c.bf16 %v10232, %v10232
        %v10329 = vpack.c.bf16 %v10233, %v10233
        %v10330 = vpack.c.bf16 %v10234, %v10234
        %10347 = vrot.lane.b32.xlu0 %v10315, 32
        %v10348 = vpop.permute.xlu0 %10347
        %10349 = vrot.lane.b32.xlu0 %v10316, 32
        %v10350 = vpop.permute.xlu0 %10349
        %10351 = vrot.lane.b32.xlu0 %v10317, 32
        %v10352 = vpop.permute.xlu0 %10351
        %10353 = vrot.lane.b32.xlu0 %v10318, 32
        %v10354 = vpop.permute.xlu0 %10353
        %10355 = vrot.lane.b32.xlu0 %v10319, 32
        %v10356 = vpop.permute.xlu0 %10355
        %10357 = vrot.lane.b32.xlu0 %v10320, 32
        %v10358 = vpop.permute.xlu0 %10357
        %10359 = vrot.lane.b32.xlu0 %v10321, 32
        %v10360 = vpop.permute.xlu0 %10359
        %10361 = vrot.lane.b32.xlu0 %v10322, 32
        %v10362 = vpop.permute.xlu0 %10361
        %10363 = vrot.lane.b32.xlu0 %v10323, 32
        %v10364 = vpop.permute.xlu0 %10363
        %10365 = vrot.lane.b32.xlu0 %v10324, 32
        %v10366 = vpop.permute.xlu0 %10365
        %10367 = vrot.lane.b32.xlu0 %v10325, 32
        %v10368 = vpop.permute.xlu0 %10367
        %10369 = vrot.lane.b32.xlu0 %v10326, 32
        %v10370 = vpop.permute.xlu0 %10369
        %10371 = vrot.lane.b32.xlu0 %v10327, 32
        %v10372 = vpop.permute.xlu0 %10371
        %10373 = vrot.lane.b32.xlu0 %v10328, 32
        %v10374 = vpop.permute.xlu0 %10373
        %10375 = vrot.lane.b32.xlu0 %v10329, 32
        %v10376 = vpop.permute.xlu0 %10375
        %10377 = vrot.lane.b32.xlu0 %v10330, 32
        %v10378 = vpop.permute.xlu0 %10377
        %s10395 = scalar_lea.vmem [#allocation5], 144
        %10396 = vst.msk [vmem:[%s10395 + $0x4] sm:$0xf] %vm3831, %v10348
        %10397 = vst.msk [vmem:[%s10395 + $0x8] sm:$0xf] %vm3831, %v10350
        %10398 = vst.msk [vmem:[%s10395 + $0x14] sm:$0xf] %vm3831, %v10352
        %10399 = vst.msk [vmem:[%s10395 + $0x18] sm:$0xf] %vm3831, %v10354
        %10400 = vst.msk [vmem:[%s10395 + $0x24] sm:$0xf] %vm3831, %v10356
        %10401 = vst.msk [vmem:[%s10395 + $0x28] sm:$0xf] %vm3831, %v10358
        %10402 = vst.msk [vmem:[%s10395 + $0x34] sm:$0xf] %vm3831, %v10360
        %10403 = vst.msk [vmem:[%s10395 + $0x38] sm:$0xf] %vm3831, %v10362
        %10404 = vst.msk [vmem:[%s10395 + $0x44] sm:$0xf] %vm3831, %v10364
        %10405 = vst.msk [vmem:[%s10395 + $0x48] sm:$0xf] %vm3831, %v10366
        %10406 = vst.msk [vmem:[%s10395 + $0x54] sm:$0xf] %vm3831, %v10368
        %10407 = vst.msk [vmem:[%s10395 + $0x58] sm:$0xf] %vm3831, %v10370
        %10408 = vst.msk [vmem:[%s10395 + $0x64] sm:$0xf] %vm3831, %v10372
        %10409 = vst.msk [vmem:[%s10395 + $0x68] sm:$0xf] %vm3831, %v10374
        %10410 = vst.msk [vmem:[%s10395 + $0x74] sm:$0xf] %vm3831, %v10376
        %10411 = vst.msk [vmem:[%s10395 + $0x78] sm:$0xf] %vm3831, %v10378
        // Predicated region
        $region56: #{tpu_custom_call.1} parent=44 // pred_check
          %p10412 = pneg %p8463
        $region57: #{tpu_custom_call.1} parent=44 // pred_check_branch
          %10414 = sbr.rel (%p10412) target = $region59
        $region58: #{tpu_custom_call.1} parent=44 // pred_region
          %10431 = vrot.lane.b32.xlu0 %v10219, 32
          %v10432 = vpop.permute.xlu0 %10431
          %10433 = vrot.lane.b32.xlu0 %v10220, 32
          %v10434 = vpop.permute.xlu0 %10433
          %10435 = vrot.lane.b32.xlu0 %v10221, 32
          %v10436 = vpop.permute.xlu0 %10435
          %10437 = vrot.lane.b32.xlu0 %v10222, 32
          %v10438 = vpop.permute.xlu0 %10437
          %10439 = vrot.lane.b32.xlu0 %v10223, 32
          %v10440 = vpop.permute.xlu0 %10439
          %10441 = vrot.lane.b32.xlu0 %v10224, 32
          %v10442 = vpop.permute.xlu0 %10441
          %10443 = vrot.lane.b32.xlu0 %v10225, 32
          %v10444 = vpop.permute.xlu0 %10443
          %10445 = vrot.lane.b32.xlu0 %v10226, 32
          %v10446 = vpop.permute.xlu0 %10445
          %10447 = vrot.lane.b32.xlu0 %v10227, 32
          %v10448 = vpop.permute.xlu0 %10447
          %10449 = vrot.lane.b32.xlu0 %v10228, 32
          %v10450 = vpop.permute.xlu0 %10449
          %10451 = vrot.lane.b32.xlu0 %v10229, 32
          %v10452 = vpop.permute.xlu0 %10451
          %10453 = vrot.lane.b32.xlu0 %v10230, 32
          %v10454 = vpop.permute.xlu0 %10453
          %10455 = vrot.lane.b32.xlu0 %v10231, 32
          %v10456 = vpop.permute.xlu0 %10455
          %10457 = vrot.lane.b32.xlu0 %v10232, 32
          %v10458 = vpop.permute.xlu0 %10457
          %10459 = vrot.lane.b32.xlu0 %v10233, 32
          %v10460 = vpop.permute.xlu0 %10459
          %10461 = vrot.lane.b32.xlu0 %v10234, 32
          %v10462 = vpop.permute.xlu0 %10461
          %s10479 = smul.u32 %s1108, 256
          %s10480 = scalar_lea.vmem %s302, %s10479
          %10481 = vst.msk [vmem:[%s10480 + $0x80] sm:$0xff] %vm423, %v10432
          %10482 = vst.msk [vmem:[%s10480 + $0x88] sm:$0xff] %vm423, %v10434
          %10483 = vst.msk [vmem:[%s10480 + $0x90] sm:$0xff] %vm423, %v10436
          %10484 = vst.msk [vmem:[%s10480 + $0x98] sm:$0xff] %vm423, %v10438
          %10485 = vst.msk [vmem:[%s10480 + $0xa0] sm:$0xff] %vm423, %v10440
          %10486 = vst.msk [vmem:[%s10480 + $0xa8] sm:$0xff] %vm423, %v10442
          %10487 = vst.msk [vmem:[%s10480 + $0xb0] sm:$0xff] %vm423, %v10444
          %10488 = vst.msk [vmem:[%s10480 + $0xb8] sm:$0xff] %vm423, %v10446
          %10489 = vst.msk [vmem:[%s10480 + $0xc0] sm:$0xff] %vm423, %v10448
          %10490 = vst.msk [vmem:[%s10480 + $0xc8] sm:$0xff] %vm423, %v10450
          %10491 = vst.msk [vmem:[%s10480 + $0xd0] sm:$0xff] %vm423, %v10452
          %10492 = vst.msk [vmem:[%s10480 + $0xd8] sm:$0xff] %vm423, %v10454
          %10493 = vst.msk [vmem:[%s10480 + $0xe0] sm:$0xff] %vm423, %v10456
          %10494 = vst.msk [vmem:[%s10480 + $0xe8] sm:$0xff] %vm423, %v10458
          %10495 = vst.msk [vmem:[%s10480 + $0xf0] sm:$0xff] %vm423, %v10460
          %10496 = vst.msk [vmem:[%s10480 + $0xf8] sm:$0xff] %vm423, %v10462
        $region59: #{tpu_custom_call.1} parent=44 // pred_fallthru
          _
        // Predicated region
        $region60: #{tpu_custom_call.1} parent=44 // pred_check
          %p10497 = pneg %p8549
        $region61: #{tpu_custom_call.1} parent=44 // pred_check_branch
          %10499 = sbr.rel (%p10497) target = $region63
        $region62: #{tpu_custom_call.1} parent=44 // pred_region
          %10516 = vrot.lane.b32.xlu0 %v10219, 32
          %v10517 = vpop.permute.xlu0 %10516
          %10518 = vrot.lane.b32.xlu0 %v10220, 32
          %v10519 = vpop.permute.xlu0 %10518
          %10520 = vrot.lane.b32.xlu0 %v10221, 32
          %v10521 = vpop.permute.xlu0 %10520
          %10522 = vrot.lane.b32.xlu0 %v10222, 32
          %v10523 = vpop.permute.xlu0 %10522
          %10524 = vrot.lane.b32.xlu0 %v10223, 32
          %v10525 = vpop.permute.xlu0 %10524
          %10526 = vrot.lane.b32.xlu0 %v10224, 32
          %v10527 = vpop.permute.xlu0 %10526
          %10528 = vrot.lane.b32.xlu0 %v10225, 32
          %v10529 = vpop.permute.xlu0 %10528
          %10530 = vrot.lane.b32.xlu0 %v10226, 32
          %v10531 = vpop.permute.xlu0 %10530
          %10532 = vrot.lane.b32.xlu0 %v10227, 32
          %v10533 = vpop.permute.xlu0 %10532
          %10534 = vrot.lane.b32.xlu0 %v10228, 32
          %v10535 = vpop.permute.xlu0 %10534
          %10536 = vrot.lane.b32.xlu0 %v10229, 32
          %v10537 = vpop.permute.xlu0 %10536
          %10538 = vrot.lane.b32.xlu0 %v10230, 32
          %v10539 = vpop.permute.xlu0 %10538
          %10540 = vrot.lane.b32.xlu0 %v10231, 32
          %v10541 = vpop.permute.xlu0 %10540
          %10542 = vrot.lane.b32.xlu0 %v10232, 32
          %v10543 = vpop.permute.xlu0 %10542
          %10544 = vrot.lane.b32.xlu0 %v10233, 32
          %v10545 = vpop.permute.xlu0 %10544
          %10546 = vrot.lane.b32.xlu0 %v10234, 32
          %v10547 = vpop.permute.xlu0 %10546
          %10564 = vst.msk [vmem:[%s307 + $0x80] sm:$0xff] %vm423, %v10517
          %10565 = vst.msk [vmem:[%s307 + $0x88] sm:$0xff] %vm423, %v10519
          %10566 = vst.msk [vmem:[%s307 + $0x90] sm:$0xff] %vm423, %v10521
          %10567 = vst.msk [vmem:[%s307 + $0x98] sm:$0xff] %vm423, %v10523
          %10568 = vst.msk [vmem:[%s307 + $0xa0] sm:$0xff] %vm423, %v10525
          %10569 = vst.msk [vmem:[%s307 + $0xa8] sm:$0xff] %vm423, %v10527
          %10570 = vst.msk [vmem:[%s307 + $0xb0] sm:$0xff] %vm423, %v10529
          %10571 = vst.msk [vmem:[%s307 + $0xb8] sm:$0xff] %vm423, %v10531
          %10572 = vst.msk [vmem:[%s307 + $0xc0] sm:$0xff] %vm423, %v10533
          %10573 = vst.msk [vmem:[%s307 + $0xc8] sm:$0xff] %vm423, %v10535
          %10574 = vst.msk [vmem:[%s307 + $0xd0] sm:$0xff] %vm423, %v10537
          %10575 = vst.msk [vmem:[%s307 + $0xd8] sm:$0xff] %vm423, %v10539
          %10576 = vst.msk [vmem:[%s307 + $0xe0] sm:$0xff] %vm423, %v10541
          %10577 = vst.msk [vmem:[%s307 + $0xe8] sm:$0xff] %vm423, %v10543
          %10578 = vst.msk [vmem:[%s307 + $0xf0] sm:$0xff] %vm423, %v10545
          %10579 = vst.msk [vmem:[%s307 + $0xf8] sm:$0xff] %vm423, %v10547
          %10580 = vst.msk [vmem:[%s312 + $0x80] sm:$0xff] %vm423, %v10252
          %10581 = vst.msk [vmem:[%s312 + $0x88] sm:$0xff] %vm423, %v10254
          %10582 = vst.msk [vmem:[%s312 + $0x90] sm:$0xff] %vm423, %v10256
          %10583 = vst.msk [vmem:[%s312 + $0x98] sm:$0xff] %vm423, %v10258
          %10584 = vst.msk [vmem:[%s312 + $0xa0] sm:$0xff] %vm423, %v10260
          %10585 = vst.msk [vmem:[%s312 + $0xa8] sm:$0xff] %vm423, %v10262
          %10586 = vst.msk [vmem:[%s312 + $0xb0] sm:$0xff] %vm423, %v10264
          %10587 = vst.msk [vmem:[%s312 + $0xb8] sm:$0xff] %vm423, %v10266
          %10588 = vst.msk [vmem:[%s312 + $0xc0] sm:$0xff] %vm423, %v10268
          %10589 = vst.msk [vmem:[%s312 + $0xc8] sm:$0xff] %vm423, %v10270
          %10590 = vst.msk [vmem:[%s312 + $0xd0] sm:$0xff] %vm423, %v10272
          %10591 = vst.msk [vmem:[%s312 + $0xd8] sm:$0xff] %vm423, %v10274
          %10592 = vst.msk [vmem:[%s312 + $0xe0] sm:$0xff] %vm423, %v10276
          %10593 = vst.msk [vmem:[%s312 + $0xe8] sm:$0xff] %vm423, %v10278
          %10594 = vst.msk [vmem:[%s312 + $0xf0] sm:$0xff] %vm423, %v10280
          %10595 = vst.msk [vmem:[%s312 + $0xf8] sm:$0xff] %vm423, %v10282
        $region63: #{tpu_custom_call.1} parent=44 // pred_fallthru
          _
      $region45: #{tpu_custom_call.1} parent=39 // loop_footer
        %s1107 = sadd.s32 1, %s1103
      $region46: #{tpu_custom_call.1} parent=39 // loop_footer_branch
        %1102 = sbr.rel target = $region42
      $region47: #{tpu_custom_call.1} parent=39 // loop_exit
        _
      %p10596 = scmp.lt.s32.totalorder %s28, 1
      %s10597 = scalar_select %p10596, %s28, 1
      %s10598 = smul.addr %s10597, 32
      %s10599 = smul.addr %s10598, 8
      %s10600 = scalar_lea.vmem %s6, %s10599
      %p10601 = scmp.lt.s32.totalorder %s28, 1
      %s10602 = scalar_select %p10601, %s28, 1
      %s10603 = smul.addr %s10602, 32
      %s10604 = smul.addr %s10603, 8
      %s10605 = scalar_lea.vmem %s7, %s10604
      %p10606 = scmp.lt.s32.totalorder %s28, 1
      %s10607 = scalar_select %p10606, %s28, 1
      %s10608 = smul.addr %s10607, 32
      %s10609 = smul.addr %s10608, 8
      %s10610 = scalar_lea.vmem %s8, %s10609
      // Predicated region
      $region64: #{tpu_custom_call.1} parent=39 // pred_check
        %p10611 = pneg %p156
      $region65: #{tpu_custom_call.1} parent=39 // pred_check_branch
        %10613 = sbr.rel (%p10611) target = $region67
      $region66: #{tpu_custom_call.1} parent=39 // pred_region
        _
      $region67: #{tpu_custom_call.1} parent=39 // pred_fallthru
        _
      // Predicated region
      $region68: #{tpu_custom_call.1} parent=39 // pred_check
        %p10614 = pneg %p182
      $region69: #{tpu_custom_call.1} parent=39 // pred_check_branch
        %10616 = sbr.rel (%p10614) target = $region71
      $region70: #{tpu_custom_call.1} parent=39 // pred_region
        _
      $region71: #{tpu_custom_call.1} parent=39 // pred_fallthru
        _
      // Predicated region
      $region72: #{tpu_custom_call.1} parent=39 // pred_check
        %p10617 = pneg %p208
      $region73: #{tpu_custom_call.1} parent=39 // pred_check_branch
        %10619 = sbr.rel (%p10617) target = $region75
      $region74: #{tpu_custom_call.1} parent=39 // pred_region
        _
      $region75: #{tpu_custom_call.1} parent=39 // pred_fallthru
        _
    $region40: #{tpu_custom_call.1} parent=5 // pred_fallthru
      _
    %p10620 = scmp.le.s32.totalorder 2, %s23
    // Predicated region
    $region76: #{tpu_custom_call.1} parent=5 // pred_check
      %p10621 = pneg %p10620
    $region77: #{tpu_custom_call.1} parent=5 // pred_check_branch
      %10623 = sbr.rel (%p10621) target = $region79
    $region78: #{tpu_custom_call.1} parent=5 // pred_region
      %s10624 = ssub.s32 %s23, 2
      // Predicated region
      $region80: #{tpu_custom_call.1} parent=78 // pred_check
        %p10625 = pneg %p162
      $region81: #{tpu_custom_call.1} parent=78 // pred_check_branch
        %10627 = sbr.rel (%p10625) target = $region83
      $region82: #{tpu_custom_call.1} parent=78 // pred_region
        %p10628 = scmp.lt.s32.totalorder %s29, 1
        %s10629 = scalar_select %p10628, %s29, 1
        %s10630 = smul.addr %s10629, 32
        %s10631 = smul.addr %s10630, 8
        %s10632 = scalar_lea.vmem %s6, %s10631
      $region83: #{tpu_custom_call.1} parent=78 // pred_fallthru
        _
      // Predicated region
      $region84: #{tpu_custom_call.1} parent=78 // pred_check
        %p10633 = pneg %p188
      $region85: #{tpu_custom_call.1} parent=78 // pred_check_branch
        %10635 = sbr.rel (%p10633) target = $region87
      $region86: #{tpu_custom_call.1} parent=78 // pred_region
        %p10636 = scmp.lt.s32.totalorder %s29, 1
        %s10637 = scalar_select %p10636, %s29, 1
        %s10638 = smul.addr %s10637, 32
        %s10639 = smul.addr %s10638, 8
        %s10640 = scalar_lea.vmem %s7, %s10639
      $region87: #{tpu_custom_call.1} parent=78 // pred_fallthru
        _
      // Predicated region
      $region88: #{tpu_custom_call.1} parent=78 // pred_check
        %p10641 = pneg %p214
      $region89: #{tpu_custom_call.1} parent=78 // pred_check_branch
        %10643 = sbr.rel (%p10641) target = $region91
      $region90: #{tpu_custom_call.1} parent=78 // pred_region
        %p10644 = scmp.lt.s32.totalorder %s29, 1
        %s10645 = scalar_select %p10644, %s29, 1
        %s10646 = smul.addr %s10645, 32
        %s10647 = smul.addr %s10646, 8
        %s10648 = scalar_lea.vmem %s8, %s10647
      $region91: #{tpu_custom_call.1} parent=78 // pred_fallthru
        _
    $region79: #{tpu_custom_call.1} parent=5 // pred_fallthru
      _
  $region6: #{tpu_custom_call.1} parent=0 // loop_footer
    %s27 = sadd.s32 1, %s23
  $region7: #{tpu_custom_call.1} parent=0 // loop_footer_branch
    %22 = sbr.rel target = $region3
  $region8: #{tpu_custom_call.1} parent=0 // loop_exit
    _

</llo_original>
